<compile_context>
chip_gen: v7x
topology: tpu7x:2x2x1
jax: 0.10.0
libtpu: 0.0.40
codegen_flags: <defaults>
</compile_context>

<pallas_src>
import functools

import jax
import jax.numpy as jnp
from jax.experimental import pallas as pl
from jax.experimental.pallas import tpu as pltpu

# ----------------------- small, module-consistent config -----------------------
B, P = 2, 8                 # batch, parts per shape
N_PTS = 256                 # raw points per part
N_S = 256                   # num_samples (module default 512; scaled down for demo)
C_PT = 3                    # xyz
BB_IN, BB_HID, BB_OUT = 12, 64, 32      # BoundingBoxTokenizer dims (4x3 bbs -> 12)
BB_PAD = 128                # bb-token channels zero-padded 32 -> 128 (lane-dense)
VIS_DIM = 128               # visual_feature_dim
OUT_DIM = 512               # out_proj output dim
TM_MAX = 128                # max token-row tile


def _round_up(x, m):
    return (x + m - 1) // m * m


def _tpu_kind():
    """Best-effort device-kind string for generation-specific tuning."""
    try:
        d = jax.devices()[0]
        if d.platform != "tpu":
            return ""
        return d.device_kind.lower()
    except Exception:
        return ""


def _choose_tm(m, tm_max=TM_MAX, multi_tc=False):
    """Row tile: fill MXU sublanes (multiple of 8), cap at tm_max.  Only on
    multi-TensorCore chips (v7x) split into >= 2 grid steps so the second TC
    gets work; on single-TC v5e/v6e keep one full-height tile."""
    tm = min(tm_max, _round_up(m, 8))
    if multi_tc and tm >= 16 and pl.cdiv(m, tm) < 2:
        tm = _round_up(pl.cdiv(m, 2), 8)
    return tm


# ------------------------------- Pallas kernel ---------------------------------
def part_tokenizer_kernel(bb_ref, pts_ref, mask_ref,
                          w1_ref, b1_ref, w2_ref, b2_ref, w3_ref, b3_ref,
                          ew_ref, eb_ref, wo_ref, bo_ref,
                          out_ref, bbtok_ref, vistok_ref,
                          *, n_s, ck, compute_dtype):
    mask = mask_ref[...]                                   # (tm, 1) float {0,1} = flipped_mask

    # --- BoundingBoxTokenizer: Linear(12,64)-ReLU-Linear(64,64)-ReLU-Linear(64,32) ---
    # w3/b3 are zero-padded 32->128 columns in the wrapper so bb_tok is a
    # lane-dense (tm, 128) slab; the extra 96 columns are exactly zero.
    h = jnp.dot(bb_ref[...], w1_ref[...], preferred_element_type=jnp.float32) + b1_ref[...]
    h = jnp.maximum(h, 0.0)
    h = jnp.dot(h, w2_ref[...], preferred_element_type=jnp.float32) + b2_ref[...]
    h = jnp.maximum(h, 0.0)
    bb_tok = jnp.dot(h, w3_ref[...], preferred_element_type=jnp.float32) + b3_ref[...]
    bb_tok = bb_tok * mask                                 # bb_tokens * flipped_mask

    # --- fused pc_encoder surrogate (Linear(3,128)+ReLU) + mean over N_S points,
    # chunked over N_S so no (tm, N_S, 128) temporary is ever materialized.
    # pts are laid out (3, tm, N_S): each coordinate plane is lane-dense.
    cdt = compute_dtype
    vis_dim = ew_ref.shape[1]
    tm = mask_ref.shape[0]

    ew = ew_ref[...].astype(cdt)                           # (3, 128)
    ew0 = ew[0][None, :, None]                             # (1, 128, 1) — hoisted
    ew1 = ew[1][None, :, None]
    ew2 = ew[2][None, :, None]
    eb = eb_ref[...].astype(cdt).reshape(1, vis_dim, 1)    # (1, 128, 1)

    n_chunks = n_s // ck

    def chunk_body(i, acc):
        off = pl.multiple_of(i * ck, ck)
        xc = pts_ref[0, :, pl.ds(off, ck)].astype(cdt)     # (tm, ck) lane-dense
        yc = pts_ref[1, :, pl.ds(off, ck)].astype(cdt)
        zc = pts_ref[2, :, pl.ds(off, ck)].astype(cdt)
        # features in (tm, 128, ck) orientation: 3 VPU FMAs + bias + ReLU
        f = (xc[:, None, :] * ew0
             + yc[:, None, :] * ew1
             + zc[:, None, :] * ew2
             + eb)
        f = jnp.maximum(f, 0)
        # reduce over the lane (ck) axis; accumulate the sum in f32
        return acc + jnp.sum(f.astype(jnp.float32), axis=2)   # (tm, 128)

    acc0 = jnp.zeros((tm, vis_dim), jnp.float32)
    acc = jax.lax.fori_loop(0, n_chunks, chunk_body, acc0,
                            unroll=(n_chunks <= 8))

    # --- WeightedAggregation: softmax over a size-1 last axis == 1.0 exactly,
    # so the module reduces to a plain mean over the N_S sampled points.
    vis = acc * (1.0 / n_s) * mask                          # (tm, 128)

    # --- out_proj over concat([bb_tok, vis], -1) as a single K=256 bf16 MXU
    # matmul (wo packed/zero-padded in the wrapper), f32 accumulation.
    comb = jnp.concatenate([bb_tok, vis], axis=-1).astype(jnp.bfloat16)   # (tm, 256)
    out = jnp.dot(comb, wo_ref[...], preferred_element_type=jnp.float32) + bo_ref[...]

    out_ref[...] = out
    bbtok_ref[...] = bb_tok                                 # lane-dense; cols >= 32 are zero
    vistok_ref[...] = vis


# ------------------------------- wrapper / glue ---------------------------------
def part_tokenizer_pallas(part_bbs, part_points, batch_mask, p, *,
                          num_samples=N_S, tm_max=TM_MAX):
    Bv, Pv = batch_mask.shape
    M = Bv * Pv
    n_s = num_samples
    flipped = (~batch_mask).astype(jnp.float32)             # (B, P)
    mask_f = flipped.reshape(M, 1)
    bb_flat = part_bbs.reshape(M, BB_IN).astype(jnp.float32)

    # subsample_parts(deterministic=True): first N_S points of every part.
    # TODO(synk): fps() (non-deterministic farthest-point sampling branch) not implemented.
    # Lane-dense layout: (C_PT, M, N_S) so the kernel block puts N_S on the lane axis.
    pts = part_points[:, :, :n_s, :].reshape(M, n_s, C_PT)
    pts_t = jnp.transpose(pts, (2, 0, 1)).astype(jnp.bfloat16)   # (3, M, N_S)

    kind = _tpu_kind()
    multi_tc = "v7" in kind                                  # v7x: 2 TensorCores/chip
    has_bf16_vpu = ("v6" in kind) or ("v7" in kind)          # v5e has no bf16 VALU
    cdt = jnp.bfloat16 if has_bf16_vpu else jnp.float32

    tm = _choose_tm(M, tm_max, multi_tc=multi_tc)
    n_tiles = pl.cdiv(M, tm)
    M_pad = n_tiles * tm
    if M_pad != M:                                           # partial-tile handling
        pad = M_pad - M
        bb_flat = jnp.pad(bb_flat, ((0, pad), (0, 0)))
        pts_t = jnp.pad(pts_t, ((0, 0), (0, pad), (0, 0)))
        mask_f = jnp.pad(mask_f, ((0, pad), (0, 0)))         # padded rows masked to 0

    # In-kernel N_S chunk size (64-128, full lanes when possible).
    ck = 128 if n_s % 128 == 0 else (64 if n_s % 64 == 0 else n_s)

    # Zero-pad bb-token channels 32 -> 128 so the residual store and the bb part
    # of out_proj are lane-dense; the padded rows/cols are zero, so the math is
    # identical to concat([bb_tok, vis]) @ wo.
    w3p = jnp.zeros((BB_HID, BB_PAD), jnp.float32).at[:, :BB_OUT].set(p['w3'])
    b3p = jnp.zeros((1, BB_PAD), jnp.float32).at[:, :BB_OUT].set(p['b3'])
    # Pack out_proj into one (256, 512) weight aligned with concat([bb_tok_pad, vis]).
    wo = p['wo']                                             # (160, 512) bf16
    wo_packed = jnp.zeros((BB_PAD + VIS_DIM, OUT_DIM), jnp.bfloat16)
    wo_packed = wo_packed.at[:BB_OUT].set(wo[:BB_OUT])
    wo_packed = wo_packed.at[BB_PAD:].set(wo[BB_OUT:])

    kernel = functools.partial(part_tokenizer_kernel,
                               n_s=n_s, ck=ck, compute_dtype=cdt)

    full2 = lambda i: (0, 0)

    out, bb_tok, vis_tok = pl.pallas_call(
        kernel,
        out_shape=(jax.ShapeDtypeStruct((M_pad, OUT_DIM), jnp.float32),
                   jax.ShapeDtypeStruct((M_pad, BB_PAD), jnp.float32),
                   jax.ShapeDtypeStruct((M_pad, VIS_DIM), jnp.float32)),
        grid_spec=pltpu.PrefetchScalarGridSpec(
            num_scalar_prefetch=0,
            grid=(n_tiles,),
            in_specs=[
                pl.BlockSpec((tm, BB_IN), lambda i: (i, 0)),
                pl.BlockSpec((C_PT, tm, n_s), lambda i: (0, i, 0)),
                pl.BlockSpec((tm, 1), lambda i: (i, 0)),
                pl.BlockSpec((BB_IN, BB_HID), full2),
                pl.BlockSpec((1, BB_HID), full2),
                pl.BlockSpec((BB_HID, BB_HID), full2),
                pl.BlockSpec((1, BB_HID), full2),
                pl.BlockSpec((BB_HID, BB_PAD), full2),
                pl.BlockSpec((1, BB_PAD), full2),
                pl.BlockSpec((C_PT, VIS_DIM), full2),
                pl.BlockSpec((1, VIS_DIM), full2),
                pl.BlockSpec((BB_PAD + VIS_DIM, OUT_DIM), full2),
                pl.BlockSpec((1, OUT_DIM), full2),
            ],
            out_specs=[
                pl.BlockSpec((tm, OUT_DIM), lambda i: (i, 0)),
                pl.BlockSpec((tm, BB_PAD), lambda i: (i, 0)),
                pl.BlockSpec((tm, VIS_DIM), lambda i: (i, 0)),
            ],
        ),
        compiler_params=pltpu.CompilerParams(
            dimension_semantics=("parallel",),
            # Headroom above the v5e 16 MiB scoped default; far below v7x's
            # 64 MiB physical VMEM now that nothing big is materialized.
            vmem_limit_bytes=32 * 1024 * 1024,
        ),
    )(bb_flat, pts_t, mask_f,
      p['w1'], p['b1'], p['w2'], p['b2'], w3p, b3p,
      p['enc_w'], p['enc_b'], wo_packed, p['bo'])

    # Padded rows of `out` equal bo (bias on zero inputs); sliced away here.
    out = out[:M].reshape(Bv, Pv, OUT_DIM)
    bb_tok = bb_tok[:M, :BB_OUT].reshape(Bv, Pv, BB_OUT)
    vis_tok = vis_tok[:M].reshape(Bv, Pv, VIS_DIM)
    return out, (bb_tok, vis_tok)


# ------------------------------ pure-JAX reference -------------------------------
def reference(part_bbs, part_points, batch_mask, p, num_samples=N_S):
    """f32 reference faithful to the PyTorch module, INCLUDING the degenerate
    softmax over the size-1 weight axis (wv/bv) — proves the kernel's plain-mean
    form is semantically identical."""
    flipped = (~batch_mask).astype(jnp.float32)
    bb = part_bbs.reshape(B, P, -1)
    h = jax.nn.relu(bb @ p['w1'] + p['b1'])
    h = jax.nn.relu(h @ p['w2'] + p['b2'])
    bb_tok = (h @ p['w3'] + p['b3']) * flipped[..., None]

    pts = part_points[:, :, :num_samples, :].astype(jnp.float32)
    enc_w = p['enc_w'].astype(jnp.float32)
    enc_b = p['enc_b'].astype(jnp.float32)
    fts = jax.nn.relu(jnp.einsum('bpnc,cd->bpnd', pts, enc_w) + enc_b)
    fts = fts * flipped[:, :, None, None]       # invalid parts stay zero (torch loop)

    w = jnp.einsum('bpnd,do->bpno', fts, p['wv']) + p['bv']
    w = jax.nn.softmax(w, axis=-1)              # size-1 axis -> all ones
    vis = jnp.mean(w * fts, axis=2) * flipped[..., None]

    comb = jnp.concatenate([bb_tok, vis], axis=-1)
    out = comb @ p['wo'].astype(jnp.float32) + p['bo']
    return out, bb_tok, vis


# ------------------------------------ main ---------------------------------------
if __name__ == "__main__":
    key = jax.random.PRNGKey(0)
    ks = jax.random.split(key, 13)

    params = {
        'w1': 0.1 * jax.random.normal(ks[0], (BB_IN, BB_HID), jnp.float32),
        'b1': 0.01 * jax.random.normal(ks[1], (1, BB_HID), jnp.float32),
        'w2': 0.1 * jax.random.normal(ks[2], (BB_HID, BB_HID), jnp.float32),
        'b2': 0.01 * jax.random.normal(ks[3], (1, BB_HID), jnp.float32),
        'w3': 0.1 * jax.random.normal(ks[4], (BB_HID, BB_OUT), jnp.float32),
        'b3': 0.01 * jax.random.normal(ks[5], (1, BB_OUT), jnp.float32),
        # WeightedAggregation.weight_layer: present in the module but provably
        # has zero effect on the output (softmax over a size-1 axis == 1.0);
        # used only by the reference.
        'wv': 0.1 * jax.random.normal(ks[6], (VIS_DIM, 1), jnp.float32),
        'bv': 0.01 * jax.random.normal(ks[7], (1, 1), jnp.float32),
        # bf16 storage for the big weights; f32 accumulation inside the kernel.
        'wo': (0.05 * jax.random.normal(ks[8], (BB_OUT + VIS_DIM, OUT_DIM),
                                        jnp.float32)).astype(jnp.bfloat16),
        'bo': 0.01 * jax.random.normal(ks[9], (1, OUT_DIM), jnp.float32),
        # TODO(synk): pc_encoder is an externally injected nn.Module with no
        # definition provided; a deterministic Linear(3->128)+ReLU surrogate
        # (fused into the kernel) stands in for it.
        'enc_w': (0.1 * jax.random.normal(ks[10], (C_PT, VIS_DIM),
                                          jnp.float32)).astype(jnp.bfloat16),
        'enc_b': (0.01 * jnp.ones((1, VIS_DIM), jnp.float32)).astype(jnp.bfloat16),
    }

    part_bbs = jax.random.normal(ks[11], (B, P, 4, 3), jnp.float32)       # 4x3 = bb_input_dim 12
    # raw point clouds stored bf16 (dominant kernel input)
    part_points = jax.random.normal(ks[12], (B, P, N_PTS, C_PT),
                                    jnp.float32).astype(jnp.bfloat16)
    # True = padded / invalid part (valid parts contiguous at the front, as the torch loop assumes)
    batch_mask = jnp.array([[False] * 6 + [True] * 2,
                            [False] * 5 + [True] * 3])

    out, (bb_tok, vis_tok) = part_tokenizer_pallas(part_bbs, part_points,
                                                   batch_mask, params)
    jax.block_until_ready(out)

    ro, rbb, rvis = reference(part_bbs, part_points, batch_mask, params)
    assert jnp.allclose(bb_tok, rbb, atol=1e-4, rtol=1e-4)
    assert jnp.allclose(vis_tok, rvis, atol=3e-3, rtol=3e-3)
    assert jnp.allclose(out, ro, atol=1e-2, rtol=1e-2)

    print("KERNEL_OK")
</pallas_src>

<mosaic_0001>
module attributes {stable_mosaic.version = 11 : i64} {
  func.func @part_tokenizer_kernel(%arg0: i32, %arg1: memref<16x12xf32, #tpu.memory_space<vmem>>, %arg2: memref<3x16x256xbf16, #tpu.memory_space<vmem>>, %arg3: memref<16x1xf32, #tpu.memory_space<vmem>>, %arg4: memref<12x64xf32, #tpu.memory_space<vmem>>, %arg5: memref<1x64xf32, #tpu.memory_space<vmem>>, %arg6: memref<64x64xf32, #tpu.memory_space<vmem>>, %arg7: memref<1x64xf32, #tpu.memory_space<vmem>>, %arg8: memref<64x128xf32, #tpu.memory_space<vmem>>, %arg9: memref<1x128xf32, #tpu.memory_space<vmem>>, %arg10: memref<3x128xbf16, #tpu.memory_space<vmem>>, %arg11: memref<1x128xbf16, #tpu.memory_space<vmem>>, %arg12: memref<256x512xbf16, #tpu.memory_space<vmem>>, %arg13: memref<1x512xf32, #tpu.memory_space<vmem>>, %arg14: memref<16x512xf32, #tpu.memory_space<vmem>>, %arg15: memref<16x128xf32, #tpu.memory_space<vmem>>, %arg16: memref<16x128xf32, #tpu.memory_space<vmem>>) attributes {dimension_semantics = [#tpu.dimension_semantics<parallel>], iteration_bounds = array<i64: 1>, scalar_prefetch = 0 : i64, scratch_operands = 0 : i64, tpu.core_type = #tpu.core_type<tc>, window_params = [{transform_indices = @transform_0, window_bounds = array<i64: 16, 12>}, {transform_indices = @transform_1, window_bounds = array<i64: 3, 16, 256>}, {transform_indices = @transform_2, window_bounds = array<i64: 16, 1>}, {pipeline_mode = #tpu.pipeline_mode<synchronous>, transform_indices = @transform_3, window_bounds = array<i64: 12, 64>}, {pipeline_mode = #tpu.pipeline_mode<synchronous>, transform_indices = @transform_4, window_bounds = array<i64: 1, 64>}, {pipeline_mode = #tpu.pipeline_mode<synchronous>, transform_indices = @transform_5, window_bounds = array<i64: 64, 64>}, {pipeline_mode = #tpu.pipeline_mode<synchronous>, transform_indices = @transform_6, window_bounds = array<i64: 1, 64>}, {pipeline_mode = #tpu.pipeline_mode<synchronous>, transform_indices = @transform_7, window_bounds = array<i64: 64, 128>}, {pipeline_mode = #tpu.pipeline_mode<synchronous>, transform_indices = @transform_8, window_bounds = array<i64: 1, 128>}, {pipeline_mode = #tpu.pipeline_mode<synchronous>, transform_indices = @transform_9, window_bounds = array<i64: 3, 128>}, {pipeline_mode = #tpu.pipeline_mode<synchronous>, transform_indices = @transform_10, window_bounds = array<i64: 1, 128>}, {pipeline_mode = #tpu.pipeline_mode<synchronous>, transform_indices = @transform_11, window_bounds = array<i64: 256, 512>}, {pipeline_mode = #tpu.pipeline_mode<synchronous>, transform_indices = @transform_12, window_bounds = array<i64: 1, 512>}, {transform_indices = @transform_13, window_bounds = array<i64: 16, 512>}, {transform_indices = @transform_14, window_bounds = array<i64: 16, 128>}, {transform_indices = @transform_15, window_bounds = array<i64: 16, 128>}]} {
    %c0 = arith.constant 0 : index
    %c0_0 = arith.constant 0 : index
    %0 = vector.load %arg3[%c0, %c0_0] : memref<16x1xf32, #tpu.memory_space<vmem>>, vector<16x1xf32>
    %c0_1 = arith.constant 0 : index
    %c0_2 = arith.constant 0 : index
    %1 = vector.load %arg1[%c0_1, %c0_2] : memref<16x12xf32, #tpu.memory_space<vmem>>, vector<16x12xf32>
    %c0_3 = arith.constant 0 : index
    %c0_4 = arith.constant 0 : index
    %2 = vector.load %arg4[%c0_3, %c0_4] : memref<12x64xf32, #tpu.memory_space<vmem>>, vector<12x64xf32>
    %cst = arith.constant dense<0.000000e+00> : vector<16x64xf32>
    %3 = tpu.matmul %1, %2, %cst {dimension_numbers = #tpu.dot_dimension_numbers<[1], [0], [0], [1], [0, 0, 1, 1], [], []>} : vector<16x12xf32>, vector<12x64xf32>, vector<16x64xf32> -> vector<16x64xf32>
    %c0_5 = arith.constant 0 : index
    %c0_6 = arith.constant 0 : index
    %4 = vector.load %arg5[%c0_5, %c0_6] : memref<1x64xf32, #tpu.memory_space<vmem>>, vector<1x64xf32>
    %5 = vector.broadcast %4 : vector<1x64xf32> to vector<16x64xf32>
    %6 = arith.addf %3, %5 : vector<16x64xf32>
    %cst_7 = arith.constant 0.000000e+00 : f32
    %7 = vector.broadcast %cst_7 : f32 to vector<16x64xf32>
    %8 = arith.maximumf %6, %7 : vector<16x64xf32>
    %c0_8 = arith.constant 0 : index
    %c0_9 = arith.constant 0 : index
    %9 = vector.load %arg6[%c0_8, %c0_9] : memref<64x64xf32, #tpu.memory_space<vmem>>, vector<64x64xf32>
    %cst_10 = arith.constant dense<0.000000e+00> : vector<16x64xf32>
    %10 = tpu.matmul %8, %9, %cst_10 {dimension_numbers = #tpu.dot_dimension_numbers<[1], [0], [0], [1], [0, 0, 1, 1], [], []>} : vector<16x64xf32>, vector<64x64xf32>, vector<16x64xf32> -> vector<16x64xf32>
    %c0_11 = arith.constant 0 : index
    %c0_12 = arith.constant 0 : index
    %11 = vector.load %arg7[%c0_11, %c0_12] : memref<1x64xf32, #tpu.memory_space<vmem>>, vector<1x64xf32>
    %12 = vector.broadcast %11 : vector<1x64xf32> to vector<16x64xf32>
    %13 = arith.addf %10, %12 : vector<16x64xf32>
    %cst_13 = arith.constant 0.000000e+00 : f32
    %14 = vector.broadcast %cst_13 : f32 to vector<16x64xf32>
    %15 = arith.maximumf %13, %14 : vector<16x64xf32>
    %c0_14 = arith.constant 0 : index
    %c0_15 = arith.constant 0 : index
    %16 = vector.load %arg8[%c0_14, %c0_15] : memref<64x128xf32, #tpu.memory_space<vmem>>, vector<64x128xf32>
    %cst_16 = arith.constant dense<0.000000e+00> : vector<16x128xf32>
    %17 = tpu.matmul %15, %16, %cst_16 {dimension_numbers = #tpu.dot_dimension_numbers<[1], [0], [0], [1], [0, 0, 1, 1], [], []>} : vector<16x64xf32>, vector<64x128xf32>, vector<16x128xf32> -> vector<16x128xf32>
    %c0_17 = arith.constant 0 : index
    %c0_18 = arith.constant 0 : index
    %18 = vector.load %arg9[%c0_17, %c0_18] : memref<1x128xf32, #tpu.memory_space<vmem>>, vector<1x128xf32>
    %19 = vector.broadcast %18 : vector<1x128xf32> to vector<16x128xf32>
    %20 = arith.addf %17, %19 : vector<16x128xf32>
    %21 = vector.broadcast %0 : vector<16x1xf32> to vector<16x128xf32>
    %22 = arith.mulf %20, %21 : vector<16x128xf32>
    %c0_19 = arith.constant 0 : index
    %c0_20 = arith.constant 0 : index
    %23 = vector.load %arg10[%c0_19, %c0_20] : memref<3x128xbf16, #tpu.memory_space<vmem>>, vector<3x128xbf16>
    %24 = arith.extf %23 : vector<3x128xbf16> to vector<3x128xf32>
    %25 = vector.extract_strided_slice %24 {offsets = [0, 0], sizes = [1, 128], strides = [1, 1]} : vector<3x128xf32> to vector<1x128xf32>
    %26 = vector.shape_cast %25 : vector<1x128xf32> to vector<128xf32>
    %27 = vector.shape_cast %26 : vector<128xf32> to vector<1x128x1xf32>
    %28 = vector.extract_strided_slice %24 {offsets = [1, 0], sizes = [1, 128], strides = [1, 1]} : vector<3x128xf32> to vector<1x128xf32>
    %29 = vector.shape_cast %28 : vector<1x128xf32> to vector<128xf32>
    %30 = vector.shape_cast %29 : vector<128xf32> to vector<1x128x1xf32>
    %31 = vector.extract_strided_slice %24 {offsets = [2, 0], sizes = [1, 128], strides = [1, 1]} : vector<3x128xf32> to vector<1x128xf32>
    %32 = vector.shape_cast %31 : vector<1x128xf32> to vector<128xf32>
    %33 = vector.shape_cast %32 : vector<128xf32> to vector<1x128x1xf32>
    %c0_21 = arith.constant 0 : index
    %c0_22 = arith.constant 0 : index
    %34 = vector.load %arg11[%c0_21, %c0_22] : memref<1x128xbf16, #tpu.memory_space<vmem>>, vector<1x128xbf16>
    %35 = arith.extf %34 : vector<1x128xbf16> to vector<1x128xf32>
    %36 = vector.shape_cast %35 : vector<1x128xf32> to vector<1x128x1xf32>
    %cst_23 = arith.constant 0.000000e+00 : f32
    %37 = vector.broadcast %cst_23 : f32 to vector<16x128xf32>
    %c0_i32 = arith.constant 0 : i32
    %c128_i32 = arith.constant 128 : i32
    %38 = arith.muli %c0_i32, %c128_i32 : i32
    %39 = tpu.assume_multiple %38, 128 : i32
    %c0_24 = arith.constant 0 : index
    %c0_25 = arith.constant 0 : index
    %40 = arith.index_cast %39 : i32 to index
    %41 = vector.load %arg2[%c0_24, %c0_25, %40] : memref<3x16x256xbf16, #tpu.memory_space<vmem>>, vector<1x16x128xbf16>
    %42 = vector.shape_cast %41 : vector<1x16x128xbf16> to vector<16x128xbf16>
    %43 = arith.extf %42 : vector<16x128xbf16> to vector<16x128xf32>
    %c1 = arith.constant 1 : index
    %c0_26 = arith.constant 0 : index
    %44 = arith.index_cast %39 : i32 to index
    %45 = vector.load %arg2[%c1, %c0_26, %44] : memref<3x16x256xbf16, #tpu.memory_space<vmem>>, vector<1x16x128xbf16>
    %46 = vector.shape_cast %45 : vector<1x16x128xbf16> to vector<16x128xbf16>
    %47 = arith.extf %46 : vector<16x128xbf16> to vector<16x128xf32>
    %c2 = arith.constant 2 : index
    %c0_27 = arith.constant 0 : index
    %48 = arith.index_cast %39 : i32 to index
    %49 = vector.load %arg2[%c2, %c0_27, %48] : memref<3x16x256xbf16, #tpu.memory_space<vmem>>, vector<1x16x128xbf16>
    %50 = vector.shape_cast %49 : vector<1x16x128xbf16> to vector<16x128xbf16>
    %51 = arith.extf %50 : vector<16x128xbf16> to vector<16x128xf32>
    %52 = vector.shape_cast %43 : vector<16x128xf32> to vector<16x1x128xf32>
    %53 = vector.broadcast %52 : vector<16x1x128xf32> to vector<16x128x128xf32>
    %54 = vector.broadcast %27 : vector<1x128x1xf32> to vector<16x128x128xf32>
    %55 = arith.mulf %53, %54 : vector<16x128x128xf32>
    %56 = vector.shape_cast %47 : vector<16x128xf32> to vector<16x1x128xf32>
    %57 = vector.broadcast %56 : vector<16x1x128xf32> to vector<16x128x128xf32>
    %58 = vector.broadcast %30 : vector<1x128x1xf32> to vector<16x128x128xf32>
    %59 = arith.mulf %57, %58 : vector<16x128x128xf32>
    %60 = arith.addf %55, %59 : vector<16x128x128xf32>
    %61 = vector.shape_cast %51 : vector<16x128xf32> to vector<16x1x128xf32>
    %62 = vector.broadcast %61 : vector<16x1x128xf32> to vector<16x128x128xf32>
    %63 = vector.broadcast %33 : vector<1x128x1xf32> to vector<16x128x128xf32>
    %64 = arith.mulf %62, %63 : vector<16x128x128xf32>
    %65 = arith.addf %60, %64 : vector<16x128x128xf32>
    %66 = vector.broadcast %36 : vector<1x128x1xf32> to vector<16x128x128xf32>
    %67 = arith.addf %65, %66 : vector<16x128x128xf32>
    %cst_28 = arith.constant 0.000000e+00 : f32
    %68 = vector.broadcast %cst_28 : f32 to vector<16x128x128xf32>
    %69 = arith.maximumf %67, %68 : vector<16x128x128xf32>
    %cst_29 = arith.constant dense<0.000000e+00> : vector<16x128xf32>
    %70 = vector.multi_reduction <add>, %69, %cst_29 [2] : vector<16x128x128xf32> to vector<16x128xf32>
    %71 = arith.addf %37, %70 : vector<16x128xf32>
    %c1_i32 = arith.constant 1 : i32
    %c128_i32_30 = arith.constant 128 : i32
    %72 = arith.muli %c1_i32, %c128_i32_30 : i32
    %73 = tpu.assume_multiple %72, 128 : i32
    %c0_31 = arith.constant 0 : index
    %c0_32 = arith.constant 0 : index
    %74 = arith.index_cast %73 : i32 to index
    %75 = vector.load %arg2[%c0_31, %c0_32, %74] : memref<3x16x256xbf16, #tpu.memory_space<vmem>>, vector<1x16x128xbf16>
    %76 = vector.shape_cast %75 : vector<1x16x128xbf16> to vector<16x128xbf16>
    %77 = arith.extf %76 : vector<16x128xbf16> to vector<16x128xf32>
    %c1_33 = arith.constant 1 : index
    %c0_34 = arith.constant 0 : index
    %78 = arith.index_cast %73 : i32 to index
    %79 = vector.load %arg2[%c1_33, %c0_34, %78] : memref<3x16x256xbf16, #tpu.memory_space<vmem>>, vector<1x16x128xbf16>
    %80 = vector.shape_cast %79 : vector<1x16x128xbf16> to vector<16x128xbf16>
    %81 = arith.extf %80 : vector<16x128xbf16> to vector<16x128xf32>
    %c2_35 = arith.constant 2 : index
    %c0_36 = arith.constant 0 : index
    %82 = arith.index_cast %73 : i32 to index
    %83 = vector.load %arg2[%c2_35, %c0_36, %82] : memref<3x16x256xbf16, #tpu.memory_space<vmem>>, vector<1x16x128xbf16>
    %84 = vector.shape_cast %83 : vector<1x16x128xbf16> to vector<16x128xbf16>
    %85 = arith.extf %84 : vector<16x128xbf16> to vector<16x128xf32>
    %86 = vector.shape_cast %77 : vector<16x128xf32> to vector<16x1x128xf32>
    %87 = vector.broadcast %86 : vector<16x1x128xf32> to vector<16x128x128xf32>
    %88 = vector.broadcast %27 : vector<1x128x1xf32> to vector<16x128x128xf32>
    %89 = arith.mulf %87, %88 : vector<16x128x128xf32>
    %90 = vector.shape_cast %81 : vector<16x128xf32> to vector<16x1x128xf32>
    %91 = vector.broadcast %90 : vector<16x1x128xf32> to vector<16x128x128xf32>
    %92 = vector.broadcast %30 : vector<1x128x1xf32> to vector<16x128x128xf32>
    %93 = arith.mulf %91, %92 : vector<16x128x128xf32>
    %94 = arith.addf %89, %93 : vector<16x128x128xf32>
    %95 = vector.shape_cast %85 : vector<16x128xf32> to vector<16x1x128xf32>
    %96 = vector.broadcast %95 : vector<16x1x128xf32> to vector<16x128x128xf32>
    %97 = vector.broadcast %33 : vector<1x128x1xf32> to vector<16x128x128xf32>
    %98 = arith.mulf %96, %97 : vector<16x128x128xf32>
    %99 = arith.addf %94, %98 : vector<16x128x128xf32>
    %100 = vector.broadcast %36 : vector<1x128x1xf32> to vector<16x128x128xf32>
    %101 = arith.addf %99, %100 : vector<16x128x128xf32>
    %cst_37 = arith.constant 0.000000e+00 : f32
    %102 = vector.broadcast %cst_37 : f32 to vector<16x128x128xf32>
    %103 = arith.maximumf %101, %102 : vector<16x128x128xf32>
    %cst_38 = arith.constant dense<0.000000e+00> : vector<16x128xf32>
    %104 = vector.multi_reduction <add>, %103, %cst_38 [2] : vector<16x128x128xf32> to vector<16x128xf32>
    %105 = arith.addf %71, %104 : vector<16x128xf32>
    %c2_i32 = arith.constant 2 : i32
    %cst_39 = arith.constant 3.906250e-03 : f32
    %106 = vector.broadcast %cst_39 : f32 to vector<16x128xf32>
    %107 = arith.mulf %105, %106 : vector<16x128xf32>
    %108 = vector.broadcast %0 : vector<16x1xf32> to vector<16x128xf32>
    %109 = arith.mulf %107, %108 : vector<16x128xf32>
    %110 = tpu.concatenate %22, %109 in 1 : vector<16x128xf32>, vector<16x128xf32> -> vector<16x256xf32>
    %111 = arith.truncf %110 : vector<16x256xf32> to vector<16x256xbf16>
    %c0_40 = arith.constant 0 : index
    %c0_41 = arith.constant 0 : index
    %112 = vector.load %arg12[%c0_40, %c0_41] : memref<256x512xbf16, #tpu.memory_space<vmem>>, vector<256x512xbf16>
    %cst_42 = arith.constant dense<0.000000e+00> : vector<16x512xf32>
    %113 = tpu.matmul %111, %112, %cst_42 {dimension_numbers = #tpu.dot_dimension_numbers<[1], [0], [0], [1], [0, 0, 1, 1], [], []>} : vector<16x256xbf16>, vector<256x512xbf16>, vector<16x512xf32> -> vector<16x512xf32>
    %c0_43 = arith.constant 0 : index
    %c0_44 = arith.constant 0 : index
    %114 = vector.load %arg13[%c0_43, %c0_44] : memref<1x512xf32, #tpu.memory_space<vmem>>, vector<1x512xf32>
    %115 = vector.broadcast %114 : vector<1x512xf32> to vector<16x512xf32>
    %116 = arith.addf %113, %115 : vector<16x512xf32>
    %c0_45 = arith.constant 0 : index
    %c0_46 = arith.constant 0 : index
    %117 = vector.load %arg14[%c0_45, %c0_46] : memref<16x512xf32, #tpu.memory_space<vmem>>, vector<16x512xf32>
    tpu.vector_store %arg14[%c0_45, %c0_46], %116 {strides = array<i32>} : memref<16x512xf32, #tpu.memory_space<vmem>>, vector<16x512xf32>,
    %c0_47 = arith.constant 0 : index
    %c0_48 = arith.constant 0 : index
    %118 = vector.load %arg15[%c0_47, %c0_48] : memref<16x128xf32, #tpu.memory_space<vmem>>, vector<16x128xf32>
    tpu.vector_store %arg15[%c0_47, %c0_48], %22 {strides = array<i32>} : memref<16x128xf32, #tpu.memory_space<vmem>>, vector<16x128xf32>,
    %c0_49 = arith.constant 0 : index
    %c0_50 = arith.constant 0 : index
    %119 = vector.load %arg16[%c0_49, %c0_50] : memref<16x128xf32, #tpu.memory_space<vmem>>, vector<16x128xf32>
    tpu.vector_store %arg16[%c0_49, %c0_50], %109 {strides = array<i32>} : memref<16x128xf32, #tpu.memory_space<vmem>>, vector<16x128xf32>,
    return
  }
  func.func @transform_0(%arg0: i32) -> (i32, i32) {
    %c0_i32 = arith.constant 0 : i32
    %c0_i32_0 = arith.constant 0 : i32
    return %arg0, %c0_i32 : i32, i32
  }
  func.func @transform_1(%arg0: i32) -> (i32, i32, i32) {
    %c0_i32 = arith.constant 0 : i32
    %c0_i32_0 = arith.constant 0 : i32
    %c0_i32_1 = arith.constant 0 : i32
    return %c0_i32, %arg0, %c0_i32_0 : i32, i32, i32
  }
  func.func @transform_2(%arg0: i32) -> (i32, i32) {
    %c0_i32 = arith.constant 0 : i32
    %c0_i32_0 = arith.constant 0 : i32
    return %arg0, %c0_i32 : i32, i32
  }
  func.func @transform_3(%arg0: i32) -> (i32, i32) {
    %c0_i32 = arith.constant 0 : i32
    %c0_i32_0 = arith.constant 0 : i32
    %c0_i32_1 = arith.constant 0 : i32
    return %c0_i32, %c0_i32_0 : i32, i32
  }
  func.func @transform_4(%arg0: i32) -> (i32, i32) {
    %c0_i32 = arith.constant 0 : i32
    %c0_i32_0 = arith.constant 0 : i32
    %c0_i32_1 = arith.constant 0 : i32
    return %c0_i32, %c0_i32_0 : i32, i32
  }
  func.func @transform_5(%arg0: i32) -> (i32, i32) {
    %c0_i32 = arith.constant 0 : i32
    %c0_i32_0 = arith.constant 0 : i32
    %c0_i32_1 = arith.constant 0 : i32
    return %c0_i32, %c0_i32_0 : i32, i32
  }
  func.func @transform_6(%arg0: i32) -> (i32, i32) {
    %c0_i32 = arith.constant 0 : i32
    %c0_i32_0 = arith.constant 0 : i32
    %c0_i32_1 = arith.constant 0 : i32
    return %c0_i32, %c0_i32_0 : i32, i32
  }
  func.func @transform_7(%arg0: i32) -> (i32, i32) {
    %c0_i32 = arith.constant 0 : i32
    %c0_i32_0 = arith.constant 0 : i32
    %c0_i32_1 = arith.constant 0 : i32
    return %c0_i32, %c0_i32_0 : i32, i32
  }
  func.func @transform_8(%arg0: i32) -> (i32, i32) {
    %c0_i32 = arith.constant 0 : i32
    %c0_i32_0 = arith.constant 0 : i32
    %c0_i32_1 = arith.constant 0 : i32
    return %c0_i32, %c0_i32_0 : i32, i32
  }
  func.func @transform_9(%arg0: i32) -> (i32, i32) {
    %c0_i32 = arith.constant 0 : i32
    %c0_i32_0 = arith.constant 0 : i32
    %c0_i32_1 = arith.constant 0 : i32
    return %c0_i32, %c0_i32_0 : i32, i32
  }
  func.func @transform_10(%arg0: i32) -> (i32, i32) {
    %c0_i32 = arith.constant 0 : i32
    %c0_i32_0 = arith.constant 0 : i32
    %c0_i32_1 = arith.constant 0 : i32
    return %c0_i32, %c0_i32_0 : i32, i32
  }
  func.func @transform_11(%arg0: i32) -> (i32, i32) {
    %c0_i32 = arith.constant 0 : i32
    %c0_i32_0 = arith.constant 0 : i32
    %c0_i32_1 = arith.constant 0 : i32
    return %c0_i32, %c0_i32_0 : i32, i32
  }
  func.func @transform_12(%arg0: i32) -> (i32, i32) {
    %c0_i32 = arith.constant 0 : i32
    %c0_i32_0 = arith.constant 0 : i32
    %c0_i32_1 = arith.constant 0 : i32
    return %c0_i32, %c0_i32_0 : i32, i32
  }
  func.func @transform_13(%arg0: i32) -> (i32, i32) {
    %c0_i32 = arith.constant 0 : i32
    %c0_i32_0 = arith.constant 0 : i32
    return %arg0, %c0_i32 : i32, i32
  }
  func.func @transform_14(%arg0: i32) -> (i32, i32) {
    %c0_i32 = arith.constant 0 : i32
    %c0_i32_0 = arith.constant 0 : i32
    return %arg0, %c0_i32 : i32, i32
  }
  func.func @transform_15(%arg0: i32) -> (i32, i32) {
    %c0_i32 = arith.constant 0 : i32
    %c0_i32_0 = arith.constant 0 : i32
    return %arg0, %c0_i32 : i32, i32
  }
}

</mosaic_0001>

<llo_original>
// kernel: tpu_custom_call.1
$region0: #{tpu_custom_call.1}
  #allocation0 [shape = 'u32[]', space=smem, size = 0x4, offset = 0x4, fixed_abs, tag = 'smem constant byte address 0x4 - core index']
  #allocation1 [shape = 'u32[144,128]{1,0:T(1,128)}', space=vmem, size = 0x12000, scoped, tag = 'internal scratch']
  %s0 = inlined_call_operand.vmem [shape: f32[16,12], index: 0, kind: input, shape index: {}]
  %s1 = inlined_call_operand.hbm [shape: bf16[3,16,256], index: 1, kind: input, shape index: {}]
  %s2 = inlined_call_operand.vmem [shape: f32[16,1], index: 2, kind: input, shape index: {}]
  %s3 = inlined_call_operand.hbm [shape: f32[12,64], index: 3, kind: input, shape index: {}]
  %s4 = inlined_call_operand.vmem [shape: f32[1,64], index: 4, kind: input, shape index: {}]
  %s5 = inlined_call_operand.hbm [shape: f32[64,64], index: 5, kind: input, shape index: {}]
  %s6 = inlined_call_operand.vmem [shape: f32[1,64], index: 6, kind: input, shape index: {}]
  %s7 = inlined_call_operand.hbm [shape: f32[64,128], index: 7, kind: input, shape index: {}]
  %s8 = inlined_call_operand.vmem [shape: f32[1,128], index: 8, kind: input, shape index: {}]
  %s9 = inlined_call_operand.vmem [shape: bf16[3,128], index: 9, kind: input, shape index: {}]
  %s10 = inlined_call_operand.vmem [shape: bf16[1,128], index: 10, kind: input, shape index: {}]
  %s11 = inlined_call_operand.hbm [shape: bf16[256,512], index: 11, kind: input, shape index: {}]
  %s12 = inlined_call_operand.vmem [shape: f32[1,512], index: 12, kind: input, shape index: {}]
  %s13 = inlined_call_operand.hbm [shape: f32[16,512], index: 13, kind: output, shape index: {0}]
  %s14 = inlined_call_operand.hbm [shape: f32[16,128], index: 14, kind: output, shape index: {1}]
  %s15 = inlined_call_operand.hbm [shape: f32[16,128], index: 15, kind: output, shape index: {2}]
  %16 = xla_tuple %s13, %s14, %s15
  %s17 = sld [smem:[#allocation0]]
  $region98: #{tpu_custom_call.1} parent=0
    _
  %s19 = ssub.s32 1, %s17
  %s20 = scalar_select 0, %s19, %s17
  $region1: #{tpu_custom_call.1} parent=0
    #allocation2 [shape = 'u8[24576]{0}', space=vmem, size = 0x6000, scoped, tag = 'input window, operand 1, single buffered']
    #allocation3 [shape = 's32[1]{0}', space=sflag, size = 0x4, scoped, tag = 'scoped memory for tpu_custom_call.1']
    #allocation4 [shape = 's32[1]{0}', space=sflag, size = 0x4, scoped, tag = 'scoped memory for tpu_custom_call.1']
    #allocation5 [shape = 'u8[8192]{0}', space=vmem, size = 0x2000, scoped, tag = 'input window, operand 3, single buffered']
    #allocation6 [shape = 's32[1]{0}', space=sflag, size = 0x4, scoped, tag = 'scoped memory for tpu_custom_call.1']
    #allocation7 [shape = 'u8[32768]{0}', space=vmem, size = 0x8000, scoped, tag = 'input window, operand 5, single buffered']
    #allocation8 [shape = 'u8[32768]{0}', space=vmem, size = 0x8000, scoped, tag = 'input window, operand 7, single buffered']
    #allocation9 [shape = 's32[1]{0}', space=sflag, size = 0x4, scoped, tag = 'scoped memory for tpu_custom_call.1']
    #allocation10 [shape = 'u8[262144]{0}', space=vmem, size = 0x40000, scoped, tag = 'input window, operand 11, single buffered']
    #allocation11 [shape = 'u8[32768]{0}', space=vmem, size = 0x8000, scoped, tag = 'output window, operand 0, single buffered']
    #allocation12 [shape = 'u8[8192]{0}', space=vmem, size = 0x2000, scoped, tag = 'output window, operand 1, single buffered']
    #allocation13 [shape = 's32[1]{0}', space=sflag, size = 0x4, scoped, tag = 'scoped memory for tpu_custom_call.1']
    #allocation14 [shape = 'u8[8192]{0}', space=vmem, size = 0x2000, scoped, tag = 'output window, operand 2, single buffered']
    %21 = vsyncpa [#allocation3], 0
    %22 = vsyncpa [#allocation6], 0
    %23 = vsyncpa [#allocation9], 0
    %24 = vsyncpa [#allocation4], 0
    %25 = vsyncpa [#allocation13], 0
    // Predicated region
    $region2: #{tpu_custom_call.1} parent=1 // pred_check
      _
    $region3: #{tpu_custom_call.1} parent=1 // pred_check_branch
      %27 = sbr.rel (0) target = $region5
    $region4: #{tpu_custom_call.1} parent=1 // pred_region
      _
    $region5: #{tpu_custom_call.1} parent=1 // pred_fallthru
      _
    // Predicated region
    $region6: #{tpu_custom_call.1} parent=1 // pred_check
      _
    $region7: #{tpu_custom_call.1} parent=1 // pred_check_branch
      %29 = sbr.rel (0) target = $region9
    $region8: #{tpu_custom_call.1} parent=1 // pred_region
      %s31 = ssub.s32 768, 768
      %32 = vsyncadd [#allocation3], %s31
      %s33 = sshll.u32 [#allocation2], 4
      %s34 = int_to_ptr.vmem [resolvable:$true] %s33
      %39 = dma.hbm_to_vmem [thread:$0]  %s1, 768, %s34, [#allocation3], 128, 128, 8
    $region9: #{tpu_custom_call.1} parent=1 // pred_fallthru
      _
    // Predicated region
    $region10: #{tpu_custom_call.1} parent=1 // pred_check
      _
    $region11: #{tpu_custom_call.1} parent=1 // pred_check_branch
      %41 = sbr.rel (0) target = $region13
    $region12: #{tpu_custom_call.1} parent=1 // pred_region
      _
    $region13: #{tpu_custom_call.1} parent=1 // pred_fallthru
      _
    // Predicated region
    $region14: #{tpu_custom_call.1} parent=1 // pred_check
      _
    $region15: #{tpu_custom_call.1} parent=1 // pred_check_branch
      %43 = sbr.rel (0) target = $region17
    $region16: #{tpu_custom_call.1} parent=1 // pred_region
      %s45 = ssub.s32 256, 256
      %46 = vsyncadd [#allocation6], %s45
      %s47 = sshll.u32 [#allocation5], 4
      %s48 = int_to_ptr.vmem [resolvable:$true] %s47
      %53 = dma.hbm_to_vmem [thread:$0]  %s3, 256, %s48, [#allocation6], 128, 128, 8
    $region17: #{tpu_custom_call.1} parent=1 // pred_fallthru
      _
    // Predicated region
    $region18: #{tpu_custom_call.1} parent=1 // pred_check
      _
    $region19: #{tpu_custom_call.1} parent=1 // pred_check_branch
      %55 = sbr.rel (0) target = $region21
    $region20: #{tpu_custom_call.1} parent=1 // pred_region
      _
    $region21: #{tpu_custom_call.1} parent=1 // pred_fallthru
      _
    // Predicated region
    $region22: #{tpu_custom_call.1} parent=1 // pred_check
      _
    $region23: #{tpu_custom_call.1} parent=1 // pred_check_branch
      %57 = sbr.rel (0) target = $region25
    $region24: #{tpu_custom_call.1} parent=1 // pred_region
      %s59 = ssub.s32 1024, 1024
      %60 = vsyncadd [#allocation6], %s59
      %s61 = sshll.u32 [#allocation7], 4
      %s62 = int_to_ptr.vmem [resolvable:$true] %s61
      %67 = dma.hbm_to_vmem [thread:$0]  %s5, 1024, %s62, [#allocation6], 128, 128, 8
    $region25: #{tpu_custom_call.1} parent=1 // pred_fallthru
      _
    // Predicated region
    $region26: #{tpu_custom_call.1} parent=1 // pred_check
      _
    $region27: #{tpu_custom_call.1} parent=1 // pred_check_branch
      %69 = sbr.rel (0) target = $region29
    $region28: #{tpu_custom_call.1} parent=1 // pred_region
      _
    $region29: #{tpu_custom_call.1} parent=1 // pred_fallthru
      _
    // Predicated region
    $region30: #{tpu_custom_call.1} parent=1 // pred_check
      _
    $region31: #{tpu_custom_call.1} parent=1 // pred_check_branch
      %71 = sbr.rel (0) target = $region33
    $region32: #{tpu_custom_call.1} parent=1 // pred_region
      %s73 = ssub.s32 1024, 1024
      %74 = vsyncadd [#allocation9], %s73
      %s75 = sshll.u32 [#allocation8], 4
      %s76 = int_to_ptr.vmem [resolvable:$true] %s75
      %81 = dma.hbm_to_vmem [thread:$0]  %s7, 1024, %s76, [#allocation9], 128, 128, 8
    $region33: #{tpu_custom_call.1} parent=1 // pred_fallthru
      _
    // Predicated region
    $region34: #{tpu_custom_call.1} parent=1 // pred_check
      _
    $region35: #{tpu_custom_call.1} parent=1 // pred_check_branch
      %83 = sbr.rel (0) target = $region37
    $region36: #{tpu_custom_call.1} parent=1 // pred_region
      _
    $region37: #{tpu_custom_call.1} parent=1 // pred_fallthru
      _
    // Predicated region
    $region38: #{tpu_custom_call.1} parent=1 // pred_check
      _
    $region39: #{tpu_custom_call.1} parent=1 // pred_check_branch
      %85 = sbr.rel (0) target = $region41
    $region40: #{tpu_custom_call.1} parent=1 // pred_region
      _
    $region41: #{tpu_custom_call.1} parent=1 // pred_fallthru
      _
    // Predicated region
    $region42: #{tpu_custom_call.1} parent=1 // pred_check
      _
    $region43: #{tpu_custom_call.1} parent=1 // pred_check_branch
      %87 = sbr.rel (0) target = $region45
    $region44: #{tpu_custom_call.1} parent=1 // pred_region
      _
    $region45: #{tpu_custom_call.1} parent=1 // pred_fallthru
      _
    // Predicated region
    $region46: #{tpu_custom_call.1} parent=1 // pred_check
      _
    $region47: #{tpu_custom_call.1} parent=1 // pred_check_branch
      %89 = sbr.rel (0) target = $region49
    $region48: #{tpu_custom_call.1} parent=1 // pred_region
      %s91 = ssub.s32 8192, 8192
      %92 = vsyncadd [#allocation9], %s91
      %s93 = sshll.u32 [#allocation10], 4
      %s94 = int_to_ptr.vmem [resolvable:$true] %s93
      %99 = dma.hbm_to_vmem [thread:$0]  %s11, 8192, %s94, [#allocation9], 256, 256, 16
    $region49: #{tpu_custom_call.1} parent=1 // pred_fallthru
      _
    // Predicated region
    $region50: #{tpu_custom_call.1} parent=1 // pred_check
      _
    $region51: #{tpu_custom_call.1} parent=1 // pred_check_branch
      %101 = sbr.rel (0) target = $region53
    $region52: #{tpu_custom_call.1} parent=1 // pred_region
      _
    $region53: #{tpu_custom_call.1} parent=1 // pred_fallthru
      _
    // Predicated region
    $region54: #{tpu_custom_call.1} parent=1 // pred_check
      _
    $region55: #{tpu_custom_call.1} parent=1 // pred_check_branch
      %103 = sbr.rel (0) target = $region57
    $region56: #{tpu_custom_call.1} parent=1 // pred_region
      %104 = dma.done [#allocation3], 768
    $region57: #{tpu_custom_call.1} parent=1 // pred_fallthru
      _
    // Predicated region
    $region58: #{tpu_custom_call.1} parent=1 // pred_check
      _
    $region59: #{tpu_custom_call.1} parent=1 // pred_check_branch
      %106 = sbr.rel (0) target = $region61
    $region60: #{tpu_custom_call.1} parent=1 // pred_region
      %107 = dma.done [#allocation6], 256
    $region61: #{tpu_custom_call.1} parent=1 // pred_fallthru
      _
    // Predicated region
    $region62: #{tpu_custom_call.1} parent=1 // pred_check
      _
    $region63: #{tpu_custom_call.1} parent=1 // pred_check_branch
      %109 = sbr.rel (0) target = $region65
    $region64: #{tpu_custom_call.1} parent=1 // pred_region
      %110 = dma.done [#allocation6], 1024
    $region65: #{tpu_custom_call.1} parent=1 // pred_fallthru
      _
    // Predicated region
    $region66: #{tpu_custom_call.1} parent=1 // pred_check
      _
    $region67: #{tpu_custom_call.1} parent=1 // pred_check_branch
      %112 = sbr.rel (0) target = $region69
    $region68: #{tpu_custom_call.1} parent=1 // pred_region
      %113 = dma.done [#allocation9], 1024
    $region69: #{tpu_custom_call.1} parent=1 // pred_fallthru
      _
    // Predicated region
    $region70: #{tpu_custom_call.1} parent=1 // pred_check
      _
    $region71: #{tpu_custom_call.1} parent=1 // pred_check_branch
      %115 = sbr.rel (0) target = $region73
    $region72: #{tpu_custom_call.1} parent=1 // pred_region
      %116 = dma.done [#allocation9], 8192
    $region73: #{tpu_custom_call.1} parent=1 // pred_fallthru
      _
    %v117 = vld [vmem:[%s2] sm:$0xff]
    %v118 = vld [vmem:[%s2 + $0x8] sm:$0xff]
    %v119 = vld [vmem:[%s0] sm:$0xff]
    %v120 = vld [vmem:[%s0 + $0x8] sm:$0xff]
    %v121 = vld [vmem:[#allocation5] sm:$0xff]
    %v122 = vld [vmem:[#allocation5 + $0x8] sm:$0xf]
    %v123 = vld [vmem:[%s4] sm:$0x1]
    %v125 = vlaneseq
    %v126 = vshrl.u32 %v125, 7
    %v127 = vsub.s32 0, %v126
    %v128 = vrot.slane %v123, %v127
    %vm130 = vcmask 97280
    %v132 = vsel %vm130, %v119, 0
    %v135 = vsel %vm130, %v120, 0
    %vm137 = vcmask 1043456
    %v139 = vsel %vm137, %v122, 0
    %141 = vmatprep.subr.mxu0 0.0
    %142 = vmatpush1.msra.mxu0 %v121
    %143 = vmatprep.subr.mxu0 0.0
    %144 = vmatpush1.msra.mxu0 %v139
    %145 = vmatprep.subr.mxu0 0.0
    %146 = vmatpush1.msra.mxu0 0.0
    %147 = vmatprep.subr.mxu0 0.0
    %148 = vmatpush1.msra.mxu0 0.0
    %149 = vmatprep.subr.mxu0 0.0
    %150 = vmatpush1.msra.mxu0 0.0
    %151 = vmatprep.subr.mxu0 0.0
    %152 = vmatpush1.msra.mxu0 0.0
    %153 = vmatprep.subr.mxu0 0.0
    %154 = vmatpush1.msra.mxu0 0.0
    %155 = vmatprep.subr.mxu0 0.0
    %156 = vmatpush1.msra.mxu0 0.0
    %157 = vmatprep.subr.mxu0 0.0
    %158 = vmatpush1.msra.mxu0 0.0
    %159 = vmatprep.subr.mxu0 0.0
    %160 = vmatpush1.msra.mxu0 0.0
    %161 = vmatprep.subr.mxu0 0.0
    %162 = vmatpush1.msra.mxu0 0.0
    %163 = vmatprep.subr.mxu0 0.0
    %164 = vmatpush1.msra.mxu0 0.0
    %165 = vmatprep.subr.mxu0 0.0
    %166 = vmatpush1.msra.mxu0 0.0
    %167 = vmatprep.subr.mxu0 0.0
    %168 = vmatpush1.msra.mxu0 0.0
    %169 = vmatprep.subr.mxu0 0.0
    %170 = vmatpush1.msra.mxu0 0.0
    %171 = vmatprep.subr.mxu0 0.0
    %172 = vmatpush1.msra.mxu0 0.0
    %173 = vmatprep.subr.mxu0 0.0
    %174 = vmatpush1.msra.mxu0 0.0
    %175 = vmatprep.subr.mxu0 0.0
    %176 = vmatpush1.msra.mxu0 0.0
    %177 = vmatprep.subr.mxu0 0.0
    %178 = vmatpush1.msra.mxu0 0.0
    %179 = vmatprep.subr.mxu0 0.0
    %180 = vmatpush1.msra.mxu0 0.0
    %181 = vmatprep.subr.mxu0 0.0
    %182 = vmatpush1.msra.mxu0 0.0
    %183 = vmatprep.subr.mxu0 0.0
    %184 = vmatpush1.msra.mxu0 0.0
    %185 = vmatprep.subr.mxu0 0.0
    %186 = vmatpush1.msra.mxu0 0.0
    %187 = vmatprep.subr.mxu0 0.0
    %188 = vmatpush1.msra.mxu0 0.0
    %189 = vmatprep.subr.mxu0 0.0
    %190 = vmatpush1.msra.mxu0 0.0
    %191 = vmatprep.subr.mxu0 0.0
    %192 = vmatpush1.msra.mxu0 0.0
    %193 = vmatprep.subr.mxu0 0.0
    %194 = vmatpush1.msra.mxu0 0.0
    %195 = vmatprep.subr.mxu0 0.0
    %196 = vmatpush1.msra.mxu0 0.0
    %197 = vmatprep.subr.mxu0 0.0
    %198 = vmatpush1.msra.mxu0 0.0
    %199 = vmatprep.subr.mxu0 0.0
    %200 = vmatpush1.msra.mxu0 0.0
    %201 = vmatprep.subr.mxu0 0.0
    %202 = vmatpush1.msra.mxu0 0.0
    %203 = vmatprep.subr.mxu0 0.0
    %204 = vmatpush1.msra.mxu0 0.0
    %205 = vmatprep.mubr.f32.mxu0 0.0
    %206 = vmatmul.mubr.f32.gmra.mrb[0].mxu0 %v132
    %v207 = vpop.f32.mrb[0].mxu0
    %v208 = vadd.f32 %v128, %v207
    %v209 = vpop.f32.mrb[0].mxu0
    %210 = vmatprep.mubr.f32.mxu0 0.0
    %211 = vmatmul.mubr.f32.gmra.mrb[0].mxu0 %v135
    %v212 = vpop.f32.mrb[0].mxu0
    %v213 = vadd.f32 %v128, %v212
    %v214 = vpop.f32.mrb[0].mxu0
    %215 = vdwg.mxu0
    %v216 = vmax.f32 %v208, 0.0
    %v217 = vmax.f32 %v213, 0.0
    %v218 = vld [vmem:[#allocation7] sm:$0xff]
    %v219 = vld [vmem:[#allocation7 + $0x8] sm:$0xff]
    %v220 = vld [vmem:[#allocation7 + $0x10] sm:$0xff]
    %v221 = vld [vmem:[#allocation7 + $0x18] sm:$0xff]
    %v222 = vld [vmem:[#allocation7 + $0x20] sm:$0xff]
    %v223 = vld [vmem:[#allocation7 + $0x28] sm:$0xff]
    %v224 = vld [vmem:[#allocation7 + $0x30] sm:$0xff]
    %v225 = vld [vmem:[#allocation7 + $0x38] sm:$0xff]
    %v226 = vld [vmem:[%s6] sm:$0x1]
    %v228 = vlaneseq
    %v229 = vshrl.u32 %v228, 7
    %v230 = vsub.s32 0, %v229
    %v231 = vrot.slane %v226, %v230
    %vm233 = vcmask 523264
    %v235 = vsel %vm233, %v216, 0
    %v238 = vsel %vm233, %v217, 0
    %240 = vmatprep.subr.mxu0 0.0
    %241 = vmatpush1.msra.mxu0 %v218
    %242 = vmatprep.subr.mxu0 0.0
    %243 = vmatpush1.msra.mxu0 %v219
    %244 = vmatprep.subr.mxu0 0.0
    %245 = vmatpush1.msra.mxu0 %v220
    %246 = vmatprep.subr.mxu0 0.0
    %247 = vmatpush1.msra.mxu0 %v221
    %248 = vmatprep.subr.mxu0 0.0
    %249 = vmatpush1.msra.mxu0 %v222
    %250 = vmatprep.subr.mxu0 0.0
    %251 = vmatpush1.msra.mxu0 %v223
    %252 = vmatprep.subr.mxu0 0.0
    %253 = vmatpush1.msra.mxu0 %v224
    %254 = vmatprep.subr.mxu0 0.0
    %255 = vmatpush1.msra.mxu0 %v225
    %256 = vmatprep.subr.mxu0 0.0
    %257 = vmatpush1.msra.mxu0 0.0
    %258 = vmatprep.subr.mxu0 0.0
    %259 = vmatpush1.msra.mxu0 0.0
    %260 = vmatprep.subr.mxu0 0.0
    %261 = vmatpush1.msra.mxu0 0.0
    %262 = vmatprep.subr.mxu0 0.0
    %263 = vmatpush1.msra.mxu0 0.0
    %264 = vmatprep.subr.mxu0 0.0
    %265 = vmatpush1.msra.mxu0 0.0
    %266 = vmatprep.subr.mxu0 0.0
    %267 = vmatpush1.msra.mxu0 0.0
    %268 = vmatprep.subr.mxu0 0.0
    %269 = vmatpush1.msra.mxu0 0.0
    %270 = vmatprep.subr.mxu0 0.0
    %271 = vmatpush1.msra.mxu0 0.0
    %272 = vmatprep.subr.mxu0 0.0
    %273 = vmatpush1.msra.mxu0 0.0
    %274 = vmatprep.subr.mxu0 0.0
    %275 = vmatpush1.msra.mxu0 0.0
    %276 = vmatprep.subr.mxu0 0.0
    %277 = vmatpush1.msra.mxu0 0.0
    %278 = vmatprep.subr.mxu0 0.0
    %279 = vmatpush1.msra.mxu0 0.0
    %280 = vmatprep.subr.mxu0 0.0
    %281 = vmatpush1.msra.mxu0 0.0
    %282 = vmatprep.subr.mxu0 0.0
    %283 = vmatpush1.msra.mxu0 0.0
    %284 = vmatprep.subr.mxu0 0.0
    %285 = vmatpush1.msra.mxu0 0.0
    %286 = vmatprep.subr.mxu0 0.0
    %287 = vmatpush1.msra.mxu0 0.0
    %288 = vmatprep.subr.mxu0 0.0
    %289 = vmatpush1.msra.mxu0 0.0
    %290 = vmatprep.subr.mxu0 0.0
    %291 = vmatpush1.msra.mxu0 0.0
    %292 = vmatprep.subr.mxu0 0.0
    %293 = vmatpush1.msra.mxu0 0.0
    %294 = vmatprep.subr.mxu0 0.0
    %295 = vmatpush1.msra.mxu0 0.0
    %296 = vmatprep.subr.mxu0 0.0
    %297 = vmatpush1.msra.mxu0 0.0
    %298 = vmatprep.subr.mxu0 0.0
    %299 = vmatpush1.msra.mxu0 0.0
    %300 = vmatprep.subr.mxu0 0.0
    %301 = vmatpush1.msra.mxu0 0.0
    %302 = vmatprep.subr.mxu0 0.0
    %303 = vmatpush1.msra.mxu0 0.0
    %304 = vmatprep.mubr.f32.mxu0 0.0
    %305 = vmatmul.mubr.f32.gmra.mrb[0].mxu0 %v235
    %v306 = vpop.f32.mrb[0].mxu0
    %v307 = vadd.f32 %v231, %v306
    %v308 = vpop.f32.mrb[0].mxu0
    %309 = vmatprep.mubr.f32.mxu0 0.0
    %310 = vmatmul.mubr.f32.gmra.mrb[0].mxu0 %v238
    %v311 = vpop.f32.mrb[0].mxu0
    %v312 = vadd.f32 %v231, %v311
    %v313 = vpop.f32.mrb[0].mxu0
    %314 = vdwg.mxu0
    %v315 = vmax.f32 %v307, 0.0
    %v316 = vmax.f32 %v312, 0.0
    %v317 = vld [vmem:[#allocation8] sm:$0xff]
    %v318 = vld [vmem:[#allocation8 + $0x8] sm:$0xff]
    %v319 = vld [vmem:[#allocation8 + $0x10] sm:$0xff]
    %v320 = vld [vmem:[#allocation8 + $0x18] sm:$0xff]
    %v321 = vld [vmem:[#allocation8 + $0x20] sm:$0xff]
    %v322 = vld [vmem:[#allocation8 + $0x28] sm:$0xff]
    %v323 = vld [vmem:[#allocation8 + $0x30] sm:$0xff]
    %v324 = vld [vmem:[#allocation8 + $0x38] sm:$0xff]
    %v325 = vld [vmem:[%s8] sm:$0x1]
    %v327 = vlaneseq
    %v328 = vshrl.u32 %v327, 7
    %v329 = vsub.s32 0, %v328
    %v330 = vrot.slane %v325, %v329
    %v333 = vsel %vm233, %v315, 0
    %v336 = vsel %vm233, %v316, 0
    %338 = vmatprep.subr.mxu0 0.0
    %339 = vmatpush1.msra.mxu0 %v317
    %340 = vmatprep.subr.mxu0 0.0
    %341 = vmatpush1.msra.mxu0 %v318
    %342 = vmatprep.subr.mxu0 0.0
    %343 = vmatpush1.msra.mxu0 %v319
    %344 = vmatprep.subr.mxu0 0.0
    %345 = vmatpush1.msra.mxu0 %v320
    %346 = vmatprep.subr.mxu0 0.0
    %347 = vmatpush1.msra.mxu0 %v321
    %348 = vmatprep.subr.mxu0 0.0
    %349 = vmatpush1.msra.mxu0 %v322
    %350 = vmatprep.subr.mxu0 0.0
    %351 = vmatpush1.msra.mxu0 %v323
    %352 = vmatprep.subr.mxu0 0.0
    %353 = vmatpush1.msra.mxu0 %v324
    %354 = vmatprep.subr.mxu0 0.0
    %355 = vmatpush1.msra.mxu0 0.0
    %356 = vmatprep.subr.mxu0 0.0
    %357 = vmatpush1.msra.mxu0 0.0
    %358 = vmatprep.subr.mxu0 0.0
    %359 = vmatpush1.msra.mxu0 0.0
    %360 = vmatprep.subr.mxu0 0.0
    %361 = vmatpush1.msra.mxu0 0.0
    %362 = vmatprep.subr.mxu0 0.0
    %363 = vmatpush1.msra.mxu0 0.0
    %364 = vmatprep.subr.mxu0 0.0
    %365 = vmatpush1.msra.mxu0 0.0
    %366 = vmatprep.subr.mxu0 0.0
    %367 = vmatpush1.msra.mxu0 0.0
    %368 = vmatprep.subr.mxu0 0.0
    %369 = vmatpush1.msra.mxu0 0.0
    %370 = vmatprep.subr.mxu0 0.0
    %371 = vmatpush1.msra.mxu0 0.0
    %372 = vmatprep.subr.mxu0 0.0
    %373 = vmatpush1.msra.mxu0 0.0
    %374 = vmatprep.subr.mxu0 0.0
    %375 = vmatpush1.msra.mxu0 0.0
    %376 = vmatprep.subr.mxu0 0.0
    %377 = vmatpush1.msra.mxu0 0.0
    %378 = vmatprep.subr.mxu0 0.0
    %379 = vmatpush1.msra.mxu0 0.0
    %380 = vmatprep.subr.mxu0 0.0
    %381 = vmatpush1.msra.mxu0 0.0
    %382 = vmatprep.subr.mxu0 0.0
    %383 = vmatpush1.msra.mxu0 0.0
    %384 = vmatprep.subr.mxu0 0.0
    %385 = vmatpush1.msra.mxu0 0.0
    %386 = vmatprep.subr.mxu0 0.0
    %387 = vmatpush1.msra.mxu0 0.0
    %388 = vmatprep.subr.mxu0 0.0
    %389 = vmatpush1.msra.mxu0 0.0
    %390 = vmatprep.subr.mxu0 0.0
    %391 = vmatpush1.msra.mxu0 0.0
    %392 = vmatprep.subr.mxu0 0.0
    %393 = vmatpush1.msra.mxu0 0.0
    %394 = vmatprep.subr.mxu0 0.0
    %395 = vmatpush1.msra.mxu0 0.0
    %396 = vmatprep.subr.mxu0 0.0
    %397 = vmatpush1.msra.mxu0 0.0
    %398 = vmatprep.subr.mxu0 0.0
    %399 = vmatpush1.msra.mxu0 0.0
    %400 = vmatprep.subr.mxu0 0.0
    %401 = vmatpush1.msra.mxu0 0.0
    %402 = vmatprep.mubr.f32.mxu0 0.0
    %403 = vmatmul.mubr.f32.gmra.mrb[0].mxu0 %v333
    %v404 = vpop.f32.mrb[0].mxu0
    %v405 = vadd.f32 %v330, %v404
    %v406 = vpop.f32.mrb[0].mxu0
    %407 = vmatprep.mubr.f32.mxu0 0.0
    %408 = vmatmul.mubr.f32.gmra.mrb[0].mxu0 %v336
    %v409 = vpop.f32.mrb[0].mxu0
    %v410 = vadd.f32 %v330, %v409
    %v411 = vpop.f32.mrb[0].mxu0
    %412 = vdwg.mxu0
    %414 = vset.pattern.permute.xlu0 0
    %415 = vperm.xlu0 %414, %v117
    %v416 = vpop.permute.xlu0 %415
    %419 = vset.pattern.permute.xlu0 0
    %420 = vperm.xlu0 %419, %v118
    %v421 = vpop.permute.xlu0 %420
    %v423 = vmul.f32 %v405, %v416
    %v424 = vmul.f32 %v410, %v421
    %v425 = vld [vmem:[%s9] sm:$0x3]
    %v426 = vunpack.c.l.bf16 %v425
    %v427 = vlaneseq
    %v428 = vshrl.u32 %v427, 7
    %v429 = vsub.s32 0, %v428
    %v430 = vrot.slane %v426, %v429
    %432 = vbcast.lane.b32.xlu0 %v430, 256
    %v433 = vpop.permute.xlu0 %432
    %s435 = sor.u32 256, 8
    %436 = vbcast.lane.b32.xlu0 %v430, %s435
    %v437 = vpop.permute.xlu0 %436
    %s439 = sor.u32 256, 16
    %440 = vbcast.lane.b32.xlu0 %v430, %s439
    %v441 = vpop.permute.xlu0 %440
    %s443 = sor.u32 256, 24
    %444 = vbcast.lane.b32.xlu0 %v430, %s443
    %v445 = vpop.permute.xlu0 %444
    %s447 = sor.u32 256, 32
    %448 = vbcast.lane.b32.xlu0 %v430, %s447
    %v449 = vpop.permute.xlu0 %448
    %s451 = sor.u32 256, 40
    %452 = vbcast.lane.b32.xlu0 %v430, %s451
    %v453 = vpop.permute.xlu0 %452
    %s455 = sor.u32 256, 48
    %456 = vbcast.lane.b32.xlu0 %v430, %s455
    %v457 = vpop.permute.xlu0 %456
    %s459 = sor.u32 256, 56
    %460 = vbcast.lane.b32.xlu0 %v430, %s459
    %v461 = vpop.permute.xlu0 %460
    %s463 = sor.u32 256, 64
    %464 = vbcast.lane.b32.xlu0 %v430, %s463
    %v465 = vpop.permute.xlu0 %464
    %s467 = sor.u32 256, 72
    %468 = vbcast.lane.b32.xlu0 %v430, %s467
    %v469 = vpop.permute.xlu0 %468
    %s471 = sor.u32 256, 80
    %472 = vbcast.lane.b32.xlu0 %v430, %s471
    %v473 = vpop.permute.xlu0 %472
    %s475 = sor.u32 256, 88
    %476 = vbcast.lane.b32.xlu0 %v430, %s475
    %v477 = vpop.permute.xlu0 %476
    %s479 = sor.u32 256, 96
    %480 = vbcast.lane.b32.xlu0 %v430, %s479
    %v481 = vpop.permute.xlu0 %480
    %s483 = sor.u32 256, 104
    %484 = vbcast.lane.b32.xlu0 %v430, %s483
    %v485 = vpop.permute.xlu0 %484
    %s487 = sor.u32 256, 112
    %488 = vbcast.lane.b32.xlu0 %v430, %s487
    %v489 = vpop.permute.xlu0 %488
    %s491 = sor.u32 256, 120
    %492 = vbcast.lane.b32.xlu0 %v430, %s491
    %v493 = vpop.permute.xlu0 %492
    %v494 = vlaneseq
    %v495 = vshrl.u32 %v494, 7
    %v496 = vsub.s32 1, %v495
    %v497 = vrot.slane %v426, %v496
    %499 = vbcast.lane.b32.xlu0 %v497, 256
    %v500 = vpop.permute.xlu0 %499
    %s502 = sor.u32 256, 8
    %503 = vbcast.lane.b32.xlu0 %v497, %s502
    %v504 = vpop.permute.xlu0 %503
    %s506 = sor.u32 256, 16
    %507 = vbcast.lane.b32.xlu0 %v497, %s506
    %v508 = vpop.permute.xlu0 %507
    %s510 = sor.u32 256, 24
    %511 = vbcast.lane.b32.xlu0 %v497, %s510
    %v512 = vpop.permute.xlu0 %511
    %s514 = sor.u32 256, 32
    %515 = vbcast.lane.b32.xlu0 %v497, %s514
    %v516 = vpop.permute.xlu0 %515
    %s518 = sor.u32 256, 40
    %519 = vbcast.lane.b32.xlu0 %v497, %s518
    %v520 = vpop.permute.xlu0 %519
    %s522 = sor.u32 256, 48
    %523 = vbcast.lane.b32.xlu0 %v497, %s522
    %v524 = vpop.permute.xlu0 %523
    %s526 = sor.u32 256, 56
    %527 = vbcast.lane.b32.xlu0 %v497, %s526
    %v528 = vpop.permute.xlu0 %527
    %s530 = sor.u32 256, 64
    %531 = vbcast.lane.b32.xlu0 %v497, %s530
    %v532 = vpop.permute.xlu0 %531
    %s534 = sor.u32 256, 72
    %535 = vbcast.lane.b32.xlu0 %v497, %s534
    %v536 = vpop.permute.xlu0 %535
    %s538 = sor.u32 256, 80
    %539 = vbcast.lane.b32.xlu0 %v497, %s538
    %v540 = vpop.permute.xlu0 %539
    %s542 = sor.u32 256, 88
    %543 = vbcast.lane.b32.xlu0 %v497, %s542
    %v544 = vpop.permute.xlu0 %543
    %s546 = sor.u32 256, 96
    %547 = vbcast.lane.b32.xlu0 %v497, %s546
    %v548 = vpop.permute.xlu0 %547
    %s550 = sor.u32 256, 104
    %551 = vbcast.lane.b32.xlu0 %v497, %s550
    %v552 = vpop.permute.xlu0 %551
    %s554 = sor.u32 256, 112
    %555 = vbcast.lane.b32.xlu0 %v497, %s554
    %v556 = vpop.permute.xlu0 %555
    %s558 = sor.u32 256, 120
    %559 = vbcast.lane.b32.xlu0 %v497, %s558
    %v560 = vpop.permute.xlu0 %559
    %v561 = vlaneseq
    %v562 = vshrl.u32 %v561, 7
    %v563 = vsub.s32 2, %v562
    %v564 = vrot.slane %v426, %v563
    %566 = vbcast.lane.b32.xlu0 %v564, 256
    %v567 = vpop.permute.xlu0 %566
    %s569 = sor.u32 256, 8
    %570 = vbcast.lane.b32.xlu0 %v564, %s569
    %v571 = vpop.permute.xlu0 %570
    %s573 = sor.u32 256, 16
    %574 = vbcast.lane.b32.xlu0 %v564, %s573
    %v575 = vpop.permute.xlu0 %574
    %s577 = sor.u32 256, 24
    %578 = vbcast.lane.b32.xlu0 %v564, %s577
    %v579 = vpop.permute.xlu0 %578
    %s581 = sor.u32 256, 32
    %582 = vbcast.lane.b32.xlu0 %v564, %s581
    %v583 = vpop.permute.xlu0 %582
    %s585 = sor.u32 256, 40
    %586 = vbcast.lane.b32.xlu0 %v564, %s585
    %v587 = vpop.permute.xlu0 %586
    %s589 = sor.u32 256, 48
    %590 = vbcast.lane.b32.xlu0 %v564, %s589
    %v591 = vpop.permute.xlu0 %590
    %s593 = sor.u32 256, 56
    %594 = vbcast.lane.b32.xlu0 %v564, %s593
    %v595 = vpop.permute.xlu0 %594
    %s597 = sor.u32 256, 64
    %598 = vbcast.lane.b32.xlu0 %v564, %s597
    %v599 = vpop.permute.xlu0 %598
    %s601 = sor.u32 256, 72
    %602 = vbcast.lane.b32.xlu0 %v564, %s601
    %v603 = vpop.permute.xlu0 %602
    %s605 = sor.u32 256, 80
    %606 = vbcast.lane.b32.xlu0 %v564, %s605
    %v607 = vpop.permute.xlu0 %606
    %s609 = sor.u32 256, 88
    %610 = vbcast.lane.b32.xlu0 %v564, %s609
    %v611 = vpop.permute.xlu0 %610
    %s613 = sor.u32 256, 96
    %614 = vbcast.lane.b32.xlu0 %v564, %s613
    %v615 = vpop.permute.xlu0 %614
    %s617 = sor.u32 256, 104
    %618 = vbcast.lane.b32.xlu0 %v564, %s617
    %v619 = vpop.permute.xlu0 %618
    %s621 = sor.u32 256, 112
    %622 = vbcast.lane.b32.xlu0 %v564, %s621
    %v623 = vpop.permute.xlu0 %622
    %s625 = sor.u32 256, 120
    %626 = vbcast.lane.b32.xlu0 %v564, %s625
    %v627 = vpop.permute.xlu0 %626
    %v628 = vld [vmem:[%s10] sm:$0x1]
    %v629 = vunpack.c.l.bf16 %v628
    %v630 = vlaneseq
    %v631 = vshrl.u32 %v630, 7
    %v632 = vsub.s32 0, %v631
    %v633 = vrot.slane %v629, %v632
    %635 = vbcast.lane.b32.xlu0 %v633, 256
    %v636 = vpop.permute.xlu0 %635
    %s638 = sor.u32 256, 8
    %639 = vbcast.lane.b32.xlu0 %v633, %s638
    %v640 = vpop.permute.xlu0 %639
    %s642 = sor.u32 256, 16
    %643 = vbcast.lane.b32.xlu0 %v633, %s642
    %v644 = vpop.permute.xlu0 %643
    %s646 = sor.u32 256, 24
    %647 = vbcast.lane.b32.xlu0 %v633, %s646
    %v648 = vpop.permute.xlu0 %647
    %s650 = sor.u32 256, 32
    %651 = vbcast.lane.b32.xlu0 %v633, %s650
    %v652 = vpop.permute.xlu0 %651
    %s654 = sor.u32 256, 40
    %655 = vbcast.lane.b32.xlu0 %v633, %s654
    %v656 = vpop.permute.xlu0 %655
    %s658 = sor.u32 256, 48
    %659 = vbcast.lane.b32.xlu0 %v633, %s658
    %v660 = vpop.permute.xlu0 %659
    %s662 = sor.u32 256, 56
    %663 = vbcast.lane.b32.xlu0 %v633, %s662
    %v664 = vpop.permute.xlu0 %663
    %s666 = sor.u32 256, 64
    %667 = vbcast.lane.b32.xlu0 %v633, %s666
    %v668 = vpop.permute.xlu0 %667
    %s670 = sor.u32 256, 72
    %671 = vbcast.lane.b32.xlu0 %v633, %s670
    %v672 = vpop.permute.xlu0 %671
    %s674 = sor.u32 256, 80
    %675 = vbcast.lane.b32.xlu0 %v633, %s674
    %v676 = vpop.permute.xlu0 %675
    %s678 = sor.u32 256, 88
    %679 = vbcast.lane.b32.xlu0 %v633, %s678
    %v680 = vpop.permute.xlu0 %679
    %s682 = sor.u32 256, 96
    %683 = vbcast.lane.b32.xlu0 %v633, %s682
    %v684 = vpop.permute.xlu0 %683
    %s686 = sor.u32 256, 104
    %687 = vbcast.lane.b32.xlu0 %v633, %s686
    %v688 = vpop.permute.xlu0 %687
    %s690 = sor.u32 256, 112
    %691 = vbcast.lane.b32.xlu0 %v633, %s690
    %v692 = vpop.permute.xlu0 %691
    %s694 = sor.u32 256, 120
    %695 = vbcast.lane.b32.xlu0 %v633, %s694
    %v696 = vpop.permute.xlu0 %695
    %v697 = vld [vmem:[#allocation2] sm:$0xf]
    %v698 = vld [vmem:[#allocation2 + $0x8] sm:$0xf]
    %v699 = vunpack.c.l.bf16 %v697
    %v700 = vunpack.c.l.bf16 %v698
    %s701 = sadd.s32 0, 4
    %s702 = smul.addr %s701, 4
    %s703 = scalar_lea.vmem [#allocation2], %s702
    %v704 = vld [vmem:[%s703] sm:$0xf]
    %v705 = vld [vmem:[%s703 + $0x8] sm:$0xf]
    %v706 = vunpack.c.l.bf16 %v704
    %v707 = vunpack.c.l.bf16 %v705
    %s708 = sadd.s32 0, 8
    %s709 = smul.addr %s708, 4
    %s710 = scalar_lea.vmem [#allocation2], %s709
    %v711 = vld [vmem:[%s710] sm:$0xf]
    %v712 = vld [vmem:[%s710 + $0x8] sm:$0xf]
    %v713 = vunpack.c.l.bf16 %v711
    %v714 = vunpack.c.l.bf16 %v712
    %v717 = vcombine.high %v699, %v699
    %v719 = vunpack.c.l.s4 1966171168
    %v720 = vunpack.c.0.s8 %v719
    %v721 = vlaneseq
    %v722 = vshrl.u32 %v721, 7
    %v723 = vsub.s32 %v720, %v722
    %v724 = vrot.slane %v699, %v723
    %v726 = vunpack.c.l.s4 1966171168
    %v727 = vunpack.c.0.s8 %v726
    %v728 = vlaneseq
    %v729 = vshrl.u32 %v728, 7
    %v730 = vsub.s32 %v727, %v729
    %v731 = vrot.slane %v717, %v730
    %v732 = vcombine.high %v724, %v724
    %v733 = vcombine.high %v731, %v731
    %v735 = vunpack.c.l.s4 1966171168
    %v736 = vunpack.c.0.s8 %v735
    %v737 = vlaneseq
    %v738 = vshrl.u32 %v737, 7
    %v739 = vsub.s32 %v736, %v738
    %v740 = vrot.slane %v724, %v739
    %v742 = vunpack.c.l.s4 1966171168
    %v743 = vunpack.c.0.s8 %v742
    %v744 = vlaneseq
    %v745 = vshrl.u32 %v744, 7
    %v746 = vsub.s32 %v743, %v745
    %v747 = vrot.slane %v731, %v746
    %v749 = vunpack.c.l.s4 1966171168
    %v750 = vunpack.c.0.s8 %v749
    %v751 = vlaneseq
    %v752 = vshrl.u32 %v751, 7
    %v753 = vsub.s32 %v750, %v752
    %v754 = vrot.slane %v732, %v753
    %v756 = vunpack.c.l.s4 1966171168
    %v757 = vunpack.c.0.s8 %v756
    %v758 = vlaneseq
    %v759 = vshrl.u32 %v758, 7
    %v760 = vsub.s32 %v757, %v759
    %v761 = vrot.slane %v733, %v760
    %v762 = vcombine.high %v740, %v740
    %v763 = vcombine.high %v747, %v747
    %v764 = vcombine.high %v754, %v754
    %v765 = vcombine.high %v761, %v761
    %v766 = vcombine.high %v700, %v700
    %v768 = vunpack.c.l.s4 1966171168
    %v769 = vunpack.c.0.s8 %v768
    %v770 = vlaneseq
    %v771 = vshrl.u32 %v770, 7
    %v772 = vsub.s32 %v769, %v771
    %v773 = vrot.slane %v700, %v772
    %v775 = vunpack.c.l.s4 1966171168
    %v776 = vunpack.c.0.s8 %v775
    %v777 = vlaneseq
    %v778 = vshrl.u32 %v777, 7
    %v779 = vsub.s32 %v776, %v778
    %v780 = vrot.slane %v766, %v779
    %v781 = vcombine.high %v773, %v773
    %v782 = vcombine.high %v780, %v780
    %v784 = vunpack.c.l.s4 1966171168
    %v785 = vunpack.c.0.s8 %v784
    %v786 = vlaneseq
    %v787 = vshrl.u32 %v786, 7
    %v788 = vsub.s32 %v785, %v787
    %v789 = vrot.slane %v773, %v788
    %v791 = vunpack.c.l.s4 1966171168
    %v792 = vunpack.c.0.s8 %v791
    %v793 = vlaneseq
    %v794 = vshrl.u32 %v793, 7
    %v795 = vsub.s32 %v792, %v794
    %v796 = vrot.slane %v780, %v795
    %v798 = vunpack.c.l.s4 1966171168
    %v799 = vunpack.c.0.s8 %v798
    %v800 = vlaneseq
    %v801 = vshrl.u32 %v800, 7
    %v802 = vsub.s32 %v799, %v801
    %v803 = vrot.slane %v781, %v802
    %v805 = vunpack.c.l.s4 1966171168
    %v806 = vunpack.c.0.s8 %v805
    %v807 = vlaneseq
    %v808 = vshrl.u32 %v807, 7
    %v809 = vsub.s32 %v806, %v808
    %v810 = vrot.slane %v782, %v809
    %v811 = vcombine.high %v789, %v789
    %v812 = vcombine.high %v796, %v796
    %v813 = vcombine.high %v803, %v803
    %v814 = vcombine.high %v810, %v810
    %v815 = vlaneseq
    %v816 = vshrl.u32 %v815, 7
    %v817 = vsub.s32 0, %v816
    %v818 = vrot.slane %v740, %v817
    %v819 = vlaneseq
    %v820 = vshrl.u32 %v819, 7
    %v821 = vsub.s32 0, %v820
    %v822 = vrot.slane %v754, %v821
    %v823 = vlaneseq
    %v824 = vshrl.u32 %v823, 7
    %v825 = vsub.s32 0, %v824
    %v826 = vrot.slane %v762, %v825
    %v827 = vlaneseq
    %v828 = vshrl.u32 %v827, 7
    %v829 = vsub.s32 0, %v828
    %v830 = vrot.slane %v764, %v829
    %v831 = vlaneseq
    %v832 = vshrl.u32 %v831, 7
    %v833 = vsub.s32 0, %v832
    %v834 = vrot.slane %v747, %v833
    %v835 = vlaneseq
    %v836 = vshrl.u32 %v835, 7
    %v837 = vsub.s32 0, %v836
    %v838 = vrot.slane %v761, %v837
    %v839 = vlaneseq
    %v840 = vshrl.u32 %v839, 7
    %v841 = vsub.s32 0, %v840
    %v842 = vrot.slane %v763, %v841
    %v843 = vlaneseq
    %v844 = vshrl.u32 %v843, 7
    %v845 = vsub.s32 0, %v844
    %v846 = vrot.slane %v765, %v845
    %v847 = vlaneseq
    %v848 = vshrl.u32 %v847, 7
    %v849 = vsub.s32 0, %v848
    %v850 = vrot.slane %v789, %v849
    %v851 = vlaneseq
    %v852 = vshrl.u32 %v851, 7
    %v853 = vsub.s32 0, %v852
    %v854 = vrot.slane %v803, %v853
    %v855 = vlaneseq
    %v856 = vshrl.u32 %v855, 7
    %v857 = vsub.s32 0, %v856
    %v858 = vrot.slane %v811, %v857
    %v859 = vlaneseq
    %v860 = vshrl.u32 %v859, 7
    %v861 = vsub.s32 0, %v860
    %v862 = vrot.slane %v813, %v861
    %v863 = vlaneseq
    %v864 = vshrl.u32 %v863, 7
    %v865 = vsub.s32 0, %v864
    %v866 = vrot.slane %v796, %v865
    %v867 = vlaneseq
    %v868 = vshrl.u32 %v867, 7
    %v869 = vsub.s32 0, %v868
    %v870 = vrot.slane %v810, %v869
    %v871 = vlaneseq
    %v872 = vshrl.u32 %v871, 7
    %v873 = vsub.s32 0, %v872
    %v874 = vrot.slane %v812, %v873
    %v875 = vlaneseq
    %v876 = vshrl.u32 %v875, 7
    %v877 = vsub.s32 0, %v876
    %v878 = vrot.slane %v814, %v877
    %v895 = vmul.f32 %v818, %v433
    %v896 = vmul.f32 %v818, %v437
    %v897 = vmul.f32 %v818, %v441
    %v898 = vmul.f32 %v818, %v445
    %v899 = vmul.f32 %v818, %v449
    %v900 = vmul.f32 %v818, %v453
    %v901 = vmul.f32 %v818, %v457
    %v902 = vmul.f32 %v818, %v461
    %v903 = vmul.f32 %v818, %v465
    %v904 = vmul.f32 %v818, %v469
    %v905 = vmul.f32 %v818, %v473
    %v906 = vmul.f32 %v818, %v477
    %v907 = vmul.f32 %v818, %v481
    %v908 = vmul.f32 %v818, %v485
    %v909 = vmul.f32 %v818, %v489
    %v910 = vmul.f32 %v818, %v493
    %v911 = vmul.f32 %v822, %v433
    %v912 = vmul.f32 %v822, %v437
    %v913 = vmul.f32 %v822, %v441
    %v914 = vmul.f32 %v822, %v445
    %v915 = vmul.f32 %v822, %v449
    %v916 = vmul.f32 %v822, %v453
    %v917 = vmul.f32 %v822, %v457
    %v918 = vmul.f32 %v822, %v461
    %v919 = vmul.f32 %v822, %v465
    %v920 = vmul.f32 %v822, %v469
    %v921 = vmul.f32 %v822, %v473
    %v922 = vmul.f32 %v822, %v477
    %v923 = vmul.f32 %v822, %v481
    %v924 = vmul.f32 %v822, %v485
    %v925 = vmul.f32 %v822, %v489
    %v926 = vmul.f32 %v822, %v493
    %v927 = vmul.f32 %v826, %v433
    %v928 = vmul.f32 %v826, %v437
    %v929 = vmul.f32 %v826, %v441
    %v930 = vmul.f32 %v826, %v445
    %v931 = vmul.f32 %v826, %v449
    %v932 = vmul.f32 %v826, %v453
    %v933 = vmul.f32 %v826, %v457
    %v934 = vmul.f32 %v826, %v461
    %v935 = vmul.f32 %v826, %v465
    %v936 = vmul.f32 %v826, %v469
    %v937 = vmul.f32 %v826, %v473
    %v938 = vmul.f32 %v826, %v477
    %v939 = vmul.f32 %v826, %v481
    %v940 = vmul.f32 %v826, %v485
    %v941 = vmul.f32 %v826, %v489
    %v942 = vmul.f32 %v826, %v493
    %v943 = vmul.f32 %v830, %v433
    %v944 = vmul.f32 %v830, %v437
    %v945 = vmul.f32 %v830, %v441
    %v946 = vmul.f32 %v830, %v445
    %v947 = vmul.f32 %v830, %v449
    %v948 = vmul.f32 %v830, %v453
    %v949 = vmul.f32 %v830, %v457
    %v950 = vmul.f32 %v830, %v461
    %v951 = vmul.f32 %v830, %v465
    %v952 = vmul.f32 %v830, %v469
    %v953 = vmul.f32 %v830, %v473
    %v954 = vmul.f32 %v830, %v477
    %v955 = vmul.f32 %v830, %v481
    %v956 = vmul.f32 %v830, %v485
    %v957 = vmul.f32 %v830, %v489
    %v958 = vmul.f32 %v830, %v493
    %v959 = vmul.f32 %v834, %v433
    %v960 = vmul.f32 %v834, %v437
    %v961 = vmul.f32 %v834, %v441
    %v962 = vmul.f32 %v834, %v445
    %v963 = vmul.f32 %v834, %v449
    %v964 = vmul.f32 %v834, %v453
    %v965 = vmul.f32 %v834, %v457
    %v966 = vmul.f32 %v834, %v461
    %v967 = vmul.f32 %v834, %v465
    %v968 = vmul.f32 %v834, %v469
    %v969 = vmul.f32 %v834, %v473
    %v970 = vmul.f32 %v834, %v477
    %v971 = vmul.f32 %v834, %v481
    %v972 = vmul.f32 %v834, %v485
    %v973 = vmul.f32 %v834, %v489
    %v974 = vmul.f32 %v834, %v493
    %v975 = vmul.f32 %v838, %v433
    %v976 = vmul.f32 %v838, %v437
    %v977 = vmul.f32 %v838, %v441
    %v978 = vmul.f32 %v838, %v445
    %v979 = vmul.f32 %v838, %v449
    %v980 = vmul.f32 %v838, %v453
    %v981 = vmul.f32 %v838, %v457
    %v982 = vmul.f32 %v838, %v461
    %v983 = vmul.f32 %v838, %v465
    %v984 = vmul.f32 %v838, %v469
    %v985 = vmul.f32 %v838, %v473
    %v986 = vmul.f32 %v838, %v477
    %v987 = vmul.f32 %v838, %v481
    %v988 = vmul.f32 %v838, %v485
    %v989 = vmul.f32 %v838, %v489
    %v990 = vmul.f32 %v838, %v493
    %v991 = vmul.f32 %v842, %v433
    %v992 = vmul.f32 %v842, %v437
    %v993 = vmul.f32 %v842, %v441
    %v994 = vmul.f32 %v842, %v445
    %v995 = vmul.f32 %v842, %v449
    %v996 = vmul.f32 %v842, %v453
    %v997 = vmul.f32 %v842, %v457
    %v998 = vmul.f32 %v842, %v461
    %v999 = vmul.f32 %v842, %v465
    %v1000 = vmul.f32 %v842, %v469
    %v1001 = vmul.f32 %v842, %v473
    %v1002 = vmul.f32 %v842, %v477
    %v1003 = vmul.f32 %v842, %v481
    %v1004 = vmul.f32 %v842, %v485
    %v1005 = vmul.f32 %v842, %v489
    %v1006 = vmul.f32 %v842, %v493
    %v1007 = vmul.f32 %v846, %v433
    %v1008 = vmul.f32 %v846, %v437
    %v1009 = vmul.f32 %v846, %v441
    %v1010 = vmul.f32 %v846, %v445
    %v1011 = vmul.f32 %v846, %v449
    %v1012 = vmul.f32 %v846, %v453
    %v1013 = vmul.f32 %v846, %v457
    %v1014 = vmul.f32 %v846, %v461
    %v1015 = vmul.f32 %v846, %v465
    %v1016 = vmul.f32 %v846, %v469
    %v1017 = vmul.f32 %v846, %v473
    %v1018 = vmul.f32 %v846, %v477
    %v1019 = vmul.f32 %v846, %v481
    %v1020 = vmul.f32 %v846, %v485
    %v1021 = vmul.f32 %v846, %v489
    %v1022 = vmul.f32 %v846, %v493
    %v1023 = vmul.f32 %v850, %v433
    %v1024 = vmul.f32 %v850, %v437
    %v1025 = vmul.f32 %v850, %v441
    %v1026 = vmul.f32 %v850, %v445
    %v1027 = vmul.f32 %v850, %v449
    %v1028 = vmul.f32 %v850, %v453
    %v1029 = vmul.f32 %v850, %v457
    %v1030 = vmul.f32 %v850, %v461
    %v1031 = vmul.f32 %v850, %v465
    %v1032 = vmul.f32 %v850, %v469
    %v1033 = vmul.f32 %v850, %v473
    %v1034 = vmul.f32 %v850, %v477
    %v1035 = vmul.f32 %v850, %v481
    %v1036 = vmul.f32 %v850, %v485
    %v1037 = vmul.f32 %v850, %v489
    %v1038 = vmul.f32 %v850, %v493
    %v1039 = vmul.f32 %v854, %v433
    %v1040 = vmul.f32 %v854, %v437
    %v1041 = vmul.f32 %v854, %v441
    %v1042 = vmul.f32 %v854, %v445
    %v1043 = vmul.f32 %v854, %v449
    %v1044 = vmul.f32 %v854, %v453
    %v1045 = vmul.f32 %v854, %v457
    %v1046 = vmul.f32 %v854, %v461
    %v1047 = vmul.f32 %v854, %v465
    %v1048 = vmul.f32 %v854, %v469
    %v1049 = vmul.f32 %v854, %v473
    %v1050 = vmul.f32 %v854, %v477
    %v1051 = vmul.f32 %v854, %v481
    %v1052 = vmul.f32 %v854, %v485
    %v1053 = vmul.f32 %v854, %v489
    %v1054 = vmul.f32 %v854, %v493
    %v1055 = vmul.f32 %v858, %v433
    %v1056 = vmul.f32 %v858, %v437
    %v1057 = vmul.f32 %v858, %v441
    %v1058 = vmul.f32 %v858, %v445
    %v1059 = vmul.f32 %v858, %v449
    %v1060 = vmul.f32 %v858, %v453
    %v1061 = vmul.f32 %v858, %v457
    %v1062 = vmul.f32 %v858, %v461
    %v1063 = vmul.f32 %v858, %v465
    %v1064 = vmul.f32 %v858, %v469
    %v1065 = vmul.f32 %v858, %v473
    %v1066 = vmul.f32 %v858, %v477
    %v1067 = vmul.f32 %v858, %v481
    %v1068 = vmul.f32 %v858, %v485
    %v1069 = vmul.f32 %v858, %v489
    %v1070 = vmul.f32 %v858, %v493
    %v1071 = vmul.f32 %v862, %v433
    %v1072 = vmul.f32 %v862, %v437
    %v1073 = vmul.f32 %v862, %v441
    %v1074 = vmul.f32 %v862, %v445
    %v1075 = vmul.f32 %v862, %v449
    %v1076 = vmul.f32 %v862, %v453
    %v1077 = vmul.f32 %v862, %v457
    %v1078 = vmul.f32 %v862, %v461
    %v1079 = vmul.f32 %v862, %v465
    %v1080 = vmul.f32 %v862, %v469
    %v1081 = vmul.f32 %v862, %v473
    %v1082 = vmul.f32 %v862, %v477
    %v1083 = vmul.f32 %v862, %v481
    %v1084 = vmul.f32 %v862, %v485
    %v1085 = vmul.f32 %v862, %v489
    %v1086 = vmul.f32 %v862, %v493
    %v1087 = vmul.f32 %v866, %v433
    %v1088 = vmul.f32 %v866, %v437
    %v1089 = vmul.f32 %v866, %v441
    %v1090 = vmul.f32 %v866, %v445
    %v1091 = vmul.f32 %v866, %v449
    %v1092 = vmul.f32 %v866, %v453
    %v1093 = vmul.f32 %v866, %v457
    %v1094 = vmul.f32 %v866, %v461
    %v1095 = vmul.f32 %v866, %v465
    %v1096 = vmul.f32 %v866, %v469
    %v1097 = vmul.f32 %v866, %v473
    %v1098 = vmul.f32 %v866, %v477
    %v1099 = vmul.f32 %v866, %v481
    %v1100 = vmul.f32 %v866, %v485
    %v1101 = vmul.f32 %v866, %v489
    %v1102 = vmul.f32 %v866, %v493
    %v1103 = vmul.f32 %v870, %v433
    %v1104 = vmul.f32 %v870, %v437
    %v1105 = vmul.f32 %v870, %v441
    %v1106 = vmul.f32 %v870, %v445
    %v1107 = vmul.f32 %v870, %v449
    %v1108 = vmul.f32 %v870, %v453
    %v1109 = vmul.f32 %v870, %v457
    %v1110 = vmul.f32 %v870, %v461
    %v1111 = vmul.f32 %v870, %v465
    %v1112 = vmul.f32 %v870, %v469
    %v1113 = vmul.f32 %v870, %v473
    %v1114 = vmul.f32 %v870, %v477
    %v1115 = vmul.f32 %v870, %v481
    %v1116 = vmul.f32 %v870, %v485
    %v1117 = vmul.f32 %v870, %v489
    %v1118 = vmul.f32 %v870, %v493
    %v1119 = vmul.f32 %v874, %v433
    %v1120 = vmul.f32 %v874, %v437
    %v1121 = vmul.f32 %v874, %v441
    %v1122 = vmul.f32 %v874, %v445
    %v1123 = vmul.f32 %v874, %v449
    %v1124 = vmul.f32 %v874, %v453
    %v1125 = vmul.f32 %v874, %v457
    %v1126 = vmul.f32 %v874, %v461
    %v1127 = vmul.f32 %v874, %v465
    %v1128 = vmul.f32 %v874, %v469
    %v1129 = vmul.f32 %v874, %v473
    %v1130 = vmul.f32 %v874, %v477
    %v1131 = vmul.f32 %v874, %v481
    %v1132 = vmul.f32 %v874, %v485
    %v1133 = vmul.f32 %v874, %v489
    %v1134 = vmul.f32 %v874, %v493
    %v1135 = vmul.f32 %v878, %v433
    %v1136 = vmul.f32 %v878, %v437
    %v1137 = vmul.f32 %v878, %v441
    %v1138 = vmul.f32 %v878, %v445
    %v1139 = vmul.f32 %v878, %v449
    %v1140 = vmul.f32 %v878, %v453
    %v1141 = vmul.f32 %v878, %v457
    %v1142 = vmul.f32 %v878, %v461
    %v1143 = vmul.f32 %v878, %v465
    %v1144 = vmul.f32 %v878, %v469
    %v1145 = vmul.f32 %v878, %v473
    %v1146 = vmul.f32 %v878, %v477
    %v1147 = vmul.f32 %v878, %v481
    %v1148 = vmul.f32 %v878, %v485
    %v1149 = vmul.f32 %v878, %v489
    %v1150 = vmul.f32 %v878, %v493
    %v1153 = vcombine.high %v706, %v706
    %v1155 = vunpack.c.l.s4 1966171168
    %v1156 = vunpack.c.0.s8 %v1155
    %v1157 = vlaneseq
    %v1158 = vshrl.u32 %v1157, 7
    %v1159 = vsub.s32 %v1156, %v1158
    %v1160 = vrot.slane %v706, %v1159
    %v1162 = vunpack.c.l.s4 1966171168
    %v1163 = vunpack.c.0.s8 %v1162
    %v1164 = vlaneseq
    %v1165 = vshrl.u32 %v1164, 7
    %v1166 = vsub.s32 %v1163, %v1165
    %v1167 = vrot.slane %v1153, %v1166
    %v1168 = vcombine.high %v1160, %v1160
    %v1169 = vcombine.high %v1167, %v1167
    %v1171 = vunpack.c.l.s4 1966171168
    %v1172 = vunpack.c.0.s8 %v1171
    %v1173 = vlaneseq
    %v1174 = vshrl.u32 %v1173, 7
    %v1175 = vsub.s32 %v1172, %v1174
    %v1176 = vrot.slane %v1160, %v1175
    %v1178 = vunpack.c.l.s4 1966171168
    %v1179 = vunpack.c.0.s8 %v1178
    %v1180 = vlaneseq
    %v1181 = vshrl.u32 %v1180, 7
    %v1182 = vsub.s32 %v1179, %v1181
    %v1183 = vrot.slane %v1167, %v1182
    %v1185 = vunpack.c.l.s4 1966171168
    %v1186 = vunpack.c.0.s8 %v1185
    %v1187 = vlaneseq
    %v1188 = vshrl.u32 %v1187, 7
    %v1189 = vsub.s32 %v1186, %v1188
    %v1190 = vrot.slane %v1168, %v1189
    %v1192 = vunpack.c.l.s4 1966171168
    %v1193 = vunpack.c.0.s8 %v1192
    %v1194 = vlaneseq
    %v1195 = vshrl.u32 %v1194, 7
    %v1196 = vsub.s32 %v1193, %v1195
    %v1197 = vrot.slane %v1169, %v1196
    %v1198 = vcombine.high %v1176, %v1176
    %v1199 = vcombine.high %v1183, %v1183
    %v1200 = vcombine.high %v1190, %v1190
    %v1201 = vcombine.high %v1197, %v1197
    %v1202 = vcombine.high %v707, %v707
    %v1204 = vunpack.c.l.s4 1966171168
    %v1205 = vunpack.c.0.s8 %v1204
    %v1206 = vlaneseq
    %v1207 = vshrl.u32 %v1206, 7
    %v1208 = vsub.s32 %v1205, %v1207
    %v1209 = vrot.slane %v707, %v1208
    %v1211 = vunpack.c.l.s4 1966171168
    %v1212 = vunpack.c.0.s8 %v1211
    %v1213 = vlaneseq
    %v1214 = vshrl.u32 %v1213, 7
    %v1215 = vsub.s32 %v1212, %v1214
    %v1216 = vrot.slane %v1202, %v1215
    %v1217 = vcombine.high %v1209, %v1209
    %v1218 = vcombine.high %v1216, %v1216
    %v1220 = vunpack.c.l.s4 1966171168
    %v1221 = vunpack.c.0.s8 %v1220
    %v1222 = vlaneseq
    %v1223 = vshrl.u32 %v1222, 7
    %v1224 = vsub.s32 %v1221, %v1223
    %v1225 = vrot.slane %v1209, %v1224
    %v1227 = vunpack.c.l.s4 1966171168
    %v1228 = vunpack.c.0.s8 %v1227
    %v1229 = vlaneseq
    %v1230 = vshrl.u32 %v1229, 7
    %v1231 = vsub.s32 %v1228, %v1230
    %v1232 = vrot.slane %v1216, %v1231
    %v1234 = vunpack.c.l.s4 1966171168
    %v1235 = vunpack.c.0.s8 %v1234
    %v1236 = vlaneseq
    %v1237 = vshrl.u32 %v1236, 7
    %v1238 = vsub.s32 %v1235, %v1237
    %v1239 = vrot.slane %v1217, %v1238
    %v1241 = vunpack.c.l.s4 1966171168
    %v1242 = vunpack.c.0.s8 %v1241
    %v1243 = vlaneseq
    %v1244 = vshrl.u32 %v1243, 7
    %v1245 = vsub.s32 %v1242, %v1244
    %v1246 = vrot.slane %v1218, %v1245
    %v1247 = vcombine.high %v1225, %v1225
    %v1248 = vcombine.high %v1232, %v1232
    %v1249 = vcombine.high %v1239, %v1239
    %v1250 = vcombine.high %v1246, %v1246
    %v1251 = vlaneseq
    %v1252 = vshrl.u32 %v1251, 7
    %v1253 = vsub.s32 0, %v1252
    %v1254 = vrot.slane %v1176, %v1253
    %v1255 = vlaneseq
    %v1256 = vshrl.u32 %v1255, 7
    %v1257 = vsub.s32 0, %v1256
    %v1258 = vrot.slane %v1190, %v1257
    %v1259 = vlaneseq
    %v1260 = vshrl.u32 %v1259, 7
    %v1261 = vsub.s32 0, %v1260
    %v1262 = vrot.slane %v1198, %v1261
    %v1263 = vlaneseq
    %v1264 = vshrl.u32 %v1263, 7
    %v1265 = vsub.s32 0, %v1264
    %v1266 = vrot.slane %v1200, %v1265
    %v1267 = vlaneseq
    %v1268 = vshrl.u32 %v1267, 7
    %v1269 = vsub.s32 0, %v1268
    %v1270 = vrot.slane %v1183, %v1269
    %v1271 = vlaneseq
    %v1272 = vshrl.u32 %v1271, 7
    %v1273 = vsub.s32 0, %v1272
    %v1274 = vrot.slane %v1197, %v1273
    %v1275 = vlaneseq
    %v1276 = vshrl.u32 %v1275, 7
    %v1277 = vsub.s32 0, %v1276
    %v1278 = vrot.slane %v1199, %v1277
    %v1279 = vlaneseq
    %v1280 = vshrl.u32 %v1279, 7
    %v1281 = vsub.s32 0, %v1280
    %v1282 = vrot.slane %v1201, %v1281
    %v1283 = vlaneseq
    %v1284 = vshrl.u32 %v1283, 7
    %v1285 = vsub.s32 0, %v1284
    %v1286 = vrot.slane %v1225, %v1285
    %v1287 = vlaneseq
    %v1288 = vshrl.u32 %v1287, 7
    %v1289 = vsub.s32 0, %v1288
    %v1290 = vrot.slane %v1239, %v1289
    %v1291 = vlaneseq
    %v1292 = vshrl.u32 %v1291, 7
    %v1293 = vsub.s32 0, %v1292
    %v1294 = vrot.slane %v1247, %v1293
    %v1295 = vlaneseq
    %v1296 = vshrl.u32 %v1295, 7
    %v1297 = vsub.s32 0, %v1296
    %v1298 = vrot.slane %v1249, %v1297
    %v1299 = vlaneseq
    %v1300 = vshrl.u32 %v1299, 7
    %v1301 = vsub.s32 0, %v1300
    %v1302 = vrot.slane %v1232, %v1301
    %v1303 = vlaneseq
    %v1304 = vshrl.u32 %v1303, 7
    %v1305 = vsub.s32 0, %v1304
    %v1306 = vrot.slane %v1246, %v1305
    %v1307 = vlaneseq
    %v1308 = vshrl.u32 %v1307, 7
    %v1309 = vsub.s32 0, %v1308
    %v1310 = vrot.slane %v1248, %v1309
    %v1311 = vlaneseq
    %v1312 = vshrl.u32 %v1311, 7
    %v1313 = vsub.s32 0, %v1312
    %v1314 = vrot.slane %v1250, %v1313
    %v1331 = vmul.f32 %v1254, %v500
    %v1332 = vmul.f32 %v1254, %v504
    %v1333 = vmul.f32 %v1254, %v508
    %v1334 = vmul.f32 %v1254, %v512
    %v1335 = vmul.f32 %v1254, %v516
    %v1336 = vmul.f32 %v1254, %v520
    %v1337 = vmul.f32 %v1254, %v524
    %v1338 = vmul.f32 %v1254, %v528
    %v1339 = vmul.f32 %v1254, %v532
    %v1340 = vmul.f32 %v1254, %v536
    %v1341 = vmul.f32 %v1254, %v540
    %v1342 = vmul.f32 %v1254, %v544
    %v1343 = vmul.f32 %v1254, %v548
    %v1344 = vmul.f32 %v1254, %v552
    %v1345 = vmul.f32 %v1254, %v556
    %v1346 = vmul.f32 %v1254, %v560
    %v1347 = vmul.f32 %v1258, %v500
    %v1348 = vmul.f32 %v1258, %v504
    %v1349 = vmul.f32 %v1258, %v508
    %v1350 = vmul.f32 %v1258, %v512
    %v1351 = vmul.f32 %v1258, %v516
    %v1352 = vmul.f32 %v1258, %v520
    %v1353 = vmul.f32 %v1258, %v524
    %v1354 = vmul.f32 %v1258, %v528
    %v1355 = vmul.f32 %v1258, %v532
    %v1356 = vmul.f32 %v1258, %v536
    %v1357 = vmul.f32 %v1258, %v540
    %v1358 = vmul.f32 %v1258, %v544
    %v1359 = vmul.f32 %v1258, %v548
    %v1360 = vmul.f32 %v1258, %v552
    %v1361 = vmul.f32 %v1258, %v556
    %v1362 = vmul.f32 %v1258, %v560
    %v1363 = vmul.f32 %v1262, %v500
    %v1364 = vmul.f32 %v1262, %v504
    %v1365 = vmul.f32 %v1262, %v508
    %v1366 = vmul.f32 %v1262, %v512
    %v1367 = vmul.f32 %v1262, %v516
    %v1368 = vmul.f32 %v1262, %v520
    %v1369 = vmul.f32 %v1262, %v524
    %v1370 = vmul.f32 %v1262, %v528
    %v1371 = vmul.f32 %v1262, %v532
    %v1372 = vmul.f32 %v1262, %v536
    %v1373 = vmul.f32 %v1262, %v540
    %v1374 = vmul.f32 %v1262, %v544
    %v1375 = vmul.f32 %v1262, %v548
    %v1376 = vmul.f32 %v1262, %v552
    %v1377 = vmul.f32 %v1262, %v556
    %v1378 = vmul.f32 %v1262, %v560
    %v1379 = vmul.f32 %v1266, %v500
    %v1380 = vmul.f32 %v1266, %v504
    %v1381 = vmul.f32 %v1266, %v508
    %v1382 = vmul.f32 %v1266, %v512
    %v1383 = vmul.f32 %v1266, %v516
    %v1384 = vmul.f32 %v1266, %v520
    %v1385 = vmul.f32 %v1266, %v524
    %v1386 = vmul.f32 %v1266, %v528
    %v1387 = vmul.f32 %v1266, %v532
    %v1388 = vmul.f32 %v1266, %v536
    %v1389 = vmul.f32 %v1266, %v540
    %v1390 = vmul.f32 %v1266, %v544
    %v1391 = vmul.f32 %v1266, %v548
    %v1392 = vmul.f32 %v1266, %v552
    %v1393 = vmul.f32 %v1266, %v556
    %v1394 = vmul.f32 %v1266, %v560
    %v1395 = vmul.f32 %v1270, %v500
    %v1396 = vmul.f32 %v1270, %v504
    %v1397 = vmul.f32 %v1270, %v508
    %v1398 = vmul.f32 %v1270, %v512
    %v1399 = vmul.f32 %v1270, %v516
    %v1400 = vmul.f32 %v1270, %v520
    %v1401 = vmul.f32 %v1270, %v524
    %v1402 = vmul.f32 %v1270, %v528
    %v1403 = vmul.f32 %v1270, %v532
    %v1404 = vmul.f32 %v1270, %v536
    %v1405 = vmul.f32 %v1270, %v540
    %v1406 = vmul.f32 %v1270, %v544
    %v1407 = vmul.f32 %v1270, %v548
    %v1408 = vmul.f32 %v1270, %v552
    %v1409 = vmul.f32 %v1270, %v556
    %v1410 = vmul.f32 %v1270, %v560
    %v1411 = vmul.f32 %v1274, %v500
    %v1412 = vmul.f32 %v1274, %v504
    %v1413 = vmul.f32 %v1274, %v508
    %v1414 = vmul.f32 %v1274, %v512
    %v1415 = vmul.f32 %v1274, %v516
    %v1416 = vmul.f32 %v1274, %v520
    %v1417 = vmul.f32 %v1274, %v524
    %v1418 = vmul.f32 %v1274, %v528
    %v1419 = vmul.f32 %v1274, %v532
    %v1420 = vmul.f32 %v1274, %v536
    %v1421 = vmul.f32 %v1274, %v540
    %v1422 = vmul.f32 %v1274, %v544
    %v1423 = vmul.f32 %v1274, %v548
    %v1424 = vmul.f32 %v1274, %v552
    %v1425 = vmul.f32 %v1274, %v556
    %v1426 = vmul.f32 %v1274, %v560
    %v1427 = vmul.f32 %v1278, %v500
    %v1428 = vmul.f32 %v1278, %v504
    %v1429 = vmul.f32 %v1278, %v508
    %v1430 = vmul.f32 %v1278, %v512
    %v1431 = vmul.f32 %v1278, %v516
    %v1432 = vmul.f32 %v1278, %v520
    %v1433 = vmul.f32 %v1278, %v524
    %v1434 = vmul.f32 %v1278, %v528
    %v1435 = vmul.f32 %v1278, %v532
    %v1436 = vmul.f32 %v1278, %v536
    %v1437 = vmul.f32 %v1278, %v540
    %v1438 = vmul.f32 %v1278, %v544
    %v1439 = vmul.f32 %v1278, %v548
    %v1440 = vmul.f32 %v1278, %v552
    %v1441 = vmul.f32 %v1278, %v556
    %v1442 = vmul.f32 %v1278, %v560
    %v1443 = vmul.f32 %v1282, %v500
    %v1444 = vmul.f32 %v1282, %v504
    %v1445 = vmul.f32 %v1282, %v508
    %v1446 = vmul.f32 %v1282, %v512
    %v1447 = vmul.f32 %v1282, %v516
    %v1448 = vmul.f32 %v1282, %v520
    %v1449 = vmul.f32 %v1282, %v524
    %v1450 = vmul.f32 %v1282, %v528
    %v1451 = vmul.f32 %v1282, %v532
    %v1452 = vmul.f32 %v1282, %v536
    %v1453 = vmul.f32 %v1282, %v540
    %v1454 = vmul.f32 %v1282, %v544
    %v1455 = vmul.f32 %v1282, %v548
    %v1456 = vmul.f32 %v1282, %v552
    %v1457 = vmul.f32 %v1282, %v556
    %v1458 = vmul.f32 %v1282, %v560
    %v1459 = vmul.f32 %v1286, %v500
    %v1460 = vmul.f32 %v1286, %v504
    %v1461 = vmul.f32 %v1286, %v508
    %v1462 = vmul.f32 %v1286, %v512
    %v1463 = vmul.f32 %v1286, %v516
    %v1464 = vmul.f32 %v1286, %v520
    %v1465 = vmul.f32 %v1286, %v524
    %v1466 = vmul.f32 %v1286, %v528
    %v1467 = vmul.f32 %v1286, %v532
    %v1468 = vmul.f32 %v1286, %v536
    %v1469 = vmul.f32 %v1286, %v540
    %v1470 = vmul.f32 %v1286, %v544
    %v1471 = vmul.f32 %v1286, %v548
    %v1472 = vmul.f32 %v1286, %v552
    %v1473 = vmul.f32 %v1286, %v556
    %v1474 = vmul.f32 %v1286, %v560
    %v1475 = vmul.f32 %v1290, %v500
    %v1476 = vmul.f32 %v1290, %v504
    %v1477 = vmul.f32 %v1290, %v508
    %v1478 = vmul.f32 %v1290, %v512
    %v1479 = vmul.f32 %v1290, %v516
    %v1480 = vmul.f32 %v1290, %v520
    %v1481 = vmul.f32 %v1290, %v524
    %v1482 = vmul.f32 %v1290, %v528
    %v1483 = vmul.f32 %v1290, %v532
    %v1484 = vmul.f32 %v1290, %v536
    %v1485 = vmul.f32 %v1290, %v540
    %v1486 = vmul.f32 %v1290, %v544
    %v1487 = vmul.f32 %v1290, %v548
    %v1488 = vmul.f32 %v1290, %v552
    %v1489 = vmul.f32 %v1290, %v556
    %v1490 = vmul.f32 %v1290, %v560
    %v1491 = vmul.f32 %v1294, %v500
    %v1492 = vmul.f32 %v1294, %v504
    %v1493 = vmul.f32 %v1294, %v508
    %v1494 = vmul.f32 %v1294, %v512
    %v1495 = vmul.f32 %v1294, %v516
    %v1496 = vmul.f32 %v1294, %v520
    %v1497 = vmul.f32 %v1294, %v524
    %v1498 = vmul.f32 %v1294, %v528
    %v1499 = vmul.f32 %v1294, %v532
    %v1500 = vmul.f32 %v1294, %v536
    %v1501 = vmul.f32 %v1294, %v540
    %v1502 = vmul.f32 %v1294, %v544
    %v1503 = vmul.f32 %v1294, %v548
    %v1504 = vmul.f32 %v1294, %v552
    %v1505 = vmul.f32 %v1294, %v556
    %v1506 = vmul.f32 %v1294, %v560
    %v1507 = vmul.f32 %v1298, %v500
    %v1508 = vmul.f32 %v1298, %v504
    %v1509 = vmul.f32 %v1298, %v508
    %v1510 = vmul.f32 %v1298, %v512
    %v1511 = vmul.f32 %v1298, %v516
    %v1512 = vmul.f32 %v1298, %v520
    %v1513 = vmul.f32 %v1298, %v524
    %v1514 = vmul.f32 %v1298, %v528
    %v1515 = vmul.f32 %v1298, %v532
    %v1516 = vmul.f32 %v1298, %v536
    %v1517 = vmul.f32 %v1298, %v540
    %v1518 = vmul.f32 %v1298, %v544
    %v1519 = vmul.f32 %v1298, %v548
    %v1520 = vmul.f32 %v1298, %v552
    %v1521 = vmul.f32 %v1298, %v556
    %v1522 = vmul.f32 %v1298, %v560
    %v1523 = vmul.f32 %v1302, %v500
    %v1524 = vmul.f32 %v1302, %v504
    %v1525 = vmul.f32 %v1302, %v508
    %v1526 = vmul.f32 %v1302, %v512
    %v1527 = vmul.f32 %v1302, %v516
    %v1528 = vmul.f32 %v1302, %v520
    %v1529 = vmul.f32 %v1302, %v524
    %v1530 = vmul.f32 %v1302, %v528
    %v1531 = vmul.f32 %v1302, %v532
    %v1532 = vmul.f32 %v1302, %v536
    %v1533 = vmul.f32 %v1302, %v540
    %v1534 = vmul.f32 %v1302, %v544
    %v1535 = vmul.f32 %v1302, %v548
    %v1536 = vmul.f32 %v1302, %v552
    %v1537 = vmul.f32 %v1302, %v556
    %v1538 = vmul.f32 %v1302, %v560
    %v1539 = vmul.f32 %v1306, %v500
    %v1540 = vmul.f32 %v1306, %v504
    %v1541 = vmul.f32 %v1306, %v508
    %v1542 = vmul.f32 %v1306, %v512
    %v1543 = vmul.f32 %v1306, %v516
    %v1544 = vmul.f32 %v1306, %v520
    %v1545 = vmul.f32 %v1306, %v524
    %v1546 = vmul.f32 %v1306, %v528
    %v1547 = vmul.f32 %v1306, %v532
    %v1548 = vmul.f32 %v1306, %v536
    %v1549 = vmul.f32 %v1306, %v540
    %v1550 = vmul.f32 %v1306, %v544
    %v1551 = vmul.f32 %v1306, %v548
    %v1552 = vmul.f32 %v1306, %v552
    %v1553 = vmul.f32 %v1306, %v556
    %v1554 = vmul.f32 %v1306, %v560
    %v1555 = vmul.f32 %v1310, %v500
    %v1556 = vmul.f32 %v1310, %v504
    %v1557 = vmul.f32 %v1310, %v508
    %v1558 = vmul.f32 %v1310, %v512
    %v1559 = vmul.f32 %v1310, %v516
    %v1560 = vmul.f32 %v1310, %v520
    %v1561 = vmul.f32 %v1310, %v524
    %v1562 = vmul.f32 %v1310, %v528
    %v1563 = vmul.f32 %v1310, %v532
    %v1564 = vmul.f32 %v1310, %v536
    %v1565 = vmul.f32 %v1310, %v540
    %v1566 = vmul.f32 %v1310, %v544
    %v1567 = vmul.f32 %v1310, %v548
    %v1568 = vmul.f32 %v1310, %v552
    %v1569 = vmul.f32 %v1310, %v556
    %v1570 = vmul.f32 %v1310, %v560
    %v1571 = vmul.f32 %v1314, %v500
    %v1572 = vmul.f32 %v1314, %v504
    %v1573 = vmul.f32 %v1314, %v508
    %v1574 = vmul.f32 %v1314, %v512
    %v1575 = vmul.f32 %v1314, %v516
    %v1576 = vmul.f32 %v1314, %v520
    %v1577 = vmul.f32 %v1314, %v524
    %v1578 = vmul.f32 %v1314, %v528
    %v1579 = vmul.f32 %v1314, %v532
    %v1580 = vmul.f32 %v1314, %v536
    %v1581 = vmul.f32 %v1314, %v540
    %v1582 = vmul.f32 %v1314, %v544
    %v1583 = vmul.f32 %v1314, %v548
    %v1584 = vmul.f32 %v1314, %v552
    %v1585 = vmul.f32 %v1314, %v556
    %v1586 = vmul.f32 %v1314, %v560
    %v1587 = vadd.f32 %v895, %v1331
    %v1588 = vadd.f32 %v896, %v1332
    %v1589 = vadd.f32 %v897, %v1333
    %v1590 = vadd.f32 %v898, %v1334
    %v1591 = vadd.f32 %v899, %v1335
    %v1592 = vadd.f32 %v900, %v1336
    %v1593 = vadd.f32 %v901, %v1337
    %v1594 = vadd.f32 %v902, %v1338
    %v1595 = vadd.f32 %v903, %v1339
    %v1596 = vadd.f32 %v904, %v1340
    %v1597 = vadd.f32 %v905, %v1341
    %v1598 = vadd.f32 %v906, %v1342
    %v1599 = vadd.f32 %v907, %v1343
    %v1600 = vadd.f32 %v908, %v1344
    %v1601 = vadd.f32 %v909, %v1345
    %v1602 = vadd.f32 %v910, %v1346
    %v1603 = vadd.f32 %v911, %v1347
    %v1604 = vadd.f32 %v912, %v1348
    %v1605 = vadd.f32 %v913, %v1349
    %v1606 = vadd.f32 %v914, %v1350
    %v1607 = vadd.f32 %v915, %v1351
    %v1608 = vadd.f32 %v916, %v1352
    %v1609 = vadd.f32 %v917, %v1353
    %v1610 = vadd.f32 %v918, %v1354
    %v1611 = vadd.f32 %v919, %v1355
    %v1612 = vadd.f32 %v920, %v1356
    %v1613 = vadd.f32 %v921, %v1357
    %v1614 = vadd.f32 %v922, %v1358
    %v1615 = vadd.f32 %v923, %v1359
    %v1616 = vadd.f32 %v924, %v1360
    %v1617 = vadd.f32 %v925, %v1361
    %v1618 = vadd.f32 %v926, %v1362
    %v1619 = vadd.f32 %v927, %v1363
    %v1620 = vadd.f32 %v928, %v1364
    %v1621 = vadd.f32 %v929, %v1365
    %v1622 = vadd.f32 %v930, %v1366
    %v1623 = vadd.f32 %v931, %v1367
    %v1624 = vadd.f32 %v932, %v1368
    %v1625 = vadd.f32 %v933, %v1369
    %v1626 = vadd.f32 %v934, %v1370
    %v1627 = vadd.f32 %v935, %v1371
    %v1628 = vadd.f32 %v936, %v1372
    %v1629 = vadd.f32 %v937, %v1373
    %v1630 = vadd.f32 %v938, %v1374
    %v1631 = vadd.f32 %v939, %v1375
    %v1632 = vadd.f32 %v940, %v1376
    %v1633 = vadd.f32 %v941, %v1377
    %v1634 = vadd.f32 %v942, %v1378
    %v1635 = vadd.f32 %v943, %v1379
    %v1636 = vadd.f32 %v944, %v1380
    %v1637 = vadd.f32 %v945, %v1381
    %v1638 = vadd.f32 %v946, %v1382
    %v1639 = vadd.f32 %v947, %v1383
    %v1640 = vadd.f32 %v948, %v1384
    %v1641 = vadd.f32 %v949, %v1385
    %v1642 = vadd.f32 %v950, %v1386
    %v1643 = vadd.f32 %v951, %v1387
    %v1644 = vadd.f32 %v952, %v1388
    %v1645 = vadd.f32 %v953, %v1389
    %v1646 = vadd.f32 %v954, %v1390
    %v1647 = vadd.f32 %v955, %v1391
    %v1648 = vadd.f32 %v956, %v1392
    %v1649 = vadd.f32 %v957, %v1393
    %v1650 = vadd.f32 %v958, %v1394
    %v1651 = vadd.f32 %v959, %v1395
    %v1652 = vadd.f32 %v960, %v1396
    %v1653 = vadd.f32 %v961, %v1397
    %v1654 = vadd.f32 %v962, %v1398
    %v1655 = vadd.f32 %v963, %v1399
    %v1656 = vadd.f32 %v964, %v1400
    %v1657 = vadd.f32 %v965, %v1401
    %v1658 = vadd.f32 %v966, %v1402
    %v1659 = vadd.f32 %v967, %v1403
    %v1660 = vadd.f32 %v968, %v1404
    %v1661 = vadd.f32 %v969, %v1405
    %v1662 = vadd.f32 %v970, %v1406
    %v1663 = vadd.f32 %v971, %v1407
    %v1664 = vadd.f32 %v972, %v1408
    %v1665 = vadd.f32 %v973, %v1409
    %v1666 = vadd.f32 %v974, %v1410
    %v1667 = vadd.f32 %v975, %v1411
    %v1668 = vadd.f32 %v976, %v1412
    %v1669 = vadd.f32 %v977, %v1413
    %v1670 = vadd.f32 %v978, %v1414
    %v1671 = vadd.f32 %v979, %v1415
    %v1672 = vadd.f32 %v980, %v1416
    %v1673 = vadd.f32 %v981, %v1417
    %v1674 = vadd.f32 %v982, %v1418
    %v1675 = vadd.f32 %v983, %v1419
    %v1676 = vadd.f32 %v984, %v1420
    %v1677 = vadd.f32 %v985, %v1421
    %v1678 = vadd.f32 %v986, %v1422
    %v1679 = vadd.f32 %v987, %v1423
    %v1680 = vadd.f32 %v988, %v1424
    %v1681 = vadd.f32 %v989, %v1425
    %v1682 = vadd.f32 %v990, %v1426
    %v1683 = vadd.f32 %v991, %v1427
    %v1684 = vadd.f32 %v992, %v1428
    %v1685 = vadd.f32 %v993, %v1429
    %v1686 = vadd.f32 %v994, %v1430
    %v1687 = vadd.f32 %v995, %v1431
    %v1688 = vadd.f32 %v996, %v1432
    %v1689 = vadd.f32 %v997, %v1433
    %v1690 = vadd.f32 %v998, %v1434
    %v1691 = vadd.f32 %v999, %v1435
    %v1692 = vadd.f32 %v1000, %v1436
    %v1693 = vadd.f32 %v1001, %v1437
    %v1694 = vadd.f32 %v1002, %v1438
    %v1695 = vadd.f32 %v1003, %v1439
    %v1696 = vadd.f32 %v1004, %v1440
    %v1697 = vadd.f32 %v1005, %v1441
    %v1698 = vadd.f32 %v1006, %v1442
    %v1699 = vadd.f32 %v1007, %v1443
    %v1700 = vadd.f32 %v1008, %v1444
    %v1701 = vadd.f32 %v1009, %v1445
    %v1702 = vadd.f32 %v1010, %v1446
    %v1703 = vadd.f32 %v1011, %v1447
    %v1704 = vadd.f32 %v1012, %v1448
    %v1705 = vadd.f32 %v1013, %v1449
    %v1706 = vadd.f32 %v1014, %v1450
    %v1707 = vadd.f32 %v1015, %v1451
    %v1708 = vadd.f32 %v1016, %v1452
    %v1709 = vadd.f32 %v1017, %v1453
    %v1710 = vadd.f32 %v1018, %v1454
    %v1711 = vadd.f32 %v1019, %v1455
    %v1712 = vadd.f32 %v1020, %v1456
    %v1713 = vadd.f32 %v1021, %v1457
    %v1714 = vadd.f32 %v1022, %v1458
    %v1715 = vadd.f32 %v1023, %v1459
    %v1716 = vadd.f32 %v1024, %v1460
    %v1717 = vadd.f32 %v1025, %v1461
    %v1718 = vadd.f32 %v1026, %v1462
    %v1719 = vadd.f32 %v1027, %v1463
    %v1720 = vadd.f32 %v1028, %v1464
    %v1721 = vadd.f32 %v1029, %v1465
    %v1722 = vadd.f32 %v1030, %v1466
    %v1723 = vadd.f32 %v1031, %v1467
    %v1724 = vadd.f32 %v1032, %v1468
    %v1725 = vadd.f32 %v1033, %v1469
    %v1726 = vadd.f32 %v1034, %v1470
    %v1727 = vadd.f32 %v1035, %v1471
    %v1728 = vadd.f32 %v1036, %v1472
    %v1729 = vadd.f32 %v1037, %v1473
    %v1730 = vadd.f32 %v1038, %v1474
    %v1731 = vadd.f32 %v1039, %v1475
    %v1732 = vadd.f32 %v1040, %v1476
    %v1733 = vadd.f32 %v1041, %v1477
    %v1734 = vadd.f32 %v1042, %v1478
    %v1735 = vadd.f32 %v1043, %v1479
    %v1736 = vadd.f32 %v1044, %v1480
    %v1737 = vadd.f32 %v1045, %v1481
    %v1738 = vadd.f32 %v1046, %v1482
    %v1739 = vadd.f32 %v1047, %v1483
    %v1740 = vadd.f32 %v1048, %v1484
    %v1741 = vadd.f32 %v1049, %v1485
    %v1742 = vadd.f32 %v1050, %v1486
    %v1743 = vadd.f32 %v1051, %v1487
    %v1744 = vadd.f32 %v1052, %v1488
    %v1745 = vadd.f32 %v1053, %v1489
    %v1746 = vadd.f32 %v1054, %v1490
    %v1747 = vadd.f32 %v1055, %v1491
    %v1748 = vadd.f32 %v1056, %v1492
    %v1749 = vadd.f32 %v1057, %v1493
    %v1750 = vadd.f32 %v1058, %v1494
    %v1751 = vadd.f32 %v1059, %v1495
    %v1752 = vadd.f32 %v1060, %v1496
    %v1753 = vadd.f32 %v1061, %v1497
    %v1754 = vadd.f32 %v1062, %v1498
    %v1755 = vadd.f32 %v1063, %v1499
    %v1756 = vadd.f32 %v1064, %v1500
    %v1757 = vadd.f32 %v1065, %v1501
    %v1758 = vadd.f32 %v1066, %v1502
    %v1759 = vadd.f32 %v1067, %v1503
    %v1760 = vadd.f32 %v1068, %v1504
    %v1761 = vadd.f32 %v1069, %v1505
    %v1762 = vadd.f32 %v1070, %v1506
    %v1763 = vadd.f32 %v1071, %v1507
    %v1764 = vadd.f32 %v1072, %v1508
    %v1765 = vadd.f32 %v1073, %v1509
    %v1766 = vadd.f32 %v1074, %v1510
    %v1767 = vadd.f32 %v1075, %v1511
    %v1768 = vadd.f32 %v1076, %v1512
    %v1769 = vadd.f32 %v1077, %v1513
    %v1770 = vadd.f32 %v1078, %v1514
    %v1771 = vadd.f32 %v1079, %v1515
    %v1772 = vadd.f32 %v1080, %v1516
    %v1773 = vadd.f32 %v1081, %v1517
    %v1774 = vadd.f32 %v1082, %v1518
    %v1775 = vadd.f32 %v1083, %v1519
    %v1776 = vadd.f32 %v1084, %v1520
    %v1777 = vadd.f32 %v1085, %v1521
    %v1778 = vadd.f32 %v1086, %v1522
    %v1779 = vadd.f32 %v1087, %v1523
    %v1780 = vadd.f32 %v1088, %v1524
    %v1781 = vadd.f32 %v1089, %v1525
    %v1782 = vadd.f32 %v1090, %v1526
    %v1783 = vadd.f32 %v1091, %v1527
    %v1784 = vadd.f32 %v1092, %v1528
    %v1785 = vadd.f32 %v1093, %v1529
    %v1786 = vadd.f32 %v1094, %v1530
    %v1787 = vadd.f32 %v1095, %v1531
    %v1788 = vadd.f32 %v1096, %v1532
    %v1789 = vadd.f32 %v1097, %v1533
    %v1790 = vadd.f32 %v1098, %v1534
    %v1791 = vadd.f32 %v1099, %v1535
    %v1792 = vadd.f32 %v1100, %v1536
    %v1793 = vadd.f32 %v1101, %v1537
    %v1794 = vadd.f32 %v1102, %v1538
    %v1795 = vadd.f32 %v1103, %v1539
    %v1796 = vadd.f32 %v1104, %v1540
    %v1797 = vadd.f32 %v1105, %v1541
    %v1798 = vadd.f32 %v1106, %v1542
    %v1799 = vadd.f32 %v1107, %v1543
    %v1800 = vadd.f32 %v1108, %v1544
    %v1801 = vadd.f32 %v1109, %v1545
    %v1802 = vadd.f32 %v1110, %v1546
    %v1803 = vadd.f32 %v1111, %v1547
    %v1804 = vadd.f32 %v1112, %v1548
    %v1805 = vadd.f32 %v1113, %v1549
    %v1806 = vadd.f32 %v1114, %v1550
    %v1807 = vadd.f32 %v1115, %v1551
    %v1808 = vadd.f32 %v1116, %v1552
    %v1809 = vadd.f32 %v1117, %v1553
    %v1810 = vadd.f32 %v1118, %v1554
    %v1811 = vadd.f32 %v1119, %v1555
    %v1812 = vadd.f32 %v1120, %v1556
    %v1813 = vadd.f32 %v1121, %v1557
    %v1814 = vadd.f32 %v1122, %v1558
    %v1815 = vadd.f32 %v1123, %v1559
    %v1816 = vadd.f32 %v1124, %v1560
    %v1817 = vadd.f32 %v1125, %v1561
    %v1818 = vadd.f32 %v1126, %v1562
    %v1819 = vadd.f32 %v1127, %v1563
    %v1820 = vadd.f32 %v1128, %v1564
    %v1821 = vadd.f32 %v1129, %v1565
    %v1822 = vadd.f32 %v1130, %v1566
    %v1823 = vadd.f32 %v1131, %v1567
    %v1824 = vadd.f32 %v1132, %v1568
    %v1825 = vadd.f32 %v1133, %v1569
    %v1826 = vadd.f32 %v1134, %v1570
    %v1827 = vadd.f32 %v1135, %v1571
    %v1828 = vadd.f32 %v1136, %v1572
    %v1829 = vadd.f32 %v1137, %v1573
    %v1830 = vadd.f32 %v1138, %v1574
    %v1831 = vadd.f32 %v1139, %v1575
    %v1832 = vadd.f32 %v1140, %v1576
    %v1833 = vadd.f32 %v1141, %v1577
    %v1834 = vadd.f32 %v1142, %v1578
    %v1835 = vadd.f32 %v1143, %v1579
    %v1836 = vadd.f32 %v1144, %v1580
    %v1837 = vadd.f32 %v1145, %v1581
    %v1838 = vadd.f32 %v1146, %v1582
    %v1839 = vadd.f32 %v1147, %v1583
    %v1840 = vadd.f32 %v1148, %v1584
    %v1841 = vadd.f32 %v1149, %v1585
    %v1842 = vadd.f32 %v1150, %v1586
    %v1845 = vcombine.high %v713, %v713
    %v1847 = vunpack.c.l.s4 1966171168
    %v1848 = vunpack.c.0.s8 %v1847
    %v1849 = vlaneseq
    %v1850 = vshrl.u32 %v1849, 7
    %v1851 = vsub.s32 %v1848, %v1850
    %v1852 = vrot.slane %v713, %v1851
    %v1854 = vunpack.c.l.s4 1966171168
    %v1855 = vunpack.c.0.s8 %v1854
    %v1856 = vlaneseq
    %v1857 = vshrl.u32 %v1856, 7
    %v1858 = vsub.s32 %v1855, %v1857
    %v1859 = vrot.slane %v1845, %v1858
    %v1860 = vcombine.high %v1852, %v1852
    %v1861 = vcombine.high %v1859, %v1859
    %v1863 = vunpack.c.l.s4 1966171168
    %v1864 = vunpack.c.0.s8 %v1863
    %v1865 = vlaneseq
    %v1866 = vshrl.u32 %v1865, 7
    %v1867 = vsub.s32 %v1864, %v1866
    %v1868 = vrot.slane %v1852, %v1867
    %v1870 = vunpack.c.l.s4 1966171168
    %v1871 = vunpack.c.0.s8 %v1870
    %v1872 = vlaneseq
    %v1873 = vshrl.u32 %v1872, 7
    %v1874 = vsub.s32 %v1871, %v1873
    %v1875 = vrot.slane %v1859, %v1874
    %v1877 = vunpack.c.l.s4 1966171168
    %v1878 = vunpack.c.0.s8 %v1877
    %v1879 = vlaneseq
    %v1880 = vshrl.u32 %v1879, 7
    %v1881 = vsub.s32 %v1878, %v1880
    %v1882 = vrot.slane %v1860, %v1881
    %v1884 = vunpack.c.l.s4 1966171168
    %v1885 = vunpack.c.0.s8 %v1884
    %v1886 = vlaneseq
    %v1887 = vshrl.u32 %v1886, 7
    %v1888 = vsub.s32 %v1885, %v1887
    %v1889 = vrot.slane %v1861, %v1888
    %v1890 = vcombine.high %v1868, %v1868
    %v1891 = vcombine.high %v1875, %v1875
    %v1892 = vcombine.high %v1882, %v1882
    %v1893 = vcombine.high %v1889, %v1889
    %v1894 = vcombine.high %v714, %v714
    %v1896 = vunpack.c.l.s4 1966171168
    %v1897 = vunpack.c.0.s8 %v1896
    %v1898 = vlaneseq
    %v1899 = vshrl.u32 %v1898, 7
    %v1900 = vsub.s32 %v1897, %v1899
    %v1901 = vrot.slane %v714, %v1900
    %v1903 = vunpack.c.l.s4 1966171168
    %v1904 = vunpack.c.0.s8 %v1903
    %v1905 = vlaneseq
    %v1906 = vshrl.u32 %v1905, 7
    %v1907 = vsub.s32 %v1904, %v1906
    %v1908 = vrot.slane %v1894, %v1907
    %v1909 = vcombine.high %v1901, %v1901
    %v1910 = vcombine.high %v1908, %v1908
    %v1912 = vunpack.c.l.s4 1966171168
    %v1913 = vunpack.c.0.s8 %v1912
    %v1914 = vlaneseq
    %v1915 = vshrl.u32 %v1914, 7
    %v1916 = vsub.s32 %v1913, %v1915
    %v1917 = vrot.slane %v1901, %v1916
    %v1919 = vunpack.c.l.s4 1966171168
    %v1920 = vunpack.c.0.s8 %v1919
    %v1921 = vlaneseq
    %v1922 = vshrl.u32 %v1921, 7
    %v1923 = vsub.s32 %v1920, %v1922
    %v1924 = vrot.slane %v1908, %v1923
    %v1926 = vunpack.c.l.s4 1966171168
    %v1927 = vunpack.c.0.s8 %v1926
    %v1928 = vlaneseq
    %v1929 = vshrl.u32 %v1928, 7
    %v1930 = vsub.s32 %v1927, %v1929
    %v1931 = vrot.slane %v1909, %v1930
    %v1933 = vunpack.c.l.s4 1966171168
    %v1934 = vunpack.c.0.s8 %v1933
    %v1935 = vlaneseq
    %v1936 = vshrl.u32 %v1935, 7
    %v1937 = vsub.s32 %v1934, %v1936
    %v1938 = vrot.slane %v1910, %v1937
    %v1939 = vcombine.high %v1917, %v1917
    %v1940 = vcombine.high %v1924, %v1924
    %v1941 = vcombine.high %v1931, %v1931
    %v1942 = vcombine.high %v1938, %v1938
    %v1943 = vlaneseq
    %v1944 = vshrl.u32 %v1943, 7
    %v1945 = vsub.s32 0, %v1944
    %v1946 = vrot.slane %v1868, %v1945
    %v1947 = vlaneseq
    %v1948 = vshrl.u32 %v1947, 7
    %v1949 = vsub.s32 0, %v1948
    %v1950 = vrot.slane %v1882, %v1949
    %v1951 = vlaneseq
    %v1952 = vshrl.u32 %v1951, 7
    %v1953 = vsub.s32 0, %v1952
    %v1954 = vrot.slane %v1890, %v1953
    %v1955 = vlaneseq
    %v1956 = vshrl.u32 %v1955, 7
    %v1957 = vsub.s32 0, %v1956
    %v1958 = vrot.slane %v1892, %v1957
    %v1959 = vlaneseq
    %v1960 = vshrl.u32 %v1959, 7
    %v1961 = vsub.s32 0, %v1960
    %v1962 = vrot.slane %v1875, %v1961
    %v1963 = vlaneseq
    %v1964 = vshrl.u32 %v1963, 7
    %v1965 = vsub.s32 0, %v1964
    %v1966 = vrot.slane %v1889, %v1965
    %v1967 = vlaneseq
    %v1968 = vshrl.u32 %v1967, 7
    %v1969 = vsub.s32 0, %v1968
    %v1970 = vrot.slane %v1891, %v1969
    %v1971 = vlaneseq
    %v1972 = vshrl.u32 %v1971, 7
    %v1973 = vsub.s32 0, %v1972
    %v1974 = vrot.slane %v1893, %v1973
    %v1975 = vlaneseq
    %v1976 = vshrl.u32 %v1975, 7
    %v1977 = vsub.s32 0, %v1976
    %v1978 = vrot.slane %v1917, %v1977
    %v1979 = vlaneseq
    %v1980 = vshrl.u32 %v1979, 7
    %v1981 = vsub.s32 0, %v1980
    %v1982 = vrot.slane %v1931, %v1981
    %v1983 = vlaneseq
    %v1984 = vshrl.u32 %v1983, 7
    %v1985 = vsub.s32 0, %v1984
    %v1986 = vrot.slane %v1939, %v1985
    %v1987 = vlaneseq
    %v1988 = vshrl.u32 %v1987, 7
    %v1989 = vsub.s32 0, %v1988
    %v1990 = vrot.slane %v1941, %v1989
    %v1991 = vlaneseq
    %v1992 = vshrl.u32 %v1991, 7
    %v1993 = vsub.s32 0, %v1992
    %v1994 = vrot.slane %v1924, %v1993
    %v1995 = vlaneseq
    %v1996 = vshrl.u32 %v1995, 7
    %v1997 = vsub.s32 0, %v1996
    %v1998 = vrot.slane %v1938, %v1997
    %v1999 = vlaneseq
    %v2000 = vshrl.u32 %v1999, 7
    %v2001 = vsub.s32 0, %v2000
    %v2002 = vrot.slane %v1940, %v2001
    %v2003 = vlaneseq
    %v2004 = vshrl.u32 %v2003, 7
    %v2005 = vsub.s32 0, %v2004
    %v2006 = vrot.slane %v1942, %v2005
    %v2023 = vmul.f32 %v1946, %v567
    %v2024 = vmul.f32 %v1946, %v571
    %v2025 = vmul.f32 %v1946, %v575
    %v2026 = vmul.f32 %v1946, %v579
    %v2027 = vmul.f32 %v1946, %v583
    %v2028 = vmul.f32 %v1946, %v587
    %v2029 = vmul.f32 %v1946, %v591
    %v2030 = vmul.f32 %v1946, %v595
    %v2031 = vmul.f32 %v1946, %v599
    %v2032 = vmul.f32 %v1946, %v603
    %v2033 = vmul.f32 %v1946, %v607
    %v2034 = vmul.f32 %v1946, %v611
    %v2035 = vmul.f32 %v1946, %v615
    %v2036 = vmul.f32 %v1946, %v619
    %v2037 = vmul.f32 %v1946, %v623
    %v2038 = vmul.f32 %v1946, %v627
    %v2039 = vmul.f32 %v1950, %v567
    %v2040 = vmul.f32 %v1950, %v571
    %v2041 = vmul.f32 %v1950, %v575
    %v2042 = vmul.f32 %v1950, %v579
    %v2043 = vmul.f32 %v1950, %v583
    %v2044 = vmul.f32 %v1950, %v587
    %v2045 = vmul.f32 %v1950, %v591
    %v2046 = vmul.f32 %v1950, %v595
    %v2047 = vmul.f32 %v1950, %v599
    %v2048 = vmul.f32 %v1950, %v603
    %v2049 = vmul.f32 %v1950, %v607
    %v2050 = vmul.f32 %v1950, %v611
    %v2051 = vmul.f32 %v1950, %v615
    %v2052 = vmul.f32 %v1950, %v619
    %v2053 = vmul.f32 %v1950, %v623
    %v2054 = vmul.f32 %v1950, %v627
    %v2055 = vmul.f32 %v1954, %v567
    %v2056 = vmul.f32 %v1954, %v571
    %v2057 = vmul.f32 %v1954, %v575
    %v2058 = vmul.f32 %v1954, %v579
    %v2059 = vmul.f32 %v1954, %v583
    %v2060 = vmul.f32 %v1954, %v587
    %v2061 = vmul.f32 %v1954, %v591
    %v2062 = vmul.f32 %v1954, %v595
    %v2063 = vmul.f32 %v1954, %v599
    %v2064 = vmul.f32 %v1954, %v603
    %v2065 = vmul.f32 %v1954, %v607
    %v2066 = vmul.f32 %v1954, %v611
    %v2067 = vmul.f32 %v1954, %v615
    %v2068 = vmul.f32 %v1954, %v619
    %v2069 = vmul.f32 %v1954, %v623
    %v2070 = vmul.f32 %v1954, %v627
    %v2071 = vmul.f32 %v1958, %v567
    %v2072 = vmul.f32 %v1958, %v571
    %v2073 = vmul.f32 %v1958, %v575
    %v2074 = vmul.f32 %v1958, %v579
    %v2075 = vmul.f32 %v1958, %v583
    %v2076 = vmul.f32 %v1958, %v587
    %v2077 = vmul.f32 %v1958, %v591
    %v2078 = vmul.f32 %v1958, %v595
    %v2079 = vmul.f32 %v1958, %v599
    %v2080 = vmul.f32 %v1958, %v603
    %v2081 = vmul.f32 %v1958, %v607
    %v2082 = vmul.f32 %v1958, %v611
    %v2083 = vmul.f32 %v1958, %v615
    %v2084 = vmul.f32 %v1958, %v619
    %v2085 = vmul.f32 %v1958, %v623
    %v2086 = vmul.f32 %v1958, %v627
    %v2087 = vmul.f32 %v1962, %v567
    %v2088 = vmul.f32 %v1962, %v571
    %v2089 = vmul.f32 %v1962, %v575
    %v2090 = vmul.f32 %v1962, %v579
    %v2091 = vmul.f32 %v1962, %v583
    %v2092 = vmul.f32 %v1962, %v587
    %v2093 = vmul.f32 %v1962, %v591
    %v2094 = vmul.f32 %v1962, %v595
    %v2095 = vmul.f32 %v1962, %v599
    %v2096 = vmul.f32 %v1962, %v603
    %v2097 = vmul.f32 %v1962, %v607
    %v2098 = vmul.f32 %v1962, %v611
    %v2099 = vmul.f32 %v1962, %v615
    %v2100 = vmul.f32 %v1962, %v619
    %v2101 = vmul.f32 %v1962, %v623
    %v2102 = vmul.f32 %v1962, %v627
    %v2103 = vmul.f32 %v1966, %v567
    %v2104 = vmul.f32 %v1966, %v571
    %v2105 = vmul.f32 %v1966, %v575
    %v2106 = vmul.f32 %v1966, %v579
    %v2107 = vmul.f32 %v1966, %v583
    %v2108 = vmul.f32 %v1966, %v587
    %v2109 = vmul.f32 %v1966, %v591
    %v2110 = vmul.f32 %v1966, %v595
    %v2111 = vmul.f32 %v1966, %v599
    %v2112 = vmul.f32 %v1966, %v603
    %v2113 = vmul.f32 %v1966, %v607
    %v2114 = vmul.f32 %v1966, %v611
    %v2115 = vmul.f32 %v1966, %v615
    %v2116 = vmul.f32 %v1966, %v619
    %v2117 = vmul.f32 %v1966, %v623
    %v2118 = vmul.f32 %v1966, %v627
    %v2119 = vmul.f32 %v1970, %v567
    %v2120 = vmul.f32 %v1970, %v571
    %v2121 = vmul.f32 %v1970, %v575
    %v2122 = vmul.f32 %v1970, %v579
    %v2123 = vmul.f32 %v1970, %v583
    %v2124 = vmul.f32 %v1970, %v587
    %v2125 = vmul.f32 %v1970, %v591
    %v2126 = vmul.f32 %v1970, %v595
    %v2127 = vmul.f32 %v1970, %v599
    %v2128 = vmul.f32 %v1970, %v603
    %v2129 = vmul.f32 %v1970, %v607
    %v2130 = vmul.f32 %v1970, %v611
    %v2131 = vmul.f32 %v1970, %v615
    %v2132 = vmul.f32 %v1970, %v619
    %v2133 = vmul.f32 %v1970, %v623
    %v2134 = vmul.f32 %v1970, %v627
    %v2135 = vmul.f32 %v1974, %v567
    %v2136 = vmul.f32 %v1974, %v571
    %v2137 = vmul.f32 %v1974, %v575
    %v2138 = vmul.f32 %v1974, %v579
    %v2139 = vmul.f32 %v1974, %v583
    %v2140 = vmul.f32 %v1974, %v587
    %v2141 = vmul.f32 %v1974, %v591
    %v2142 = vmul.f32 %v1974, %v595
    %v2143 = vmul.f32 %v1974, %v599
    %v2144 = vmul.f32 %v1974, %v603
    %v2145 = vmul.f32 %v1974, %v607
    %v2146 = vmul.f32 %v1974, %v611
    %v2147 = vmul.f32 %v1974, %v615
    %v2148 = vmul.f32 %v1974, %v619
    %v2149 = vmul.f32 %v1974, %v623
    %v2150 = vmul.f32 %v1974, %v627
    %v2151 = vmul.f32 %v1978, %v567
    %v2152 = vmul.f32 %v1978, %v571
    %v2153 = vmul.f32 %v1978, %v575
    %v2154 = vmul.f32 %v1978, %v579
    %v2155 = vmul.f32 %v1978, %v583
    %v2156 = vmul.f32 %v1978, %v587
    %v2157 = vmul.f32 %v1978, %v591
    %v2158 = vmul.f32 %v1978, %v595
    %v2159 = vmul.f32 %v1978, %v599
    %v2160 = vmul.f32 %v1978, %v603
    %v2161 = vmul.f32 %v1978, %v607
    %v2162 = vmul.f32 %v1978, %v611
    %v2163 = vmul.f32 %v1978, %v615
    %v2164 = vmul.f32 %v1978, %v619
    %v2165 = vmul.f32 %v1978, %v623
    %v2166 = vmul.f32 %v1978, %v627
    %v2167 = vmul.f32 %v1982, %v567
    %v2168 = vmul.f32 %v1982, %v571
    %v2169 = vmul.f32 %v1982, %v575
    %v2170 = vmul.f32 %v1982, %v579
    %v2171 = vmul.f32 %v1982, %v583
    %v2172 = vmul.f32 %v1982, %v587
    %v2173 = vmul.f32 %v1982, %v591
    %v2174 = vmul.f32 %v1982, %v595
    %v2175 = vmul.f32 %v1982, %v599
    %v2176 = vmul.f32 %v1982, %v603
    %v2177 = vmul.f32 %v1982, %v607
    %v2178 = vmul.f32 %v1982, %v611
    %v2179 = vmul.f32 %v1982, %v615
    %v2180 = vmul.f32 %v1982, %v619
    %v2181 = vmul.f32 %v1982, %v623
    %v2182 = vmul.f32 %v1982, %v627
    %v2183 = vmul.f32 %v1986, %v567
    %v2184 = vmul.f32 %v1986, %v571
    %v2185 = vmul.f32 %v1986, %v575
    %v2186 = vmul.f32 %v1986, %v579
    %v2187 = vmul.f32 %v1986, %v583
    %v2188 = vmul.f32 %v1986, %v587
    %v2189 = vmul.f32 %v1986, %v591
    %v2190 = vmul.f32 %v1986, %v595
    %v2191 = vmul.f32 %v1986, %v599
    %v2192 = vmul.f32 %v1986, %v603
    %v2193 = vmul.f32 %v1986, %v607
    %v2194 = vmul.f32 %v1986, %v611
    %v2195 = vmul.f32 %v1986, %v615
    %v2196 = vmul.f32 %v1986, %v619
    %v2197 = vmul.f32 %v1986, %v623
    %v2198 = vmul.f32 %v1986, %v627
    %v2199 = vmul.f32 %v1990, %v567
    %v2200 = vmul.f32 %v1990, %v571
    %v2201 = vmul.f32 %v1990, %v575
    %v2202 = vmul.f32 %v1990, %v579
    %v2203 = vmul.f32 %v1990, %v583
    %v2204 = vmul.f32 %v1990, %v587
    %v2205 = vmul.f32 %v1990, %v591
    %v2206 = vmul.f32 %v1990, %v595
    %v2207 = vmul.f32 %v1990, %v599
    %v2208 = vmul.f32 %v1990, %v603
    %v2209 = vmul.f32 %v1990, %v607
    %v2210 = vmul.f32 %v1990, %v611
    %v2211 = vmul.f32 %v1990, %v615
    %v2212 = vmul.f32 %v1990, %v619
    %v2213 = vmul.f32 %v1990, %v623
    %v2214 = vmul.f32 %v1990, %v627
    %v2215 = vmul.f32 %v1994, %v567
    %v2216 = vmul.f32 %v1994, %v571
    %v2217 = vmul.f32 %v1994, %v575
    %v2218 = vmul.f32 %v1994, %v579
    %v2219 = vmul.f32 %v1994, %v583
    %v2220 = vmul.f32 %v1994, %v587
    %v2221 = vmul.f32 %v1994, %v591
    %v2222 = vmul.f32 %v1994, %v595
    %v2223 = vmul.f32 %v1994, %v599
    %v2224 = vmul.f32 %v1994, %v603
    %v2225 = vmul.f32 %v1994, %v607
    %v2226 = vmul.f32 %v1994, %v611
    %v2227 = vmul.f32 %v1994, %v615
    %v2228 = vmul.f32 %v1994, %v619
    %v2229 = vmul.f32 %v1994, %v623
    %v2230 = vmul.f32 %v1994, %v627
    %v2231 = vmul.f32 %v1998, %v567
    %v2232 = vmul.f32 %v1998, %v571
    %v2233 = vmul.f32 %v1998, %v575
    %v2234 = vmul.f32 %v1998, %v579
    %v2235 = vmul.f32 %v1998, %v583
    %v2236 = vmul.f32 %v1998, %v587
    %v2237 = vmul.f32 %v1998, %v591
    %v2238 = vmul.f32 %v1998, %v595
    %v2239 = vmul.f32 %v1998, %v599
    %v2240 = vmul.f32 %v1998, %v603
    %v2241 = vmul.f32 %v1998, %v607
    %v2242 = vmul.f32 %v1998, %v611
    %v2243 = vmul.f32 %v1998, %v615
    %v2244 = vmul.f32 %v1998, %v619
    %v2245 = vmul.f32 %v1998, %v623
    %v2246 = vmul.f32 %v1998, %v627
    %v2247 = vmul.f32 %v2002, %v567
    %v2248 = vmul.f32 %v2002, %v571
    %v2249 = vmul.f32 %v2002, %v575
    %v2250 = vmul.f32 %v2002, %v579
    %v2251 = vmul.f32 %v2002, %v583
    %v2252 = vmul.f32 %v2002, %v587
    %v2253 = vmul.f32 %v2002, %v591
    %v2254 = vmul.f32 %v2002, %v595
    %v2255 = vmul.f32 %v2002, %v599
    %v2256 = vmul.f32 %v2002, %v603
    %v2257 = vmul.f32 %v2002, %v607
    %v2258 = vmul.f32 %v2002, %v611
    %v2259 = vmul.f32 %v2002, %v615
    %v2260 = vmul.f32 %v2002, %v619
    %v2261 = vmul.f32 %v2002, %v623
    %v2262 = vmul.f32 %v2002, %v627
    %v2263 = vmul.f32 %v2006, %v567
    %v2264 = vmul.f32 %v2006, %v571
    %v2265 = vmul.f32 %v2006, %v575
    %v2266 = vmul.f32 %v2006, %v579
    %v2267 = vmul.f32 %v2006, %v583
    %v2268 = vmul.f32 %v2006, %v587
    %v2269 = vmul.f32 %v2006, %v591
    %v2270 = vmul.f32 %v2006, %v595
    %v2271 = vmul.f32 %v2006, %v599
    %v2272 = vmul.f32 %v2006, %v603
    %v2273 = vmul.f32 %v2006, %v607
    %v2274 = vmul.f32 %v2006, %v611
    %v2275 = vmul.f32 %v2006, %v615
    %v2276 = vmul.f32 %v2006, %v619
    %v2277 = vmul.f32 %v2006, %v623
    %v2278 = vmul.f32 %v2006, %v627
    %v2279 = vadd.f32 %v1587, %v2023
    %v2280 = vadd.f32 %v1588, %v2024
    %v2281 = vadd.f32 %v1589, %v2025
    %v2282 = vadd.f32 %v1590, %v2026
    %v2283 = vadd.f32 %v1591, %v2027
    %v2284 = vadd.f32 %v1592, %v2028
    %v2285 = vadd.f32 %v1593, %v2029
    %v2286 = vadd.f32 %v1594, %v2030
    %v2287 = vadd.f32 %v1595, %v2031
    %v2288 = vadd.f32 %v1596, %v2032
    %v2289 = vadd.f32 %v1597, %v2033
    %v2290 = vadd.f32 %v1598, %v2034
    %v2291 = vadd.f32 %v1599, %v2035
    %v2292 = vadd.f32 %v1600, %v2036
    %v2293 = vadd.f32 %v1601, %v2037
    %v2294 = vadd.f32 %v1602, %v2038
    %v2295 = vadd.f32 %v1603, %v2039
    %v2296 = vadd.f32 %v1604, %v2040
    %v2297 = vadd.f32 %v1605, %v2041
    %v2298 = vadd.f32 %v1606, %v2042
    %v2299 = vadd.f32 %v1607, %v2043
    %v2300 = vadd.f32 %v1608, %v2044
    %v2301 = vadd.f32 %v1609, %v2045
    %v2302 = vadd.f32 %v1610, %v2046
    %v2303 = vadd.f32 %v1611, %v2047
    %v2304 = vadd.f32 %v1612, %v2048
    %v2305 = vadd.f32 %v1613, %v2049
    %v2306 = vadd.f32 %v1614, %v2050
    %v2307 = vadd.f32 %v1615, %v2051
    %v2308 = vadd.f32 %v1616, %v2052
    %v2309 = vadd.f32 %v1617, %v2053
    %v2310 = vadd.f32 %v1618, %v2054
    %v2311 = vadd.f32 %v1619, %v2055
    %v2312 = vadd.f32 %v1620, %v2056
    %v2313 = vadd.f32 %v1621, %v2057
    %v2314 = vadd.f32 %v1622, %v2058
    %v2315 = vadd.f32 %v1623, %v2059
    %v2316 = vadd.f32 %v1624, %v2060
    %v2317 = vadd.f32 %v1625, %v2061
    %v2318 = vadd.f32 %v1626, %v2062
    %v2319 = vadd.f32 %v1627, %v2063
    %v2320 = vadd.f32 %v1628, %v2064
    %v2321 = vadd.f32 %v1629, %v2065
    %v2322 = vadd.f32 %v1630, %v2066
    %v2323 = vadd.f32 %v1631, %v2067
    %v2324 = vadd.f32 %v1632, %v2068
    %v2325 = vadd.f32 %v1633, %v2069
    %v2326 = vadd.f32 %v1634, %v2070
    %v2327 = vadd.f32 %v1635, %v2071
    %v2328 = vadd.f32 %v1636, %v2072
    %v2329 = vadd.f32 %v1637, %v2073
    %v2330 = vadd.f32 %v1638, %v2074
    %v2331 = vadd.f32 %v1639, %v2075
    %v2332 = vadd.f32 %v1640, %v2076
    %v2333 = vadd.f32 %v1641, %v2077
    %v2334 = vadd.f32 %v1642, %v2078
    %v2335 = vadd.f32 %v1643, %v2079
    %v2336 = vadd.f32 %v1644, %v2080
    %v2337 = vadd.f32 %v1645, %v2081
    %v2338 = vadd.f32 %v1646, %v2082
    %v2339 = vadd.f32 %v1647, %v2083
    %v2340 = vadd.f32 %v1648, %v2084
    %v2341 = vadd.f32 %v1649, %v2085
    %v2342 = vadd.f32 %v1650, %v2086
    %v2343 = vadd.f32 %v1651, %v2087
    %v2344 = vadd.f32 %v1652, %v2088
    %v2345 = vadd.f32 %v1653, %v2089
    %v2346 = vadd.f32 %v1654, %v2090
    %v2347 = vadd.f32 %v1655, %v2091
    %v2348 = vadd.f32 %v1656, %v2092
    %v2349 = vadd.f32 %v1657, %v2093
    %v2350 = vadd.f32 %v1658, %v2094
    %v2351 = vadd.f32 %v1659, %v2095
    %v2352 = vadd.f32 %v1660, %v2096
    %v2353 = vadd.f32 %v1661, %v2097
    %v2354 = vadd.f32 %v1662, %v2098
    %v2355 = vadd.f32 %v1663, %v2099
    %v2356 = vadd.f32 %v1664, %v2100
    %v2357 = vadd.f32 %v1665, %v2101
    %v2358 = vadd.f32 %v1666, %v2102
    %v2359 = vadd.f32 %v1667, %v2103
    %v2360 = vadd.f32 %v1668, %v2104
    %v2361 = vadd.f32 %v1669, %v2105
    %v2362 = vadd.f32 %v1670, %v2106
    %v2363 = vadd.f32 %v1671, %v2107
    %v2364 = vadd.f32 %v1672, %v2108
    %v2365 = vadd.f32 %v1673, %v2109
    %v2366 = vadd.f32 %v1674, %v2110
    %v2367 = vadd.f32 %v1675, %v2111
    %v2368 = vadd.f32 %v1676, %v2112
    %v2369 = vadd.f32 %v1677, %v2113
    %v2370 = vadd.f32 %v1678, %v2114
    %v2371 = vadd.f32 %v1679, %v2115
    %v2372 = vadd.f32 %v1680, %v2116
    %v2373 = vadd.f32 %v1681, %v2117
    %v2374 = vadd.f32 %v1682, %v2118
    %v2375 = vadd.f32 %v1683, %v2119
    %v2376 = vadd.f32 %v1684, %v2120
    %v2377 = vadd.f32 %v1685, %v2121
    %v2378 = vadd.f32 %v1686, %v2122
    %v2379 = vadd.f32 %v1687, %v2123
    %v2380 = vadd.f32 %v1688, %v2124
    %v2381 = vadd.f32 %v1689, %v2125
    %v2382 = vadd.f32 %v1690, %v2126
    %v2383 = vadd.f32 %v1691, %v2127
    %v2384 = vadd.f32 %v1692, %v2128
    %v2385 = vadd.f32 %v1693, %v2129
    %v2386 = vadd.f32 %v1694, %v2130
    %v2387 = vadd.f32 %v1695, %v2131
    %v2388 = vadd.f32 %v1696, %v2132
    %v2389 = vadd.f32 %v1697, %v2133
    %v2390 = vadd.f32 %v1698, %v2134
    %v2391 = vadd.f32 %v1699, %v2135
    %v2392 = vadd.f32 %v1700, %v2136
    %v2393 = vadd.f32 %v1701, %v2137
    %v2394 = vadd.f32 %v1702, %v2138
    %v2395 = vadd.f32 %v1703, %v2139
    %v2396 = vadd.f32 %v1704, %v2140
    %v2397 = vadd.f32 %v1705, %v2141
    %v2398 = vadd.f32 %v1706, %v2142
    %v2399 = vadd.f32 %v1707, %v2143
    %v2400 = vadd.f32 %v1708, %v2144
    %v2401 = vadd.f32 %v1709, %v2145
    %v2402 = vadd.f32 %v1710, %v2146
    %v2403 = vadd.f32 %v1711, %v2147
    %v2404 = vadd.f32 %v1712, %v2148
    %v2405 = vadd.f32 %v1713, %v2149
    %v2406 = vadd.f32 %v1714, %v2150
    %v2407 = vadd.f32 %v1715, %v2151
    %v2408 = vadd.f32 %v1716, %v2152
    %v2409 = vadd.f32 %v1717, %v2153
    %v2410 = vadd.f32 %v1718, %v2154
    %v2411 = vadd.f32 %v1719, %v2155
    %v2412 = vadd.f32 %v1720, %v2156
    %v2413 = vadd.f32 %v1721, %v2157
    %v2414 = vadd.f32 %v1722, %v2158
    %v2415 = vadd.f32 %v1723, %v2159
    %v2416 = vadd.f32 %v1724, %v2160
    %v2417 = vadd.f32 %v1725, %v2161
    %v2418 = vadd.f32 %v1726, %v2162
    %v2419 = vadd.f32 %v1727, %v2163
    %v2420 = vadd.f32 %v1728, %v2164
    %v2421 = vadd.f32 %v1729, %v2165
    %v2422 = vadd.f32 %v1730, %v2166
    %v2423 = vadd.f32 %v1731, %v2167
    %v2424 = vadd.f32 %v1732, %v2168
    %v2425 = vadd.f32 %v1733, %v2169
    %v2426 = vadd.f32 %v1734, %v2170
    %v2427 = vadd.f32 %v1735, %v2171
    %v2428 = vadd.f32 %v1736, %v2172
    %v2429 = vadd.f32 %v1737, %v2173
    %v2430 = vadd.f32 %v1738, %v2174
    %v2431 = vadd.f32 %v1739, %v2175
    %v2432 = vadd.f32 %v1740, %v2176
    %v2433 = vadd.f32 %v1741, %v2177
    %v2434 = vadd.f32 %v1742, %v2178
    %v2435 = vadd.f32 %v1743, %v2179
    %v2436 = vadd.f32 %v1744, %v2180
    %v2437 = vadd.f32 %v1745, %v2181
    %v2438 = vadd.f32 %v1746, %v2182
    %v2439 = vadd.f32 %v1747, %v2183
    %v2440 = vadd.f32 %v1748, %v2184
    %v2441 = vadd.f32 %v1749, %v2185
    %v2442 = vadd.f32 %v1750, %v2186
    %v2443 = vadd.f32 %v1751, %v2187
    %v2444 = vadd.f32 %v1752, %v2188
    %v2445 = vadd.f32 %v1753, %v2189
    %v2446 = vadd.f32 %v1754, %v2190
    %v2447 = vadd.f32 %v1755, %v2191
    %v2448 = vadd.f32 %v1756, %v2192
    %v2449 = vadd.f32 %v1757, %v2193
    %v2450 = vadd.f32 %v1758, %v2194
    %v2451 = vadd.f32 %v1759, %v2195
    %v2452 = vadd.f32 %v1760, %v2196
    %v2453 = vadd.f32 %v1761, %v2197
    %v2454 = vadd.f32 %v1762, %v2198
    %v2455 = vadd.f32 %v1763, %v2199
    %v2456 = vadd.f32 %v1764, %v2200
    %v2457 = vadd.f32 %v1765, %v2201
    %v2458 = vadd.f32 %v1766, %v2202
    %v2459 = vadd.f32 %v1767, %v2203
    %v2460 = vadd.f32 %v1768, %v2204
    %v2461 = vadd.f32 %v1769, %v2205
    %v2462 = vadd.f32 %v1770, %v2206
    %v2463 = vadd.f32 %v1771, %v2207
    %v2464 = vadd.f32 %v1772, %v2208
    %v2465 = vadd.f32 %v1773, %v2209
    %v2466 = vadd.f32 %v1774, %v2210
    %v2467 = vadd.f32 %v1775, %v2211
    %v2468 = vadd.f32 %v1776, %v2212
    %v2469 = vadd.f32 %v1777, %v2213
    %v2470 = vadd.f32 %v1778, %v2214
    %v2471 = vadd.f32 %v1779, %v2215
    %v2472 = vadd.f32 %v1780, %v2216
    %v2473 = vadd.f32 %v1781, %v2217
    %v2474 = vadd.f32 %v1782, %v2218
    %v2475 = vadd.f32 %v1783, %v2219
    %v2476 = vadd.f32 %v1784, %v2220
    %v2477 = vadd.f32 %v1785, %v2221
    %v2478 = vadd.f32 %v1786, %v2222
    %v2479 = vadd.f32 %v1787, %v2223
    %v2480 = vadd.f32 %v1788, %v2224
    %v2481 = vadd.f32 %v1789, %v2225
    %v2482 = vadd.f32 %v1790, %v2226
    %v2483 = vadd.f32 %v1791, %v2227
    %v2484 = vadd.f32 %v1792, %v2228
    %v2485 = vadd.f32 %v1793, %v2229
    %v2486 = vadd.f32 %v1794, %v2230
    %v2487 = vadd.f32 %v1795, %v2231
    %v2488 = vadd.f32 %v1796, %v2232
    %v2489 = vadd.f32 %v1797, %v2233
    %v2490 = vadd.f32 %v1798, %v2234
    %v2491 = vadd.f32 %v1799, %v2235
    %v2492 = vadd.f32 %v1800, %v2236
    %v2493 = vadd.f32 %v1801, %v2237
    %v2494 = vadd.f32 %v1802, %v2238
    %v2495 = vadd.f32 %v1803, %v2239
    %v2496 = vadd.f32 %v1804, %v2240
    %v2497 = vadd.f32 %v1805, %v2241
    %v2498 = vadd.f32 %v1806, %v2242
    %v2499 = vadd.f32 %v1807, %v2243
    %v2500 = vadd.f32 %v1808, %v2244
    %v2501 = vadd.f32 %v1809, %v2245
    %v2502 = vadd.f32 %v1810, %v2246
    %v2503 = vadd.f32 %v1811, %v2247
    %v2504 = vadd.f32 %v1812, %v2248
    %v2505 = vadd.f32 %v1813, %v2249
    %v2506 = vadd.f32 %v1814, %v2250
    %v2507 = vadd.f32 %v1815, %v2251
    %v2508 = vadd.f32 %v1816, %v2252
    %v2509 = vadd.f32 %v1817, %v2253
    %v2510 = vadd.f32 %v1818, %v2254
    %v2511 = vadd.f32 %v1819, %v2255
    %v2512 = vadd.f32 %v1820, %v2256
    %v2513 = vadd.f32 %v1821, %v2257
    %v2514 = vadd.f32 %v1822, %v2258
    %v2515 = vadd.f32 %v1823, %v2259
    %v2516 = vadd.f32 %v1824, %v2260
    %v2517 = vadd.f32 %v1825, %v2261
    %v2518 = vadd.f32 %v1826, %v2262
    %v2519 = vadd.f32 %v1827, %v2263
    %v2520 = vadd.f32 %v1828, %v2264
    %v2521 = vadd.f32 %v1829, %v2265
    %v2522 = vadd.f32 %v1830, %v2266
    %v2523 = vadd.f32 %v1831, %v2267
    %v2524 = vadd.f32 %v1832, %v2268
    %v2525 = vadd.f32 %v1833, %v2269
    %v2526 = vadd.f32 %v1834, %v2270
    %v2527 = vadd.f32 %v1835, %v2271
    %v2528 = vadd.f32 %v1836, %v2272
    %v2529 = vadd.f32 %v1837, %v2273
    %v2530 = vadd.f32 %v1838, %v2274
    %v2531 = vadd.f32 %v1839, %v2275
    %v2532 = vadd.f32 %v1840, %v2276
    %v2533 = vadd.f32 %v1841, %v2277
    %v2534 = vadd.f32 %v1842, %v2278
    %v2535 = vadd.f32 %v2279, %v636
    %v2536 = vadd.f32 %v2280, %v640
    %v2537 = vadd.f32 %v2281, %v644
    %v2538 = vadd.f32 %v2282, %v648
    %v2539 = vadd.f32 %v2283, %v652
    %v2540 = vadd.f32 %v2284, %v656
    %v2541 = vadd.f32 %v2285, %v660
    %v2542 = vadd.f32 %v2286, %v664
    %v2543 = vadd.f32 %v2287, %v668
    %v2544 = vadd.f32 %v2288, %v672
    %v2545 = vadd.f32 %v2289, %v676
    %v2546 = vadd.f32 %v2290, %v680
    %v2547 = vadd.f32 %v2291, %v684
    %v2548 = vadd.f32 %v2292, %v688
    %v2549 = vadd.f32 %v2293, %v692
    %v2550 = vadd.f32 %v2294, %v696
    %v2551 = vadd.f32 %v2295, %v636
    %v2552 = vadd.f32 %v2296, %v640
    %v2553 = vadd.f32 %v2297, %v644
    %v2554 = vadd.f32 %v2298, %v648
    %v2555 = vadd.f32 %v2299, %v652
    %v2556 = vadd.f32 %v2300, %v656
    %v2557 = vadd.f32 %v2301, %v660
    %v2558 = vadd.f32 %v2302, %v664
    %v2559 = vadd.f32 %v2303, %v668
    %v2560 = vadd.f32 %v2304, %v672
    %v2561 = vadd.f32 %v2305, %v676
    %v2562 = vadd.f32 %v2306, %v680
    %v2563 = vadd.f32 %v2307, %v684
    %v2564 = vadd.f32 %v2308, %v688
    %v2565 = vadd.f32 %v2309, %v692
    %v2566 = vadd.f32 %v2310, %v696
    %v2567 = vadd.f32 %v2311, %v636
    %v2568 = vadd.f32 %v2312, %v640
    %v2569 = vadd.f32 %v2313, %v644
    %v2570 = vadd.f32 %v2314, %v648
    %v2571 = vadd.f32 %v2315, %v652
    %v2572 = vadd.f32 %v2316, %v656
    %v2573 = vadd.f32 %v2317, %v660
    %v2574 = vadd.f32 %v2318, %v664
    %v2575 = vadd.f32 %v2319, %v668
    %v2576 = vadd.f32 %v2320, %v672
    %v2577 = vadd.f32 %v2321, %v676
    %v2578 = vadd.f32 %v2322, %v680
    %v2579 = vadd.f32 %v2323, %v684
    %v2580 = vadd.f32 %v2324, %v688
    %v2581 = vadd.f32 %v2325, %v692
    %v2582 = vadd.f32 %v2326, %v696
    %v2583 = vadd.f32 %v2327, %v636
    %v2584 = vadd.f32 %v2328, %v640
    %v2585 = vadd.f32 %v2329, %v644
    %v2586 = vadd.f32 %v2330, %v648
    %v2587 = vadd.f32 %v2331, %v652
    %v2588 = vadd.f32 %v2332, %v656
    %v2589 = vadd.f32 %v2333, %v660
    %v2590 = vadd.f32 %v2334, %v664
    %v2591 = vadd.f32 %v2335, %v668
    %v2592 = vadd.f32 %v2336, %v672
    %v2593 = vadd.f32 %v2337, %v676
    %v2594 = vadd.f32 %v2338, %v680
    %v2595 = vadd.f32 %v2339, %v684
    %v2596 = vadd.f32 %v2340, %v688
    %v2597 = vadd.f32 %v2341, %v692
    %v2598 = vadd.f32 %v2342, %v696
    %v2599 = vadd.f32 %v2343, %v636
    %v2600 = vadd.f32 %v2344, %v640
    %v2601 = vadd.f32 %v2345, %v644
    %v2602 = vadd.f32 %v2346, %v648
    %v2603 = vadd.f32 %v2347, %v652
    %v2604 = vadd.f32 %v2348, %v656
    %v2605 = vadd.f32 %v2349, %v660
    %v2606 = vadd.f32 %v2350, %v664
    %v2607 = vadd.f32 %v2351, %v668
    %v2608 = vadd.f32 %v2352, %v672
    %v2609 = vadd.f32 %v2353, %v676
    %v2610 = vadd.f32 %v2354, %v680
    %v2611 = vadd.f32 %v2355, %v684
    %v2612 = vadd.f32 %v2356, %v688
    %v2613 = vadd.f32 %v2357, %v692
    %v2614 = vadd.f32 %v2358, %v696
    %v2615 = vadd.f32 %v2359, %v636
    %v2616 = vadd.f32 %v2360, %v640
    %v2617 = vadd.f32 %v2361, %v644
    %v2618 = vadd.f32 %v2362, %v648
    %v2619 = vadd.f32 %v2363, %v652
    %v2620 = vadd.f32 %v2364, %v656
    %v2621 = vadd.f32 %v2365, %v660
    %v2622 = vadd.f32 %v2366, %v664
    %v2623 = vadd.f32 %v2367, %v668
    %v2624 = vadd.f32 %v2368, %v672
    %v2625 = vadd.f32 %v2369, %v676
    %v2626 = vadd.f32 %v2370, %v680
    %v2627 = vadd.f32 %v2371, %v684
    %v2628 = vadd.f32 %v2372, %v688
    %v2629 = vadd.f32 %v2373, %v692
    %v2630 = vadd.f32 %v2374, %v696
    %v2631 = vadd.f32 %v2375, %v636
    %v2632 = vadd.f32 %v2376, %v640
    %v2633 = vadd.f32 %v2377, %v644
    %v2634 = vadd.f32 %v2378, %v648
    %v2635 = vadd.f32 %v2379, %v652
    %v2636 = vadd.f32 %v2380, %v656
    %v2637 = vadd.f32 %v2381, %v660
    %v2638 = vadd.f32 %v2382, %v664
    %v2639 = vadd.f32 %v2383, %v668
    %v2640 = vadd.f32 %v2384, %v672
    %v2641 = vadd.f32 %v2385, %v676
    %v2642 = vadd.f32 %v2386, %v680
    %v2643 = vadd.f32 %v2387, %v684
    %v2644 = vadd.f32 %v2388, %v688
    %v2645 = vadd.f32 %v2389, %v692
    %v2646 = vadd.f32 %v2390, %v696
    %v2647 = vadd.f32 %v2391, %v636
    %v2648 = vadd.f32 %v2392, %v640
    %v2649 = vadd.f32 %v2393, %v644
    %v2650 = vadd.f32 %v2394, %v648
    %v2651 = vadd.f32 %v2395, %v652
    %v2652 = vadd.f32 %v2396, %v656
    %v2653 = vadd.f32 %v2397, %v660
    %v2654 = vadd.f32 %v2398, %v664
    %v2655 = vadd.f32 %v2399, %v668
    %v2656 = vadd.f32 %v2400, %v672
    %v2657 = vadd.f32 %v2401, %v676
    %v2658 = vadd.f32 %v2402, %v680
    %v2659 = vadd.f32 %v2403, %v684
    %v2660 = vadd.f32 %v2404, %v688
    %v2661 = vadd.f32 %v2405, %v692
    %v2662 = vadd.f32 %v2406, %v696
    %v2663 = vadd.f32 %v2407, %v636
    %v2664 = vadd.f32 %v2408, %v640
    %v2665 = vadd.f32 %v2409, %v644
    %v2666 = vadd.f32 %v2410, %v648
    %v2667 = vadd.f32 %v2411, %v652
    %v2668 = vadd.f32 %v2412, %v656
    %v2669 = vadd.f32 %v2413, %v660
    %v2670 = vadd.f32 %v2414, %v664
    %v2671 = vadd.f32 %v2415, %v668
    %v2672 = vadd.f32 %v2416, %v672
    %v2673 = vadd.f32 %v2417, %v676
    %v2674 = vadd.f32 %v2418, %v680
    %v2675 = vadd.f32 %v2419, %v684
    %v2676 = vadd.f32 %v2420, %v688
    %v2677 = vadd.f32 %v2421, %v692
    %v2678 = vadd.f32 %v2422, %v696
    %v2679 = vadd.f32 %v2423, %v636
    %v2680 = vadd.f32 %v2424, %v640
    %v2681 = vadd.f32 %v2425, %v644
    %v2682 = vadd.f32 %v2426, %v648
    %v2683 = vadd.f32 %v2427, %v652
    %v2684 = vadd.f32 %v2428, %v656
    %v2685 = vadd.f32 %v2429, %v660
    %v2686 = vadd.f32 %v2430, %v664
    %v2687 = vadd.f32 %v2431, %v668
    %v2688 = vadd.f32 %v2432, %v672
    %v2689 = vadd.f32 %v2433, %v676
    %v2690 = vadd.f32 %v2434, %v680
    %v2691 = vadd.f32 %v2435, %v684
    %v2692 = vadd.f32 %v2436, %v688
    %v2693 = vadd.f32 %v2437, %v692
    %v2694 = vadd.f32 %v2438, %v696
    %v2695 = vadd.f32 %v2439, %v636
    %v2696 = vadd.f32 %v2440, %v640
    %v2697 = vadd.f32 %v2441, %v644
    %v2698 = vadd.f32 %v2442, %v648
    %v2699 = vadd.f32 %v2443, %v652
    %v2700 = vadd.f32 %v2444, %v656
    %v2701 = vadd.f32 %v2445, %v660
    %v2702 = vadd.f32 %v2446, %v664
    %v2703 = vadd.f32 %v2447, %v668
    %v2704 = vadd.f32 %v2448, %v672
    %v2705 = vadd.f32 %v2449, %v676
    %v2706 = vadd.f32 %v2450, %v680
    %v2707 = vadd.f32 %v2451, %v684
    %v2708 = vadd.f32 %v2452, %v688
    %v2709 = vadd.f32 %v2453, %v692
    %v2710 = vadd.f32 %v2454, %v696
    %v2711 = vadd.f32 %v2455, %v636
    %v2712 = vadd.f32 %v2456, %v640
    %v2713 = vadd.f32 %v2457, %v644
    %v2714 = vadd.f32 %v2458, %v648
    %v2715 = vadd.f32 %v2459, %v652
    %v2716 = vadd.f32 %v2460, %v656
    %v2717 = vadd.f32 %v2461, %v660
    %v2718 = vadd.f32 %v2462, %v664
    %v2719 = vadd.f32 %v2463, %v668
    %v2720 = vadd.f32 %v2464, %v672
    %v2721 = vadd.f32 %v2465, %v676
    %v2722 = vadd.f32 %v2466, %v680
    %v2723 = vadd.f32 %v2467, %v684
    %v2724 = vadd.f32 %v2468, %v688
    %v2725 = vadd.f32 %v2469, %v692
    %v2726 = vadd.f32 %v2470, %v696
    %v2727 = vadd.f32 %v2471, %v636
    %v2728 = vadd.f32 %v2472, %v640
    %v2729 = vadd.f32 %v2473, %v644
    %v2730 = vadd.f32 %v2474, %v648
    %v2731 = vadd.f32 %v2475, %v652
    %v2732 = vadd.f32 %v2476, %v656
    %v2733 = vadd.f32 %v2477, %v660
    %v2734 = vadd.f32 %v2478, %v664
    %v2735 = vadd.f32 %v2479, %v668
    %v2736 = vadd.f32 %v2480, %v672
    %v2737 = vadd.f32 %v2481, %v676
    %v2738 = vadd.f32 %v2482, %v680
    %v2739 = vadd.f32 %v2483, %v684
    %v2740 = vadd.f32 %v2484, %v688
    %v2741 = vadd.f32 %v2485, %v692
    %v2742 = vadd.f32 %v2486, %v696
    %v2743 = vadd.f32 %v2487, %v636
    %v2744 = vadd.f32 %v2488, %v640
    %v2745 = vadd.f32 %v2489, %v644
    %v2746 = vadd.f32 %v2490, %v648
    %v2747 = vadd.f32 %v2491, %v652
    %v2748 = vadd.f32 %v2492, %v656
    %v2749 = vadd.f32 %v2493, %v660
    %v2750 = vadd.f32 %v2494, %v664
    %v2751 = vadd.f32 %v2495, %v668
    %v2752 = vadd.f32 %v2496, %v672
    %v2753 = vadd.f32 %v2497, %v676
    %v2754 = vadd.f32 %v2498, %v680
    %v2755 = vadd.f32 %v2499, %v684
    %v2756 = vadd.f32 %v2500, %v688
    %v2757 = vadd.f32 %v2501, %v692
    %v2758 = vadd.f32 %v2502, %v696
    %v2759 = vadd.f32 %v2503, %v636
    %v2760 = vadd.f32 %v2504, %v640
    %v2761 = vadd.f32 %v2505, %v644
    %v2762 = vadd.f32 %v2506, %v648
    %v2763 = vadd.f32 %v2507, %v652
    %v2764 = vadd.f32 %v2508, %v656
    %v2765 = vadd.f32 %v2509, %v660
    %v2766 = vadd.f32 %v2510, %v664
    %v2767 = vadd.f32 %v2511, %v668
    %v2768 = vadd.f32 %v2512, %v672
    %v2769 = vadd.f32 %v2513, %v676
    %v2770 = vadd.f32 %v2514, %v680
    %v2771 = vadd.f32 %v2515, %v684
    %v2772 = vadd.f32 %v2516, %v688
    %v2773 = vadd.f32 %v2517, %v692
    %v2774 = vadd.f32 %v2518, %v696
    %v2775 = vadd.f32 %v2519, %v636
    %v2776 = vadd.f32 %v2520, %v640
    %v2777 = vadd.f32 %v2521, %v644
    %v2778 = vadd.f32 %v2522, %v648
    %v2779 = vadd.f32 %v2523, %v652
    %v2780 = vadd.f32 %v2524, %v656
    %v2781 = vadd.f32 %v2525, %v660
    %v2782 = vadd.f32 %v2526, %v664
    %v2783 = vadd.f32 %v2527, %v668
    %v2784 = vadd.f32 %v2528, %v672
    %v2785 = vadd.f32 %v2529, %v676
    %v2786 = vadd.f32 %v2530, %v680
    %v2787 = vadd.f32 %v2531, %v684
    %v2788 = vadd.f32 %v2532, %v688
    %v2789 = vadd.f32 %v2533, %v692
    %v2790 = vadd.f32 %v2534, %v696
    %v2791 = vmax.f32 %v2535, 0.0
    %v2792 = vmax.f32 %v2536, 0.0
    %v2793 = vmax.f32 %v2537, 0.0
    %v2794 = vmax.f32 %v2538, 0.0
    %v2795 = vmax.f32 %v2539, 0.0
    %v2796 = vmax.f32 %v2540, 0.0
    %v2797 = vmax.f32 %v2541, 0.0
    %v2798 = vmax.f32 %v2542, 0.0
    %v2799 = vmax.f32 %v2543, 0.0
    %v2800 = vmax.f32 %v2544, 0.0
    %v2801 = vmax.f32 %v2545, 0.0
    %v2802 = vmax.f32 %v2546, 0.0
    %v2803 = vmax.f32 %v2547, 0.0
    %v2804 = vmax.f32 %v2548, 0.0
    %v2805 = vmax.f32 %v2549, 0.0
    %v2806 = vmax.f32 %v2550, 0.0
    %v2807 = vmax.f32 %v2551, 0.0
    %v2808 = vmax.f32 %v2552, 0.0
    %v2809 = vmax.f32 %v2553, 0.0
    %v2810 = vmax.f32 %v2554, 0.0
    %v2811 = vmax.f32 %v2555, 0.0
    %v2812 = vmax.f32 %v2556, 0.0
    %v2813 = vmax.f32 %v2557, 0.0
    %v2814 = vmax.f32 %v2558, 0.0
    %v2815 = vmax.f32 %v2559, 0.0
    %v2816 = vmax.f32 %v2560, 0.0
    %v2817 = vmax.f32 %v2561, 0.0
    %v2818 = vmax.f32 %v2562, 0.0
    %v2819 = vmax.f32 %v2563, 0.0
    %v2820 = vmax.f32 %v2564, 0.0
    %v2821 = vmax.f32 %v2565, 0.0
    %v2822 = vmax.f32 %v2566, 0.0
    %v2823 = vmax.f32 %v2567, 0.0
    %v2824 = vmax.f32 %v2568, 0.0
    %v2825 = vmax.f32 %v2569, 0.0
    %v2826 = vmax.f32 %v2570, 0.0
    %v2827 = vmax.f32 %v2571, 0.0
    %v2828 = vmax.f32 %v2572, 0.0
    %v2829 = vmax.f32 %v2573, 0.0
    %v2830 = vmax.f32 %v2574, 0.0
    %v2831 = vmax.f32 %v2575, 0.0
    %v2832 = vmax.f32 %v2576, 0.0
    %v2833 = vmax.f32 %v2577, 0.0
    %v2834 = vmax.f32 %v2578, 0.0
    %v2835 = vmax.f32 %v2579, 0.0
    %v2836 = vmax.f32 %v2580, 0.0
    %v2837 = vmax.f32 %v2581, 0.0
    %v2838 = vmax.f32 %v2582, 0.0
    %v2839 = vmax.f32 %v2583, 0.0
    %v2840 = vmax.f32 %v2584, 0.0
    %v2841 = vmax.f32 %v2585, 0.0
    %v2842 = vmax.f32 %v2586, 0.0
    %v2843 = vmax.f32 %v2587, 0.0
    %v2844 = vmax.f32 %v2588, 0.0
    %v2845 = vmax.f32 %v2589, 0.0
    %v2846 = vmax.f32 %v2590, 0.0
    %v2847 = vmax.f32 %v2591, 0.0
    %v2848 = vmax.f32 %v2592, 0.0
    %v2849 = vmax.f32 %v2593, 0.0
    %v2850 = vmax.f32 %v2594, 0.0
    %v2851 = vmax.f32 %v2595, 0.0
    %v2852 = vmax.f32 %v2596, 0.0
    %v2853 = vmax.f32 %v2597, 0.0
    %v2854 = vmax.f32 %v2598, 0.0
    %v2855 = vmax.f32 %v2599, 0.0
    %v2856 = vmax.f32 %v2600, 0.0
    %v2857 = vmax.f32 %v2601, 0.0
    %v2858 = vmax.f32 %v2602, 0.0
    %v2859 = vmax.f32 %v2603, 0.0
    %v2860 = vmax.f32 %v2604, 0.0
    %v2861 = vmax.f32 %v2605, 0.0
    %v2862 = vmax.f32 %v2606, 0.0
    %v2863 = vmax.f32 %v2607, 0.0
    %v2864 = vmax.f32 %v2608, 0.0
    %v2865 = vmax.f32 %v2609, 0.0
    %v2866 = vmax.f32 %v2610, 0.0
    %v2867 = vmax.f32 %v2611, 0.0
    %v2868 = vmax.f32 %v2612, 0.0
    %v2869 = vmax.f32 %v2613, 0.0
    %v2870 = vmax.f32 %v2614, 0.0
    %v2871 = vmax.f32 %v2615, 0.0
    %v2872 = vmax.f32 %v2616, 0.0
    %v2873 = vmax.f32 %v2617, 0.0
    %v2874 = vmax.f32 %v2618, 0.0
    %v2875 = vmax.f32 %v2619, 0.0
    %v2876 = vmax.f32 %v2620, 0.0
    %v2877 = vmax.f32 %v2621, 0.0
    %v2878 = vmax.f32 %v2622, 0.0
    %v2879 = vmax.f32 %v2623, 0.0
    %v2880 = vmax.f32 %v2624, 0.0
    %v2881 = vmax.f32 %v2625, 0.0
    %v2882 = vmax.f32 %v2626, 0.0
    %v2883 = vmax.f32 %v2627, 0.0
    %v2884 = vmax.f32 %v2628, 0.0
    %v2885 = vmax.f32 %v2629, 0.0
    %v2886 = vmax.f32 %v2630, 0.0
    %v2887 = vmax.f32 %v2631, 0.0
    %v2888 = vmax.f32 %v2632, 0.0
    %v2889 = vmax.f32 %v2633, 0.0
    %v2890 = vmax.f32 %v2634, 0.0
    %v2891 = vmax.f32 %v2635, 0.0
    %v2892 = vmax.f32 %v2636, 0.0
    %v2893 = vmax.f32 %v2637, 0.0
    %v2894 = vmax.f32 %v2638, 0.0
    %v2895 = vmax.f32 %v2639, 0.0
    %v2896 = vmax.f32 %v2640, 0.0
    %v2897 = vmax.f32 %v2641, 0.0
    %v2898 = vmax.f32 %v2642, 0.0
    %v2899 = vmax.f32 %v2643, 0.0
    %v2900 = vmax.f32 %v2644, 0.0
    %v2901 = vmax.f32 %v2645, 0.0
    %v2902 = vmax.f32 %v2646, 0.0
    %v2903 = vmax.f32 %v2647, 0.0
    %v2904 = vmax.f32 %v2648, 0.0
    %v2905 = vmax.f32 %v2649, 0.0
    %v2906 = vmax.f32 %v2650, 0.0
    %v2907 = vmax.f32 %v2651, 0.0
    %v2908 = vmax.f32 %v2652, 0.0
    %v2909 = vmax.f32 %v2653, 0.0
    %v2910 = vmax.f32 %v2654, 0.0
    %v2911 = vmax.f32 %v2655, 0.0
    %v2912 = vmax.f32 %v2656, 0.0
    %v2913 = vmax.f32 %v2657, 0.0
    %v2914 = vmax.f32 %v2658, 0.0
    %v2915 = vmax.f32 %v2659, 0.0
    %v2916 = vmax.f32 %v2660, 0.0
    %v2917 = vmax.f32 %v2661, 0.0
    %v2918 = vmax.f32 %v2662, 0.0
    %v2919 = vmax.f32 %v2663, 0.0
    %v2920 = vmax.f32 %v2664, 0.0
    %v2921 = vmax.f32 %v2665, 0.0
    %v2922 = vmax.f32 %v2666, 0.0
    %v2923 = vmax.f32 %v2667, 0.0
    %v2924 = vmax.f32 %v2668, 0.0
    %v2925 = vmax.f32 %v2669, 0.0
    %v2926 = vmax.f32 %v2670, 0.0
    %v2927 = vmax.f32 %v2671, 0.0
    %v2928 = vmax.f32 %v2672, 0.0
    %v2929 = vmax.f32 %v2673, 0.0
    %v2930 = vmax.f32 %v2674, 0.0
    %v2931 = vmax.f32 %v2675, 0.0
    %v2932 = vmax.f32 %v2676, 0.0
    %v2933 = vmax.f32 %v2677, 0.0
    %v2934 = vmax.f32 %v2678, 0.0
    %v2935 = vmax.f32 %v2679, 0.0
    %v2936 = vmax.f32 %v2680, 0.0
    %v2937 = vmax.f32 %v2681, 0.0
    %v2938 = vmax.f32 %v2682, 0.0
    %v2939 = vmax.f32 %v2683, 0.0
    %v2940 = vmax.f32 %v2684, 0.0
    %v2941 = vmax.f32 %v2685, 0.0
    %v2942 = vmax.f32 %v2686, 0.0
    %v2943 = vmax.f32 %v2687, 0.0
    %v2944 = vmax.f32 %v2688, 0.0
    %v2945 = vmax.f32 %v2689, 0.0
    %v2946 = vmax.f32 %v2690, 0.0
    %v2947 = vmax.f32 %v2691, 0.0
    %v2948 = vmax.f32 %v2692, 0.0
    %v2949 = vmax.f32 %v2693, 0.0
    %v2950 = vmax.f32 %v2694, 0.0
    %v2951 = vmax.f32 %v2695, 0.0
    %v2952 = vmax.f32 %v2696, 0.0
    %v2953 = vmax.f32 %v2697, 0.0
    %v2954 = vmax.f32 %v2698, 0.0
    %v2955 = vmax.f32 %v2699, 0.0
    %v2956 = vmax.f32 %v2700, 0.0
    %v2957 = vmax.f32 %v2701, 0.0
    %v2958 = vmax.f32 %v2702, 0.0
    %v2959 = vmax.f32 %v2703, 0.0
    %v2960 = vmax.f32 %v2704, 0.0
    %v2961 = vmax.f32 %v2705, 0.0
    %v2962 = vmax.f32 %v2706, 0.0
    %v2963 = vmax.f32 %v2707, 0.0
    %v2964 = vmax.f32 %v2708, 0.0
    %v2965 = vmax.f32 %v2709, 0.0
    %v2966 = vmax.f32 %v2710, 0.0
    %v2967 = vmax.f32 %v2711, 0.0
    %v2968 = vmax.f32 %v2712, 0.0
    %v2969 = vmax.f32 %v2713, 0.0
    %v2970 = vmax.f32 %v2714, 0.0
    %v2971 = vmax.f32 %v2715, 0.0
    %v2972 = vmax.f32 %v2716, 0.0
    %v2973 = vmax.f32 %v2717, 0.0
    %v2974 = vmax.f32 %v2718, 0.0
    %v2975 = vmax.f32 %v2719, 0.0
    %v2976 = vmax.f32 %v2720, 0.0
    %v2977 = vmax.f32 %v2721, 0.0
    %v2978 = vmax.f32 %v2722, 0.0
    %v2979 = vmax.f32 %v2723, 0.0
    %v2980 = vmax.f32 %v2724, 0.0
    %v2981 = vmax.f32 %v2725, 0.0
    %v2982 = vmax.f32 %v2726, 0.0
    %v2983 = vmax.f32 %v2727, 0.0
    %v2984 = vmax.f32 %v2728, 0.0
    %v2985 = vmax.f32 %v2729, 0.0
    %v2986 = vmax.f32 %v2730, 0.0
    %v2987 = vmax.f32 %v2731, 0.0
    %v2988 = vmax.f32 %v2732, 0.0
    %v2989 = vmax.f32 %v2733, 0.0
    %v2990 = vmax.f32 %v2734, 0.0
    %v2991 = vmax.f32 %v2735, 0.0
    %v2992 = vmax.f32 %v2736, 0.0
    %v2993 = vmax.f32 %v2737, 0.0
    %v2994 = vmax.f32 %v2738, 0.0
    %v2995 = vmax.f32 %v2739, 0.0
    %v2996 = vmax.f32 %v2740, 0.0
    %v2997 = vmax.f32 %v2741, 0.0
    %v2998 = vmax.f32 %v2742, 0.0
    %v2999 = vmax.f32 %v2743, 0.0
    %v3000 = vmax.f32 %v2744, 0.0
    %v3001 = vmax.f32 %v2745, 0.0
    %v3002 = vmax.f32 %v2746, 0.0
    %v3003 = vmax.f32 %v2747, 0.0
    %v3004 = vmax.f32 %v2748, 0.0
    %v3005 = vmax.f32 %v2749, 0.0
    %v3006 = vmax.f32 %v2750, 0.0
    %v3007 = vmax.f32 %v2751, 0.0
    %v3008 = vmax.f32 %v2752, 0.0
    %v3009 = vmax.f32 %v2753, 0.0
    %v3010 = vmax.f32 %v2754, 0.0
    %v3011 = vmax.f32 %v2755, 0.0
    %v3012 = vmax.f32 %v2756, 0.0
    %v3013 = vmax.f32 %v2757, 0.0
    %v3014 = vmax.f32 %v2758, 0.0
    %v3015 = vmax.f32 %v2759, 0.0
    %v3016 = vmax.f32 %v2760, 0.0
    %v3017 = vmax.f32 %v2761, 0.0
    %v3018 = vmax.f32 %v2762, 0.0
    %v3019 = vmax.f32 %v2763, 0.0
    %v3020 = vmax.f32 %v2764, 0.0
    %v3021 = vmax.f32 %v2765, 0.0
    %v3022 = vmax.f32 %v2766, 0.0
    %v3023 = vmax.f32 %v2767, 0.0
    %v3024 = vmax.f32 %v2768, 0.0
    %v3025 = vmax.f32 %v2769, 0.0
    %v3026 = vmax.f32 %v2770, 0.0
    %v3027 = vmax.f32 %v2771, 0.0
    %v3028 = vmax.f32 %v2772, 0.0
    %v3029 = vmax.f32 %v2773, 0.0
    %v3030 = vmax.f32 %v2774, 0.0
    %v3031 = vmax.f32 %v2775, 0.0
    %v3032 = vmax.f32 %v2776, 0.0
    %v3033 = vmax.f32 %v2777, 0.0
    %v3034 = vmax.f32 %v2778, 0.0
    %v3035 = vmax.f32 %v2779, 0.0
    %v3036 = vmax.f32 %v2780, 0.0
    %v3037 = vmax.f32 %v2781, 0.0
    %v3038 = vmax.f32 %v2782, 0.0
    %v3039 = vmax.f32 %v2783, 0.0
    %v3040 = vmax.f32 %v2784, 0.0
    %v3041 = vmax.f32 %v2785, 0.0
    %v3042 = vmax.f32 %v2786, 0.0
    %v3043 = vmax.f32 %v2787, 0.0
    %v3044 = vmax.f32 %v2788, 0.0
    %v3045 = vmax.f32 %v2789, 0.0
    %v3046 = vmax.f32 %v2790, 0.0
    %3047 = vadd.xlane.f32.xlu0 %v2791
    %v3048 = vpop.xlane.xlu0 %3047
    %3049 = vadd.xlane.f32.xlu0 %v2792
    %v3050 = vpop.xlane.xlu0 %3049
    %3051 = vadd.xlane.f32.xlu0 %v2793
    %v3052 = vpop.xlane.xlu0 %3051
    %3053 = vadd.xlane.f32.xlu0 %v2794
    %v3054 = vpop.xlane.xlu0 %3053
    %3055 = vadd.xlane.f32.xlu0 %v2795
    %v3056 = vpop.xlane.xlu0 %3055
    %3057 = vadd.xlane.f32.xlu0 %v2796
    %v3058 = vpop.xlane.xlu0 %3057
    %3059 = vadd.xlane.f32.xlu0 %v2797
    %v3060 = vpop.xlane.xlu0 %3059
    %3061 = vadd.xlane.f32.xlu0 %v2798
    %v3062 = vpop.xlane.xlu0 %3061
    %3063 = vadd.xlane.f32.xlu0 %v2799
    %v3064 = vpop.xlane.xlu0 %3063
    %3065 = vadd.xlane.f32.xlu0 %v2800
    %v3066 = vpop.xlane.xlu0 %3065
    %3067 = vadd.xlane.f32.xlu0 %v2801
    %v3068 = vpop.xlane.xlu0 %3067
    %3069 = vadd.xlane.f32.xlu0 %v2802
    %v3070 = vpop.xlane.xlu0 %3069
    %3071 = vadd.xlane.f32.xlu0 %v2803
    %v3072 = vpop.xlane.xlu0 %3071
    %3073 = vadd.xlane.f32.xlu0 %v2804
    %v3074 = vpop.xlane.xlu0 %3073
    %3075 = vadd.xlane.f32.xlu0 %v2805
    %v3076 = vpop.xlane.xlu0 %3075
    %3077 = vadd.xlane.f32.xlu0 %v2806
    %v3078 = vpop.xlane.xlu0 %3077
    %3079 = vadd.xlane.f32.xlu0 %v2807
    %v3080 = vpop.xlane.xlu0 %3079
    %3081 = vadd.xlane.f32.xlu0 %v2808
    %v3082 = vpop.xlane.xlu0 %3081
    %3083 = vadd.xlane.f32.xlu0 %v2809
    %v3084 = vpop.xlane.xlu0 %3083
    %3085 = vadd.xlane.f32.xlu0 %v2810
    %v3086 = vpop.xlane.xlu0 %3085
    %3087 = vadd.xlane.f32.xlu0 %v2811
    %v3088 = vpop.xlane.xlu0 %3087
    %3089 = vadd.xlane.f32.xlu0 %v2812
    %v3090 = vpop.xlane.xlu0 %3089
    %3091 = vadd.xlane.f32.xlu0 %v2813
    %v3092 = vpop.xlane.xlu0 %3091
    %3093 = vadd.xlane.f32.xlu0 %v2814
    %v3094 = vpop.xlane.xlu0 %3093
    %3095 = vadd.xlane.f32.xlu0 %v2815
    %v3096 = vpop.xlane.xlu0 %3095
    %3097 = vadd.xlane.f32.xlu0 %v2816
    %v3098 = vpop.xlane.xlu0 %3097
    %3099 = vadd.xlane.f32.xlu0 %v2817
    %v3100 = vpop.xlane.xlu0 %3099
    %3101 = vadd.xlane.f32.xlu0 %v2818
    %v3102 = vpop.xlane.xlu0 %3101
    %3103 = vadd.xlane.f32.xlu0 %v2819
    %v3104 = vpop.xlane.xlu0 %3103
    %3105 = vadd.xlane.f32.xlu0 %v2820
    %v3106 = vpop.xlane.xlu0 %3105
    %3107 = vadd.xlane.f32.xlu0 %v2821
    %v3108 = vpop.xlane.xlu0 %3107
    %3109 = vadd.xlane.f32.xlu0 %v2822
    %v3110 = vpop.xlane.xlu0 %3109
    %3111 = vadd.xlane.f32.xlu0 %v2823
    %v3112 = vpop.xlane.xlu0 %3111
    %3113 = vadd.xlane.f32.xlu0 %v2824
    %v3114 = vpop.xlane.xlu0 %3113
    %3115 = vadd.xlane.f32.xlu0 %v2825
    %v3116 = vpop.xlane.xlu0 %3115
    %3117 = vadd.xlane.f32.xlu0 %v2826
    %v3118 = vpop.xlane.xlu0 %3117
    %3119 = vadd.xlane.f32.xlu0 %v2827
    %v3120 = vpop.xlane.xlu0 %3119
    %3121 = vadd.xlane.f32.xlu0 %v2828
    %v3122 = vpop.xlane.xlu0 %3121
    %3123 = vadd.xlane.f32.xlu0 %v2829
    %v3124 = vpop.xlane.xlu0 %3123
    %3125 = vadd.xlane.f32.xlu0 %v2830
    %v3126 = vpop.xlane.xlu0 %3125
    %3127 = vadd.xlane.f32.xlu0 %v2831
    %v3128 = vpop.xlane.xlu0 %3127
    %3129 = vadd.xlane.f32.xlu0 %v2832
    %v3130 = vpop.xlane.xlu0 %3129
    %3131 = vadd.xlane.f32.xlu0 %v2833
    %v3132 = vpop.xlane.xlu0 %3131
    %3133 = vadd.xlane.f32.xlu0 %v2834
    %v3134 = vpop.xlane.xlu0 %3133
    %3135 = vadd.xlane.f32.xlu0 %v2835
    %v3136 = vpop.xlane.xlu0 %3135
    %3137 = vadd.xlane.f32.xlu0 %v2836
    %v3138 = vpop.xlane.xlu0 %3137
    %3139 = vadd.xlane.f32.xlu0 %v2837
    %v3140 = vpop.xlane.xlu0 %3139
    %3141 = vadd.xlane.f32.xlu0 %v2838
    %v3142 = vpop.xlane.xlu0 %3141
    %3143 = vadd.xlane.f32.xlu0 %v2839
    %v3144 = vpop.xlane.xlu0 %3143
    %3145 = vadd.xlane.f32.xlu0 %v2840
    %v3146 = vpop.xlane.xlu0 %3145
    %3147 = vadd.xlane.f32.xlu0 %v2841
    %v3148 = vpop.xlane.xlu0 %3147
    %3149 = vadd.xlane.f32.xlu0 %v2842
    %v3150 = vpop.xlane.xlu0 %3149
    %3151 = vadd.xlane.f32.xlu0 %v2843
    %v3152 = vpop.xlane.xlu0 %3151
    %3153 = vadd.xlane.f32.xlu0 %v2844
    %v3154 = vpop.xlane.xlu0 %3153
    %3155 = vadd.xlane.f32.xlu0 %v2845
    %v3156 = vpop.xlane.xlu0 %3155
    %3157 = vadd.xlane.f32.xlu0 %v2846
    %v3158 = vpop.xlane.xlu0 %3157
    %3159 = vadd.xlane.f32.xlu0 %v2847
    %v3160 = vpop.xlane.xlu0 %3159
    %3161 = vadd.xlane.f32.xlu0 %v2848
    %v3162 = vpop.xlane.xlu0 %3161
    %3163 = vadd.xlane.f32.xlu0 %v2849
    %v3164 = vpop.xlane.xlu0 %3163
    %3165 = vadd.xlane.f32.xlu0 %v2850
    %v3166 = vpop.xlane.xlu0 %3165
    %3167 = vadd.xlane.f32.xlu0 %v2851
    %v3168 = vpop.xlane.xlu0 %3167
    %3169 = vadd.xlane.f32.xlu0 %v2852
    %v3170 = vpop.xlane.xlu0 %3169
    %3171 = vadd.xlane.f32.xlu0 %v2853
    %v3172 = vpop.xlane.xlu0 %3171
    %3173 = vadd.xlane.f32.xlu0 %v2854
    %v3174 = vpop.xlane.xlu0 %3173
    %3175 = vadd.xlane.f32.xlu0 %v2855
    %v3176 = vpop.xlane.xlu0 %3175
    %3177 = vadd.xlane.f32.xlu0 %v2856
    %v3178 = vpop.xlane.xlu0 %3177
    %3179 = vadd.xlane.f32.xlu0 %v2857
    %v3180 = vpop.xlane.xlu0 %3179
    %3181 = vadd.xlane.f32.xlu0 %v2858
    %v3182 = vpop.xlane.xlu0 %3181
    %3183 = vadd.xlane.f32.xlu0 %v2859
    %v3184 = vpop.xlane.xlu0 %3183
    %3185 = vadd.xlane.f32.xlu0 %v2860
    %v3186 = vpop.xlane.xlu0 %3185
    %3187 = vadd.xlane.f32.xlu0 %v2861
    %v3188 = vpop.xlane.xlu0 %3187
    %3189 = vadd.xlane.f32.xlu0 %v2862
    %v3190 = vpop.xlane.xlu0 %3189
    %3191 = vadd.xlane.f32.xlu0 %v2863
    %v3192 = vpop.xlane.xlu0 %3191
    %3193 = vadd.xlane.f32.xlu0 %v2864
    %v3194 = vpop.xlane.xlu0 %3193
    %3195 = vadd.xlane.f32.xlu0 %v2865
    %v3196 = vpop.xlane.xlu0 %3195
    %3197 = vadd.xlane.f32.xlu0 %v2866
    %v3198 = vpop.xlane.xlu0 %3197
    %3199 = vadd.xlane.f32.xlu0 %v2867
    %v3200 = vpop.xlane.xlu0 %3199
    %3201 = vadd.xlane.f32.xlu0 %v2868
    %v3202 = vpop.xlane.xlu0 %3201
    %3203 = vadd.xlane.f32.xlu0 %v2869
    %v3204 = vpop.xlane.xlu0 %3203
    %3205 = vadd.xlane.f32.xlu0 %v2870
    %v3206 = vpop.xlane.xlu0 %3205
    %3207 = vadd.xlane.f32.xlu0 %v2871
    %v3208 = vpop.xlane.xlu0 %3207
    %3209 = vadd.xlane.f32.xlu0 %v2872
    %v3210 = vpop.xlane.xlu0 %3209
    %3211 = vadd.xlane.f32.xlu0 %v2873
    %v3212 = vpop.xlane.xlu0 %3211
    %3213 = vadd.xlane.f32.xlu0 %v2874
    %v3214 = vpop.xlane.xlu0 %3213
    %3215 = vadd.xlane.f32.xlu0 %v2875
    %v3216 = vpop.xlane.xlu0 %3215
    %3217 = vadd.xlane.f32.xlu0 %v2876
    %v3218 = vpop.xlane.xlu0 %3217
    %3219 = vadd.xlane.f32.xlu0 %v2877
    %v3220 = vpop.xlane.xlu0 %3219
    %3221 = vadd.xlane.f32.xlu0 %v2878
    %v3222 = vpop.xlane.xlu0 %3221
    %3223 = vadd.xlane.f32.xlu0 %v2879
    %v3224 = vpop.xlane.xlu0 %3223
    %3225 = vadd.xlane.f32.xlu0 %v2880
    %v3226 = vpop.xlane.xlu0 %3225
    %3227 = vadd.xlane.f32.xlu0 %v2881
    %v3228 = vpop.xlane.xlu0 %3227
    %3229 = vadd.xlane.f32.xlu0 %v2882
    %v3230 = vpop.xlane.xlu0 %3229
    %3231 = vadd.xlane.f32.xlu0 %v2883
    %v3232 = vpop.xlane.xlu0 %3231
    %3233 = vadd.xlane.f32.xlu0 %v2884
    %v3234 = vpop.xlane.xlu0 %3233
    %3235 = vadd.xlane.f32.xlu0 %v2885
    %v3236 = vpop.xlane.xlu0 %3235
    %3237 = vadd.xlane.f32.xlu0 %v2886
    %v3238 = vpop.xlane.xlu0 %3237
    %3239 = vadd.xlane.f32.xlu0 %v2887
    %v3240 = vpop.xlane.xlu0 %3239
    %3241 = vadd.xlane.f32.xlu0 %v2888
    %v3242 = vpop.xlane.xlu0 %3241
    %3243 = vadd.xlane.f32.xlu0 %v2889
    %v3244 = vpop.xlane.xlu0 %3243
    %3245 = vadd.xlane.f32.xlu0 %v2890
    %v3246 = vpop.xlane.xlu0 %3245
    %3247 = vadd.xlane.f32.xlu0 %v2891
    %v3248 = vpop.xlane.xlu0 %3247
    %3249 = vadd.xlane.f32.xlu0 %v2892
    %v3250 = vpop.xlane.xlu0 %3249
    %3251 = vadd.xlane.f32.xlu0 %v2893
    %v3252 = vpop.xlane.xlu0 %3251
    %3253 = vadd.xlane.f32.xlu0 %v2894
    %v3254 = vpop.xlane.xlu0 %3253
    %3255 = vadd.xlane.f32.xlu0 %v2895
    %v3256 = vpop.xlane.xlu0 %3255
    %3257 = vadd.xlane.f32.xlu0 %v2896
    %v3258 = vpop.xlane.xlu0 %3257
    %3259 = vadd.xlane.f32.xlu0 %v2897
    %v3260 = vpop.xlane.xlu0 %3259
    %3261 = vadd.xlane.f32.xlu0 %v2898
    %v3262 = vpop.xlane.xlu0 %3261
    %3263 = vadd.xlane.f32.xlu0 %v2899
    %v3264 = vpop.xlane.xlu0 %3263
    %3265 = vadd.xlane.f32.xlu0 %v2900
    %v3266 = vpop.xlane.xlu0 %3265
    %3267 = vadd.xlane.f32.xlu0 %v2901
    %v3268 = vpop.xlane.xlu0 %3267
    %3269 = vadd.xlane.f32.xlu0 %v2902
    %v3270 = vpop.xlane.xlu0 %3269
    %3271 = vadd.xlane.f32.xlu0 %v2903
    %v3272 = vpop.xlane.xlu0 %3271
    %3273 = vadd.xlane.f32.xlu0 %v2904
    %v3274 = vpop.xlane.xlu0 %3273
    %3275 = vadd.xlane.f32.xlu0 %v2905
    %v3276 = vpop.xlane.xlu0 %3275
    %3277 = vadd.xlane.f32.xlu0 %v2906
    %v3278 = vpop.xlane.xlu0 %3277
    %3279 = vadd.xlane.f32.xlu0 %v2907
    %v3280 = vpop.xlane.xlu0 %3279
    %3281 = vadd.xlane.f32.xlu0 %v2908
    %v3282 = vpop.xlane.xlu0 %3281
    %3283 = vadd.xlane.f32.xlu0 %v2909
    %v3284 = vpop.xlane.xlu0 %3283
    %3285 = vadd.xlane.f32.xlu0 %v2910
    %v3286 = vpop.xlane.xlu0 %3285
    %3287 = vadd.xlane.f32.xlu0 %v2911
    %v3288 = vpop.xlane.xlu0 %3287
    %3289 = vadd.xlane.f32.xlu0 %v2912
    %v3290 = vpop.xlane.xlu0 %3289
    %3291 = vadd.xlane.f32.xlu0 %v2913
    %v3292 = vpop.xlane.xlu0 %3291
    %3293 = vadd.xlane.f32.xlu0 %v2914
    %v3294 = vpop.xlane.xlu0 %3293
    %3295 = vadd.xlane.f32.xlu0 %v2915
    %v3296 = vpop.xlane.xlu0 %3295
    %3297 = vadd.xlane.f32.xlu0 %v2916
    %v3298 = vpop.xlane.xlu0 %3297
    %3299 = vadd.xlane.f32.xlu0 %v2917
    %v3300 = vpop.xlane.xlu0 %3299
    %3301 = vadd.xlane.f32.xlu0 %v2918
    %v3302 = vpop.xlane.xlu0 %3301
    %3303 = vadd.xlane.f32.xlu0 %v2919
    %v3304 = vpop.xlane.xlu0 %3303
    %3305 = vadd.xlane.f32.xlu0 %v2920
    %v3306 = vpop.xlane.xlu0 %3305
    %3307 = vadd.xlane.f32.xlu0 %v2921
    %v3308 = vpop.xlane.xlu0 %3307
    %3309 = vadd.xlane.f32.xlu0 %v2922
    %v3310 = vpop.xlane.xlu0 %3309
    %3311 = vadd.xlane.f32.xlu0 %v2923
    %v3312 = vpop.xlane.xlu0 %3311
    %3313 = vadd.xlane.f32.xlu0 %v2924
    %v3314 = vpop.xlane.xlu0 %3313
    %3315 = vadd.xlane.f32.xlu0 %v2925
    %v3316 = vpop.xlane.xlu0 %3315
    %3317 = vadd.xlane.f32.xlu0 %v2926
    %v3318 = vpop.xlane.xlu0 %3317
    %3319 = vadd.xlane.f32.xlu0 %v2927
    %v3320 = vpop.xlane.xlu0 %3319
    %3321 = vadd.xlane.f32.xlu0 %v2928
    %v3322 = vpop.xlane.xlu0 %3321
    %3323 = vadd.xlane.f32.xlu0 %v2929
    %v3324 = vpop.xlane.xlu0 %3323
    %3325 = vadd.xlane.f32.xlu0 %v2930
    %v3326 = vpop.xlane.xlu0 %3325
    %3327 = vadd.xlane.f32.xlu0 %v2931
    %v3328 = vpop.xlane.xlu0 %3327
    %3329 = vadd.xlane.f32.xlu0 %v2932
    %v3330 = vpop.xlane.xlu0 %3329
    %3331 = vadd.xlane.f32.xlu0 %v2933
    %v3332 = vpop.xlane.xlu0 %3331
    %3333 = vadd.xlane.f32.xlu0 %v2934
    %v3334 = vpop.xlane.xlu0 %3333
    %3335 = vadd.xlane.f32.xlu0 %v2935
    %v3336 = vpop.xlane.xlu0 %3335
    %3337 = vadd.xlane.f32.xlu0 %v2936
    %v3338 = vpop.xlane.xlu0 %3337
    %3339 = vadd.xlane.f32.xlu0 %v2937
    %v3340 = vpop.xlane.xlu0 %3339
    %3341 = vadd.xlane.f32.xlu0 %v2938
    %v3342 = vpop.xlane.xlu0 %3341
    %3343 = vadd.xlane.f32.xlu0 %v2939
    %v3344 = vpop.xlane.xlu0 %3343
    %3345 = vadd.xlane.f32.xlu0 %v2940
    %v3346 = vpop.xlane.xlu0 %3345
    %3347 = vadd.xlane.f32.xlu0 %v2941
    %v3348 = vpop.xlane.xlu0 %3347
    %3349 = vadd.xlane.f32.xlu0 %v2942
    %v3350 = vpop.xlane.xlu0 %3349
    %3351 = vadd.xlane.f32.xlu0 %v2943
    %v3352 = vpop.xlane.xlu0 %3351
    %3353 = vadd.xlane.f32.xlu0 %v2944
    %v3354 = vpop.xlane.xlu0 %3353
    %3355 = vadd.xlane.f32.xlu0 %v2945
    %v3356 = vpop.xlane.xlu0 %3355
    %3357 = vadd.xlane.f32.xlu0 %v2946
    %v3358 = vpop.xlane.xlu0 %3357
    %3359 = vadd.xlane.f32.xlu0 %v2947
    %v3360 = vpop.xlane.xlu0 %3359
    %3361 = vadd.xlane.f32.xlu0 %v2948
    %v3362 = vpop.xlane.xlu0 %3361
    %3363 = vadd.xlane.f32.xlu0 %v2949
    %v3364 = vpop.xlane.xlu0 %3363
    %3365 = vadd.xlane.f32.xlu0 %v2950
    %v3366 = vpop.xlane.xlu0 %3365
    %3367 = vadd.xlane.f32.xlu0 %v2951
    %v3368 = vpop.xlane.xlu0 %3367
    %3369 = vadd.xlane.f32.xlu0 %v2952
    %v3370 = vpop.xlane.xlu0 %3369
    %3371 = vadd.xlane.f32.xlu0 %v2953
    %v3372 = vpop.xlane.xlu0 %3371
    %3373 = vadd.xlane.f32.xlu0 %v2954
    %v3374 = vpop.xlane.xlu0 %3373
    %3375 = vadd.xlane.f32.xlu0 %v2955
    %v3376 = vpop.xlane.xlu0 %3375
    %3377 = vadd.xlane.f32.xlu0 %v2956
    %v3378 = vpop.xlane.xlu0 %3377
    %3379 = vadd.xlane.f32.xlu0 %v2957
    %v3380 = vpop.xlane.xlu0 %3379
    %3381 = vadd.xlane.f32.xlu0 %v2958
    %v3382 = vpop.xlane.xlu0 %3381
    %3383 = vadd.xlane.f32.xlu0 %v2959
    %v3384 = vpop.xlane.xlu0 %3383
    %3385 = vadd.xlane.f32.xlu0 %v2960
    %v3386 = vpop.xlane.xlu0 %3385
    %3387 = vadd.xlane.f32.xlu0 %v2961
    %v3388 = vpop.xlane.xlu0 %3387
    %3389 = vadd.xlane.f32.xlu0 %v2962
    %v3390 = vpop.xlane.xlu0 %3389
    %3391 = vadd.xlane.f32.xlu0 %v2963
    %v3392 = vpop.xlane.xlu0 %3391
    %3393 = vadd.xlane.f32.xlu0 %v2964
    %v3394 = vpop.xlane.xlu0 %3393
    %3395 = vadd.xlane.f32.xlu0 %v2965
    %v3396 = vpop.xlane.xlu0 %3395
    %3397 = vadd.xlane.f32.xlu0 %v2966
    %v3398 = vpop.xlane.xlu0 %3397
    %3399 = vadd.xlane.f32.xlu0 %v2967
    %v3400 = vpop.xlane.xlu0 %3399
    %3401 = vadd.xlane.f32.xlu0 %v2968
    %v3402 = vpop.xlane.xlu0 %3401
    %3403 = vadd.xlane.f32.xlu0 %v2969
    %v3404 = vpop.xlane.xlu0 %3403
    %3405 = vadd.xlane.f32.xlu0 %v2970
    %v3406 = vpop.xlane.xlu0 %3405
    %3407 = vadd.xlane.f32.xlu0 %v2971
    %v3408 = vpop.xlane.xlu0 %3407
    %3409 = vadd.xlane.f32.xlu0 %v2972
    %v3410 = vpop.xlane.xlu0 %3409
    %3411 = vadd.xlane.f32.xlu0 %v2973
    %v3412 = vpop.xlane.xlu0 %3411
    %3413 = vadd.xlane.f32.xlu0 %v2974
    %v3414 = vpop.xlane.xlu0 %3413
    %3415 = vadd.xlane.f32.xlu0 %v2975
    %v3416 = vpop.xlane.xlu0 %3415
    %3417 = vadd.xlane.f32.xlu0 %v2976
    %v3418 = vpop.xlane.xlu0 %3417
    %3419 = vadd.xlane.f32.xlu0 %v2977
    %v3420 = vpop.xlane.xlu0 %3419
    %3421 = vadd.xlane.f32.xlu0 %v2978
    %v3422 = vpop.xlane.xlu0 %3421
    %3423 = vadd.xlane.f32.xlu0 %v2979
    %v3424 = vpop.xlane.xlu0 %3423
    %3425 = vadd.xlane.f32.xlu0 %v2980
    %v3426 = vpop.xlane.xlu0 %3425
    %3427 = vadd.xlane.f32.xlu0 %v2981
    %v3428 = vpop.xlane.xlu0 %3427
    %3429 = vadd.xlane.f32.xlu0 %v2982
    %v3430 = vpop.xlane.xlu0 %3429
    %3431 = vadd.xlane.f32.xlu0 %v2983
    %v3432 = vpop.xlane.xlu0 %3431
    %3433 = vadd.xlane.f32.xlu0 %v2984
    %v3434 = vpop.xlane.xlu0 %3433
    %3435 = vadd.xlane.f32.xlu0 %v2985
    %v3436 = vpop.xlane.xlu0 %3435
    %3437 = vadd.xlane.f32.xlu0 %v2986
    %v3438 = vpop.xlane.xlu0 %3437
    %3439 = vadd.xlane.f32.xlu0 %v2987
    %v3440 = vpop.xlane.xlu0 %3439
    %3441 = vadd.xlane.f32.xlu0 %v2988
    %v3442 = vpop.xlane.xlu0 %3441
    %3443 = vadd.xlane.f32.xlu0 %v2989
    %v3444 = vpop.xlane.xlu0 %3443
    %3445 = vadd.xlane.f32.xlu0 %v2990
    %v3446 = vpop.xlane.xlu0 %3445
    %3447 = vadd.xlane.f32.xlu0 %v2991
    %v3448 = vpop.xlane.xlu0 %3447
    %3449 = vadd.xlane.f32.xlu0 %v2992
    %v3450 = vpop.xlane.xlu0 %3449
    %3451 = vadd.xlane.f32.xlu0 %v2993
    %v3452 = vpop.xlane.xlu0 %3451
    %3453 = vadd.xlane.f32.xlu0 %v2994
    %v3454 = vpop.xlane.xlu0 %3453
    %3455 = vadd.xlane.f32.xlu0 %v2995
    %v3456 = vpop.xlane.xlu0 %3455
    %3457 = vadd.xlane.f32.xlu0 %v2996
    %v3458 = vpop.xlane.xlu0 %3457
    %3459 = vadd.xlane.f32.xlu0 %v2997
    %v3460 = vpop.xlane.xlu0 %3459
    %3461 = vadd.xlane.f32.xlu0 %v2998
    %v3462 = vpop.xlane.xlu0 %3461
    %3463 = vadd.xlane.f32.xlu0 %v2999
    %v3464 = vpop.xlane.xlu0 %3463
    %3465 = vadd.xlane.f32.xlu0 %v3000
    %v3466 = vpop.xlane.xlu0 %3465
    %3467 = vadd.xlane.f32.xlu0 %v3001
    %v3468 = vpop.xlane.xlu0 %3467
    %3469 = vadd.xlane.f32.xlu0 %v3002
    %v3470 = vpop.xlane.xlu0 %3469
    %3471 = vadd.xlane.f32.xlu0 %v3003
    %v3472 = vpop.xlane.xlu0 %3471
    %3473 = vadd.xlane.f32.xlu0 %v3004
    %v3474 = vpop.xlane.xlu0 %3473
    %3475 = vadd.xlane.f32.xlu0 %v3005
    %v3476 = vpop.xlane.xlu0 %3475
    %3477 = vadd.xlane.f32.xlu0 %v3006
    %v3478 = vpop.xlane.xlu0 %3477
    %3479 = vadd.xlane.f32.xlu0 %v3007
    %v3480 = vpop.xlane.xlu0 %3479
    %3481 = vadd.xlane.f32.xlu0 %v3008
    %v3482 = vpop.xlane.xlu0 %3481
    %3483 = vadd.xlane.f32.xlu0 %v3009
    %v3484 = vpop.xlane.xlu0 %3483
    %3485 = vadd.xlane.f32.xlu0 %v3010
    %v3486 = vpop.xlane.xlu0 %3485
    %3487 = vadd.xlane.f32.xlu0 %v3011
    %v3488 = vpop.xlane.xlu0 %3487
    %3489 = vadd.xlane.f32.xlu0 %v3012
    %v3490 = vpop.xlane.xlu0 %3489
    %3491 = vadd.xlane.f32.xlu0 %v3013
    %v3492 = vpop.xlane.xlu0 %3491
    %3493 = vadd.xlane.f32.xlu0 %v3014
    %v3494 = vpop.xlane.xlu0 %3493
    %3495 = vadd.xlane.f32.xlu0 %v3015
    %v3496 = vpop.xlane.xlu0 %3495
    %3497 = vadd.xlane.f32.xlu0 %v3016
    %v3498 = vpop.xlane.xlu0 %3497
    %3499 = vadd.xlane.f32.xlu0 %v3017
    %v3500 = vpop.xlane.xlu0 %3499
    %3501 = vadd.xlane.f32.xlu0 %v3018
    %v3502 = vpop.xlane.xlu0 %3501
    %3503 = vadd.xlane.f32.xlu0 %v3019
    %v3504 = vpop.xlane.xlu0 %3503
    %3505 = vadd.xlane.f32.xlu0 %v3020
    %v3506 = vpop.xlane.xlu0 %3505
    %3507 = vadd.xlane.f32.xlu0 %v3021
    %v3508 = vpop.xlane.xlu0 %3507
    %3509 = vadd.xlane.f32.xlu0 %v3022
    %v3510 = vpop.xlane.xlu0 %3509
    %3511 = vadd.xlane.f32.xlu0 %v3023
    %v3512 = vpop.xlane.xlu0 %3511
    %3513 = vadd.xlane.f32.xlu0 %v3024
    %v3514 = vpop.xlane.xlu0 %3513
    %3515 = vadd.xlane.f32.xlu0 %v3025
    %v3516 = vpop.xlane.xlu0 %3515
    %3517 = vadd.xlane.f32.xlu0 %v3026
    %v3518 = vpop.xlane.xlu0 %3517
    %3519 = vadd.xlane.f32.xlu0 %v3027
    %v3520 = vpop.xlane.xlu0 %3519
    %3521 = vadd.xlane.f32.xlu0 %v3028
    %v3522 = vpop.xlane.xlu0 %3521
    %3523 = vadd.xlane.f32.xlu0 %v3029
    %v3524 = vpop.xlane.xlu0 %3523
    %3525 = vadd.xlane.f32.xlu0 %v3030
    %v3526 = vpop.xlane.xlu0 %3525
    %3527 = vadd.xlane.f32.xlu0 %v3031
    %v3528 = vpop.xlane.xlu0 %3527
    %3529 = vadd.xlane.f32.xlu0 %v3032
    %v3530 = vpop.xlane.xlu0 %3529
    %3531 = vadd.xlane.f32.xlu0 %v3033
    %v3532 = vpop.xlane.xlu0 %3531
    %3533 = vadd.xlane.f32.xlu0 %v3034
    %v3534 = vpop.xlane.xlu0 %3533
    %3535 = vadd.xlane.f32.xlu0 %v3035
    %v3536 = vpop.xlane.xlu0 %3535
    %3537 = vadd.xlane.f32.xlu0 %v3036
    %v3538 = vpop.xlane.xlu0 %3537
    %3539 = vadd.xlane.f32.xlu0 %v3037
    %v3540 = vpop.xlane.xlu0 %3539
    %3541 = vadd.xlane.f32.xlu0 %v3038
    %v3542 = vpop.xlane.xlu0 %3541
    %3543 = vadd.xlane.f32.xlu0 %v3039
    %v3544 = vpop.xlane.xlu0 %3543
    %3545 = vadd.xlane.f32.xlu0 %v3040
    %v3546 = vpop.xlane.xlu0 %3545
    %3547 = vadd.xlane.f32.xlu0 %v3041
    %v3548 = vpop.xlane.xlu0 %3547
    %3549 = vadd.xlane.f32.xlu0 %v3042
    %v3550 = vpop.xlane.xlu0 %3549
    %3551 = vadd.xlane.f32.xlu0 %v3043
    %v3552 = vpop.xlane.xlu0 %3551
    %3553 = vadd.xlane.f32.xlu0 %v3044
    %v3554 = vpop.xlane.xlu0 %3553
    %3555 = vadd.xlane.f32.xlu0 %v3045
    %v3556 = vpop.xlane.xlu0 %3555
    %3557 = vadd.xlane.f32.xlu0 %v3046
    %v3558 = vpop.xlane.xlu0 %3557
    %v3559 = vadd.f32 %v3048, 0.0
    %v3560 = vadd.f32 %v3050, 0.0
    %v3561 = vadd.f32 %v3052, 0.0
    %v3562 = vadd.f32 %v3054, 0.0
    %v3563 = vadd.f32 %v3056, 0.0
    %v3564 = vadd.f32 %v3058, 0.0
    %v3565 = vadd.f32 %v3060, 0.0
    %v3566 = vadd.f32 %v3062, 0.0
    %v3567 = vadd.f32 %v3064, 0.0
    %v3568 = vadd.f32 %v3066, 0.0
    %v3569 = vadd.f32 %v3068, 0.0
    %v3570 = vadd.f32 %v3070, 0.0
    %v3571 = vadd.f32 %v3072, 0.0
    %v3572 = vadd.f32 %v3074, 0.0
    %v3573 = vadd.f32 %v3076, 0.0
    %v3574 = vadd.f32 %v3078, 0.0
    %v3575 = vadd.f32 %v3080, 0.0
    %v3576 = vadd.f32 %v3082, 0.0
    %v3577 = vadd.f32 %v3084, 0.0
    %v3578 = vadd.f32 %v3086, 0.0
    %v3579 = vadd.f32 %v3088, 0.0
    %v3580 = vadd.f32 %v3090, 0.0
    %v3581 = vadd.f32 %v3092, 0.0
    %v3582 = vadd.f32 %v3094, 0.0
    %v3583 = vadd.f32 %v3096, 0.0
    %v3584 = vadd.f32 %v3098, 0.0
    %v3585 = vadd.f32 %v3100, 0.0
    %v3586 = vadd.f32 %v3102, 0.0
    %v3587 = vadd.f32 %v3104, 0.0
    %v3588 = vadd.f32 %v3106, 0.0
    %v3589 = vadd.f32 %v3108, 0.0
    %v3590 = vadd.f32 %v3110, 0.0
    %v3591 = vadd.f32 %v3112, 0.0
    %v3592 = vadd.f32 %v3114, 0.0
    %v3593 = vadd.f32 %v3116, 0.0
    %v3594 = vadd.f32 %v3118, 0.0
    %v3595 = vadd.f32 %v3120, 0.0
    %v3596 = vadd.f32 %v3122, 0.0
    %v3597 = vadd.f32 %v3124, 0.0
    %v3598 = vadd.f32 %v3126, 0.0
    %v3599 = vadd.f32 %v3128, 0.0
    %v3600 = vadd.f32 %v3130, 0.0
    %v3601 = vadd.f32 %v3132, 0.0
    %v3602 = vadd.f32 %v3134, 0.0
    %v3603 = vadd.f32 %v3136, 0.0
    %v3604 = vadd.f32 %v3138, 0.0
    %v3605 = vadd.f32 %v3140, 0.0
    %v3606 = vadd.f32 %v3142, 0.0
    %v3607 = vadd.f32 %v3144, 0.0
    %v3608 = vadd.f32 %v3146, 0.0
    %v3609 = vadd.f32 %v3148, 0.0
    %v3610 = vadd.f32 %v3150, 0.0
    %v3611 = vadd.f32 %v3152, 0.0
    %v3612 = vadd.f32 %v3154, 0.0
    %v3613 = vadd.f32 %v3156, 0.0
    %v3614 = vadd.f32 %v3158, 0.0
    %v3615 = vadd.f32 %v3160, 0.0
    %v3616 = vadd.f32 %v3162, 0.0
    %v3617 = vadd.f32 %v3164, 0.0
    %v3618 = vadd.f32 %v3166, 0.0
    %v3619 = vadd.f32 %v3168, 0.0
    %v3620 = vadd.f32 %v3170, 0.0
    %v3621 = vadd.f32 %v3172, 0.0
    %v3622 = vadd.f32 %v3174, 0.0
    %v3623 = vadd.f32 %v3176, 0.0
    %v3624 = vadd.f32 %v3178, 0.0
    %v3625 = vadd.f32 %v3180, 0.0
    %v3626 = vadd.f32 %v3182, 0.0
    %v3627 = vadd.f32 %v3184, 0.0
    %v3628 = vadd.f32 %v3186, 0.0
    %v3629 = vadd.f32 %v3188, 0.0
    %v3630 = vadd.f32 %v3190, 0.0
    %v3631 = vadd.f32 %v3192, 0.0
    %v3632 = vadd.f32 %v3194, 0.0
    %v3633 = vadd.f32 %v3196, 0.0
    %v3634 = vadd.f32 %v3198, 0.0
    %v3635 = vadd.f32 %v3200, 0.0
    %v3636 = vadd.f32 %v3202, 0.0
    %v3637 = vadd.f32 %v3204, 0.0
    %v3638 = vadd.f32 %v3206, 0.0
    %v3639 = vadd.f32 %v3208, 0.0
    %v3640 = vadd.f32 %v3210, 0.0
    %v3641 = vadd.f32 %v3212, 0.0
    %v3642 = vadd.f32 %v3214, 0.0
    %v3643 = vadd.f32 %v3216, 0.0
    %v3644 = vadd.f32 %v3218, 0.0
    %v3645 = vadd.f32 %v3220, 0.0
    %v3646 = vadd.f32 %v3222, 0.0
    %v3647 = vadd.f32 %v3224, 0.0
    %v3648 = vadd.f32 %v3226, 0.0
    %v3649 = vadd.f32 %v3228, 0.0
    %v3650 = vadd.f32 %v3230, 0.0
    %v3651 = vadd.f32 %v3232, 0.0
    %v3652 = vadd.f32 %v3234, 0.0
    %v3653 = vadd.f32 %v3236, 0.0
    %v3654 = vadd.f32 %v3238, 0.0
    %v3655 = vadd.f32 %v3240, 0.0
    %v3656 = vadd.f32 %v3242, 0.0
    %v3657 = vadd.f32 %v3244, 0.0
    %v3658 = vadd.f32 %v3246, 0.0
    %v3659 = vadd.f32 %v3248, 0.0
    %v3660 = vadd.f32 %v3250, 0.0
    %v3661 = vadd.f32 %v3252, 0.0
    %v3662 = vadd.f32 %v3254, 0.0
    %v3663 = vadd.f32 %v3256, 0.0
    %v3664 = vadd.f32 %v3258, 0.0
    %v3665 = vadd.f32 %v3260, 0.0
    %v3666 = vadd.f32 %v3262, 0.0
    %v3667 = vadd.f32 %v3264, 0.0
    %v3668 = vadd.f32 %v3266, 0.0
    %v3669 = vadd.f32 %v3268, 0.0
    %v3670 = vadd.f32 %v3270, 0.0
    %v3671 = vadd.f32 %v3272, 0.0
    %v3672 = vadd.f32 %v3274, 0.0
    %v3673 = vadd.f32 %v3276, 0.0
    %v3674 = vadd.f32 %v3278, 0.0
    %v3675 = vadd.f32 %v3280, 0.0
    %v3676 = vadd.f32 %v3282, 0.0
    %v3677 = vadd.f32 %v3284, 0.0
    %v3678 = vadd.f32 %v3286, 0.0
    %v3679 = vadd.f32 %v3288, 0.0
    %v3680 = vadd.f32 %v3290, 0.0
    %v3681 = vadd.f32 %v3292, 0.0
    %v3682 = vadd.f32 %v3294, 0.0
    %v3683 = vadd.f32 %v3296, 0.0
    %v3684 = vadd.f32 %v3298, 0.0
    %v3685 = vadd.f32 %v3300, 0.0
    %v3686 = vadd.f32 %v3302, 0.0
    %v3687 = vadd.f32 %v3304, 0.0
    %v3688 = vadd.f32 %v3306, 0.0
    %v3689 = vadd.f32 %v3308, 0.0
    %v3690 = vadd.f32 %v3310, 0.0
    %v3691 = vadd.f32 %v3312, 0.0
    %v3692 = vadd.f32 %v3314, 0.0
    %v3693 = vadd.f32 %v3316, 0.0
    %v3694 = vadd.f32 %v3318, 0.0
    %v3695 = vadd.f32 %v3320, 0.0
    %v3696 = vadd.f32 %v3322, 0.0
    %v3697 = vadd.f32 %v3324, 0.0
    %v3698 = vadd.f32 %v3326, 0.0
    %v3699 = vadd.f32 %v3328, 0.0
    %v3700 = vadd.f32 %v3330, 0.0
    %v3701 = vadd.f32 %v3332, 0.0
    %v3702 = vadd.f32 %v3334, 0.0
    %v3703 = vadd.f32 %v3336, 0.0
    %v3704 = vadd.f32 %v3338, 0.0
    %v3705 = vadd.f32 %v3340, 0.0
    %v3706 = vadd.f32 %v3342, 0.0
    %v3707 = vadd.f32 %v3344, 0.0
    %v3708 = vadd.f32 %v3346, 0.0
    %v3709 = vadd.f32 %v3348, 0.0
    %v3710 = vadd.f32 %v3350, 0.0
    %v3711 = vadd.f32 %v3352, 0.0
    %v3712 = vadd.f32 %v3354, 0.0
    %v3713 = vadd.f32 %v3356, 0.0
    %v3714 = vadd.f32 %v3358, 0.0
    %v3715 = vadd.f32 %v3360, 0.0
    %v3716 = vadd.f32 %v3362, 0.0
    %v3717 = vadd.f32 %v3364, 0.0
    %v3718 = vadd.f32 %v3366, 0.0
    %v3719 = vadd.f32 %v3368, 0.0
    %v3720 = vadd.f32 %v3370, 0.0
    %v3721 = vadd.f32 %v3372, 0.0
    %v3722 = vadd.f32 %v3374, 0.0
    %v3723 = vadd.f32 %v3376, 0.0
    %v3724 = vadd.f32 %v3378, 0.0
    %v3725 = vadd.f32 %v3380, 0.0
    %v3726 = vadd.f32 %v3382, 0.0
    %v3727 = vadd.f32 %v3384, 0.0
    %v3728 = vadd.f32 %v3386, 0.0
    %v3729 = vadd.f32 %v3388, 0.0
    %v3730 = vadd.f32 %v3390, 0.0
    %v3731 = vadd.f32 %v3392, 0.0
    %v3732 = vadd.f32 %v3394, 0.0
    %v3733 = vadd.f32 %v3396, 0.0
    %v3734 = vadd.f32 %v3398, 0.0
    %v3735 = vadd.f32 %v3400, 0.0
    %v3736 = vadd.f32 %v3402, 0.0
    %v3737 = vadd.f32 %v3404, 0.0
    %v3738 = vadd.f32 %v3406, 0.0
    %v3739 = vadd.f32 %v3408, 0.0
    %v3740 = vadd.f32 %v3410, 0.0
    %v3741 = vadd.f32 %v3412, 0.0
    %v3742 = vadd.f32 %v3414, 0.0
    %v3743 = vadd.f32 %v3416, 0.0
    %v3744 = vadd.f32 %v3418, 0.0
    %v3745 = vadd.f32 %v3420, 0.0
    %v3746 = vadd.f32 %v3422, 0.0
    %v3747 = vadd.f32 %v3424, 0.0
    %v3748 = vadd.f32 %v3426, 0.0
    %v3749 = vadd.f32 %v3428, 0.0
    %v3750 = vadd.f32 %v3430, 0.0
    %v3751 = vadd.f32 %v3432, 0.0
    %v3752 = vadd.f32 %v3434, 0.0
    %v3753 = vadd.f32 %v3436, 0.0
    %v3754 = vadd.f32 %v3438, 0.0
    %v3755 = vadd.f32 %v3440, 0.0
    %v3756 = vadd.f32 %v3442, 0.0
    %v3757 = vadd.f32 %v3444, 0.0
    %v3758 = vadd.f32 %v3446, 0.0
    %v3759 = vadd.f32 %v3448, 0.0
    %v3760 = vadd.f32 %v3450, 0.0
    %v3761 = vadd.f32 %v3452, 0.0
    %v3762 = vadd.f32 %v3454, 0.0
    %v3763 = vadd.f32 %v3456, 0.0
    %v3764 = vadd.f32 %v3458, 0.0
    %v3765 = vadd.f32 %v3460, 0.0
    %v3766 = vadd.f32 %v3462, 0.0
    %v3767 = vadd.f32 %v3464, 0.0
    %v3768 = vadd.f32 %v3466, 0.0
    %v3769 = vadd.f32 %v3468, 0.0
    %v3770 = vadd.f32 %v3470, 0.0
    %v3771 = vadd.f32 %v3472, 0.0
    %v3772 = vadd.f32 %v3474, 0.0
    %v3773 = vadd.f32 %v3476, 0.0
    %v3774 = vadd.f32 %v3478, 0.0
    %v3775 = vadd.f32 %v3480, 0.0
    %v3776 = vadd.f32 %v3482, 0.0
    %v3777 = vadd.f32 %v3484, 0.0
    %v3778 = vadd.f32 %v3486, 0.0
    %v3779 = vadd.f32 %v3488, 0.0
    %v3780 = vadd.f32 %v3490, 0.0
    %v3781 = vadd.f32 %v3492, 0.0
    %v3782 = vadd.f32 %v3494, 0.0
    %v3783 = vadd.f32 %v3496, 0.0
    %v3784 = vadd.f32 %v3498, 0.0
    %v3785 = vadd.f32 %v3500, 0.0
    %v3786 = vadd.f32 %v3502, 0.0
    %v3787 = vadd.f32 %v3504, 0.0
    %v3788 = vadd.f32 %v3506, 0.0
    %v3789 = vadd.f32 %v3508, 0.0
    %v3790 = vadd.f32 %v3510, 0.0
    %v3791 = vadd.f32 %v3512, 0.0
    %v3792 = vadd.f32 %v3514, 0.0
    %v3793 = vadd.f32 %v3516, 0.0
    %v3794 = vadd.f32 %v3518, 0.0
    %v3795 = vadd.f32 %v3520, 0.0
    %v3796 = vadd.f32 %v3522, 0.0
    %v3797 = vadd.f32 %v3524, 0.0
    %v3798 = vadd.f32 %v3526, 0.0
    %v3799 = vadd.f32 %v3528, 0.0
    %v3800 = vadd.f32 %v3530, 0.0
    %v3801 = vadd.f32 %v3532, 0.0
    %v3802 = vadd.f32 %v3534, 0.0
    %v3803 = vadd.f32 %v3536, 0.0
    %v3804 = vadd.f32 %v3538, 0.0
    %v3805 = vadd.f32 %v3540, 0.0
    %v3806 = vadd.f32 %v3542, 0.0
    %v3807 = vadd.f32 %v3544, 0.0
    %v3808 = vadd.f32 %v3546, 0.0
    %v3809 = vadd.f32 %v3548, 0.0
    %v3810 = vadd.f32 %v3550, 0.0
    %v3811 = vadd.f32 %v3552, 0.0
    %v3812 = vadd.f32 %v3554, 0.0
    %v3813 = vadd.f32 %v3556, 0.0
    %v3814 = vadd.f32 %v3558, 0.0
    %s3815 = scalar_lea.vmem [#allocation2], 4
    %v3816 = vld [vmem:[%s3815] sm:$0xf]
    %v3817 = vld [vmem:[%s3815 + $0x8] sm:$0xf]
    %v3818 = vunpack.c.l.bf16 %v3816
    %v3819 = vunpack.c.l.bf16 %v3817
    %s3820 = sadd.s32 1, 4
    %s3821 = smul.addr %s3820, 4
    %s3822 = scalar_lea.vmem [#allocation2], %s3821
    %v3823 = vld [vmem:[%s3822] sm:$0xf]
    %v3824 = vld [vmem:[%s3822 + $0x8] sm:$0xf]
    %v3825 = vunpack.c.l.bf16 %v3823
    %v3826 = vunpack.c.l.bf16 %v3824
    %s3827 = sadd.s32 1, 8
    %s3828 = smul.addr %s3827, 4
    %s3829 = scalar_lea.vmem [#allocation2], %s3828
    %v3830 = vld [vmem:[%s3829] sm:$0xf]
    %v3831 = vld [vmem:[%s3829 + $0x8] sm:$0xf]
    %v3832 = vunpack.c.l.bf16 %v3830
    %v3833 = vunpack.c.l.bf16 %v3831
    %v3836 = vcombine.high %v3818, %v3818
    %v3838 = vunpack.c.l.s4 1966171168
    %v3839 = vunpack.c.0.s8 %v3838
    %v3840 = vlaneseq
    %v3841 = vshrl.u32 %v3840, 7
    %v3842 = vsub.s32 %v3839, %v3841
    %v3843 = vrot.slane %v3818, %v3842
    %v3845 = vunpack.c.l.s4 1966171168
    %v3846 = vunpack.c.0.s8 %v3845
    %v3847 = vlaneseq
    %v3848 = vshrl.u32 %v3847, 7
    %v3849 = vsub.s32 %v3846, %v3848
    %v3850 = vrot.slane %v3836, %v3849
    %v3851 = vcombine.high %v3843, %v3843
    %v3852 = vcombine.high %v3850, %v3850
    %v3854 = vunpack.c.l.s4 1966171168
    %v3855 = vunpack.c.0.s8 %v3854
    %v3856 = vlaneseq
    %v3857 = vshrl.u32 %v3856, 7
    %v3858 = vsub.s32 %v3855, %v3857
    %v3859 = vrot.slane %v3843, %v3858
    %v3861 = vunpack.c.l.s4 1966171168
    %v3862 = vunpack.c.0.s8 %v3861
    %v3863 = vlaneseq
    %v3864 = vshrl.u32 %v3863, 7
    %v3865 = vsub.s32 %v3862, %v3864
    %v3866 = vrot.slane %v3850, %v3865
    %v3868 = vunpack.c.l.s4 1966171168
    %v3869 = vunpack.c.0.s8 %v3868
    %v3870 = vlaneseq
    %v3871 = vshrl.u32 %v3870, 7
    %v3872 = vsub.s32 %v3869, %v3871
    %v3873 = vrot.slane %v3851, %v3872
    %v3875 = vunpack.c.l.s4 1966171168
    %v3876 = vunpack.c.0.s8 %v3875
    %v3877 = vlaneseq
    %v3878 = vshrl.u32 %v3877, 7
    %v3879 = vsub.s32 %v3876, %v3878
    %v3880 = vrot.slane %v3852, %v3879
    %v3881 = vcombine.high %v3859, %v3859
    %v3882 = vcombine.high %v3866, %v3866
    %v3883 = vcombine.high %v3873, %v3873
    %v3884 = vcombine.high %v3880, %v3880
    %v3885 = vcombine.high %v3819, %v3819
    %v3887 = vunpack.c.l.s4 1966171168
    %v3888 = vunpack.c.0.s8 %v3887
    %v3889 = vlaneseq
    %v3890 = vshrl.u32 %v3889, 7
    %v3891 = vsub.s32 %v3888, %v3890
    %v3892 = vrot.slane %v3819, %v3891
    %v3894 = vunpack.c.l.s4 1966171168
    %v3895 = vunpack.c.0.s8 %v3894
    %v3896 = vlaneseq
    %v3897 = vshrl.u32 %v3896, 7
    %v3898 = vsub.s32 %v3895, %v3897
    %v3899 = vrot.slane %v3885, %v3898
    %v3900 = vcombine.high %v3892, %v3892
    %v3901 = vcombine.high %v3899, %v3899
    %v3903 = vunpack.c.l.s4 1966171168
    %v3904 = vunpack.c.0.s8 %v3903
    %v3905 = vlaneseq
    %v3906 = vshrl.u32 %v3905, 7
    %v3907 = vsub.s32 %v3904, %v3906
    %v3908 = vrot.slane %v3892, %v3907
    %v3910 = vunpack.c.l.s4 1966171168
    %v3911 = vunpack.c.0.s8 %v3910
    %v3912 = vlaneseq
    %v3913 = vshrl.u32 %v3912, 7
    %v3914 = vsub.s32 %v3911, %v3913
    %v3915 = vrot.slane %v3899, %v3914
    %v3917 = vunpack.c.l.s4 1966171168
    %v3918 = vunpack.c.0.s8 %v3917
    %v3919 = vlaneseq
    %v3920 = vshrl.u32 %v3919, 7
    %v3921 = vsub.s32 %v3918, %v3920
    %v3922 = vrot.slane %v3900, %v3921
    %v3924 = vunpack.c.l.s4 1966171168
    %v3925 = vunpack.c.0.s8 %v3924
    %v3926 = vlaneseq
    %v3927 = vshrl.u32 %v3926, 7
    %v3928 = vsub.s32 %v3925, %v3927
    %v3929 = vrot.slane %v3901, %v3928
    %v3930 = vcombine.high %v3908, %v3908
    %v3931 = vcombine.high %v3915, %v3915
    %v3932 = vcombine.high %v3922, %v3922
    %v3933 = vcombine.high %v3929, %v3929
    %v3934 = vlaneseq
    %v3935 = vshrl.u32 %v3934, 7
    %v3936 = vsub.s32 0, %v3935
    %v3937 = vrot.slane %v3859, %v3936
    %v3938 = vlaneseq
    %v3939 = vshrl.u32 %v3938, 7
    %v3940 = vsub.s32 0, %v3939
    %v3941 = vrot.slane %v3873, %v3940
    %v3942 = vlaneseq
    %v3943 = vshrl.u32 %v3942, 7
    %v3944 = vsub.s32 0, %v3943
    %v3945 = vrot.slane %v3881, %v3944
    %v3946 = vlaneseq
    %v3947 = vshrl.u32 %v3946, 7
    %v3948 = vsub.s32 0, %v3947
    %v3949 = vrot.slane %v3883, %v3948
    %v3950 = vlaneseq
    %v3951 = vshrl.u32 %v3950, 7
    %v3952 = vsub.s32 0, %v3951
    %v3953 = vrot.slane %v3866, %v3952
    %v3954 = vlaneseq
    %v3955 = vshrl.u32 %v3954, 7
    %v3956 = vsub.s32 0, %v3955
    %v3957 = vrot.slane %v3880, %v3956
    %v3958 = vlaneseq
    %v3959 = vshrl.u32 %v3958, 7
    %v3960 = vsub.s32 0, %v3959
    %v3961 = vrot.slane %v3882, %v3960
    %v3962 = vlaneseq
    %v3963 = vshrl.u32 %v3962, 7
    %v3964 = vsub.s32 0, %v3963
    %v3965 = vrot.slane %v3884, %v3964
    %v3966 = vlaneseq
    %v3967 = vshrl.u32 %v3966, 7
    %v3968 = vsub.s32 0, %v3967
    %v3969 = vrot.slane %v3908, %v3968
    %v3970 = vlaneseq
    %v3971 = vshrl.u32 %v3970, 7
    %v3972 = vsub.s32 0, %v3971
    %v3973 = vrot.slane %v3922, %v3972
    %v3974 = vlaneseq
    %v3975 = vshrl.u32 %v3974, 7
    %v3976 = vsub.s32 0, %v3975
    %v3977 = vrot.slane %v3930, %v3976
    %v3978 = vlaneseq
    %v3979 = vshrl.u32 %v3978, 7
    %v3980 = vsub.s32 0, %v3979
    %v3981 = vrot.slane %v3932, %v3980
    %v3982 = vlaneseq
    %v3983 = vshrl.u32 %v3982, 7
    %v3984 = vsub.s32 0, %v3983
    %v3985 = vrot.slane %v3915, %v3984
    %v3986 = vlaneseq
    %v3987 = vshrl.u32 %v3986, 7
    %v3988 = vsub.s32 0, %v3987
    %v3989 = vrot.slane %v3929, %v3988
    %v3990 = vlaneseq
    %v3991 = vshrl.u32 %v3990, 7
    %v3992 = vsub.s32 0, %v3991
    %v3993 = vrot.slane %v3931, %v3992
    %v3994 = vlaneseq
    %v3995 = vshrl.u32 %v3994, 7
    %v3996 = vsub.s32 0, %v3995
    %v3997 = vrot.slane %v3933, %v3996
    %v4014 = vmul.f32 %v3937, %v433
    %v4015 = vmul.f32 %v3937, %v437
    %v4016 = vmul.f32 %v3937, %v441
    %v4017 = vmul.f32 %v3937, %v445
    %v4018 = vmul.f32 %v3937, %v449
    %v4019 = vmul.f32 %v3937, %v453
    %v4020 = vmul.f32 %v3937, %v457
    %v4021 = vmul.f32 %v3937, %v461
    %v4022 = vmul.f32 %v3937, %v465
    %v4023 = vmul.f32 %v3937, %v469
    %v4024 = vmul.f32 %v3937, %v473
    %v4025 = vmul.f32 %v3937, %v477
    %v4026 = vmul.f32 %v3937, %v481
    %v4027 = vmul.f32 %v3937, %v485
    %v4028 = vmul.f32 %v3937, %v489
    %v4029 = vmul.f32 %v3937, %v493
    %v4030 = vmul.f32 %v3941, %v433
    %v4031 = vmul.f32 %v3941, %v437
    %v4032 = vmul.f32 %v3941, %v441
    %v4033 = vmul.f32 %v3941, %v445
    %v4034 = vmul.f32 %v3941, %v449
    %v4035 = vmul.f32 %v3941, %v453
    %v4036 = vmul.f32 %v3941, %v457
    %v4037 = vmul.f32 %v3941, %v461
    %v4038 = vmul.f32 %v3941, %v465
    %v4039 = vmul.f32 %v3941, %v469
    %v4040 = vmul.f32 %v3941, %v473
    %v4041 = vmul.f32 %v3941, %v477
    %v4042 = vmul.f32 %v3941, %v481
    %v4043 = vmul.f32 %v3941, %v485
    %v4044 = vmul.f32 %v3941, %v489
    %v4045 = vmul.f32 %v3941, %v493
    %v4046 = vmul.f32 %v3945, %v433
    %v4047 = vmul.f32 %v3945, %v437
    %v4048 = vmul.f32 %v3945, %v441
    %v4049 = vmul.f32 %v3945, %v445
    %v4050 = vmul.f32 %v3945, %v449
    %v4051 = vmul.f32 %v3945, %v453
    %v4052 = vmul.f32 %v3945, %v457
    %v4053 = vmul.f32 %v3945, %v461
    %v4054 = vmul.f32 %v3945, %v465
    %v4055 = vmul.f32 %v3945, %v469
    %v4056 = vmul.f32 %v3945, %v473
    %v4057 = vmul.f32 %v3945, %v477
    %v4058 = vmul.f32 %v3945, %v481
    %v4059 = vmul.f32 %v3945, %v485
    %v4060 = vmul.f32 %v3945, %v489
    %v4061 = vmul.f32 %v3945, %v493
    %v4062 = vmul.f32 %v3949, %v433
    %v4063 = vmul.f32 %v3949, %v437
    %v4064 = vmul.f32 %v3949, %v441
    %v4065 = vmul.f32 %v3949, %v445
    %v4066 = vmul.f32 %v3949, %v449
    %v4067 = vmul.f32 %v3949, %v453
    %v4068 = vmul.f32 %v3949, %v457
    %v4069 = vmul.f32 %v3949, %v461
    %v4070 = vmul.f32 %v3949, %v465
    %v4071 = vmul.f32 %v3949, %v469
    %v4072 = vmul.f32 %v3949, %v473
    %v4073 = vmul.f32 %v3949, %v477
    %v4074 = vmul.f32 %v3949, %v481
    %v4075 = vmul.f32 %v3949, %v485
    %v4076 = vmul.f32 %v3949, %v489
    %v4077 = vmul.f32 %v3949, %v493
    %v4078 = vmul.f32 %v3953, %v433
    %v4079 = vmul.f32 %v3953, %v437
    %v4080 = vmul.f32 %v3953, %v441
    %v4081 = vmul.f32 %v3953, %v445
    %v4082 = vmul.f32 %v3953, %v449
    %v4083 = vmul.f32 %v3953, %v453
    %v4084 = vmul.f32 %v3953, %v457
    %v4085 = vmul.f32 %v3953, %v461
    %v4086 = vmul.f32 %v3953, %v465
    %v4087 = vmul.f32 %v3953, %v469
    %v4088 = vmul.f32 %v3953, %v473
    %v4089 = vmul.f32 %v3953, %v477
    %v4090 = vmul.f32 %v3953, %v481
    %v4091 = vmul.f32 %v3953, %v485
    %v4092 = vmul.f32 %v3953, %v489
    %v4093 = vmul.f32 %v3953, %v493
    %v4094 = vmul.f32 %v3957, %v433
    %v4095 = vmul.f32 %v3957, %v437
    %v4096 = vmul.f32 %v3957, %v441
    %v4097 = vmul.f32 %v3957, %v445
    %v4098 = vmul.f32 %v3957, %v449
    %v4099 = vmul.f32 %v3957, %v453
    %v4100 = vmul.f32 %v3957, %v457
    %v4101 = vmul.f32 %v3957, %v461
    %v4102 = vmul.f32 %v3957, %v465
    %v4103 = vmul.f32 %v3957, %v469
    %v4104 = vmul.f32 %v3957, %v473
    %v4105 = vmul.f32 %v3957, %v477
    %v4106 = vmul.f32 %v3957, %v481
    %v4107 = vmul.f32 %v3957, %v485
    %v4108 = vmul.f32 %v3957, %v489
    %v4109 = vmul.f32 %v3957, %v493
    %v4110 = vmul.f32 %v3961, %v433
    %v4111 = vmul.f32 %v3961, %v437
    %v4112 = vmul.f32 %v3961, %v441
    %v4113 = vmul.f32 %v3961, %v445
    %v4114 = vmul.f32 %v3961, %v449
    %v4115 = vmul.f32 %v3961, %v453
    %v4116 = vmul.f32 %v3961, %v457
    %v4117 = vmul.f32 %v3961, %v461
    %v4118 = vmul.f32 %v3961, %v465
    %v4119 = vmul.f32 %v3961, %v469
    %v4120 = vmul.f32 %v3961, %v473
    %v4121 = vmul.f32 %v3961, %v477
    %v4122 = vmul.f32 %v3961, %v481
    %v4123 = vmul.f32 %v3961, %v485
    %v4124 = vmul.f32 %v3961, %v489
    %v4125 = vmul.f32 %v3961, %v493
    %v4126 = vmul.f32 %v3965, %v433
    %v4127 = vmul.f32 %v3965, %v437
    %v4128 = vmul.f32 %v3965, %v441
    %v4129 = vmul.f32 %v3965, %v445
    %v4130 = vmul.f32 %v3965, %v449
    %v4131 = vmul.f32 %v3965, %v453
    %v4132 = vmul.f32 %v3965, %v457
    %v4133 = vmul.f32 %v3965, %v461
    %v4134 = vmul.f32 %v3965, %v465
    %v4135 = vmul.f32 %v3965, %v469
    %v4136 = vmul.f32 %v3965, %v473
    %v4137 = vmul.f32 %v3965, %v477
    %v4138 = vmul.f32 %v3965, %v481
    %v4139 = vmul.f32 %v3965, %v485
    %v4140 = vmul.f32 %v3965, %v489
    %v4141 = vmul.f32 %v3965, %v493
    %v4142 = vmul.f32 %v3969, %v433
    %v4143 = vmul.f32 %v3969, %v437
    %v4144 = vmul.f32 %v3969, %v441
    %v4145 = vmul.f32 %v3969, %v445
    %v4146 = vmul.f32 %v3969, %v449
    %v4147 = vmul.f32 %v3969, %v453
    %v4148 = vmul.f32 %v3969, %v457
    %v4149 = vmul.f32 %v3969, %v461
    %v4150 = vmul.f32 %v3969, %v465
    %v4151 = vmul.f32 %v3969, %v469
    %v4152 = vmul.f32 %v3969, %v473
    %v4153 = vmul.f32 %v3969, %v477
    %v4154 = vmul.f32 %v3969, %v481
    %v4155 = vmul.f32 %v3969, %v485
    %v4156 = vmul.f32 %v3969, %v489
    %v4157 = vmul.f32 %v3969, %v493
    %v4158 = vmul.f32 %v3973, %v433
    %v4159 = vmul.f32 %v3973, %v437
    %v4160 = vmul.f32 %v3973, %v441
    %v4161 = vmul.f32 %v3973, %v445
    %v4162 = vmul.f32 %v3973, %v449
    %v4163 = vmul.f32 %v3973, %v453
    %v4164 = vmul.f32 %v3973, %v457
    %v4165 = vmul.f32 %v3973, %v461
    %v4166 = vmul.f32 %v3973, %v465
    %v4167 = vmul.f32 %v3973, %v469
    %v4168 = vmul.f32 %v3973, %v473
    %v4169 = vmul.f32 %v3973, %v477
    %v4170 = vmul.f32 %v3973, %v481
    %v4171 = vmul.f32 %v3973, %v485
    %v4172 = vmul.f32 %v3973, %v489
    %v4173 = vmul.f32 %v3973, %v493
    %v4174 = vmul.f32 %v3977, %v433
    %v4175 = vmul.f32 %v3977, %v437
    %v4176 = vmul.f32 %v3977, %v441
    %v4177 = vmul.f32 %v3977, %v445
    %v4178 = vmul.f32 %v3977, %v449
    %v4179 = vmul.f32 %v3977, %v453
    %v4180 = vmul.f32 %v3977, %v457
    %v4181 = vmul.f32 %v3977, %v461
    %v4182 = vmul.f32 %v3977, %v465
    %v4183 = vmul.f32 %v3977, %v469
    %v4184 = vmul.f32 %v3977, %v473
    %v4185 = vmul.f32 %v3977, %v477
    %v4186 = vmul.f32 %v3977, %v481
    %v4187 = vmul.f32 %v3977, %v485
    %v4188 = vmul.f32 %v3977, %v489
    %v4189 = vmul.f32 %v3977, %v493
    %v4190 = vmul.f32 %v3981, %v433
    %v4191 = vmul.f32 %v3981, %v437
    %v4192 = vmul.f32 %v3981, %v441
    %v4193 = vmul.f32 %v3981, %v445
    %v4194 = vmul.f32 %v3981, %v449
    %v4195 = vmul.f32 %v3981, %v453
    %v4196 = vmul.f32 %v3981, %v457
    %v4197 = vmul.f32 %v3981, %v461
    %v4198 = vmul.f32 %v3981, %v465
    %v4199 = vmul.f32 %v3981, %v469
    %v4200 = vmul.f32 %v3981, %v473
    %v4201 = vmul.f32 %v3981, %v477
    %v4202 = vmul.f32 %v3981, %v481
    %v4203 = vmul.f32 %v3981, %v485
    %v4204 = vmul.f32 %v3981, %v489
    %v4205 = vmul.f32 %v3981, %v493
    %v4206 = vmul.f32 %v3985, %v433
    %v4207 = vmul.f32 %v3985, %v437
    %v4208 = vmul.f32 %v3985, %v441
    %v4209 = vmul.f32 %v3985, %v445
    %v4210 = vmul.f32 %v3985, %v449
    %v4211 = vmul.f32 %v3985, %v453
    %v4212 = vmul.f32 %v3985, %v457
    %v4213 = vmul.f32 %v3985, %v461
    %v4214 = vmul.f32 %v3985, %v465
    %v4215 = vmul.f32 %v3985, %v469
    %v4216 = vmul.f32 %v3985, %v473
    %v4217 = vmul.f32 %v3985, %v477
    %v4218 = vmul.f32 %v3985, %v481
    %v4219 = vmul.f32 %v3985, %v485
    %v4220 = vmul.f32 %v3985, %v489
    %v4221 = vmul.f32 %v3985, %v493
    %v4222 = vmul.f32 %v3989, %v433
    %v4223 = vmul.f32 %v3989, %v437
    %v4224 = vmul.f32 %v3989, %v441
    %v4225 = vmul.f32 %v3989, %v445
    %v4226 = vmul.f32 %v3989, %v449
    %v4227 = vmul.f32 %v3989, %v453
    %v4228 = vmul.f32 %v3989, %v457
    %v4229 = vmul.f32 %v3989, %v461
    %v4230 = vmul.f32 %v3989, %v465
    %v4231 = vmul.f32 %v3989, %v469
    %v4232 = vmul.f32 %v3989, %v473
    %v4233 = vmul.f32 %v3989, %v477
    %v4234 = vmul.f32 %v3989, %v481
    %v4235 = vmul.f32 %v3989, %v485
    %v4236 = vmul.f32 %v3989, %v489
    %v4237 = vmul.f32 %v3989, %v493
    %v4238 = vmul.f32 %v3993, %v433
    %v4239 = vmul.f32 %v3993, %v437
    %v4240 = vmul.f32 %v3993, %v441
    %v4241 = vmul.f32 %v3993, %v445
    %v4242 = vmul.f32 %v3993, %v449
    %v4243 = vmul.f32 %v3993, %v453
    %v4244 = vmul.f32 %v3993, %v457
    %v4245 = vmul.f32 %v3993, %v461
    %v4246 = vmul.f32 %v3993, %v465
    %v4247 = vmul.f32 %v3993, %v469
    %v4248 = vmul.f32 %v3993, %v473
    %v4249 = vmul.f32 %v3993, %v477
    %v4250 = vmul.f32 %v3993, %v481
    %v4251 = vmul.f32 %v3993, %v485
    %v4252 = vmul.f32 %v3993, %v489
    %v4253 = vmul.f32 %v3993, %v493
    %v4254 = vmul.f32 %v3997, %v433
    %v4255 = vmul.f32 %v3997, %v437
    %v4256 = vmul.f32 %v3997, %v441
    %v4257 = vmul.f32 %v3997, %v445
    %v4258 = vmul.f32 %v3997, %v449
    %v4259 = vmul.f32 %v3997, %v453
    %v4260 = vmul.f32 %v3997, %v457
    %v4261 = vmul.f32 %v3997, %v461
    %v4262 = vmul.f32 %v3997, %v465
    %v4263 = vmul.f32 %v3997, %v469
    %v4264 = vmul.f32 %v3997, %v473
    %v4265 = vmul.f32 %v3997, %v477
    %v4266 = vmul.f32 %v3997, %v481
    %v4267 = vmul.f32 %v3997, %v485
    %v4268 = vmul.f32 %v3997, %v489
    %v4269 = vmul.f32 %v3997, %v493
    %v4272 = vcombine.high %v3825, %v3825
    %v4274 = vunpack.c.l.s4 1966171168
    %v4275 = vunpack.c.0.s8 %v4274
    %v4276 = vlaneseq
    %v4277 = vshrl.u32 %v4276, 7
    %v4278 = vsub.s32 %v4275, %v4277
    %v4279 = vrot.slane %v3825, %v4278
    %v4281 = vunpack.c.l.s4 1966171168
    %v4282 = vunpack.c.0.s8 %v4281
    %v4283 = vlaneseq
    %v4284 = vshrl.u32 %v4283, 7
    %v4285 = vsub.s32 %v4282, %v4284
    %v4286 = vrot.slane %v4272, %v4285
    %v4287 = vcombine.high %v4279, %v4279
    %v4288 = vcombine.high %v4286, %v4286
    %v4290 = vunpack.c.l.s4 1966171168
    %v4291 = vunpack.c.0.s8 %v4290
    %v4292 = vlaneseq
    %v4293 = vshrl.u32 %v4292, 7
    %v4294 = vsub.s32 %v4291, %v4293
    %v4295 = vrot.slane %v4279, %v4294
    %v4297 = vunpack.c.l.s4 1966171168
    %v4298 = vunpack.c.0.s8 %v4297
    %v4299 = vlaneseq
    %v4300 = vshrl.u32 %v4299, 7
    %v4301 = vsub.s32 %v4298, %v4300
    %v4302 = vrot.slane %v4286, %v4301
    %v4304 = vunpack.c.l.s4 1966171168
    %v4305 = vunpack.c.0.s8 %v4304
    %v4306 = vlaneseq
    %v4307 = vshrl.u32 %v4306, 7
    %v4308 = vsub.s32 %v4305, %v4307
    %v4309 = vrot.slane %v4287, %v4308
    %v4311 = vunpack.c.l.s4 1966171168
    %v4312 = vunpack.c.0.s8 %v4311
    %v4313 = vlaneseq
    %v4314 = vshrl.u32 %v4313, 7
    %v4315 = vsub.s32 %v4312, %v4314
    %v4316 = vrot.slane %v4288, %v4315
    %v4317 = vcombine.high %v4295, %v4295
    %v4318 = vcombine.high %v4302, %v4302
    %v4319 = vcombine.high %v4309, %v4309
    %v4320 = vcombine.high %v4316, %v4316
    %v4321 = vcombine.high %v3826, %v3826
    %v4323 = vunpack.c.l.s4 1966171168
    %v4324 = vunpack.c.0.s8 %v4323
    %v4325 = vlaneseq
    %v4326 = vshrl.u32 %v4325, 7
    %v4327 = vsub.s32 %v4324, %v4326
    %v4328 = vrot.slane %v3826, %v4327
    %v4330 = vunpack.c.l.s4 1966171168
    %v4331 = vunpack.c.0.s8 %v4330
    %v4332 = vlaneseq
    %v4333 = vshrl.u32 %v4332, 7
    %v4334 = vsub.s32 %v4331, %v4333
    %v4335 = vrot.slane %v4321, %v4334
    %v4336 = vcombine.high %v4328, %v4328
    %v4337 = vcombine.high %v4335, %v4335
    %v4339 = vunpack.c.l.s4 1966171168
    %v4340 = vunpack.c.0.s8 %v4339
    %v4341 = vlaneseq
    %v4342 = vshrl.u32 %v4341, 7
    %v4343 = vsub.s32 %v4340, %v4342
    %v4344 = vrot.slane %v4328, %v4343
    %v4346 = vunpack.c.l.s4 1966171168
    %v4347 = vunpack.c.0.s8 %v4346
    %v4348 = vlaneseq
    %v4349 = vshrl.u32 %v4348, 7
    %v4350 = vsub.s32 %v4347, %v4349
    %v4351 = vrot.slane %v4335, %v4350
    %v4353 = vunpack.c.l.s4 1966171168
    %v4354 = vunpack.c.0.s8 %v4353
    %v4355 = vlaneseq
    %v4356 = vshrl.u32 %v4355, 7
    %v4357 = vsub.s32 %v4354, %v4356
    %v4358 = vrot.slane %v4336, %v4357
    %v4360 = vunpack.c.l.s4 1966171168
    %v4361 = vunpack.c.0.s8 %v4360
    %v4362 = vlaneseq
    %v4363 = vshrl.u32 %v4362, 7
    %v4364 = vsub.s32 %v4361, %v4363
    %v4365 = vrot.slane %v4337, %v4364
    %v4366 = vcombine.high %v4344, %v4344
    %v4367 = vcombine.high %v4351, %v4351
    %v4368 = vcombine.high %v4358, %v4358
    %v4369 = vcombine.high %v4365, %v4365
    %v4370 = vlaneseq
    %v4371 = vshrl.u32 %v4370, 7
    %v4372 = vsub.s32 0, %v4371
    %v4373 = vrot.slane %v4295, %v4372
    %v4374 = vlaneseq
    %v4375 = vshrl.u32 %v4374, 7
    %v4376 = vsub.s32 0, %v4375
    %v4377 = vrot.slane %v4309, %v4376
    %v4378 = vlaneseq
    %v4379 = vshrl.u32 %v4378, 7
    %v4380 = vsub.s32 0, %v4379
    %v4381 = vrot.slane %v4317, %v4380
    %v4382 = vlaneseq
    %v4383 = vshrl.u32 %v4382, 7
    %v4384 = vsub.s32 0, %v4383
    %v4385 = vrot.slane %v4319, %v4384
    %v4386 = vlaneseq
    %v4387 = vshrl.u32 %v4386, 7
    %v4388 = vsub.s32 0, %v4387
    %v4389 = vrot.slane %v4302, %v4388
    %v4390 = vlaneseq
    %v4391 = vshrl.u32 %v4390, 7
    %v4392 = vsub.s32 0, %v4391
    %v4393 = vrot.slane %v4316, %v4392
    %v4394 = vlaneseq
    %v4395 = vshrl.u32 %v4394, 7
    %v4396 = vsub.s32 0, %v4395
    %v4397 = vrot.slane %v4318, %v4396
    %v4398 = vlaneseq
    %v4399 = vshrl.u32 %v4398, 7
    %v4400 = vsub.s32 0, %v4399
    %v4401 = vrot.slane %v4320, %v4400
    %v4402 = vlaneseq
    %v4403 = vshrl.u32 %v4402, 7
    %v4404 = vsub.s32 0, %v4403
    %v4405 = vrot.slane %v4344, %v4404
    %v4406 = vlaneseq
    %v4407 = vshrl.u32 %v4406, 7
    %v4408 = vsub.s32 0, %v4407
    %v4409 = vrot.slane %v4358, %v4408
    %v4410 = vlaneseq
    %v4411 = vshrl.u32 %v4410, 7
    %v4412 = vsub.s32 0, %v4411
    %v4413 = vrot.slane %v4366, %v4412
    %v4414 = vlaneseq
    %v4415 = vshrl.u32 %v4414, 7
    %v4416 = vsub.s32 0, %v4415
    %v4417 = vrot.slane %v4368, %v4416
    %v4418 = vlaneseq
    %v4419 = vshrl.u32 %v4418, 7
    %v4420 = vsub.s32 0, %v4419
    %v4421 = vrot.slane %v4351, %v4420
    %v4422 = vlaneseq
    %v4423 = vshrl.u32 %v4422, 7
    %v4424 = vsub.s32 0, %v4423
    %v4425 = vrot.slane %v4365, %v4424
    %v4426 = vlaneseq
    %v4427 = vshrl.u32 %v4426, 7
    %v4428 = vsub.s32 0, %v4427
    %v4429 = vrot.slane %v4367, %v4428
    %v4430 = vlaneseq
    %v4431 = vshrl.u32 %v4430, 7
    %v4432 = vsub.s32 0, %v4431
    %v4433 = vrot.slane %v4369, %v4432
    %v4450 = vmul.f32 %v4373, %v500
    %v4451 = vmul.f32 %v4373, %v504
    %v4452 = vmul.f32 %v4373, %v508
    %v4453 = vmul.f32 %v4373, %v512
    %v4454 = vmul.f32 %v4373, %v516
    %v4455 = vmul.f32 %v4373, %v520
    %v4456 = vmul.f32 %v4373, %v524
    %v4457 = vmul.f32 %v4373, %v528
    %v4458 = vmul.f32 %v4373, %v532
    %v4459 = vmul.f32 %v4373, %v536
    %v4460 = vmul.f32 %v4373, %v540
    %v4461 = vmul.f32 %v4373, %v544
    %v4462 = vmul.f32 %v4373, %v548
    %v4463 = vmul.f32 %v4373, %v552
    %v4464 = vmul.f32 %v4373, %v556
    %v4465 = vmul.f32 %v4373, %v560
    %v4466 = vmul.f32 %v4377, %v500
    %v4467 = vmul.f32 %v4377, %v504
    %v4468 = vmul.f32 %v4377, %v508
    %v4469 = vmul.f32 %v4377, %v512
    %v4470 = vmul.f32 %v4377, %v516
    %v4471 = vmul.f32 %v4377, %v520
    %v4472 = vmul.f32 %v4377, %v524
    %v4473 = vmul.f32 %v4377, %v528
    %v4474 = vmul.f32 %v4377, %v532
    %v4475 = vmul.f32 %v4377, %v536
    %v4476 = vmul.f32 %v4377, %v540
    %v4477 = vmul.f32 %v4377, %v544
    %v4478 = vmul.f32 %v4377, %v548
    %v4479 = vmul.f32 %v4377, %v552
    %v4480 = vmul.f32 %v4377, %v556
    %v4481 = vmul.f32 %v4377, %v560
    %v4482 = vmul.f32 %v4381, %v500
    %v4483 = vmul.f32 %v4381, %v504
    %v4484 = vmul.f32 %v4381, %v508
    %v4485 = vmul.f32 %v4381, %v512
    %v4486 = vmul.f32 %v4381, %v516
    %v4487 = vmul.f32 %v4381, %v520
    %v4488 = vmul.f32 %v4381, %v524
    %v4489 = vmul.f32 %v4381, %v528
    %v4490 = vmul.f32 %v4381, %v532
    %v4491 = vmul.f32 %v4381, %v536
    %v4492 = vmul.f32 %v4381, %v540
    %v4493 = vmul.f32 %v4381, %v544
    %v4494 = vmul.f32 %v4381, %v548
    %v4495 = vmul.f32 %v4381, %v552
    %v4496 = vmul.f32 %v4381, %v556
    %v4497 = vmul.f32 %v4381, %v560
    %v4498 = vmul.f32 %v4385, %v500
    %v4499 = vmul.f32 %v4385, %v504
    %v4500 = vmul.f32 %v4385, %v508
    %v4501 = vmul.f32 %v4385, %v512
    %v4502 = vmul.f32 %v4385, %v516
    %v4503 = vmul.f32 %v4385, %v520
    %v4504 = vmul.f32 %v4385, %v524
    %v4505 = vmul.f32 %v4385, %v528
    %v4506 = vmul.f32 %v4385, %v532
    %v4507 = vmul.f32 %v4385, %v536
    %v4508 = vmul.f32 %v4385, %v540
    %v4509 = vmul.f32 %v4385, %v544
    %v4510 = vmul.f32 %v4385, %v548
    %v4511 = vmul.f32 %v4385, %v552
    %v4512 = vmul.f32 %v4385, %v556
    %v4513 = vmul.f32 %v4385, %v560
    %v4514 = vmul.f32 %v4389, %v500
    %v4515 = vmul.f32 %v4389, %v504
    %v4516 = vmul.f32 %v4389, %v508
    %v4517 = vmul.f32 %v4389, %v512
    %v4518 = vmul.f32 %v4389, %v516
    %v4519 = vmul.f32 %v4389, %v520
    %v4520 = vmul.f32 %v4389, %v524
    %v4521 = vmul.f32 %v4389, %v528
    %v4522 = vmul.f32 %v4389, %v532
    %v4523 = vmul.f32 %v4389, %v536
    %v4524 = vmul.f32 %v4389, %v540
    %v4525 = vmul.f32 %v4389, %v544
    %v4526 = vmul.f32 %v4389, %v548
    %v4527 = vmul.f32 %v4389, %v552
    %v4528 = vmul.f32 %v4389, %v556
    %v4529 = vmul.f32 %v4389, %v560
    %v4530 = vmul.f32 %v4393, %v500
    %v4531 = vmul.f32 %v4393, %v504
    %v4532 = vmul.f32 %v4393, %v508
    %v4533 = vmul.f32 %v4393, %v512
    %v4534 = vmul.f32 %v4393, %v516
    %v4535 = vmul.f32 %v4393, %v520
    %v4536 = vmul.f32 %v4393, %v524
    %v4537 = vmul.f32 %v4393, %v528
    %v4538 = vmul.f32 %v4393, %v532
    %v4539 = vmul.f32 %v4393, %v536
    %v4540 = vmul.f32 %v4393, %v540
    %v4541 = vmul.f32 %v4393, %v544
    %v4542 = vmul.f32 %v4393, %v548
    %v4543 = vmul.f32 %v4393, %v552
    %v4544 = vmul.f32 %v4393, %v556
    %v4545 = vmul.f32 %v4393, %v560
    %v4546 = vmul.f32 %v4397, %v500
    %v4547 = vmul.f32 %v4397, %v504
    %v4548 = vmul.f32 %v4397, %v508
    %v4549 = vmul.f32 %v4397, %v512
    %v4550 = vmul.f32 %v4397, %v516
    %v4551 = vmul.f32 %v4397, %v520
    %v4552 = vmul.f32 %v4397, %v524
    %v4553 = vmul.f32 %v4397, %v528
    %v4554 = vmul.f32 %v4397, %v532
    %v4555 = vmul.f32 %v4397, %v536
    %v4556 = vmul.f32 %v4397, %v540
    %v4557 = vmul.f32 %v4397, %v544
    %v4558 = vmul.f32 %v4397, %v548
    %v4559 = vmul.f32 %v4397, %v552
    %v4560 = vmul.f32 %v4397, %v556
    %v4561 = vmul.f32 %v4397, %v560
    %v4562 = vmul.f32 %v4401, %v500
    %v4563 = vmul.f32 %v4401, %v504
    %v4564 = vmul.f32 %v4401, %v508
    %v4565 = vmul.f32 %v4401, %v512
    %v4566 = vmul.f32 %v4401, %v516
    %v4567 = vmul.f32 %v4401, %v520
    %v4568 = vmul.f32 %v4401, %v524
    %v4569 = vmul.f32 %v4401, %v528
    %v4570 = vmul.f32 %v4401, %v532
    %v4571 = vmul.f32 %v4401, %v536
    %v4572 = vmul.f32 %v4401, %v540
    %v4573 = vmul.f32 %v4401, %v544
    %v4574 = vmul.f32 %v4401, %v548
    %v4575 = vmul.f32 %v4401, %v552
    %v4576 = vmul.f32 %v4401, %v556
    %v4577 = vmul.f32 %v4401, %v560
    %v4578 = vmul.f32 %v4405, %v500
    %v4579 = vmul.f32 %v4405, %v504
    %v4580 = vmul.f32 %v4405, %v508
    %v4581 = vmul.f32 %v4405, %v512
    %v4582 = vmul.f32 %v4405, %v516
    %v4583 = vmul.f32 %v4405, %v520
    %v4584 = vmul.f32 %v4405, %v524
    %v4585 = vmul.f32 %v4405, %v528
    %v4586 = vmul.f32 %v4405, %v532
    %v4587 = vmul.f32 %v4405, %v536
    %v4588 = vmul.f32 %v4405, %v540
    %v4589 = vmul.f32 %v4405, %v544
    %v4590 = vmul.f32 %v4405, %v548
    %v4591 = vmul.f32 %v4405, %v552
    %v4592 = vmul.f32 %v4405, %v556
    %v4593 = vmul.f32 %v4405, %v560
    %v4594 = vmul.f32 %v4409, %v500
    %v4595 = vmul.f32 %v4409, %v504
    %v4596 = vmul.f32 %v4409, %v508
    %v4597 = vmul.f32 %v4409, %v512
    %v4598 = vmul.f32 %v4409, %v516
    %v4599 = vmul.f32 %v4409, %v520
    %v4600 = vmul.f32 %v4409, %v524
    %v4601 = vmul.f32 %v4409, %v528
    %v4602 = vmul.f32 %v4409, %v532
    %v4603 = vmul.f32 %v4409, %v536
    %v4604 = vmul.f32 %v4409, %v540
    %v4605 = vmul.f32 %v4409, %v544
    %v4606 = vmul.f32 %v4409, %v548
    %v4607 = vmul.f32 %v4409, %v552
    %v4608 = vmul.f32 %v4409, %v556
    %v4609 = vmul.f32 %v4409, %v560
    %v4610 = vmul.f32 %v4413, %v500
    %v4611 = vmul.f32 %v4413, %v504
    %v4612 = vmul.f32 %v4413, %v508
    %v4613 = vmul.f32 %v4413, %v512
    %v4614 = vmul.f32 %v4413, %v516
    %v4615 = vmul.f32 %v4413, %v520
    %v4616 = vmul.f32 %v4413, %v524
    %v4617 = vmul.f32 %v4413, %v528
    %v4618 = vmul.f32 %v4413, %v532
    %v4619 = vmul.f32 %v4413, %v536
    %v4620 = vmul.f32 %v4413, %v540
    %v4621 = vmul.f32 %v4413, %v544
    %v4622 = vmul.f32 %v4413, %v548
    %v4623 = vmul.f32 %v4413, %v552
    %v4624 = vmul.f32 %v4413, %v556
    %v4625 = vmul.f32 %v4413, %v560
    %v4626 = vmul.f32 %v4417, %v500
    %v4627 = vmul.f32 %v4417, %v504
    %v4628 = vmul.f32 %v4417, %v508
    %v4629 = vmul.f32 %v4417, %v512
    %v4630 = vmul.f32 %v4417, %v516
    %v4631 = vmul.f32 %v4417, %v520
    %v4632 = vmul.f32 %v4417, %v524
    %v4633 = vmul.f32 %v4417, %v528
    %v4634 = vmul.f32 %v4417, %v532
    %v4635 = vmul.f32 %v4417, %v536
    %v4636 = vmul.f32 %v4417, %v540
    %v4637 = vmul.f32 %v4417, %v544
    %v4638 = vmul.f32 %v4417, %v548
    %v4639 = vmul.f32 %v4417, %v552
    %v4640 = vmul.f32 %v4417, %v556
    %v4641 = vmul.f32 %v4417, %v560
    %v4642 = vmul.f32 %v4421, %v500
    %v4643 = vmul.f32 %v4421, %v504
    %v4644 = vmul.f32 %v4421, %v508
    %v4645 = vmul.f32 %v4421, %v512
    %v4646 = vmul.f32 %v4421, %v516
    %v4647 = vmul.f32 %v4421, %v520
    %v4648 = vmul.f32 %v4421, %v524
    %v4649 = vmul.f32 %v4421, %v528
    %v4650 = vmul.f32 %v4421, %v532
    %v4651 = vmul.f32 %v4421, %v536
    %v4652 = vmul.f32 %v4421, %v540
    %v4653 = vmul.f32 %v4421, %v544
    %v4654 = vmul.f32 %v4421, %v548
    %v4655 = vmul.f32 %v4421, %v552
    %v4656 = vmul.f32 %v4421, %v556
    %v4657 = vmul.f32 %v4421, %v560
    %v4658 = vmul.f32 %v4425, %v500
    %v4659 = vmul.f32 %v4425, %v504
    %v4660 = vmul.f32 %v4425, %v508
    %v4661 = vmul.f32 %v4425, %v512
    %v4662 = vmul.f32 %v4425, %v516
    %v4663 = vmul.f32 %v4425, %v520
    %v4664 = vmul.f32 %v4425, %v524
    %v4665 = vmul.f32 %v4425, %v528
    %v4666 = vmul.f32 %v4425, %v532
    %v4667 = vmul.f32 %v4425, %v536
    %v4668 = vmul.f32 %v4425, %v540
    %v4669 = vmul.f32 %v4425, %v544
    %v4670 = vmul.f32 %v4425, %v548
    %v4671 = vmul.f32 %v4425, %v552
    %v4672 = vmul.f32 %v4425, %v556
    %v4673 = vmul.f32 %v4425, %v560
    %v4674 = vmul.f32 %v4429, %v500
    %v4675 = vmul.f32 %v4429, %v504
    %v4676 = vmul.f32 %v4429, %v508
    %v4677 = vmul.f32 %v4429, %v512
    %v4678 = vmul.f32 %v4429, %v516
    %v4679 = vmul.f32 %v4429, %v520
    %v4680 = vmul.f32 %v4429, %v524
    %v4681 = vmul.f32 %v4429, %v528
    %v4682 = vmul.f32 %v4429, %v532
    %v4683 = vmul.f32 %v4429, %v536
    %v4684 = vmul.f32 %v4429, %v540
    %v4685 = vmul.f32 %v4429, %v544
    %v4686 = vmul.f32 %v4429, %v548
    %v4687 = vmul.f32 %v4429, %v552
    %v4688 = vmul.f32 %v4429, %v556
    %v4689 = vmul.f32 %v4429, %v560
    %v4690 = vmul.f32 %v4433, %v500
    %v4691 = vmul.f32 %v4433, %v504
    %v4692 = vmul.f32 %v4433, %v508
    %v4693 = vmul.f32 %v4433, %v512
    %v4694 = vmul.f32 %v4433, %v516
    %v4695 = vmul.f32 %v4433, %v520
    %v4696 = vmul.f32 %v4433, %v524
    %v4697 = vmul.f32 %v4433, %v528
    %v4698 = vmul.f32 %v4433, %v532
    %v4699 = vmul.f32 %v4433, %v536
    %v4700 = vmul.f32 %v4433, %v540
    %v4701 = vmul.f32 %v4433, %v544
    %v4702 = vmul.f32 %v4433, %v548
    %v4703 = vmul.f32 %v4433, %v552
    %v4704 = vmul.f32 %v4433, %v556
    %v4705 = vmul.f32 %v4433, %v560
    %v4706 = vadd.f32 %v4014, %v4450
    %v4707 = vadd.f32 %v4015, %v4451
    %v4708 = vadd.f32 %v4016, %v4452
    %v4709 = vadd.f32 %v4017, %v4453
    %v4710 = vadd.f32 %v4018, %v4454
    %v4711 = vadd.f32 %v4019, %v4455
    %v4712 = vadd.f32 %v4020, %v4456
    %v4713 = vadd.f32 %v4021, %v4457
    %v4714 = vadd.f32 %v4022, %v4458
    %v4715 = vadd.f32 %v4023, %v4459
    %v4716 = vadd.f32 %v4024, %v4460
    %v4717 = vadd.f32 %v4025, %v4461
    %v4718 = vadd.f32 %v4026, %v4462
    %v4719 = vadd.f32 %v4027, %v4463
    %v4720 = vadd.f32 %v4028, %v4464
    %v4721 = vadd.f32 %v4029, %v4465
    %v4722 = vadd.f32 %v4030, %v4466
    %v4723 = vadd.f32 %v4031, %v4467
    %v4724 = vadd.f32 %v4032, %v4468
    %v4725 = vadd.f32 %v4033, %v4469
    %v4726 = vadd.f32 %v4034, %v4470
    %v4727 = vadd.f32 %v4035, %v4471
    %v4728 = vadd.f32 %v4036, %v4472
    %v4729 = vadd.f32 %v4037, %v4473
    %v4730 = vadd.f32 %v4038, %v4474
    %v4731 = vadd.f32 %v4039, %v4475
    %v4732 = vadd.f32 %v4040, %v4476
    %v4733 = vadd.f32 %v4041, %v4477
    %v4734 = vadd.f32 %v4042, %v4478
    %v4735 = vadd.f32 %v4043, %v4479
    %v4736 = vadd.f32 %v4044, %v4480
    %v4737 = vadd.f32 %v4045, %v4481
    %v4738 = vadd.f32 %v4046, %v4482
    %v4739 = vadd.f32 %v4047, %v4483
    %v4740 = vadd.f32 %v4048, %v4484
    %v4741 = vadd.f32 %v4049, %v4485
    %v4742 = vadd.f32 %v4050, %v4486
    %v4743 = vadd.f32 %v4051, %v4487
    %v4744 = vadd.f32 %v4052, %v4488
    %v4745 = vadd.f32 %v4053, %v4489
    %v4746 = vadd.f32 %v4054, %v4490
    %v4747 = vadd.f32 %v4055, %v4491
    %v4748 = vadd.f32 %v4056, %v4492
    %v4749 = vadd.f32 %v4057, %v4493
    %v4750 = vadd.f32 %v4058, %v4494
    %v4751 = vadd.f32 %v4059, %v4495
    %v4752 = vadd.f32 %v4060, %v4496
    %v4753 = vadd.f32 %v4061, %v4497
    %v4754 = vadd.f32 %v4062, %v4498
    %v4755 = vadd.f32 %v4063, %v4499
    %v4756 = vadd.f32 %v4064, %v4500
    %v4757 = vadd.f32 %v4065, %v4501
    %v4758 = vadd.f32 %v4066, %v4502
    %v4759 = vadd.f32 %v4067, %v4503
    %v4760 = vadd.f32 %v4068, %v4504
    %v4761 = vadd.f32 %v4069, %v4505
    %v4762 = vadd.f32 %v4070, %v4506
    %v4763 = vadd.f32 %v4071, %v4507
    %v4764 = vadd.f32 %v4072, %v4508
    %v4765 = vadd.f32 %v4073, %v4509
    %v4766 = vadd.f32 %v4074, %v4510
    %v4767 = vadd.f32 %v4075, %v4511
    %v4768 = vadd.f32 %v4076, %v4512
    %v4769 = vadd.f32 %v4077, %v4513
    %v4770 = vadd.f32 %v4078, %v4514
    %v4771 = vadd.f32 %v4079, %v4515
    %v4772 = vadd.f32 %v4080, %v4516
    %v4773 = vadd.f32 %v4081, %v4517
    %v4774 = vadd.f32 %v4082, %v4518
    %v4775 = vadd.f32 %v4083, %v4519
    %v4776 = vadd.f32 %v4084, %v4520
    %v4777 = vadd.f32 %v4085, %v4521
    %v4778 = vadd.f32 %v4086, %v4522
    %v4779 = vadd.f32 %v4087, %v4523
    %v4780 = vadd.f32 %v4088, %v4524
    %v4781 = vadd.f32 %v4089, %v4525
    %v4782 = vadd.f32 %v4090, %v4526
    %v4783 = vadd.f32 %v4091, %v4527
    %v4784 = vadd.f32 %v4092, %v4528
    %v4785 = vadd.f32 %v4093, %v4529
    %v4786 = vadd.f32 %v4094, %v4530
    %v4787 = vadd.f32 %v4095, %v4531
    %v4788 = vadd.f32 %v4096, %v4532
    %v4789 = vadd.f32 %v4097, %v4533
    %v4790 = vadd.f32 %v4098, %v4534
    %v4791 = vadd.f32 %v4099, %v4535
    %v4792 = vadd.f32 %v4100, %v4536
    %v4793 = vadd.f32 %v4101, %v4537
    %v4794 = vadd.f32 %v4102, %v4538
    %v4795 = vadd.f32 %v4103, %v4539
    %v4796 = vadd.f32 %v4104, %v4540
    %v4797 = vadd.f32 %v4105, %v4541
    %v4798 = vadd.f32 %v4106, %v4542
    %v4799 = vadd.f32 %v4107, %v4543
    %v4800 = vadd.f32 %v4108, %v4544
    %v4801 = vadd.f32 %v4109, %v4545
    %v4802 = vadd.f32 %v4110, %v4546
    %v4803 = vadd.f32 %v4111, %v4547
    %v4804 = vadd.f32 %v4112, %v4548
    %v4805 = vadd.f32 %v4113, %v4549
    %v4806 = vadd.f32 %v4114, %v4550
    %v4807 = vadd.f32 %v4115, %v4551
    %v4808 = vadd.f32 %v4116, %v4552
    %v4809 = vadd.f32 %v4117, %v4553
    %v4810 = vadd.f32 %v4118, %v4554
    %v4811 = vadd.f32 %v4119, %v4555
    %v4812 = vadd.f32 %v4120, %v4556
    %v4813 = vadd.f32 %v4121, %v4557
    %v4814 = vadd.f32 %v4122, %v4558
    %v4815 = vadd.f32 %v4123, %v4559
    %v4816 = vadd.f32 %v4124, %v4560
    %v4817 = vadd.f32 %v4125, %v4561
    %v4818 = vadd.f32 %v4126, %v4562
    %v4819 = vadd.f32 %v4127, %v4563
    %v4820 = vadd.f32 %v4128, %v4564
    %v4821 = vadd.f32 %v4129, %v4565
    %v4822 = vadd.f32 %v4130, %v4566
    %v4823 = vadd.f32 %v4131, %v4567
    %v4824 = vadd.f32 %v4132, %v4568
    %v4825 = vadd.f32 %v4133, %v4569
    %v4826 = vadd.f32 %v4134, %v4570
    %v4827 = vadd.f32 %v4135, %v4571
    %v4828 = vadd.f32 %v4136, %v4572
    %v4829 = vadd.f32 %v4137, %v4573
    %v4830 = vadd.f32 %v4138, %v4574
    %v4831 = vadd.f32 %v4139, %v4575
    %v4832 = vadd.f32 %v4140, %v4576
    %v4833 = vadd.f32 %v4141, %v4577
    %v4834 = vadd.f32 %v4142, %v4578
    %v4835 = vadd.f32 %v4143, %v4579
    %v4836 = vadd.f32 %v4144, %v4580
    %v4837 = vadd.f32 %v4145, %v4581
    %v4838 = vadd.f32 %v4146, %v4582
    %v4839 = vadd.f32 %v4147, %v4583
    %v4840 = vadd.f32 %v4148, %v4584
    %v4841 = vadd.f32 %v4149, %v4585
    %v4842 = vadd.f32 %v4150, %v4586
    %v4843 = vadd.f32 %v4151, %v4587
    %v4844 = vadd.f32 %v4152, %v4588
    %v4845 = vadd.f32 %v4153, %v4589
    %v4846 = vadd.f32 %v4154, %v4590
    %v4847 = vadd.f32 %v4155, %v4591
    %v4848 = vadd.f32 %v4156, %v4592
    %v4849 = vadd.f32 %v4157, %v4593
    %v4850 = vadd.f32 %v4158, %v4594
    %v4851 = vadd.f32 %v4159, %v4595
    %v4852 = vadd.f32 %v4160, %v4596
    %v4853 = vadd.f32 %v4161, %v4597
    %v4854 = vadd.f32 %v4162, %v4598
    %v4855 = vadd.f32 %v4163, %v4599
    %v4856 = vadd.f32 %v4164, %v4600
    %v4857 = vadd.f32 %v4165, %v4601
    %v4858 = vadd.f32 %v4166, %v4602
    %v4859 = vadd.f32 %v4167, %v4603
    %v4860 = vadd.f32 %v4168, %v4604
    %v4861 = vadd.f32 %v4169, %v4605
    %v4862 = vadd.f32 %v4170, %v4606
    %v4863 = vadd.f32 %v4171, %v4607
    %v4864 = vadd.f32 %v4172, %v4608
    %v4865 = vadd.f32 %v4173, %v4609
    %v4866 = vadd.f32 %v4174, %v4610
    %v4867 = vadd.f32 %v4175, %v4611
    %v4868 = vadd.f32 %v4176, %v4612
    %v4869 = vadd.f32 %v4177, %v4613
    %v4870 = vadd.f32 %v4178, %v4614
    %v4871 = vadd.f32 %v4179, %v4615
    %v4872 = vadd.f32 %v4180, %v4616
    %v4873 = vadd.f32 %v4181, %v4617
    %v4874 = vadd.f32 %v4182, %v4618
    %v4875 = vadd.f32 %v4183, %v4619
    %v4876 = vadd.f32 %v4184, %v4620
    %v4877 = vadd.f32 %v4185, %v4621
    %v4878 = vadd.f32 %v4186, %v4622
    %v4879 = vadd.f32 %v4187, %v4623
    %v4880 = vadd.f32 %v4188, %v4624
    %v4881 = vadd.f32 %v4189, %v4625
    %v4882 = vadd.f32 %v4190, %v4626
    %v4883 = vadd.f32 %v4191, %v4627
    %v4884 = vadd.f32 %v4192, %v4628
    %v4885 = vadd.f32 %v4193, %v4629
    %v4886 = vadd.f32 %v4194, %v4630
    %v4887 = vadd.f32 %v4195, %v4631
    %v4888 = vadd.f32 %v4196, %v4632
    %v4889 = vadd.f32 %v4197, %v4633
    %v4890 = vadd.f32 %v4198, %v4634
    %v4891 = vadd.f32 %v4199, %v4635
    %v4892 = vadd.f32 %v4200, %v4636
    %v4893 = vadd.f32 %v4201, %v4637
    %v4894 = vadd.f32 %v4202, %v4638
    %v4895 = vadd.f32 %v4203, %v4639
    %v4896 = vadd.f32 %v4204, %v4640
    %v4897 = vadd.f32 %v4205, %v4641
    %v4898 = vadd.f32 %v4206, %v4642
    %v4899 = vadd.f32 %v4207, %v4643
    %v4900 = vadd.f32 %v4208, %v4644
    %v4901 = vadd.f32 %v4209, %v4645
    %v4902 = vadd.f32 %v4210, %v4646
    %v4903 = vadd.f32 %v4211, %v4647
    %v4904 = vadd.f32 %v4212, %v4648
    %v4905 = vadd.f32 %v4213, %v4649
    %v4906 = vadd.f32 %v4214, %v4650
    %v4907 = vadd.f32 %v4215, %v4651
    %v4908 = vadd.f32 %v4216, %v4652
    %v4909 = vadd.f32 %v4217, %v4653
    %v4910 = vadd.f32 %v4218, %v4654
    %v4911 = vadd.f32 %v4219, %v4655
    %v4912 = vadd.f32 %v4220, %v4656
    %v4913 = vadd.f32 %v4221, %v4657
    %v4914 = vadd.f32 %v4222, %v4658
    %v4915 = vadd.f32 %v4223, %v4659
    %v4916 = vadd.f32 %v4224, %v4660
    %v4917 = vadd.f32 %v4225, %v4661
    %v4918 = vadd.f32 %v4226, %v4662
    %v4919 = vadd.f32 %v4227, %v4663
    %v4920 = vadd.f32 %v4228, %v4664
    %v4921 = vadd.f32 %v4229, %v4665
    %v4922 = vadd.f32 %v4230, %v4666
    %v4923 = vadd.f32 %v4231, %v4667
    %v4924 = vadd.f32 %v4232, %v4668
    %v4925 = vadd.f32 %v4233, %v4669
    %v4926 = vadd.f32 %v4234, %v4670
    %v4927 = vadd.f32 %v4235, %v4671
    %v4928 = vadd.f32 %v4236, %v4672
    %v4929 = vadd.f32 %v4237, %v4673
    %v4930 = vadd.f32 %v4238, %v4674
    %v4931 = vadd.f32 %v4239, %v4675
    %v4932 = vadd.f32 %v4240, %v4676
    %v4933 = vadd.f32 %v4241, %v4677
    %v4934 = vadd.f32 %v4242, %v4678
    %v4935 = vadd.f32 %v4243, %v4679
    %v4936 = vadd.f32 %v4244, %v4680
    %v4937 = vadd.f32 %v4245, %v4681
    %v4938 = vadd.f32 %v4246, %v4682
    %v4939 = vadd.f32 %v4247, %v4683
    %v4940 = vadd.f32 %v4248, %v4684
    %v4941 = vadd.f32 %v4249, %v4685
    %v4942 = vadd.f32 %v4250, %v4686
    %v4943 = vadd.f32 %v4251, %v4687
    %v4944 = vadd.f32 %v4252, %v4688
    %v4945 = vadd.f32 %v4253, %v4689
    %v4946 = vadd.f32 %v4254, %v4690
    %v4947 = vadd.f32 %v4255, %v4691
    %v4948 = vadd.f32 %v4256, %v4692
    %v4949 = vadd.f32 %v4257, %v4693
    %v4950 = vadd.f32 %v4258, %v4694
    %v4951 = vadd.f32 %v4259, %v4695
    %v4952 = vadd.f32 %v4260, %v4696
    %v4953 = vadd.f32 %v4261, %v4697
    %v4954 = vadd.f32 %v4262, %v4698
    %v4955 = vadd.f32 %v4263, %v4699
    %v4956 = vadd.f32 %v4264, %v4700
    %v4957 = vadd.f32 %v4265, %v4701
    %v4958 = vadd.f32 %v4266, %v4702
    %v4959 = vadd.f32 %v4267, %v4703
    %v4960 = vadd.f32 %v4268, %v4704
    %v4961 = vadd.f32 %v4269, %v4705
    %v4964 = vcombine.high %v3832, %v3832
    %v4966 = vunpack.c.l.s4 1966171168
    %v4967 = vunpack.c.0.s8 %v4966
    %v4968 = vlaneseq
    %v4969 = vshrl.u32 %v4968, 7
    %v4970 = vsub.s32 %v4967, %v4969
    %v4971 = vrot.slane %v3832, %v4970
    %v4973 = vunpack.c.l.s4 1966171168
    %v4974 = vunpack.c.0.s8 %v4973
    %v4975 = vlaneseq
    %v4976 = vshrl.u32 %v4975, 7
    %v4977 = vsub.s32 %v4974, %v4976
    %v4978 = vrot.slane %v4964, %v4977
    %v4979 = vcombine.high %v4971, %v4971
    %v4980 = vcombine.high %v4978, %v4978
    %v4982 = vunpack.c.l.s4 1966171168
    %v4983 = vunpack.c.0.s8 %v4982
    %v4984 = vlaneseq
    %v4985 = vshrl.u32 %v4984, 7
    %v4986 = vsub.s32 %v4983, %v4985
    %v4987 = vrot.slane %v4971, %v4986
    %v4989 = vunpack.c.l.s4 1966171168
    %v4990 = vunpack.c.0.s8 %v4989
    %v4991 = vlaneseq
    %v4992 = vshrl.u32 %v4991, 7
    %v4993 = vsub.s32 %v4990, %v4992
    %v4994 = vrot.slane %v4978, %v4993
    %v4996 = vunpack.c.l.s4 1966171168
    %v4997 = vunpack.c.0.s8 %v4996
    %v4998 = vlaneseq
    %v4999 = vshrl.u32 %v4998, 7
    %v5000 = vsub.s32 %v4997, %v4999
    %v5001 = vrot.slane %v4979, %v5000
    %v5003 = vunpack.c.l.s4 1966171168
    %v5004 = vunpack.c.0.s8 %v5003
    %v5005 = vlaneseq
    %v5006 = vshrl.u32 %v5005, 7
    %v5007 = vsub.s32 %v5004, %v5006
    %v5008 = vrot.slane %v4980, %v5007
    %v5009 = vcombine.high %v4987, %v4987
    %v5010 = vcombine.high %v4994, %v4994
    %v5011 = vcombine.high %v5001, %v5001
    %v5012 = vcombine.high %v5008, %v5008
    %v5013 = vcombine.high %v3833, %v3833
    %v5015 = vunpack.c.l.s4 1966171168
    %v5016 = vunpack.c.0.s8 %v5015
    %v5017 = vlaneseq
    %v5018 = vshrl.u32 %v5017, 7
    %v5019 = vsub.s32 %v5016, %v5018
    %v5020 = vrot.slane %v3833, %v5019
    %v5022 = vunpack.c.l.s4 1966171168
    %v5023 = vunpack.c.0.s8 %v5022
    %v5024 = vlaneseq
    %v5025 = vshrl.u32 %v5024, 7
    %v5026 = vsub.s32 %v5023, %v5025
    %v5027 = vrot.slane %v5013, %v5026
    %v5028 = vcombine.high %v5020, %v5020
    %v5029 = vcombine.high %v5027, %v5027
    %v5031 = vunpack.c.l.s4 1966171168
    %v5032 = vunpack.c.0.s8 %v5031
    %v5033 = vlaneseq
    %v5034 = vshrl.u32 %v5033, 7
    %v5035 = vsub.s32 %v5032, %v5034
    %v5036 = vrot.slane %v5020, %v5035
    %v5038 = vunpack.c.l.s4 1966171168
    %v5039 = vunpack.c.0.s8 %v5038
    %v5040 = vlaneseq
    %v5041 = vshrl.u32 %v5040, 7
    %v5042 = vsub.s32 %v5039, %v5041
    %v5043 = vrot.slane %v5027, %v5042
    %v5045 = vunpack.c.l.s4 1966171168
    %v5046 = vunpack.c.0.s8 %v5045
    %v5047 = vlaneseq
    %v5048 = vshrl.u32 %v5047, 7
    %v5049 = vsub.s32 %v5046, %v5048
    %v5050 = vrot.slane %v5028, %v5049
    %v5052 = vunpack.c.l.s4 1966171168
    %v5053 = vunpack.c.0.s8 %v5052
    %v5054 = vlaneseq
    %v5055 = vshrl.u32 %v5054, 7
    %v5056 = vsub.s32 %v5053, %v5055
    %v5057 = vrot.slane %v5029, %v5056
    %v5058 = vcombine.high %v5036, %v5036
    %v5059 = vcombine.high %v5043, %v5043
    %v5060 = vcombine.high %v5050, %v5050
    %v5061 = vcombine.high %v5057, %v5057
    %v5062 = vlaneseq
    %v5063 = vshrl.u32 %v5062, 7
    %v5064 = vsub.s32 0, %v5063
    %v5065 = vrot.slane %v4987, %v5064
    %v5066 = vlaneseq
    %v5067 = vshrl.u32 %v5066, 7
    %v5068 = vsub.s32 0, %v5067
    %v5069 = vrot.slane %v5001, %v5068
    %v5070 = vlaneseq
    %v5071 = vshrl.u32 %v5070, 7
    %v5072 = vsub.s32 0, %v5071
    %v5073 = vrot.slane %v5009, %v5072
    %v5074 = vlaneseq
    %v5075 = vshrl.u32 %v5074, 7
    %v5076 = vsub.s32 0, %v5075
    %v5077 = vrot.slane %v5011, %v5076
    %v5078 = vlaneseq
    %v5079 = vshrl.u32 %v5078, 7
    %v5080 = vsub.s32 0, %v5079
    %v5081 = vrot.slane %v4994, %v5080
    %v5082 = vlaneseq
    %v5083 = vshrl.u32 %v5082, 7
    %v5084 = vsub.s32 0, %v5083
    %v5085 = vrot.slane %v5008, %v5084
    %v5086 = vlaneseq
    %v5087 = vshrl.u32 %v5086, 7
    %v5088 = vsub.s32 0, %v5087
    %v5089 = vrot.slane %v5010, %v5088
    %v5090 = vlaneseq
    %v5091 = vshrl.u32 %v5090, 7
    %v5092 = vsub.s32 0, %v5091
    %v5093 = vrot.slane %v5012, %v5092
    %v5094 = vlaneseq
    %v5095 = vshrl.u32 %v5094, 7
    %v5096 = vsub.s32 0, %v5095
    %v5097 = vrot.slane %v5036, %v5096
    %v5098 = vlaneseq
    %v5099 = vshrl.u32 %v5098, 7
    %v5100 = vsub.s32 0, %v5099
    %v5101 = vrot.slane %v5050, %v5100
    %v5102 = vlaneseq
    %v5103 = vshrl.u32 %v5102, 7
    %v5104 = vsub.s32 0, %v5103
    %v5105 = vrot.slane %v5058, %v5104
    %v5106 = vlaneseq
    %v5107 = vshrl.u32 %v5106, 7
    %v5108 = vsub.s32 0, %v5107
    %v5109 = vrot.slane %v5060, %v5108
    %v5110 = vlaneseq
    %v5111 = vshrl.u32 %v5110, 7
    %v5112 = vsub.s32 0, %v5111
    %v5113 = vrot.slane %v5043, %v5112
    %v5114 = vlaneseq
    %v5115 = vshrl.u32 %v5114, 7
    %v5116 = vsub.s32 0, %v5115
    %v5117 = vrot.slane %v5057, %v5116
    %v5118 = vlaneseq
    %v5119 = vshrl.u32 %v5118, 7
    %v5120 = vsub.s32 0, %v5119
    %v5121 = vrot.slane %v5059, %v5120
    %v5122 = vlaneseq
    %v5123 = vshrl.u32 %v5122, 7
    %v5124 = vsub.s32 0, %v5123
    %v5125 = vrot.slane %v5061, %v5124
    %v5142 = vmul.f32 %v5065, %v567
    %v5143 = vmul.f32 %v5065, %v571
    %v5144 = vmul.f32 %v5065, %v575
    %v5145 = vmul.f32 %v5065, %v579
    %v5146 = vmul.f32 %v5065, %v583
    %v5147 = vmul.f32 %v5065, %v587
    %v5148 = vmul.f32 %v5065, %v591
    %v5149 = vmul.f32 %v5065, %v595
    %v5150 = vmul.f32 %v5065, %v599
    %v5151 = vmul.f32 %v5065, %v603
    %v5152 = vmul.f32 %v5065, %v607
    %v5153 = vmul.f32 %v5065, %v611
    %v5154 = vmul.f32 %v5065, %v615
    %v5155 = vmul.f32 %v5065, %v619
    %v5156 = vmul.f32 %v5065, %v623
    %v5157 = vmul.f32 %v5065, %v627
    %v5158 = vmul.f32 %v5069, %v567
    %v5159 = vmul.f32 %v5069, %v571
    %v5160 = vmul.f32 %v5069, %v575
    %v5161 = vmul.f32 %v5069, %v579
    %v5162 = vmul.f32 %v5069, %v583
    %v5163 = vmul.f32 %v5069, %v587
    %v5164 = vmul.f32 %v5069, %v591
    %v5165 = vmul.f32 %v5069, %v595
    %v5166 = vmul.f32 %v5069, %v599
    %v5167 = vmul.f32 %v5069, %v603
    %v5168 = vmul.f32 %v5069, %v607
    %v5169 = vmul.f32 %v5069, %v611
    %v5170 = vmul.f32 %v5069, %v615
    %v5171 = vmul.f32 %v5069, %v619
    %v5172 = vmul.f32 %v5069, %v623
    %v5173 = vmul.f32 %v5069, %v627
    %v5174 = vmul.f32 %v5073, %v567
    %v5175 = vmul.f32 %v5073, %v571
    %v5176 = vmul.f32 %v5073, %v575
    %v5177 = vmul.f32 %v5073, %v579
    %v5178 = vmul.f32 %v5073, %v583
    %v5179 = vmul.f32 %v5073, %v587
    %v5180 = vmul.f32 %v5073, %v591
    %v5181 = vmul.f32 %v5073, %v595
    %v5182 = vmul.f32 %v5073, %v599
    %v5183 = vmul.f32 %v5073, %v603
    %v5184 = vmul.f32 %v5073, %v607
    %v5185 = vmul.f32 %v5073, %v611
    %v5186 = vmul.f32 %v5073, %v615
    %v5187 = vmul.f32 %v5073, %v619
    %v5188 = vmul.f32 %v5073, %v623
    %v5189 = vmul.f32 %v5073, %v627
    %v5190 = vmul.f32 %v5077, %v567
    %v5191 = vmul.f32 %v5077, %v571
    %v5192 = vmul.f32 %v5077, %v575
    %v5193 = vmul.f32 %v5077, %v579
    %v5194 = vmul.f32 %v5077, %v583
    %v5195 = vmul.f32 %v5077, %v587
    %v5196 = vmul.f32 %v5077, %v591
    %v5197 = vmul.f32 %v5077, %v595
    %v5198 = vmul.f32 %v5077, %v599
    %v5199 = vmul.f32 %v5077, %v603
    %v5200 = vmul.f32 %v5077, %v607
    %v5201 = vmul.f32 %v5077, %v611
    %v5202 = vmul.f32 %v5077, %v615
    %v5203 = vmul.f32 %v5077, %v619
    %v5204 = vmul.f32 %v5077, %v623
    %v5205 = vmul.f32 %v5077, %v627
    %v5206 = vmul.f32 %v5081, %v567
    %v5207 = vmul.f32 %v5081, %v571
    %v5208 = vmul.f32 %v5081, %v575
    %v5209 = vmul.f32 %v5081, %v579
    %v5210 = vmul.f32 %v5081, %v583
    %v5211 = vmul.f32 %v5081, %v587
    %v5212 = vmul.f32 %v5081, %v591
    %v5213 = vmul.f32 %v5081, %v595
    %v5214 = vmul.f32 %v5081, %v599
    %v5215 = vmul.f32 %v5081, %v603
    %v5216 = vmul.f32 %v5081, %v607
    %v5217 = vmul.f32 %v5081, %v611
    %v5218 = vmul.f32 %v5081, %v615
    %v5219 = vmul.f32 %v5081, %v619
    %v5220 = vmul.f32 %v5081, %v623
    %v5221 = vmul.f32 %v5081, %v627
    %v5222 = vmul.f32 %v5085, %v567
    %v5223 = vmul.f32 %v5085, %v571
    %v5224 = vmul.f32 %v5085, %v575
    %v5225 = vmul.f32 %v5085, %v579
    %v5226 = vmul.f32 %v5085, %v583
    %v5227 = vmul.f32 %v5085, %v587
    %v5228 = vmul.f32 %v5085, %v591
    %v5229 = vmul.f32 %v5085, %v595
    %v5230 = vmul.f32 %v5085, %v599
    %v5231 = vmul.f32 %v5085, %v603
    %v5232 = vmul.f32 %v5085, %v607
    %v5233 = vmul.f32 %v5085, %v611
    %v5234 = vmul.f32 %v5085, %v615
    %v5235 = vmul.f32 %v5085, %v619
    %v5236 = vmul.f32 %v5085, %v623
    %v5237 = vmul.f32 %v5085, %v627
    %v5238 = vmul.f32 %v5089, %v567
    %v5239 = vmul.f32 %v5089, %v571
    %v5240 = vmul.f32 %v5089, %v575
    %v5241 = vmul.f32 %v5089, %v579
    %v5242 = vmul.f32 %v5089, %v583
    %v5243 = vmul.f32 %v5089, %v587
    %v5244 = vmul.f32 %v5089, %v591
    %v5245 = vmul.f32 %v5089, %v595
    %v5246 = vmul.f32 %v5089, %v599
    %v5247 = vmul.f32 %v5089, %v603
    %v5248 = vmul.f32 %v5089, %v607
    %v5249 = vmul.f32 %v5089, %v611
    %v5250 = vmul.f32 %v5089, %v615
    %v5251 = vmul.f32 %v5089, %v619
    %v5252 = vmul.f32 %v5089, %v623
    %v5253 = vmul.f32 %v5089, %v627
    %v5254 = vmul.f32 %v5093, %v567
    %v5255 = vmul.f32 %v5093, %v571
    %v5256 = vmul.f32 %v5093, %v575
    %v5257 = vmul.f32 %v5093, %v579
    %v5258 = vmul.f32 %v5093, %v583
    %v5259 = vmul.f32 %v5093, %v587
    %v5260 = vmul.f32 %v5093, %v591
    %v5261 = vmul.f32 %v5093, %v595
    %v5262 = vmul.f32 %v5093, %v599
    %v5263 = vmul.f32 %v5093, %v603
    %v5264 = vmul.f32 %v5093, %v607
    %v5265 = vmul.f32 %v5093, %v611
    %v5266 = vmul.f32 %v5093, %v615
    %v5267 = vmul.f32 %v5093, %v619
    %v5268 = vmul.f32 %v5093, %v623
    %v5269 = vmul.f32 %v5093, %v627
    %v5270 = vmul.f32 %v5097, %v567
    %v5271 = vmul.f32 %v5097, %v571
    %v5272 = vmul.f32 %v5097, %v575
    %v5273 = vmul.f32 %v5097, %v579
    %v5274 = vmul.f32 %v5097, %v583
    %v5275 = vmul.f32 %v5097, %v587
    %v5276 = vmul.f32 %v5097, %v591
    %v5277 = vmul.f32 %v5097, %v595
    %v5278 = vmul.f32 %v5097, %v599
    %v5279 = vmul.f32 %v5097, %v603
    %v5280 = vmul.f32 %v5097, %v607
    %v5281 = vmul.f32 %v5097, %v611
    %v5282 = vmul.f32 %v5097, %v615
    %v5283 = vmul.f32 %v5097, %v619
    %v5284 = vmul.f32 %v5097, %v623
    %v5285 = vmul.f32 %v5097, %v627
    %v5286 = vmul.f32 %v5101, %v567
    %v5287 = vmul.f32 %v5101, %v571
    %v5288 = vmul.f32 %v5101, %v575
    %v5289 = vmul.f32 %v5101, %v579
    %v5290 = vmul.f32 %v5101, %v583
    %v5291 = vmul.f32 %v5101, %v587
    %v5292 = vmul.f32 %v5101, %v591
    %v5293 = vmul.f32 %v5101, %v595
    %v5294 = vmul.f32 %v5101, %v599
    %v5295 = vmul.f32 %v5101, %v603
    %v5296 = vmul.f32 %v5101, %v607
    %v5297 = vmul.f32 %v5101, %v611
    %v5298 = vmul.f32 %v5101, %v615
    %v5299 = vmul.f32 %v5101, %v619
    %v5300 = vmul.f32 %v5101, %v623
    %v5301 = vmul.f32 %v5101, %v627
    %v5302 = vmul.f32 %v5105, %v567
    %v5303 = vmul.f32 %v5105, %v571
    %v5304 = vmul.f32 %v5105, %v575
    %v5305 = vmul.f32 %v5105, %v579
    %v5306 = vmul.f32 %v5105, %v583
    %v5307 = vmul.f32 %v5105, %v587
    %v5308 = vmul.f32 %v5105, %v591
    %v5309 = vmul.f32 %v5105, %v595
    %v5310 = vmul.f32 %v5105, %v599
    %v5311 = vmul.f32 %v5105, %v603
    %v5312 = vmul.f32 %v5105, %v607
    %v5313 = vmul.f32 %v5105, %v611
    %v5314 = vmul.f32 %v5105, %v615
    %v5315 = vmul.f32 %v5105, %v619
    %v5316 = vmul.f32 %v5105, %v623
    %v5317 = vmul.f32 %v5105, %v627
    %v5318 = vmul.f32 %v5109, %v567
    %v5319 = vmul.f32 %v5109, %v571
    %v5320 = vmul.f32 %v5109, %v575
    %v5321 = vmul.f32 %v5109, %v579
    %v5322 = vmul.f32 %v5109, %v583
    %v5323 = vmul.f32 %v5109, %v587
    %v5324 = vmul.f32 %v5109, %v591
    %v5325 = vmul.f32 %v5109, %v595
    %v5326 = vmul.f32 %v5109, %v599
    %v5327 = vmul.f32 %v5109, %v603
    %v5328 = vmul.f32 %v5109, %v607
    %v5329 = vmul.f32 %v5109, %v611
    %v5330 = vmul.f32 %v5109, %v615
    %v5331 = vmul.f32 %v5109, %v619
    %v5332 = vmul.f32 %v5109, %v623
    %v5333 = vmul.f32 %v5109, %v627
    %v5334 = vmul.f32 %v5113, %v567
    %v5335 = vmul.f32 %v5113, %v571
    %v5336 = vmul.f32 %v5113, %v575
    %v5337 = vmul.f32 %v5113, %v579
    %v5338 = vmul.f32 %v5113, %v583
    %v5339 = vmul.f32 %v5113, %v587
    %v5340 = vmul.f32 %v5113, %v591
    %v5341 = vmul.f32 %v5113, %v595
    %v5342 = vmul.f32 %v5113, %v599
    %v5343 = vmul.f32 %v5113, %v603
    %v5344 = vmul.f32 %v5113, %v607
    %v5345 = vmul.f32 %v5113, %v611
    %v5346 = vmul.f32 %v5113, %v615
    %v5347 = vmul.f32 %v5113, %v619
    %v5348 = vmul.f32 %v5113, %v623
    %v5349 = vmul.f32 %v5113, %v627
    %v5350 = vmul.f32 %v5117, %v567
    %v5351 = vmul.f32 %v5117, %v571
    %v5352 = vmul.f32 %v5117, %v575
    %v5353 = vmul.f32 %v5117, %v579
    %v5354 = vmul.f32 %v5117, %v583
    %v5355 = vmul.f32 %v5117, %v587
    %v5356 = vmul.f32 %v5117, %v591
    %v5357 = vmul.f32 %v5117, %v595
    %v5358 = vmul.f32 %v5117, %v599
    %v5359 = vmul.f32 %v5117, %v603
    %v5360 = vmul.f32 %v5117, %v607
    %v5361 = vmul.f32 %v5117, %v611
    %v5362 = vmul.f32 %v5117, %v615
    %v5363 = vmul.f32 %v5117, %v619
    %v5364 = vmul.f32 %v5117, %v623
    %v5365 = vmul.f32 %v5117, %v627
    %v5366 = vmul.f32 %v5121, %v567
    %v5367 = vmul.f32 %v5121, %v571
    %v5368 = vmul.f32 %v5121, %v575
    %v5369 = vmul.f32 %v5121, %v579
    %v5370 = vmul.f32 %v5121, %v583
    %v5371 = vmul.f32 %v5121, %v587
    %v5372 = vmul.f32 %v5121, %v591
    %v5373 = vmul.f32 %v5121, %v595
    %v5374 = vmul.f32 %v5121, %v599
    %v5375 = vmul.f32 %v5121, %v603
    %v5376 = vmul.f32 %v5121, %v607
    %v5377 = vmul.f32 %v5121, %v611
    %v5378 = vmul.f32 %v5121, %v615
    %v5379 = vmul.f32 %v5121, %v619
    %v5380 = vmul.f32 %v5121, %v623
    %v5381 = vmul.f32 %v5121, %v627
    %v5382 = vmul.f32 %v5125, %v567
    %v5383 = vmul.f32 %v5125, %v571
    %v5384 = vmul.f32 %v5125, %v575
    %v5385 = vmul.f32 %v5125, %v579
    %v5386 = vmul.f32 %v5125, %v583
    %v5387 = vmul.f32 %v5125, %v587
    %v5388 = vmul.f32 %v5125, %v591
    %v5389 = vmul.f32 %v5125, %v595
    %v5390 = vmul.f32 %v5125, %v599
    %v5391 = vmul.f32 %v5125, %v603
    %v5392 = vmul.f32 %v5125, %v607
    %v5393 = vmul.f32 %v5125, %v611
    %v5394 = vmul.f32 %v5125, %v615
    %v5395 = vmul.f32 %v5125, %v619
    %v5396 = vmul.f32 %v5125, %v623
    %v5397 = vmul.f32 %v5125, %v627
    %v5398 = vadd.f32 %v4706, %v5142
    %v5399 = vadd.f32 %v4707, %v5143
    %v5400 = vadd.f32 %v4708, %v5144
    %v5401 = vadd.f32 %v4709, %v5145
    %v5402 = vadd.f32 %v4710, %v5146
    %v5403 = vadd.f32 %v4711, %v5147
    %v5404 = vadd.f32 %v4712, %v5148
    %v5405 = vadd.f32 %v4713, %v5149
    %v5406 = vadd.f32 %v4714, %v5150
    %v5407 = vadd.f32 %v4715, %v5151
    %v5408 = vadd.f32 %v4716, %v5152
    %v5409 = vadd.f32 %v4717, %v5153
    %v5410 = vadd.f32 %v4718, %v5154
    %v5411 = vadd.f32 %v4719, %v5155
    %v5412 = vadd.f32 %v4720, %v5156
    %v5413 = vadd.f32 %v4721, %v5157
    %v5414 = vadd.f32 %v4722, %v5158
    %v5415 = vadd.f32 %v4723, %v5159
    %v5416 = vadd.f32 %v4724, %v5160
    %v5417 = vadd.f32 %v4725, %v5161
    %v5418 = vadd.f32 %v4726, %v5162
    %v5419 = vadd.f32 %v4727, %v5163
    %v5420 = vadd.f32 %v4728, %v5164
    %v5421 = vadd.f32 %v4729, %v5165
    %v5422 = vadd.f32 %v4730, %v5166
    %v5423 = vadd.f32 %v4731, %v5167
    %v5424 = vadd.f32 %v4732, %v5168
    %v5425 = vadd.f32 %v4733, %v5169
    %v5426 = vadd.f32 %v4734, %v5170
    %v5427 = vadd.f32 %v4735, %v5171
    %v5428 = vadd.f32 %v4736, %v5172
    %v5429 = vadd.f32 %v4737, %v5173
    %v5430 = vadd.f32 %v4738, %v5174
    %v5431 = vadd.f32 %v4739, %v5175
    %v5432 = vadd.f32 %v4740, %v5176
    %v5433 = vadd.f32 %v4741, %v5177
    %v5434 = vadd.f32 %v4742, %v5178
    %v5435 = vadd.f32 %v4743, %v5179
    %v5436 = vadd.f32 %v4744, %v5180
    %v5437 = vadd.f32 %v4745, %v5181
    %v5438 = vadd.f32 %v4746, %v5182
    %v5439 = vadd.f32 %v4747, %v5183
    %v5440 = vadd.f32 %v4748, %v5184
    %v5441 = vadd.f32 %v4749, %v5185
    %v5442 = vadd.f32 %v4750, %v5186
    %v5443 = vadd.f32 %v4751, %v5187
    %v5444 = vadd.f32 %v4752, %v5188
    %v5445 = vadd.f32 %v4753, %v5189
    %v5446 = vadd.f32 %v4754, %v5190
    %v5447 = vadd.f32 %v4755, %v5191
    %v5448 = vadd.f32 %v4756, %v5192
    %v5449 = vadd.f32 %v4757, %v5193
    %v5450 = vadd.f32 %v4758, %v5194
    %v5451 = vadd.f32 %v4759, %v5195
    %v5452 = vadd.f32 %v4760, %v5196
    %v5453 = vadd.f32 %v4761, %v5197
    %v5454 = vadd.f32 %v4762, %v5198
    %v5455 = vadd.f32 %v4763, %v5199
    %v5456 = vadd.f32 %v4764, %v5200
    %v5457 = vadd.f32 %v4765, %v5201
    %v5458 = vadd.f32 %v4766, %v5202
    %v5459 = vadd.f32 %v4767, %v5203
    %v5460 = vadd.f32 %v4768, %v5204
    %v5461 = vadd.f32 %v4769, %v5205
    %v5462 = vadd.f32 %v4770, %v5206
    %v5463 = vadd.f32 %v4771, %v5207
    %v5464 = vadd.f32 %v4772, %v5208
    %v5465 = vadd.f32 %v4773, %v5209
    %v5466 = vadd.f32 %v4774, %v5210
    %v5467 = vadd.f32 %v4775, %v5211
    %v5468 = vadd.f32 %v4776, %v5212
    %v5469 = vadd.f32 %v4777, %v5213
    %v5470 = vadd.f32 %v4778, %v5214
    %v5471 = vadd.f32 %v4779, %v5215
    %v5472 = vadd.f32 %v4780, %v5216
    %v5473 = vadd.f32 %v4781, %v5217
    %v5474 = vadd.f32 %v4782, %v5218
    %v5475 = vadd.f32 %v4783, %v5219
    %v5476 = vadd.f32 %v4784, %v5220
    %v5477 = vadd.f32 %v4785, %v5221
    %v5478 = vadd.f32 %v4786, %v5222
    %v5479 = vadd.f32 %v4787, %v5223
    %v5480 = vadd.f32 %v4788, %v5224
    %v5481 = vadd.f32 %v4789, %v5225
    %v5482 = vadd.f32 %v4790, %v5226
    %v5483 = vadd.f32 %v4791, %v5227
    %v5484 = vadd.f32 %v4792, %v5228
    %v5485 = vadd.f32 %v4793, %v5229
    %v5486 = vadd.f32 %v4794, %v5230
    %v5487 = vadd.f32 %v4795, %v5231
    %v5488 = vadd.f32 %v4796, %v5232
    %v5489 = vadd.f32 %v4797, %v5233
    %v5490 = vadd.f32 %v4798, %v5234
    %v5491 = vadd.f32 %v4799, %v5235
    %v5492 = vadd.f32 %v4800, %v5236
    %v5493 = vadd.f32 %v4801, %v5237
    %v5494 = vadd.f32 %v4802, %v5238
    %v5495 = vadd.f32 %v4803, %v5239
    %v5496 = vadd.f32 %v4804, %v5240
    %v5497 = vadd.f32 %v4805, %v5241
    %v5498 = vadd.f32 %v4806, %v5242
    %v5499 = vadd.f32 %v4807, %v5243
    %v5500 = vadd.f32 %v4808, %v5244
    %v5501 = vadd.f32 %v4809, %v5245
    %v5502 = vadd.f32 %v4810, %v5246
    %v5503 = vadd.f32 %v4811, %v5247
    %v5504 = vadd.f32 %v4812, %v5248
    %v5505 = vadd.f32 %v4813, %v5249
    %v5506 = vadd.f32 %v4814, %v5250
    %v5507 = vadd.f32 %v4815, %v5251
    %v5508 = vadd.f32 %v4816, %v5252
    %v5509 = vadd.f32 %v4817, %v5253
    %v5510 = vadd.f32 %v4818, %v5254
    %v5511 = vadd.f32 %v4819, %v5255
    %v5512 = vadd.f32 %v4820, %v5256
    %v5513 = vadd.f32 %v4821, %v5257
    %v5514 = vadd.f32 %v4822, %v5258
    %v5515 = vadd.f32 %v4823, %v5259
    %v5516 = vadd.f32 %v4824, %v5260
    %v5517 = vadd.f32 %v4825, %v5261
    %v5518 = vadd.f32 %v4826, %v5262
    %v5519 = vadd.f32 %v4827, %v5263
    %v5520 = vadd.f32 %v4828, %v5264
    %v5521 = vadd.f32 %v4829, %v5265
    %v5522 = vadd.f32 %v4830, %v5266
    %v5523 = vadd.f32 %v4831, %v5267
    %v5524 = vadd.f32 %v4832, %v5268
    %v5525 = vadd.f32 %v4833, %v5269
    %v5526 = vadd.f32 %v4834, %v5270
    %v5527 = vadd.f32 %v4835, %v5271
    %v5528 = vadd.f32 %v4836, %v5272
    %v5529 = vadd.f32 %v4837, %v5273
    %v5530 = vadd.f32 %v4838, %v5274
    %v5531 = vadd.f32 %v4839, %v5275
    %v5532 = vadd.f32 %v4840, %v5276
    %v5533 = vadd.f32 %v4841, %v5277
    %v5534 = vadd.f32 %v4842, %v5278
    %v5535 = vadd.f32 %v4843, %v5279
    %v5536 = vadd.f32 %v4844, %v5280
    %v5537 = vadd.f32 %v4845, %v5281
    %v5538 = vadd.f32 %v4846, %v5282
    %v5539 = vadd.f32 %v4847, %v5283
    %v5540 = vadd.f32 %v4848, %v5284
    %v5541 = vadd.f32 %v4849, %v5285
    %v5542 = vadd.f32 %v4850, %v5286
    %v5543 = vadd.f32 %v4851, %v5287
    %v5544 = vadd.f32 %v4852, %v5288
    %v5545 = vadd.f32 %v4853, %v5289
    %v5546 = vadd.f32 %v4854, %v5290
    %v5547 = vadd.f32 %v4855, %v5291
    %v5548 = vadd.f32 %v4856, %v5292
    %v5549 = vadd.f32 %v4857, %v5293
    %v5550 = vadd.f32 %v4858, %v5294
    %v5551 = vadd.f32 %v4859, %v5295
    %v5552 = vadd.f32 %v4860, %v5296
    %v5553 = vadd.f32 %v4861, %v5297
    %v5554 = vadd.f32 %v4862, %v5298
    %v5555 = vadd.f32 %v4863, %v5299
    %v5556 = vadd.f32 %v4864, %v5300
    %v5557 = vadd.f32 %v4865, %v5301
    %v5558 = vadd.f32 %v4866, %v5302
    %v5559 = vadd.f32 %v4867, %v5303
    %v5560 = vadd.f32 %v4868, %v5304
    %v5561 = vadd.f32 %v4869, %v5305
    %v5562 = vadd.f32 %v4870, %v5306
    %v5563 = vadd.f32 %v4871, %v5307
    %v5564 = vadd.f32 %v4872, %v5308
    %v5565 = vadd.f32 %v4873, %v5309
    %v5566 = vadd.f32 %v4874, %v5310
    %v5567 = vadd.f32 %v4875, %v5311
    %v5568 = vadd.f32 %v4876, %v5312
    %v5569 = vadd.f32 %v4877, %v5313
    %v5570 = vadd.f32 %v4878, %v5314
    %v5571 = vadd.f32 %v4879, %v5315
    %v5572 = vadd.f32 %v4880, %v5316
    %v5573 = vadd.f32 %v4881, %v5317
    %v5574 = vadd.f32 %v4882, %v5318
    %v5575 = vadd.f32 %v4883, %v5319
    %v5576 = vadd.f32 %v4884, %v5320
    %v5577 = vadd.f32 %v4885, %v5321
    %v5578 = vadd.f32 %v4886, %v5322
    %v5579 = vadd.f32 %v4887, %v5323
    %v5580 = vadd.f32 %v4888, %v5324
    %v5581 = vadd.f32 %v4889, %v5325
    %v5582 = vadd.f32 %v4890, %v5326
    %v5583 = vadd.f32 %v4891, %v5327
    %v5584 = vadd.f32 %v4892, %v5328
    %v5585 = vadd.f32 %v4893, %v5329
    %v5586 = vadd.f32 %v4894, %v5330
    %v5587 = vadd.f32 %v4895, %v5331
    %v5588 = vadd.f32 %v4896, %v5332
    %v5589 = vadd.f32 %v4897, %v5333
    %v5590 = vadd.f32 %v4898, %v5334
    %v5591 = vadd.f32 %v4899, %v5335
    %v5592 = vadd.f32 %v4900, %v5336
    %v5593 = vadd.f32 %v4901, %v5337
    %v5594 = vadd.f32 %v4902, %v5338
    %v5595 = vadd.f32 %v4903, %v5339
    %v5596 = vadd.f32 %v4904, %v5340
    %v5597 = vadd.f32 %v4905, %v5341
    %v5598 = vadd.f32 %v4906, %v5342
    %v5599 = vadd.f32 %v4907, %v5343
    %v5600 = vadd.f32 %v4908, %v5344
    %v5601 = vadd.f32 %v4909, %v5345
    %v5602 = vadd.f32 %v4910, %v5346
    %v5603 = vadd.f32 %v4911, %v5347
    %v5604 = vadd.f32 %v4912, %v5348
    %v5605 = vadd.f32 %v4913, %v5349
    %v5606 = vadd.f32 %v4914, %v5350
    %v5607 = vadd.f32 %v4915, %v5351
    %v5608 = vadd.f32 %v4916, %v5352
    %v5609 = vadd.f32 %v4917, %v5353
    %v5610 = vadd.f32 %v4918, %v5354
    %v5611 = vadd.f32 %v4919, %v5355
    %v5612 = vadd.f32 %v4920, %v5356
    %v5613 = vadd.f32 %v4921, %v5357
    %v5614 = vadd.f32 %v4922, %v5358
    %v5615 = vadd.f32 %v4923, %v5359
    %v5616 = vadd.f32 %v4924, %v5360
    %v5617 = vadd.f32 %v4925, %v5361
    %v5618 = vadd.f32 %v4926, %v5362
    %v5619 = vadd.f32 %v4927, %v5363
    %v5620 = vadd.f32 %v4928, %v5364
    %v5621 = vadd.f32 %v4929, %v5365
    %v5622 = vadd.f32 %v4930, %v5366
    %v5623 = vadd.f32 %v4931, %v5367
    %v5624 = vadd.f32 %v4932, %v5368
    %v5625 = vadd.f32 %v4933, %v5369
    %v5626 = vadd.f32 %v4934, %v5370
    %v5627 = vadd.f32 %v4935, %v5371
    %v5628 = vadd.f32 %v4936, %v5372
    %v5629 = vadd.f32 %v4937, %v5373
    %v5630 = vadd.f32 %v4938, %v5374
    %v5631 = vadd.f32 %v4939, %v5375
    %v5632 = vadd.f32 %v4940, %v5376
    %v5633 = vadd.f32 %v4941, %v5377
    %v5634 = vadd.f32 %v4942, %v5378
    %v5635 = vadd.f32 %v4943, %v5379
    %v5636 = vadd.f32 %v4944, %v5380
    %v5637 = vadd.f32 %v4945, %v5381
    %v5638 = vadd.f32 %v4946, %v5382
    %v5639 = vadd.f32 %v4947, %v5383
    %v5640 = vadd.f32 %v4948, %v5384
    %v5641 = vadd.f32 %v4949, %v5385
    %v5642 = vadd.f32 %v4950, %v5386
    %v5643 = vadd.f32 %v4951, %v5387
    %v5644 = vadd.f32 %v4952, %v5388
    %v5645 = vadd.f32 %v4953, %v5389
    %v5646 = vadd.f32 %v4954, %v5390
    %v5647 = vadd.f32 %v4955, %v5391
    %v5648 = vadd.f32 %v4956, %v5392
    %v5649 = vadd.f32 %v4957, %v5393
    %v5650 = vadd.f32 %v4958, %v5394
    %v5651 = vadd.f32 %v4959, %v5395
    %v5652 = vadd.f32 %v4960, %v5396
    %v5653 = vadd.f32 %v4961, %v5397
    %v5654 = vadd.f32 %v5398, %v636
    %v5655 = vadd.f32 %v5399, %v640
    %v5656 = vadd.f32 %v5400, %v644
    %v5657 = vadd.f32 %v5401, %v648
    %v5658 = vadd.f32 %v5402, %v652
    %v5659 = vadd.f32 %v5403, %v656
    %v5660 = vadd.f32 %v5404, %v660
    %v5661 = vadd.f32 %v5405, %v664
    %v5662 = vadd.f32 %v5406, %v668
    %v5663 = vadd.f32 %v5407, %v672
    %v5664 = vadd.f32 %v5408, %v676
    %v5665 = vadd.f32 %v5409, %v680
    %v5666 = vadd.f32 %v5410, %v684
    %v5667 = vadd.f32 %v5411, %v688
    %v5668 = vadd.f32 %v5412, %v692
    %v5669 = vadd.f32 %v5413, %v696
    %v5670 = vadd.f32 %v5414, %v636
    %v5671 = vadd.f32 %v5415, %v640
    %v5672 = vadd.f32 %v5416, %v644
    %v5673 = vadd.f32 %v5417, %v648
    %v5674 = vadd.f32 %v5418, %v652
    %v5675 = vadd.f32 %v5419, %v656
    %v5676 = vadd.f32 %v5420, %v660
    %v5677 = vadd.f32 %v5421, %v664
    %v5678 = vadd.f32 %v5422, %v668
    %v5679 = vadd.f32 %v5423, %v672
    %v5680 = vadd.f32 %v5424, %v676
    %v5681 = vadd.f32 %v5425, %v680
    %v5682 = vadd.f32 %v5426, %v684
    %v5683 = vadd.f32 %v5427, %v688
    %v5684 = vadd.f32 %v5428, %v692
    %v5685 = vadd.f32 %v5429, %v696
    %v5686 = vadd.f32 %v5430, %v636
    %v5687 = vadd.f32 %v5431, %v640
    %v5688 = vadd.f32 %v5432, %v644
    %v5689 = vadd.f32 %v5433, %v648
    %v5690 = vadd.f32 %v5434, %v652
    %v5691 = vadd.f32 %v5435, %v656
    %v5692 = vadd.f32 %v5436, %v660
    %v5693 = vadd.f32 %v5437, %v664
    %v5694 = vadd.f32 %v5438, %v668
    %v5695 = vadd.f32 %v5439, %v672
    %v5696 = vadd.f32 %v5440, %v676
    %v5697 = vadd.f32 %v5441, %v680
    %v5698 = vadd.f32 %v5442, %v684
    %v5699 = vadd.f32 %v5443, %v688
    %v5700 = vadd.f32 %v5444, %v692
    %v5701 = vadd.f32 %v5445, %v696
    %v5702 = vadd.f32 %v5446, %v636
    %v5703 = vadd.f32 %v5447, %v640
    %v5704 = vadd.f32 %v5448, %v644
    %v5705 = vadd.f32 %v5449, %v648
    %v5706 = vadd.f32 %v5450, %v652
    %v5707 = vadd.f32 %v5451, %v656
    %v5708 = vadd.f32 %v5452, %v660
    %v5709 = vadd.f32 %v5453, %v664
    %v5710 = vadd.f32 %v5454, %v668
    %v5711 = vadd.f32 %v5455, %v672
    %v5712 = vadd.f32 %v5456, %v676
    %v5713 = vadd.f32 %v5457, %v680
    %v5714 = vadd.f32 %v5458, %v684
    %v5715 = vadd.f32 %v5459, %v688
    %v5716 = vadd.f32 %v5460, %v692
    %v5717 = vadd.f32 %v5461, %v696
    %v5718 = vadd.f32 %v5462, %v636
    %v5719 = vadd.f32 %v5463, %v640
    %v5720 = vadd.f32 %v5464, %v644
    %v5721 = vadd.f32 %v5465, %v648
    %v5722 = vadd.f32 %v5466, %v652
    %v5723 = vadd.f32 %v5467, %v656
    %v5724 = vadd.f32 %v5468, %v660
    %v5725 = vadd.f32 %v5469, %v664
    %v5726 = vadd.f32 %v5470, %v668
    %v5727 = vadd.f32 %v5471, %v672
    %v5728 = vadd.f32 %v5472, %v676
    %v5729 = vadd.f32 %v5473, %v680
    %v5730 = vadd.f32 %v5474, %v684
    %v5731 = vadd.f32 %v5475, %v688
    %v5732 = vadd.f32 %v5476, %v692
    %v5733 = vadd.f32 %v5477, %v696
    %v5734 = vadd.f32 %v5478, %v636
    %v5735 = vadd.f32 %v5479, %v640
    %v5736 = vadd.f32 %v5480, %v644
    %v5737 = vadd.f32 %v5481, %v648
    %v5738 = vadd.f32 %v5482, %v652
    %v5739 = vadd.f32 %v5483, %v656
    %v5740 = vadd.f32 %v5484, %v660
    %v5741 = vadd.f32 %v5485, %v664
    %v5742 = vadd.f32 %v5486, %v668
    %v5743 = vadd.f32 %v5487, %v672
    %v5744 = vadd.f32 %v5488, %v676
    %v5745 = vadd.f32 %v5489, %v680
    %v5746 = vadd.f32 %v5490, %v684
    %v5747 = vadd.f32 %v5491, %v688
    %v5748 = vadd.f32 %v5492, %v692
    %v5749 = vadd.f32 %v5493, %v696
    %v5750 = vadd.f32 %v5494, %v636
    %v5751 = vadd.f32 %v5495, %v640
    %v5752 = vadd.f32 %v5496, %v644
    %v5753 = vadd.f32 %v5497, %v648
    %v5754 = vadd.f32 %v5498, %v652
    %v5755 = vadd.f32 %v5499, %v656
    %v5756 = vadd.f32 %v5500, %v660
    %v5757 = vadd.f32 %v5501, %v664
    %v5758 = vadd.f32 %v5502, %v668
    %v5759 = vadd.f32 %v5503, %v672
    %v5760 = vadd.f32 %v5504, %v676
    %v5761 = vadd.f32 %v5505, %v680
    %v5762 = vadd.f32 %v5506, %v684
    %v5763 = vadd.f32 %v5507, %v688
    %v5764 = vadd.f32 %v5508, %v692
    %v5765 = vadd.f32 %v5509, %v696
    %v5766 = vadd.f32 %v5510, %v636
    %v5767 = vadd.f32 %v5511, %v640
    %v5768 = vadd.f32 %v5512, %v644
    %v5769 = vadd.f32 %v5513, %v648
    %v5770 = vadd.f32 %v5514, %v652
    %v5771 = vadd.f32 %v5515, %v656
    %v5772 = vadd.f32 %v5516, %v660
    %v5773 = vadd.f32 %v5517, %v664
    %v5774 = vadd.f32 %v5518, %v668
    %v5775 = vadd.f32 %v5519, %v672
    %v5776 = vadd.f32 %v5520, %v676
    %v5777 = vadd.f32 %v5521, %v680
    %v5778 = vadd.f32 %v5522, %v684
    %v5779 = vadd.f32 %v5523, %v688
    %v5780 = vadd.f32 %v5524, %v692
    %v5781 = vadd.f32 %v5525, %v696
    %v5782 = vadd.f32 %v5526, %v636
    %v5783 = vadd.f32 %v5527, %v640
    %v5784 = vadd.f32 %v5528, %v644
    %v5785 = vadd.f32 %v5529, %v648
    %v5786 = vadd.f32 %v5530, %v652
    %v5787 = vadd.f32 %v5531, %v656
    %v5788 = vadd.f32 %v5532, %v660
    %v5789 = vadd.f32 %v5533, %v664
    %v5790 = vadd.f32 %v5534, %v668
    %v5791 = vadd.f32 %v5535, %v672
    %v5792 = vadd.f32 %v5536, %v676
    %v5793 = vadd.f32 %v5537, %v680
    %v5794 = vadd.f32 %v5538, %v684
    %v5795 = vadd.f32 %v5539, %v688
    %v5796 = vadd.f32 %v5540, %v692
    %v5797 = vadd.f32 %v5541, %v696
    %v5798 = vadd.f32 %v5542, %v636
    %v5799 = vadd.f32 %v5543, %v640
    %v5800 = vadd.f32 %v5544, %v644
    %v5801 = vadd.f32 %v5545, %v648
    %v5802 = vadd.f32 %v5546, %v652
    %v5803 = vadd.f32 %v5547, %v656
    %v5804 = vadd.f32 %v5548, %v660
    %v5805 = vadd.f32 %v5549, %v664
    %v5806 = vadd.f32 %v5550, %v668
    %v5807 = vadd.f32 %v5551, %v672
    %v5808 = vadd.f32 %v5552, %v676
    %v5809 = vadd.f32 %v5553, %v680
    %v5810 = vadd.f32 %v5554, %v684
    %v5811 = vadd.f32 %v5555, %v688
    %v5812 = vadd.f32 %v5556, %v692
    %v5813 = vadd.f32 %v5557, %v696
    %v5814 = vadd.f32 %v5558, %v636
    %v5815 = vadd.f32 %v5559, %v640
    %v5816 = vadd.f32 %v5560, %v644
    %v5817 = vadd.f32 %v5561, %v648
    %v5818 = vadd.f32 %v5562, %v652
    %v5819 = vadd.f32 %v5563, %v656
    %v5820 = vadd.f32 %v5564, %v660
    %v5821 = vadd.f32 %v5565, %v664
    %v5822 = vadd.f32 %v5566, %v668
    %v5823 = vadd.f32 %v5567, %v672
    %v5824 = vadd.f32 %v5568, %v676
    %v5825 = vadd.f32 %v5569, %v680
    %v5826 = vadd.f32 %v5570, %v684
    %v5827 = vadd.f32 %v5571, %v688
    %v5828 = vadd.f32 %v5572, %v692
    %v5829 = vadd.f32 %v5573, %v696
    %v5830 = vadd.f32 %v5574, %v636
    %v5831 = vadd.f32 %v5575, %v640
    %v5832 = vadd.f32 %v5576, %v644
    %v5833 = vadd.f32 %v5577, %v648
    %v5834 = vadd.f32 %v5578, %v652
    %v5835 = vadd.f32 %v5579, %v656
    %v5836 = vadd.f32 %v5580, %v660
    %v5837 = vadd.f32 %v5581, %v664
    %v5838 = vadd.f32 %v5582, %v668
    %v5839 = vadd.f32 %v5583, %v672
    %v5840 = vadd.f32 %v5584, %v676
    %v5841 = vadd.f32 %v5585, %v680
    %v5842 = vadd.f32 %v5586, %v684
    %v5843 = vadd.f32 %v5587, %v688
    %v5844 = vadd.f32 %v5588, %v692
    %v5845 = vadd.f32 %v5589, %v696
    %v5846 = vadd.f32 %v5590, %v636
    %v5847 = vadd.f32 %v5591, %v640
    %v5848 = vadd.f32 %v5592, %v644
    %v5849 = vadd.f32 %v5593, %v648
    %v5850 = vadd.f32 %v5594, %v652
    %v5851 = vadd.f32 %v5595, %v656
    %v5852 = vadd.f32 %v5596, %v660
    %v5853 = vadd.f32 %v5597, %v664
    %v5854 = vadd.f32 %v5598, %v668
    %v5855 = vadd.f32 %v5599, %v672
    %v5856 = vadd.f32 %v5600, %v676
    %v5857 = vadd.f32 %v5601, %v680
    %v5858 = vadd.f32 %v5602, %v684
    %v5859 = vadd.f32 %v5603, %v688
    %v5860 = vadd.f32 %v5604, %v692
    %v5861 = vadd.f32 %v5605, %v696
    %v5862 = vadd.f32 %v5606, %v636
    %v5863 = vadd.f32 %v5607, %v640
    %v5864 = vadd.f32 %v5608, %v644
    %v5865 = vadd.f32 %v5609, %v648
    %v5866 = vadd.f32 %v5610, %v652
    %v5867 = vadd.f32 %v5611, %v656
    %v5868 = vadd.f32 %v5612, %v660
    %v5869 = vadd.f32 %v5613, %v664
    %v5870 = vadd.f32 %v5614, %v668
    %v5871 = vadd.f32 %v5615, %v672
    %v5872 = vadd.f32 %v5616, %v676
    %v5873 = vadd.f32 %v5617, %v680
    %v5874 = vadd.f32 %v5618, %v684
    %v5875 = vadd.f32 %v5619, %v688
    %v5876 = vadd.f32 %v5620, %v692
    %v5877 = vadd.f32 %v5621, %v696
    %v5878 = vadd.f32 %v5622, %v636
    %v5879 = vadd.f32 %v5623, %v640
    %v5880 = vadd.f32 %v5624, %v644
    %v5881 = vadd.f32 %v5625, %v648
    %v5882 = vadd.f32 %v5626, %v652
    %v5883 = vadd.f32 %v5627, %v656
    %v5884 = vadd.f32 %v5628, %v660
    %v5885 = vadd.f32 %v5629, %v664
    %v5886 = vadd.f32 %v5630, %v668
    %v5887 = vadd.f32 %v5631, %v672
    %v5888 = vadd.f32 %v5632, %v676
    %v5889 = vadd.f32 %v5633, %v680
    %v5890 = vadd.f32 %v5634, %v684
    %v5891 = vadd.f32 %v5635, %v688
    %v5892 = vadd.f32 %v5636, %v692
    %v5893 = vadd.f32 %v5637, %v696
    %v5894 = vadd.f32 %v5638, %v636
    %v5895 = vadd.f32 %v5639, %v640
    %v5896 = vadd.f32 %v5640, %v644
    %v5897 = vadd.f32 %v5641, %v648
    %v5898 = vadd.f32 %v5642, %v652
    %v5899 = vadd.f32 %v5643, %v656
    %v5900 = vadd.f32 %v5644, %v660
    %v5901 = vadd.f32 %v5645, %v664
    %v5902 = vadd.f32 %v5646, %v668
    %v5903 = vadd.f32 %v5647, %v672
    %v5904 = vadd.f32 %v5648, %v676
    %v5905 = vadd.f32 %v5649, %v680
    %v5906 = vadd.f32 %v5650, %v684
    %v5907 = vadd.f32 %v5651, %v688
    %v5908 = vadd.f32 %v5652, %v692
    %v5909 = vadd.f32 %v5653, %v696
    %v5910 = vmax.f32 %v5654, 0.0
    %v5911 = vmax.f32 %v5655, 0.0
    %v5912 = vmax.f32 %v5656, 0.0
    %v5913 = vmax.f32 %v5657, 0.0
    %v5914 = vmax.f32 %v5658, 0.0
    %v5915 = vmax.f32 %v5659, 0.0
    %v5916 = vmax.f32 %v5660, 0.0
    %v5917 = vmax.f32 %v5661, 0.0
    %v5918 = vmax.f32 %v5662, 0.0
    %v5919 = vmax.f32 %v5663, 0.0
    %v5920 = vmax.f32 %v5664, 0.0
    %v5921 = vmax.f32 %v5665, 0.0
    %v5922 = vmax.f32 %v5666, 0.0
    %v5923 = vmax.f32 %v5667, 0.0
    %v5924 = vmax.f32 %v5668, 0.0
    %v5925 = vmax.f32 %v5669, 0.0
    %v5926 = vmax.f32 %v5670, 0.0
    %v5927 = vmax.f32 %v5671, 0.0
    %v5928 = vmax.f32 %v5672, 0.0
    %v5929 = vmax.f32 %v5673, 0.0
    %v5930 = vmax.f32 %v5674, 0.0
    %v5931 = vmax.f32 %v5675, 0.0
    %v5932 = vmax.f32 %v5676, 0.0
    %v5933 = vmax.f32 %v5677, 0.0
    %v5934 = vmax.f32 %v5678, 0.0
    %v5935 = vmax.f32 %v5679, 0.0
    %v5936 = vmax.f32 %v5680, 0.0
    %v5937 = vmax.f32 %v5681, 0.0
    %v5938 = vmax.f32 %v5682, 0.0
    %v5939 = vmax.f32 %v5683, 0.0
    %v5940 = vmax.f32 %v5684, 0.0
    %v5941 = vmax.f32 %v5685, 0.0
    %v5942 = vmax.f32 %v5686, 0.0
    %v5943 = vmax.f32 %v5687, 0.0
    %v5944 = vmax.f32 %v5688, 0.0
    %v5945 = vmax.f32 %v5689, 0.0
    %v5946 = vmax.f32 %v5690, 0.0
    %v5947 = vmax.f32 %v5691, 0.0
    %v5948 = vmax.f32 %v5692, 0.0
    %v5949 = vmax.f32 %v5693, 0.0
    %v5950 = vmax.f32 %v5694, 0.0
    %v5951 = vmax.f32 %v5695, 0.0
    %v5952 = vmax.f32 %v5696, 0.0
    %v5953 = vmax.f32 %v5697, 0.0
    %v5954 = vmax.f32 %v5698, 0.0
    %v5955 = vmax.f32 %v5699, 0.0
    %v5956 = vmax.f32 %v5700, 0.0
    %v5957 = vmax.f32 %v5701, 0.0
    %v5958 = vmax.f32 %v5702, 0.0
    %v5959 = vmax.f32 %v5703, 0.0
    %v5960 = vmax.f32 %v5704, 0.0
    %v5961 = vmax.f32 %v5705, 0.0
    %v5962 = vmax.f32 %v5706, 0.0
    %v5963 = vmax.f32 %v5707, 0.0
    %v5964 = vmax.f32 %v5708, 0.0
    %v5965 = vmax.f32 %v5709, 0.0
    %v5966 = vmax.f32 %v5710, 0.0
    %v5967 = vmax.f32 %v5711, 0.0
    %v5968 = vmax.f32 %v5712, 0.0
    %v5969 = vmax.f32 %v5713, 0.0
    %v5970 = vmax.f32 %v5714, 0.0
    %v5971 = vmax.f32 %v5715, 0.0
    %v5972 = vmax.f32 %v5716, 0.0
    %v5973 = vmax.f32 %v5717, 0.0
    %v5974 = vmax.f32 %v5718, 0.0
    %v5975 = vmax.f32 %v5719, 0.0
    %v5976 = vmax.f32 %v5720, 0.0
    %v5977 = vmax.f32 %v5721, 0.0
    %v5978 = vmax.f32 %v5722, 0.0
    %v5979 = vmax.f32 %v5723, 0.0
    %v5980 = vmax.f32 %v5724, 0.0
    %v5981 = vmax.f32 %v5725, 0.0
    %v5982 = vmax.f32 %v5726, 0.0
    %v5983 = vmax.f32 %v5727, 0.0
    %v5984 = vmax.f32 %v5728, 0.0
    %v5985 = vmax.f32 %v5729, 0.0
    %v5986 = vmax.f32 %v5730, 0.0
    %v5987 = vmax.f32 %v5731, 0.0
    %v5988 = vmax.f32 %v5732, 0.0
    %v5989 = vmax.f32 %v5733, 0.0
    %v5990 = vmax.f32 %v5734, 0.0
    %v5991 = vmax.f32 %v5735, 0.0
    %v5992 = vmax.f32 %v5736, 0.0
    %v5993 = vmax.f32 %v5737, 0.0
    %v5994 = vmax.f32 %v5738, 0.0
    %v5995 = vmax.f32 %v5739, 0.0
    %v5996 = vmax.f32 %v5740, 0.0
    %v5997 = vmax.f32 %v5741, 0.0
    %v5998 = vmax.f32 %v5742, 0.0
    %v5999 = vmax.f32 %v5743, 0.0
    %v6000 = vmax.f32 %v5744, 0.0
    %v6001 = vmax.f32 %v5745, 0.0
    %v6002 = vmax.f32 %v5746, 0.0
    %v6003 = vmax.f32 %v5747, 0.0
    %v6004 = vmax.f32 %v5748, 0.0
    %v6005 = vmax.f32 %v5749, 0.0
    %v6006 = vmax.f32 %v5750, 0.0
    %v6007 = vmax.f32 %v5751, 0.0
    %v6008 = vmax.f32 %v5752, 0.0
    %v6009 = vmax.f32 %v5753, 0.0
    %v6010 = vmax.f32 %v5754, 0.0
    %v6011 = vmax.f32 %v5755, 0.0
    %v6012 = vmax.f32 %v5756, 0.0
    %v6013 = vmax.f32 %v5757, 0.0
    %v6014 = vmax.f32 %v5758, 0.0
    %v6015 = vmax.f32 %v5759, 0.0
    %v6016 = vmax.f32 %v5760, 0.0
    %v6017 = vmax.f32 %v5761, 0.0
    %v6018 = vmax.f32 %v5762, 0.0
    %v6019 = vmax.f32 %v5763, 0.0
    %v6020 = vmax.f32 %v5764, 0.0
    %v6021 = vmax.f32 %v5765, 0.0
    %v6022 = vmax.f32 %v5766, 0.0
    %v6023 = vmax.f32 %v5767, 0.0
    %v6024 = vmax.f32 %v5768, 0.0
    %v6025 = vmax.f32 %v5769, 0.0
    %v6026 = vmax.f32 %v5770, 0.0
    %v6027 = vmax.f32 %v5771, 0.0
    %v6028 = vmax.f32 %v5772, 0.0
    %v6029 = vmax.f32 %v5773, 0.0
    %v6030 = vmax.f32 %v5774, 0.0
    %v6031 = vmax.f32 %v5775, 0.0
    %v6032 = vmax.f32 %v5776, 0.0
    %v6033 = vmax.f32 %v5777, 0.0
    %v6034 = vmax.f32 %v5778, 0.0
    %v6035 = vmax.f32 %v5779, 0.0
    %v6036 = vmax.f32 %v5780, 0.0
    %v6037 = vmax.f32 %v5781, 0.0
    %v6038 = vmax.f32 %v5782, 0.0
    %v6039 = vmax.f32 %v5783, 0.0
    %v6040 = vmax.f32 %v5784, 0.0
    %v6041 = vmax.f32 %v5785, 0.0
    %v6042 = vmax.f32 %v5786, 0.0
    %v6043 = vmax.f32 %v5787, 0.0
    %v6044 = vmax.f32 %v5788, 0.0
    %v6045 = vmax.f32 %v5789, 0.0
    %v6046 = vmax.f32 %v5790, 0.0
    %v6047 = vmax.f32 %v5791, 0.0
    %v6048 = vmax.f32 %v5792, 0.0
    %v6049 = vmax.f32 %v5793, 0.0
    %v6050 = vmax.f32 %v5794, 0.0
    %v6051 = vmax.f32 %v5795, 0.0
    %v6052 = vmax.f32 %v5796, 0.0
    %v6053 = vmax.f32 %v5797, 0.0
    %v6054 = vmax.f32 %v5798, 0.0
    %v6055 = vmax.f32 %v5799, 0.0
    %v6056 = vmax.f32 %v5800, 0.0
    %v6057 = vmax.f32 %v5801, 0.0
    %v6058 = vmax.f32 %v5802, 0.0
    %v6059 = vmax.f32 %v5803, 0.0
    %v6060 = vmax.f32 %v5804, 0.0
    %v6061 = vmax.f32 %v5805, 0.0
    %v6062 = vmax.f32 %v5806, 0.0
    %v6063 = vmax.f32 %v5807, 0.0
    %v6064 = vmax.f32 %v5808, 0.0
    %v6065 = vmax.f32 %v5809, 0.0
    %v6066 = vmax.f32 %v5810, 0.0
    %v6067 = vmax.f32 %v5811, 0.0
    %v6068 = vmax.f32 %v5812, 0.0
    %v6069 = vmax.f32 %v5813, 0.0
    %v6070 = vmax.f32 %v5814, 0.0
    %v6071 = vmax.f32 %v5815, 0.0
    %v6072 = vmax.f32 %v5816, 0.0
    %v6073 = vmax.f32 %v5817, 0.0
    %v6074 = vmax.f32 %v5818, 0.0
    %v6075 = vmax.f32 %v5819, 0.0
    %v6076 = vmax.f32 %v5820, 0.0
    %v6077 = vmax.f32 %v5821, 0.0
    %v6078 = vmax.f32 %v5822, 0.0
    %v6079 = vmax.f32 %v5823, 0.0
    %v6080 = vmax.f32 %v5824, 0.0
    %v6081 = vmax.f32 %v5825, 0.0
    %v6082 = vmax.f32 %v5826, 0.0
    %v6083 = vmax.f32 %v5827, 0.0
    %v6084 = vmax.f32 %v5828, 0.0
    %v6085 = vmax.f32 %v5829, 0.0
    %v6086 = vmax.f32 %v5830, 0.0
    %v6087 = vmax.f32 %v5831, 0.0
    %v6088 = vmax.f32 %v5832, 0.0
    %v6089 = vmax.f32 %v5833, 0.0
    %v6090 = vmax.f32 %v5834, 0.0
    %v6091 = vmax.f32 %v5835, 0.0
    %v6092 = vmax.f32 %v5836, 0.0
    %v6093 = vmax.f32 %v5837, 0.0
    %v6094 = vmax.f32 %v5838, 0.0
    %v6095 = vmax.f32 %v5839, 0.0
    %v6096 = vmax.f32 %v5840, 0.0
    %v6097 = vmax.f32 %v5841, 0.0
    %v6098 = vmax.f32 %v5842, 0.0
    %v6099 = vmax.f32 %v5843, 0.0
    %v6100 = vmax.f32 %v5844, 0.0
    %v6101 = vmax.f32 %v5845, 0.0
    %v6102 = vmax.f32 %v5846, 0.0
    %v6103 = vmax.f32 %v5847, 0.0
    %v6104 = vmax.f32 %v5848, 0.0
    %v6105 = vmax.f32 %v5849, 0.0
    %v6106 = vmax.f32 %v5850, 0.0
    %v6107 = vmax.f32 %v5851, 0.0
    %v6108 = vmax.f32 %v5852, 0.0
    %v6109 = vmax.f32 %v5853, 0.0
    %v6110 = vmax.f32 %v5854, 0.0
    %v6111 = vmax.f32 %v5855, 0.0
    %v6112 = vmax.f32 %v5856, 0.0
    %v6113 = vmax.f32 %v5857, 0.0
    %v6114 = vmax.f32 %v5858, 0.0
    %v6115 = vmax.f32 %v5859, 0.0
    %v6116 = vmax.f32 %v5860, 0.0
    %v6117 = vmax.f32 %v5861, 0.0
    %v6118 = vmax.f32 %v5862, 0.0
    %v6119 = vmax.f32 %v5863, 0.0
    %v6120 = vmax.f32 %v5864, 0.0
    %v6121 = vmax.f32 %v5865, 0.0
    %v6122 = vmax.f32 %v5866, 0.0
    %v6123 = vmax.f32 %v5867, 0.0
    %v6124 = vmax.f32 %v5868, 0.0
    %v6125 = vmax.f32 %v5869, 0.0
    %v6126 = vmax.f32 %v5870, 0.0
    %v6127 = vmax.f32 %v5871, 0.0
    %v6128 = vmax.f32 %v5872, 0.0
    %v6129 = vmax.f32 %v5873, 0.0
    %v6130 = vmax.f32 %v5874, 0.0
    %v6131 = vmax.f32 %v5875, 0.0
    %v6132 = vmax.f32 %v5876, 0.0
    %v6133 = vmax.f32 %v5877, 0.0
    %v6134 = vmax.f32 %v5878, 0.0
    %v6135 = vmax.f32 %v5879, 0.0
    %v6136 = vmax.f32 %v5880, 0.0
    %v6137 = vmax.f32 %v5881, 0.0
    %v6138 = vmax.f32 %v5882, 0.0
    %v6139 = vmax.f32 %v5883, 0.0
    %v6140 = vmax.f32 %v5884, 0.0
    %v6141 = vmax.f32 %v5885, 0.0
    %v6142 = vmax.f32 %v5886, 0.0
    %v6143 = vmax.f32 %v5887, 0.0
    %v6144 = vmax.f32 %v5888, 0.0
    %v6145 = vmax.f32 %v5889, 0.0
    %v6146 = vmax.f32 %v5890, 0.0
    %v6147 = vmax.f32 %v5891, 0.0
    %v6148 = vmax.f32 %v5892, 0.0
    %v6149 = vmax.f32 %v5893, 0.0
    %v6150 = vmax.f32 %v5894, 0.0
    %v6151 = vmax.f32 %v5895, 0.0
    %v6152 = vmax.f32 %v5896, 0.0
    %v6153 = vmax.f32 %v5897, 0.0
    %v6154 = vmax.f32 %v5898, 0.0
    %v6155 = vmax.f32 %v5899, 0.0
    %v6156 = vmax.f32 %v5900, 0.0
    %v6157 = vmax.f32 %v5901, 0.0
    %v6158 = vmax.f32 %v5902, 0.0
    %v6159 = vmax.f32 %v5903, 0.0
    %v6160 = vmax.f32 %v5904, 0.0
    %v6161 = vmax.f32 %v5905, 0.0
    %v6162 = vmax.f32 %v5906, 0.0
    %v6163 = vmax.f32 %v5907, 0.0
    %v6164 = vmax.f32 %v5908, 0.0
    %v6165 = vmax.f32 %v5909, 0.0
    %6166 = vadd.xlane.f32.xlu0 %v5910
    %v6167 = vpop.xlane.xlu0 %6166
    %6168 = vadd.xlane.f32.xlu0 %v5911
    %v6169 = vpop.xlane.xlu0 %6168
    %6170 = vadd.xlane.f32.xlu0 %v5912
    %v6171 = vpop.xlane.xlu0 %6170
    %6172 = vadd.xlane.f32.xlu0 %v5913
    %v6173 = vpop.xlane.xlu0 %6172
    %6174 = vadd.xlane.f32.xlu0 %v5914
    %v6175 = vpop.xlane.xlu0 %6174
    %6176 = vadd.xlane.f32.xlu0 %v5915
    %v6177 = vpop.xlane.xlu0 %6176
    %6178 = vadd.xlane.f32.xlu0 %v5916
    %v6179 = vpop.xlane.xlu0 %6178
    %6180 = vadd.xlane.f32.xlu0 %v5917
    %v6181 = vpop.xlane.xlu0 %6180
    %6182 = vadd.xlane.f32.xlu0 %v5918
    %v6183 = vpop.xlane.xlu0 %6182
    %6184 = vadd.xlane.f32.xlu0 %v5919
    %v6185 = vpop.xlane.xlu0 %6184
    %6186 = vadd.xlane.f32.xlu0 %v5920
    %v6187 = vpop.xlane.xlu0 %6186
    %6188 = vadd.xlane.f32.xlu0 %v5921
    %v6189 = vpop.xlane.xlu0 %6188
    %6190 = vadd.xlane.f32.xlu0 %v5922
    %v6191 = vpop.xlane.xlu0 %6190
    %6192 = vadd.xlane.f32.xlu0 %v5923
    %v6193 = vpop.xlane.xlu0 %6192
    %6194 = vadd.xlane.f32.xlu0 %v5924
    %v6195 = vpop.xlane.xlu0 %6194
    %6196 = vadd.xlane.f32.xlu0 %v5925
    %v6197 = vpop.xlane.xlu0 %6196
    %6198 = vadd.xlane.f32.xlu0 %v5926
    %v6199 = vpop.xlane.xlu0 %6198
    %6200 = vadd.xlane.f32.xlu0 %v5927
    %v6201 = vpop.xlane.xlu0 %6200
    %6202 = vadd.xlane.f32.xlu0 %v5928
    %v6203 = vpop.xlane.xlu0 %6202
    %6204 = vadd.xlane.f32.xlu0 %v5929
    %v6205 = vpop.xlane.xlu0 %6204
    %6206 = vadd.xlane.f32.xlu0 %v5930
    %v6207 = vpop.xlane.xlu0 %6206
    %6208 = vadd.xlane.f32.xlu0 %v5931
    %v6209 = vpop.xlane.xlu0 %6208
    %6210 = vadd.xlane.f32.xlu0 %v5932
    %v6211 = vpop.xlane.xlu0 %6210
    %6212 = vadd.xlane.f32.xlu0 %v5933
    %v6213 = vpop.xlane.xlu0 %6212
    %6214 = vadd.xlane.f32.xlu0 %v5934
    %v6215 = vpop.xlane.xlu0 %6214
    %6216 = vadd.xlane.f32.xlu0 %v5935
    %v6217 = vpop.xlane.xlu0 %6216
    %6218 = vadd.xlane.f32.xlu0 %v5936
    %v6219 = vpop.xlane.xlu0 %6218
    %6220 = vadd.xlane.f32.xlu0 %v5937
    %v6221 = vpop.xlane.xlu0 %6220
    %6222 = vadd.xlane.f32.xlu0 %v5938
    %v6223 = vpop.xlane.xlu0 %6222
    %6224 = vadd.xlane.f32.xlu0 %v5939
    %v6225 = vpop.xlane.xlu0 %6224
    %6226 = vadd.xlane.f32.xlu0 %v5940
    %v6227 = vpop.xlane.xlu0 %6226
    %6228 = vadd.xlane.f32.xlu0 %v5941
    %v6229 = vpop.xlane.xlu0 %6228
    %6230 = vadd.xlane.f32.xlu0 %v5942
    %v6231 = vpop.xlane.xlu0 %6230
    %6232 = vadd.xlane.f32.xlu0 %v5943
    %v6233 = vpop.xlane.xlu0 %6232
    %6234 = vadd.xlane.f32.xlu0 %v5944
    %v6235 = vpop.xlane.xlu0 %6234
    %6236 = vadd.xlane.f32.xlu0 %v5945
    %v6237 = vpop.xlane.xlu0 %6236
    %6238 = vadd.xlane.f32.xlu0 %v5946
    %v6239 = vpop.xlane.xlu0 %6238
    %6240 = vadd.xlane.f32.xlu0 %v5947
    %v6241 = vpop.xlane.xlu0 %6240
    %6242 = vadd.xlane.f32.xlu0 %v5948
    %v6243 = vpop.xlane.xlu0 %6242
    %6244 = vadd.xlane.f32.xlu0 %v5949
    %v6245 = vpop.xlane.xlu0 %6244
    %6246 = vadd.xlane.f32.xlu0 %v5950
    %v6247 = vpop.xlane.xlu0 %6246
    %6248 = vadd.xlane.f32.xlu0 %v5951
    %v6249 = vpop.xlane.xlu0 %6248
    %6250 = vadd.xlane.f32.xlu0 %v5952
    %v6251 = vpop.xlane.xlu0 %6250
    %6252 = vadd.xlane.f32.xlu0 %v5953
    %v6253 = vpop.xlane.xlu0 %6252
    %6254 = vadd.xlane.f32.xlu0 %v5954
    %v6255 = vpop.xlane.xlu0 %6254
    %6256 = vadd.xlane.f32.xlu0 %v5955
    %v6257 = vpop.xlane.xlu0 %6256
    %6258 = vadd.xlane.f32.xlu0 %v5956
    %v6259 = vpop.xlane.xlu0 %6258
    %6260 = vadd.xlane.f32.xlu0 %v5957
    %v6261 = vpop.xlane.xlu0 %6260
    %6262 = vadd.xlane.f32.xlu0 %v5958
    %v6263 = vpop.xlane.xlu0 %6262
    %6264 = vadd.xlane.f32.xlu0 %v5959
    %v6265 = vpop.xlane.xlu0 %6264
    %6266 = vadd.xlane.f32.xlu0 %v5960
    %v6267 = vpop.xlane.xlu0 %6266
    %6268 = vadd.xlane.f32.xlu0 %v5961
    %v6269 = vpop.xlane.xlu0 %6268
    %6270 = vadd.xlane.f32.xlu0 %v5962
    %v6271 = vpop.xlane.xlu0 %6270
    %6272 = vadd.xlane.f32.xlu0 %v5963
    %v6273 = vpop.xlane.xlu0 %6272
    %6274 = vadd.xlane.f32.xlu0 %v5964
    %v6275 = vpop.xlane.xlu0 %6274
    %6276 = vadd.xlane.f32.xlu0 %v5965
    %v6277 = vpop.xlane.xlu0 %6276
    %6278 = vadd.xlane.f32.xlu0 %v5966
    %v6279 = vpop.xlane.xlu0 %6278
    %6280 = vadd.xlane.f32.xlu0 %v5967
    %v6281 = vpop.xlane.xlu0 %6280
    %6282 = vadd.xlane.f32.xlu0 %v5968
    %v6283 = vpop.xlane.xlu0 %6282
    %6284 = vadd.xlane.f32.xlu0 %v5969
    %v6285 = vpop.xlane.xlu0 %6284
    %6286 = vadd.xlane.f32.xlu0 %v5970
    %v6287 = vpop.xlane.xlu0 %6286
    %6288 = vadd.xlane.f32.xlu0 %v5971
    %v6289 = vpop.xlane.xlu0 %6288
    %6290 = vadd.xlane.f32.xlu0 %v5972
    %v6291 = vpop.xlane.xlu0 %6290
    %6292 = vadd.xlane.f32.xlu0 %v5973
    %v6293 = vpop.xlane.xlu0 %6292
    %6294 = vadd.xlane.f32.xlu0 %v5974
    %v6295 = vpop.xlane.xlu0 %6294
    %6296 = vadd.xlane.f32.xlu0 %v5975
    %v6297 = vpop.xlane.xlu0 %6296
    %6298 = vadd.xlane.f32.xlu0 %v5976
    %v6299 = vpop.xlane.xlu0 %6298
    %6300 = vadd.xlane.f32.xlu0 %v5977
    %v6301 = vpop.xlane.xlu0 %6300
    %6302 = vadd.xlane.f32.xlu0 %v5978
    %v6303 = vpop.xlane.xlu0 %6302
    %6304 = vadd.xlane.f32.xlu0 %v5979
    %v6305 = vpop.xlane.xlu0 %6304
    %6306 = vadd.xlane.f32.xlu0 %v5980
    %v6307 = vpop.xlane.xlu0 %6306
    %6308 = vadd.xlane.f32.xlu0 %v5981
    %v6309 = vpop.xlane.xlu0 %6308
    %6310 = vadd.xlane.f32.xlu0 %v5982
    %v6311 = vpop.xlane.xlu0 %6310
    %6312 = vadd.xlane.f32.xlu0 %v5983
    %v6313 = vpop.xlane.xlu0 %6312
    %6314 = vadd.xlane.f32.xlu0 %v5984
    %v6315 = vpop.xlane.xlu0 %6314
    %6316 = vadd.xlane.f32.xlu0 %v5985
    %v6317 = vpop.xlane.xlu0 %6316
    %6318 = vadd.xlane.f32.xlu0 %v5986
    %v6319 = vpop.xlane.xlu0 %6318
    %6320 = vadd.xlane.f32.xlu0 %v5987
    %v6321 = vpop.xlane.xlu0 %6320
    %6322 = vadd.xlane.f32.xlu0 %v5988
    %v6323 = vpop.xlane.xlu0 %6322
    %6324 = vadd.xlane.f32.xlu0 %v5989
    %v6325 = vpop.xlane.xlu0 %6324
    %6326 = vadd.xlane.f32.xlu0 %v5990
    %v6327 = vpop.xlane.xlu0 %6326
    %6328 = vadd.xlane.f32.xlu0 %v5991
    %v6329 = vpop.xlane.xlu0 %6328
    %6330 = vadd.xlane.f32.xlu0 %v5992
    %v6331 = vpop.xlane.xlu0 %6330
    %6332 = vadd.xlane.f32.xlu0 %v5993
    %v6333 = vpop.xlane.xlu0 %6332
    %6334 = vadd.xlane.f32.xlu0 %v5994
    %v6335 = vpop.xlane.xlu0 %6334
    %6336 = vadd.xlane.f32.xlu0 %v5995
    %v6337 = vpop.xlane.xlu0 %6336
    %6338 = vadd.xlane.f32.xlu0 %v5996
    %v6339 = vpop.xlane.xlu0 %6338
    %6340 = vadd.xlane.f32.xlu0 %v5997
    %v6341 = vpop.xlane.xlu0 %6340
    %6342 = vadd.xlane.f32.xlu0 %v5998
    %v6343 = vpop.xlane.xlu0 %6342
    %6344 = vadd.xlane.f32.xlu0 %v5999
    %v6345 = vpop.xlane.xlu0 %6344
    %6346 = vadd.xlane.f32.xlu0 %v6000
    %v6347 = vpop.xlane.xlu0 %6346
    %6348 = vadd.xlane.f32.xlu0 %v6001
    %v6349 = vpop.xlane.xlu0 %6348
    %6350 = vadd.xlane.f32.xlu0 %v6002
    %v6351 = vpop.xlane.xlu0 %6350
    %6352 = vadd.xlane.f32.xlu0 %v6003
    %v6353 = vpop.xlane.xlu0 %6352
    %6354 = vadd.xlane.f32.xlu0 %v6004
    %v6355 = vpop.xlane.xlu0 %6354
    %6356 = vadd.xlane.f32.xlu0 %v6005
    %v6357 = vpop.xlane.xlu0 %6356
    %6358 = vadd.xlane.f32.xlu0 %v6006
    %v6359 = vpop.xlane.xlu0 %6358
    %6360 = vadd.xlane.f32.xlu0 %v6007
    %v6361 = vpop.xlane.xlu0 %6360
    %6362 = vadd.xlane.f32.xlu0 %v6008
    %v6363 = vpop.xlane.xlu0 %6362
    %6364 = vadd.xlane.f32.xlu0 %v6009
    %v6365 = vpop.xlane.xlu0 %6364
    %6366 = vadd.xlane.f32.xlu0 %v6010
    %v6367 = vpop.xlane.xlu0 %6366
    %6368 = vadd.xlane.f32.xlu0 %v6011
    %v6369 = vpop.xlane.xlu0 %6368
    %6370 = vadd.xlane.f32.xlu0 %v6012
    %v6371 = vpop.xlane.xlu0 %6370
    %6372 = vadd.xlane.f32.xlu0 %v6013
    %v6373 = vpop.xlane.xlu0 %6372
    %6374 = vadd.xlane.f32.xlu0 %v6014
    %v6375 = vpop.xlane.xlu0 %6374
    %6376 = vadd.xlane.f32.xlu0 %v6015
    %v6377 = vpop.xlane.xlu0 %6376
    %6378 = vadd.xlane.f32.xlu0 %v6016
    %v6379 = vpop.xlane.xlu0 %6378
    %6380 = vadd.xlane.f32.xlu0 %v6017
    %v6381 = vpop.xlane.xlu0 %6380
    %6382 = vadd.xlane.f32.xlu0 %v6018
    %v6383 = vpop.xlane.xlu0 %6382
    %6384 = vadd.xlane.f32.xlu0 %v6019
    %v6385 = vpop.xlane.xlu0 %6384
    %6386 = vadd.xlane.f32.xlu0 %v6020
    %v6387 = vpop.xlane.xlu0 %6386
    %6388 = vadd.xlane.f32.xlu0 %v6021
    %v6389 = vpop.xlane.xlu0 %6388
    %6390 = vadd.xlane.f32.xlu0 %v6022
    %v6391 = vpop.xlane.xlu0 %6390
    %6392 = vadd.xlane.f32.xlu0 %v6023
    %v6393 = vpop.xlane.xlu0 %6392
    %6394 = vadd.xlane.f32.xlu0 %v6024
    %v6395 = vpop.xlane.xlu0 %6394
    %6396 = vadd.xlane.f32.xlu0 %v6025
    %v6397 = vpop.xlane.xlu0 %6396
    %6398 = vadd.xlane.f32.xlu0 %v6026
    %v6399 = vpop.xlane.xlu0 %6398
    %6400 = vadd.xlane.f32.xlu0 %v6027
    %v6401 = vpop.xlane.xlu0 %6400
    %6402 = vadd.xlane.f32.xlu0 %v6028
    %v6403 = vpop.xlane.xlu0 %6402
    %6404 = vadd.xlane.f32.xlu0 %v6029
    %v6405 = vpop.xlane.xlu0 %6404
    %6406 = vadd.xlane.f32.xlu0 %v6030
    %v6407 = vpop.xlane.xlu0 %6406
    %6408 = vadd.xlane.f32.xlu0 %v6031
    %v6409 = vpop.xlane.xlu0 %6408
    %6410 = vadd.xlane.f32.xlu0 %v6032
    %v6411 = vpop.xlane.xlu0 %6410
    %6412 = vadd.xlane.f32.xlu0 %v6033
    %v6413 = vpop.xlane.xlu0 %6412
    %6414 = vadd.xlane.f32.xlu0 %v6034
    %v6415 = vpop.xlane.xlu0 %6414
    %6416 = vadd.xlane.f32.xlu0 %v6035
    %v6417 = vpop.xlane.xlu0 %6416
    %6418 = vadd.xlane.f32.xlu0 %v6036
    %v6419 = vpop.xlane.xlu0 %6418
    %6420 = vadd.xlane.f32.xlu0 %v6037
    %v6421 = vpop.xlane.xlu0 %6420
    %6422 = vadd.xlane.f32.xlu0 %v6038
    %v6423 = vpop.xlane.xlu0 %6422
    %6424 = vadd.xlane.f32.xlu0 %v6039
    %v6425 = vpop.xlane.xlu0 %6424
    %6426 = vadd.xlane.f32.xlu0 %v6040
    %v6427 = vpop.xlane.xlu0 %6426
    %6428 = vadd.xlane.f32.xlu0 %v6041
    %v6429 = vpop.xlane.xlu0 %6428
    %6430 = vadd.xlane.f32.xlu0 %v6042
    %v6431 = vpop.xlane.xlu0 %6430
    %6432 = vadd.xlane.f32.xlu0 %v6043
    %v6433 = vpop.xlane.xlu0 %6432
    %6434 = vadd.xlane.f32.xlu0 %v6044
    %v6435 = vpop.xlane.xlu0 %6434
    %6436 = vadd.xlane.f32.xlu0 %v6045
    %v6437 = vpop.xlane.xlu0 %6436
    %6438 = vadd.xlane.f32.xlu0 %v6046
    %v6439 = vpop.xlane.xlu0 %6438
    %6440 = vadd.xlane.f32.xlu0 %v6047
    %v6441 = vpop.xlane.xlu0 %6440
    %6442 = vadd.xlane.f32.xlu0 %v6048
    %v6443 = vpop.xlane.xlu0 %6442
    %6444 = vadd.xlane.f32.xlu0 %v6049
    %v6445 = vpop.xlane.xlu0 %6444
    %6446 = vadd.xlane.f32.xlu0 %v6050
    %v6447 = vpop.xlane.xlu0 %6446
    %6448 = vadd.xlane.f32.xlu0 %v6051
    %v6449 = vpop.xlane.xlu0 %6448
    %6450 = vadd.xlane.f32.xlu0 %v6052
    %v6451 = vpop.xlane.xlu0 %6450
    %6452 = vadd.xlane.f32.xlu0 %v6053
    %v6453 = vpop.xlane.xlu0 %6452
    %6454 = vadd.xlane.f32.xlu0 %v6054
    %v6455 = vpop.xlane.xlu0 %6454
    %6456 = vadd.xlane.f32.xlu0 %v6055
    %v6457 = vpop.xlane.xlu0 %6456
    %6458 = vadd.xlane.f32.xlu0 %v6056
    %v6459 = vpop.xlane.xlu0 %6458
    %6460 = vadd.xlane.f32.xlu0 %v6057
    %v6461 = vpop.xlane.xlu0 %6460
    %6462 = vadd.xlane.f32.xlu0 %v6058
    %v6463 = vpop.xlane.xlu0 %6462
    %6464 = vadd.xlane.f32.xlu0 %v6059
    %v6465 = vpop.xlane.xlu0 %6464
    %6466 = vadd.xlane.f32.xlu0 %v6060
    %v6467 = vpop.xlane.xlu0 %6466
    %6468 = vadd.xlane.f32.xlu0 %v6061
    %v6469 = vpop.xlane.xlu0 %6468
    %6470 = vadd.xlane.f32.xlu0 %v6062
    %v6471 = vpop.xlane.xlu0 %6470
    %6472 = vadd.xlane.f32.xlu0 %v6063
    %v6473 = vpop.xlane.xlu0 %6472
    %6474 = vadd.xlane.f32.xlu0 %v6064
    %v6475 = vpop.xlane.xlu0 %6474
    %6476 = vadd.xlane.f32.xlu0 %v6065
    %v6477 = vpop.xlane.xlu0 %6476
    %6478 = vadd.xlane.f32.xlu0 %v6066
    %v6479 = vpop.xlane.xlu0 %6478
    %6480 = vadd.xlane.f32.xlu0 %v6067
    %v6481 = vpop.xlane.xlu0 %6480
    %6482 = vadd.xlane.f32.xlu0 %v6068
    %v6483 = vpop.xlane.xlu0 %6482
    %6484 = vadd.xlane.f32.xlu0 %v6069
    %v6485 = vpop.xlane.xlu0 %6484
    %6486 = vadd.xlane.f32.xlu0 %v6070
    %v6487 = vpop.xlane.xlu0 %6486
    %6488 = vadd.xlane.f32.xlu0 %v6071
    %v6489 = vpop.xlane.xlu0 %6488
    %6490 = vadd.xlane.f32.xlu0 %v6072
    %v6491 = vpop.xlane.xlu0 %6490
    %6492 = vadd.xlane.f32.xlu0 %v6073
    %v6493 = vpop.xlane.xlu0 %6492
    %6494 = vadd.xlane.f32.xlu0 %v6074
    %v6495 = vpop.xlane.xlu0 %6494
    %6496 = vadd.xlane.f32.xlu0 %v6075
    %v6497 = vpop.xlane.xlu0 %6496
    %6498 = vadd.xlane.f32.xlu0 %v6076
    %v6499 = vpop.xlane.xlu0 %6498
    %6500 = vadd.xlane.f32.xlu0 %v6077
    %v6501 = vpop.xlane.xlu0 %6500
    %6502 = vadd.xlane.f32.xlu0 %v6078
    %v6503 = vpop.xlane.xlu0 %6502
    %6504 = vadd.xlane.f32.xlu0 %v6079
    %v6505 = vpop.xlane.xlu0 %6504
    %6506 = vadd.xlane.f32.xlu0 %v6080
    %v6507 = vpop.xlane.xlu0 %6506
    %6508 = vadd.xlane.f32.xlu0 %v6081
    %v6509 = vpop.xlane.xlu0 %6508
    %6510 = vadd.xlane.f32.xlu0 %v6082
    %v6511 = vpop.xlane.xlu0 %6510
    %6512 = vadd.xlane.f32.xlu0 %v6083
    %v6513 = vpop.xlane.xlu0 %6512
    %6514 = vadd.xlane.f32.xlu0 %v6084
    %v6515 = vpop.xlane.xlu0 %6514
    %6516 = vadd.xlane.f32.xlu0 %v6085
    %v6517 = vpop.xlane.xlu0 %6516
    %6518 = vadd.xlane.f32.xlu0 %v6086
    %v6519 = vpop.xlane.xlu0 %6518
    %6520 = vadd.xlane.f32.xlu0 %v6087
    %v6521 = vpop.xlane.xlu0 %6520
    %6522 = vadd.xlane.f32.xlu0 %v6088
    %v6523 = vpop.xlane.xlu0 %6522
    %6524 = vadd.xlane.f32.xlu0 %v6089
    %v6525 = vpop.xlane.xlu0 %6524
    %6526 = vadd.xlane.f32.xlu0 %v6090
    %v6527 = vpop.xlane.xlu0 %6526
    %6528 = vadd.xlane.f32.xlu0 %v6091
    %v6529 = vpop.xlane.xlu0 %6528
    %6530 = vadd.xlane.f32.xlu0 %v6092
    %v6531 = vpop.xlane.xlu0 %6530
    %6532 = vadd.xlane.f32.xlu0 %v6093
    %v6533 = vpop.xlane.xlu0 %6532
    %6534 = vadd.xlane.f32.xlu0 %v6094
    %v6535 = vpop.xlane.xlu0 %6534
    %6536 = vadd.xlane.f32.xlu0 %v6095
    %v6537 = vpop.xlane.xlu0 %6536
    %6538 = vadd.xlane.f32.xlu0 %v6096
    %v6539 = vpop.xlane.xlu0 %6538
    %6540 = vadd.xlane.f32.xlu0 %v6097
    %v6541 = vpop.xlane.xlu0 %6540
    %6542 = vadd.xlane.f32.xlu0 %v6098
    %v6543 = vpop.xlane.xlu0 %6542
    %6544 = vadd.xlane.f32.xlu0 %v6099
    %v6545 = vpop.xlane.xlu0 %6544
    %6546 = vadd.xlane.f32.xlu0 %v6100
    %v6547 = vpop.xlane.xlu0 %6546
    %6548 = vadd.xlane.f32.xlu0 %v6101
    %v6549 = vpop.xlane.xlu0 %6548
    %6550 = vadd.xlane.f32.xlu0 %v6102
    %v6551 = vpop.xlane.xlu0 %6550
    %6552 = vadd.xlane.f32.xlu0 %v6103
    %v6553 = vpop.xlane.xlu0 %6552
    %6554 = vadd.xlane.f32.xlu0 %v6104
    %v6555 = vpop.xlane.xlu0 %6554
    %6556 = vadd.xlane.f32.xlu0 %v6105
    %v6557 = vpop.xlane.xlu0 %6556
    %6558 = vadd.xlane.f32.xlu0 %v6106
    %v6559 = vpop.xlane.xlu0 %6558
    %6560 = vadd.xlane.f32.xlu0 %v6107
    %v6561 = vpop.xlane.xlu0 %6560
    %6562 = vadd.xlane.f32.xlu0 %v6108
    %v6563 = vpop.xlane.xlu0 %6562
    %6564 = vadd.xlane.f32.xlu0 %v6109
    %v6565 = vpop.xlane.xlu0 %6564
    %6566 = vadd.xlane.f32.xlu0 %v6110
    %v6567 = vpop.xlane.xlu0 %6566
    %6568 = vadd.xlane.f32.xlu0 %v6111
    %v6569 = vpop.xlane.xlu0 %6568
    %6570 = vadd.xlane.f32.xlu0 %v6112
    %v6571 = vpop.xlane.xlu0 %6570
    %6572 = vadd.xlane.f32.xlu0 %v6113
    %v6573 = vpop.xlane.xlu0 %6572
    %6574 = vadd.xlane.f32.xlu0 %v6114
    %v6575 = vpop.xlane.xlu0 %6574
    %6576 = vadd.xlane.f32.xlu0 %v6115
    %v6577 = vpop.xlane.xlu0 %6576
    %6578 = vadd.xlane.f32.xlu0 %v6116
    %v6579 = vpop.xlane.xlu0 %6578
    %6580 = vadd.xlane.f32.xlu0 %v6117
    %v6581 = vpop.xlane.xlu0 %6580
    %6582 = vadd.xlane.f32.xlu0 %v6118
    %v6583 = vpop.xlane.xlu0 %6582
    %6584 = vadd.xlane.f32.xlu0 %v6119
    %v6585 = vpop.xlane.xlu0 %6584
    %6586 = vadd.xlane.f32.xlu0 %v6120
    %v6587 = vpop.xlane.xlu0 %6586
    %6588 = vadd.xlane.f32.xlu0 %v6121
    %v6589 = vpop.xlane.xlu0 %6588
    %6590 = vadd.xlane.f32.xlu0 %v6122
    %v6591 = vpop.xlane.xlu0 %6590
    %6592 = vadd.xlane.f32.xlu0 %v6123
    %v6593 = vpop.xlane.xlu0 %6592
    %6594 = vadd.xlane.f32.xlu0 %v6124
    %v6595 = vpop.xlane.xlu0 %6594
    %6596 = vadd.xlane.f32.xlu0 %v6125
    %v6597 = vpop.xlane.xlu0 %6596
    %6598 = vadd.xlane.f32.xlu0 %v6126
    %v6599 = vpop.xlane.xlu0 %6598
    %6600 = vadd.xlane.f32.xlu0 %v6127
    %v6601 = vpop.xlane.xlu0 %6600
    %6602 = vadd.xlane.f32.xlu0 %v6128
    %v6603 = vpop.xlane.xlu0 %6602
    %6604 = vadd.xlane.f32.xlu0 %v6129
    %v6605 = vpop.xlane.xlu0 %6604
    %6606 = vadd.xlane.f32.xlu0 %v6130
    %v6607 = vpop.xlane.xlu0 %6606
    %6608 = vadd.xlane.f32.xlu0 %v6131
    %v6609 = vpop.xlane.xlu0 %6608
    %6610 = vadd.xlane.f32.xlu0 %v6132
    %v6611 = vpop.xlane.xlu0 %6610
    %6612 = vadd.xlane.f32.xlu0 %v6133
    %v6613 = vpop.xlane.xlu0 %6612
    %6614 = vadd.xlane.f32.xlu0 %v6134
    %v6615 = vpop.xlane.xlu0 %6614
    %6616 = vadd.xlane.f32.xlu0 %v6135
    %v6617 = vpop.xlane.xlu0 %6616
    %6618 = vadd.xlane.f32.xlu0 %v6136
    %v6619 = vpop.xlane.xlu0 %6618
    %6620 = vadd.xlane.f32.xlu0 %v6137
    %v6621 = vpop.xlane.xlu0 %6620
    %6622 = vadd.xlane.f32.xlu0 %v6138
    %v6623 = vpop.xlane.xlu0 %6622
    %6624 = vadd.xlane.f32.xlu0 %v6139
    %v6625 = vpop.xlane.xlu0 %6624
    %6626 = vadd.xlane.f32.xlu0 %v6140
    %v6627 = vpop.xlane.xlu0 %6626
    %6628 = vadd.xlane.f32.xlu0 %v6141
    %v6629 = vpop.xlane.xlu0 %6628
    %6630 = vadd.xlane.f32.xlu0 %v6142
    %v6631 = vpop.xlane.xlu0 %6630
    %6632 = vadd.xlane.f32.xlu0 %v6143
    %v6633 = vpop.xlane.xlu0 %6632
    %6634 = vadd.xlane.f32.xlu0 %v6144
    %v6635 = vpop.xlane.xlu0 %6634
    %6636 = vadd.xlane.f32.xlu0 %v6145
    %v6637 = vpop.xlane.xlu0 %6636
    %6638 = vadd.xlane.f32.xlu0 %v6146
    %v6639 = vpop.xlane.xlu0 %6638
    %6640 = vadd.xlane.f32.xlu0 %v6147
    %v6641 = vpop.xlane.xlu0 %6640
    %6642 = vadd.xlane.f32.xlu0 %v6148
    %v6643 = vpop.xlane.xlu0 %6642
    %6644 = vadd.xlane.f32.xlu0 %v6149
    %v6645 = vpop.xlane.xlu0 %6644
    %6646 = vadd.xlane.f32.xlu0 %v6150
    %v6647 = vpop.xlane.xlu0 %6646
    %6648 = vadd.xlane.f32.xlu0 %v6151
    %v6649 = vpop.xlane.xlu0 %6648
    %6650 = vadd.xlane.f32.xlu0 %v6152
    %v6651 = vpop.xlane.xlu0 %6650
    %6652 = vadd.xlane.f32.xlu0 %v6153
    %v6653 = vpop.xlane.xlu0 %6652
    %6654 = vadd.xlane.f32.xlu0 %v6154
    %v6655 = vpop.xlane.xlu0 %6654
    %6656 = vadd.xlane.f32.xlu0 %v6155
    %v6657 = vpop.xlane.xlu0 %6656
    %6658 = vadd.xlane.f32.xlu0 %v6156
    %v6659 = vpop.xlane.xlu0 %6658
    %6660 = vadd.xlane.f32.xlu0 %v6157
    %v6661 = vpop.xlane.xlu0 %6660
    %6662 = vadd.xlane.f32.xlu0 %v6158
    %v6663 = vpop.xlane.xlu0 %6662
    %6664 = vadd.xlane.f32.xlu0 %v6159
    %v6665 = vpop.xlane.xlu0 %6664
    %6666 = vadd.xlane.f32.xlu0 %v6160
    %v6667 = vpop.xlane.xlu0 %6666
    %6668 = vadd.xlane.f32.xlu0 %v6161
    %v6669 = vpop.xlane.xlu0 %6668
    %6670 = vadd.xlane.f32.xlu0 %v6162
    %v6671 = vpop.xlane.xlu0 %6670
    %6672 = vadd.xlane.f32.xlu0 %v6163
    %v6673 = vpop.xlane.xlu0 %6672
    %6674 = vadd.xlane.f32.xlu0 %v6164
    %v6675 = vpop.xlane.xlu0 %6674
    %6676 = vadd.xlane.f32.xlu0 %v6165
    %v6677 = vpop.xlane.xlu0 %6676
    %v6678 = vadd.f32 %v3559, %v6167
    %v6679 = vadd.f32 %v3560, %v6169
    %v6680 = vadd.f32 %v3561, %v6171
    %v6681 = vadd.f32 %v3562, %v6173
    %v6682 = vadd.f32 %v3563, %v6175
    %v6683 = vadd.f32 %v3564, %v6177
    %v6684 = vadd.f32 %v3565, %v6179
    %v6685 = vadd.f32 %v3566, %v6181
    %v6686 = vadd.f32 %v3567, %v6183
    %v6687 = vadd.f32 %v3568, %v6185
    %v6688 = vadd.f32 %v3569, %v6187
    %v6689 = vadd.f32 %v3570, %v6189
    %v6690 = vadd.f32 %v3571, %v6191
    %v6691 = vadd.f32 %v3572, %v6193
    %v6692 = vadd.f32 %v3573, %v6195
    %v6693 = vadd.f32 %v3574, %v6197
    %v6694 = vadd.f32 %v3575, %v6199
    %v6695 = vadd.f32 %v3576, %v6201
    %v6696 = vadd.f32 %v3577, %v6203
    %v6697 = vadd.f32 %v3578, %v6205
    %v6698 = vadd.f32 %v3579, %v6207
    %v6699 = vadd.f32 %v3580, %v6209
    %v6700 = vadd.f32 %v3581, %v6211
    %v6701 = vadd.f32 %v3582, %v6213
    %v6702 = vadd.f32 %v3583, %v6215
    %v6703 = vadd.f32 %v3584, %v6217
    %v6704 = vadd.f32 %v3585, %v6219
    %v6705 = vadd.f32 %v3586, %v6221
    %v6706 = vadd.f32 %v3587, %v6223
    %v6707 = vadd.f32 %v3588, %v6225
    %v6708 = vadd.f32 %v3589, %v6227
    %v6709 = vadd.f32 %v3590, %v6229
    %v6710 = vadd.f32 %v3591, %v6231
    %v6711 = vadd.f32 %v3592, %v6233
    %v6712 = vadd.f32 %v3593, %v6235
    %v6713 = vadd.f32 %v3594, %v6237
    %v6714 = vadd.f32 %v3595, %v6239
    %v6715 = vadd.f32 %v3596, %v6241
    %v6716 = vadd.f32 %v3597, %v6243
    %v6717 = vadd.f32 %v3598, %v6245
    %v6718 = vadd.f32 %v3599, %v6247
    %v6719 = vadd.f32 %v3600, %v6249
    %v6720 = vadd.f32 %v3601, %v6251
    %v6721 = vadd.f32 %v3602, %v6253
    %v6722 = vadd.f32 %v3603, %v6255
    %v6723 = vadd.f32 %v3604, %v6257
    %v6724 = vadd.f32 %v3605, %v6259
    %v6725 = vadd.f32 %v3606, %v6261
    %v6726 = vadd.f32 %v3607, %v6263
    %v6727 = vadd.f32 %v3608, %v6265
    %v6728 = vadd.f32 %v3609, %v6267
    %v6729 = vadd.f32 %v3610, %v6269
    %v6730 = vadd.f32 %v3611, %v6271
    %v6731 = vadd.f32 %v3612, %v6273
    %v6732 = vadd.f32 %v3613, %v6275
    %v6733 = vadd.f32 %v3614, %v6277
    %v6734 = vadd.f32 %v3615, %v6279
    %v6735 = vadd.f32 %v3616, %v6281
    %v6736 = vadd.f32 %v3617, %v6283
    %v6737 = vadd.f32 %v3618, %v6285
    %v6738 = vadd.f32 %v3619, %v6287
    %v6739 = vadd.f32 %v3620, %v6289
    %v6740 = vadd.f32 %v3621, %v6291
    %v6741 = vadd.f32 %v3622, %v6293
    %v6742 = vadd.f32 %v3623, %v6295
    %v6743 = vadd.f32 %v3624, %v6297
    %v6744 = vadd.f32 %v3625, %v6299
    %v6745 = vadd.f32 %v3626, %v6301
    %v6746 = vadd.f32 %v3627, %v6303
    %v6747 = vadd.f32 %v3628, %v6305
    %v6748 = vadd.f32 %v3629, %v6307
    %v6749 = vadd.f32 %v3630, %v6309
    %v6750 = vadd.f32 %v3631, %v6311
    %v6751 = vadd.f32 %v3632, %v6313
    %v6752 = vadd.f32 %v3633, %v6315
    %v6753 = vadd.f32 %v3634, %v6317
    %v6754 = vadd.f32 %v3635, %v6319
    %v6755 = vadd.f32 %v3636, %v6321
    %v6756 = vadd.f32 %v3637, %v6323
    %v6757 = vadd.f32 %v3638, %v6325
    %v6758 = vadd.f32 %v3639, %v6327
    %v6759 = vadd.f32 %v3640, %v6329
    %v6760 = vadd.f32 %v3641, %v6331
    %v6761 = vadd.f32 %v3642, %v6333
    %v6762 = vadd.f32 %v3643, %v6335
    %v6763 = vadd.f32 %v3644, %v6337
    %v6764 = vadd.f32 %v3645, %v6339
    %v6765 = vadd.f32 %v3646, %v6341
    %v6766 = vadd.f32 %v3647, %v6343
    %v6767 = vadd.f32 %v3648, %v6345
    %v6768 = vadd.f32 %v3649, %v6347
    %v6769 = vadd.f32 %v3650, %v6349
    %v6770 = vadd.f32 %v3651, %v6351
    %v6771 = vadd.f32 %v3652, %v6353
    %v6772 = vadd.f32 %v3653, %v6355
    %v6773 = vadd.f32 %v3654, %v6357
    %v6774 = vadd.f32 %v3655, %v6359
    %v6775 = vadd.f32 %v3656, %v6361
    %v6776 = vadd.f32 %v3657, %v6363
    %v6777 = vadd.f32 %v3658, %v6365
    %v6778 = vadd.f32 %v3659, %v6367
    %v6779 = vadd.f32 %v3660, %v6369
    %v6780 = vadd.f32 %v3661, %v6371
    %v6781 = vadd.f32 %v3662, %v6373
    %v6782 = vadd.f32 %v3663, %v6375
    %v6783 = vadd.f32 %v3664, %v6377
    %v6784 = vadd.f32 %v3665, %v6379
    %v6785 = vadd.f32 %v3666, %v6381
    %v6786 = vadd.f32 %v3667, %v6383
    %v6787 = vadd.f32 %v3668, %v6385
    %v6788 = vadd.f32 %v3669, %v6387
    %v6789 = vadd.f32 %v3670, %v6389
    %v6790 = vadd.f32 %v3671, %v6391
    %v6791 = vadd.f32 %v3672, %v6393
    %v6792 = vadd.f32 %v3673, %v6395
    %v6793 = vadd.f32 %v3674, %v6397
    %v6794 = vadd.f32 %v3675, %v6399
    %v6795 = vadd.f32 %v3676, %v6401
    %v6796 = vadd.f32 %v3677, %v6403
    %v6797 = vadd.f32 %v3678, %v6405
    %v6798 = vadd.f32 %v3679, %v6407
    %v6799 = vadd.f32 %v3680, %v6409
    %v6800 = vadd.f32 %v3681, %v6411
    %v6801 = vadd.f32 %v3682, %v6413
    %v6802 = vadd.f32 %v3683, %v6415
    %v6803 = vadd.f32 %v3684, %v6417
    %v6804 = vadd.f32 %v3685, %v6419
    %v6805 = vadd.f32 %v3686, %v6421
    %v6806 = vadd.f32 %v3687, %v6423
    %v6807 = vadd.f32 %v3688, %v6425
    %v6808 = vadd.f32 %v3689, %v6427
    %v6809 = vadd.f32 %v3690, %v6429
    %v6810 = vadd.f32 %v3691, %v6431
    %v6811 = vadd.f32 %v3692, %v6433
    %v6812 = vadd.f32 %v3693, %v6435
    %v6813 = vadd.f32 %v3694, %v6437
    %v6814 = vadd.f32 %v3695, %v6439
    %v6815 = vadd.f32 %v3696, %v6441
    %v6816 = vadd.f32 %v3697, %v6443
    %v6817 = vadd.f32 %v3698, %v6445
    %v6818 = vadd.f32 %v3699, %v6447
    %v6819 = vadd.f32 %v3700, %v6449
    %v6820 = vadd.f32 %v3701, %v6451
    %v6821 = vadd.f32 %v3702, %v6453
    %v6822 = vadd.f32 %v3703, %v6455
    %v6823 = vadd.f32 %v3704, %v6457
    %v6824 = vadd.f32 %v3705, %v6459
    %v6825 = vadd.f32 %v3706, %v6461
    %v6826 = vadd.f32 %v3707, %v6463
    %v6827 = vadd.f32 %v3708, %v6465
    %v6828 = vadd.f32 %v3709, %v6467
    %v6829 = vadd.f32 %v3710, %v6469
    %v6830 = vadd.f32 %v3711, %v6471
    %v6831 = vadd.f32 %v3712, %v6473
    %v6832 = vadd.f32 %v3713, %v6475
    %v6833 = vadd.f32 %v3714, %v6477
    %v6834 = vadd.f32 %v3715, %v6479
    %v6835 = vadd.f32 %v3716, %v6481
    %v6836 = vadd.f32 %v3717, %v6483
    %v6837 = vadd.f32 %v3718, %v6485
    %v6838 = vadd.f32 %v3719, %v6487
    %v6839 = vadd.f32 %v3720, %v6489
    %v6840 = vadd.f32 %v3721, %v6491
    %v6841 = vadd.f32 %v3722, %v6493
    %v6842 = vadd.f32 %v3723, %v6495
    %v6843 = vadd.f32 %v3724, %v6497
    %v6844 = vadd.f32 %v3725, %v6499
    %v6845 = vadd.f32 %v3726, %v6501
    %v6846 = vadd.f32 %v3727, %v6503
    %v6847 = vadd.f32 %v3728, %v6505
    %v6848 = vadd.f32 %v3729, %v6507
    %v6849 = vadd.f32 %v3730, %v6509
    %v6850 = vadd.f32 %v3731, %v6511
    %v6851 = vadd.f32 %v3732, %v6513
    %v6852 = vadd.f32 %v3733, %v6515
    %v6853 = vadd.f32 %v3734, %v6517
    %v6854 = vadd.f32 %v3735, %v6519
    %v6855 = vadd.f32 %v3736, %v6521
    %v6856 = vadd.f32 %v3737, %v6523
    %v6857 = vadd.f32 %v3738, %v6525
    %v6858 = vadd.f32 %v3739, %v6527
    %v6859 = vadd.f32 %v3740, %v6529
    %v6860 = vadd.f32 %v3741, %v6531
    %v6861 = vadd.f32 %v3742, %v6533
    %v6862 = vadd.f32 %v3743, %v6535
    %v6863 = vadd.f32 %v3744, %v6537
    %v6864 = vadd.f32 %v3745, %v6539
    %v6865 = vadd.f32 %v3746, %v6541
    %v6866 = vadd.f32 %v3747, %v6543
    %v6867 = vadd.f32 %v3748, %v6545
    %v6868 = vadd.f32 %v3749, %v6547
    %v6869 = vadd.f32 %v3750, %v6549
    %v6870 = vadd.f32 %v3751, %v6551
    %v6871 = vadd.f32 %v3752, %v6553
    %v6872 = vadd.f32 %v3753, %v6555
    %v6873 = vadd.f32 %v3754, %v6557
    %v6874 = vadd.f32 %v3755, %v6559
    %v6875 = vadd.f32 %v3756, %v6561
    %v6876 = vadd.f32 %v3757, %v6563
    %v6877 = vadd.f32 %v3758, %v6565
    %v6878 = vadd.f32 %v3759, %v6567
    %v6879 = vadd.f32 %v3760, %v6569
    %v6880 = vadd.f32 %v3761, %v6571
    %v6881 = vadd.f32 %v3762, %v6573
    %v6882 = vadd.f32 %v3763, %v6575
    %v6883 = vadd.f32 %v3764, %v6577
    %v6884 = vadd.f32 %v3765, %v6579
    %v6885 = vadd.f32 %v3766, %v6581
    %v6886 = vadd.f32 %v3767, %v6583
    %v6887 = vadd.f32 %v3768, %v6585
    %v6888 = vadd.f32 %v3769, %v6587
    %v6889 = vadd.f32 %v3770, %v6589
    %v6890 = vadd.f32 %v3771, %v6591
    %v6891 = vadd.f32 %v3772, %v6593
    %v6892 = vadd.f32 %v3773, %v6595
    %v6893 = vadd.f32 %v3774, %v6597
    %v6894 = vadd.f32 %v3775, %v6599
    %v6895 = vadd.f32 %v3776, %v6601
    %v6896 = vadd.f32 %v3777, %v6603
    %v6897 = vadd.f32 %v3778, %v6605
    %v6898 = vadd.f32 %v3779, %v6607
    %v6899 = vadd.f32 %v3780, %v6609
    %v6900 = vadd.f32 %v3781, %v6611
    %v6901 = vadd.f32 %v3782, %v6613
    %v6902 = vadd.f32 %v3783, %v6615
    %v6903 = vadd.f32 %v3784, %v6617
    %v6904 = vadd.f32 %v3785, %v6619
    %v6905 = vadd.f32 %v3786, %v6621
    %v6906 = vadd.f32 %v3787, %v6623
    %v6907 = vadd.f32 %v3788, %v6625
    %v6908 = vadd.f32 %v3789, %v6627
    %v6909 = vadd.f32 %v3790, %v6629
    %v6910 = vadd.f32 %v3791, %v6631
    %v6911 = vadd.f32 %v3792, %v6633
    %v6912 = vadd.f32 %v3793, %v6635
    %v6913 = vadd.f32 %v3794, %v6637
    %v6914 = vadd.f32 %v3795, %v6639
    %v6915 = vadd.f32 %v3796, %v6641
    %v6916 = vadd.f32 %v3797, %v6643
    %v6917 = vadd.f32 %v3798, %v6645
    %v6918 = vadd.f32 %v3799, %v6647
    %v6919 = vadd.f32 %v3800, %v6649
    %v6920 = vadd.f32 %v3801, %v6651
    %v6921 = vadd.f32 %v3802, %v6653
    %v6922 = vadd.f32 %v3803, %v6655
    %v6923 = vadd.f32 %v3804, %v6657
    %v6924 = vadd.f32 %v3805, %v6659
    %v6925 = vadd.f32 %v3806, %v6661
    %v6926 = vadd.f32 %v3807, %v6663
    %v6927 = vadd.f32 %v3808, %v6665
    %v6928 = vadd.f32 %v3809, %v6667
    %v6929 = vadd.f32 %v3810, %v6669
    %v6930 = vadd.f32 %v3811, %v6671
    %v6931 = vadd.f32 %v3812, %v6673
    %v6932 = vadd.f32 %v3813, %v6675
    %v6933 = vadd.f32 %v3814, %v6677
    %v6934 = vmul.f32 %v6678, 0.00390625
    %v6935 = vmul.f32 %v6679, 0.00390625
    %v6936 = vmul.f32 %v6680, 0.00390625
    %v6937 = vmul.f32 %v6681, 0.00390625
    %v6938 = vmul.f32 %v6682, 0.00390625
    %v6939 = vmul.f32 %v6683, 0.00390625
    %v6940 = vmul.f32 %v6684, 0.00390625
    %v6941 = vmul.f32 %v6685, 0.00390625
    %v6942 = vmul.f32 %v6686, 0.00390625
    %v6943 = vmul.f32 %v6687, 0.00390625
    %v6944 = vmul.f32 %v6688, 0.00390625
    %v6945 = vmul.f32 %v6689, 0.00390625
    %v6946 = vmul.f32 %v6690, 0.00390625
    %v6947 = vmul.f32 %v6691, 0.00390625
    %v6948 = vmul.f32 %v6692, 0.00390625
    %v6949 = vmul.f32 %v6693, 0.00390625
    %v6950 = vmul.f32 %v6694, 0.00390625
    %v6951 = vmul.f32 %v6695, 0.00390625
    %v6952 = vmul.f32 %v6696, 0.00390625
    %v6953 = vmul.f32 %v6697, 0.00390625
    %v6954 = vmul.f32 %v6698, 0.00390625
    %v6955 = vmul.f32 %v6699, 0.00390625
    %v6956 = vmul.f32 %v6700, 0.00390625
    %v6957 = vmul.f32 %v6701, 0.00390625
    %v6958 = vmul.f32 %v6702, 0.00390625
    %v6959 = vmul.f32 %v6703, 0.00390625
    %v6960 = vmul.f32 %v6704, 0.00390625
    %v6961 = vmul.f32 %v6705, 0.00390625
    %v6962 = vmul.f32 %v6706, 0.00390625
    %v6963 = vmul.f32 %v6707, 0.00390625
    %v6964 = vmul.f32 %v6708, 0.00390625
    %v6965 = vmul.f32 %v6709, 0.00390625
    %v6966 = vmul.f32 %v6710, 0.00390625
    %v6967 = vmul.f32 %v6711, 0.00390625
    %v6968 = vmul.f32 %v6712, 0.00390625
    %v6969 = vmul.f32 %v6713, 0.00390625
    %v6970 = vmul.f32 %v6714, 0.00390625
    %v6971 = vmul.f32 %v6715, 0.00390625
    %v6972 = vmul.f32 %v6716, 0.00390625
    %v6973 = vmul.f32 %v6717, 0.00390625
    %v6974 = vmul.f32 %v6718, 0.00390625
    %v6975 = vmul.f32 %v6719, 0.00390625
    %v6976 = vmul.f32 %v6720, 0.00390625
    %v6977 = vmul.f32 %v6721, 0.00390625
    %v6978 = vmul.f32 %v6722, 0.00390625
    %v6979 = vmul.f32 %v6723, 0.00390625
    %v6980 = vmul.f32 %v6724, 0.00390625
    %v6981 = vmul.f32 %v6725, 0.00390625
    %v6982 = vmul.f32 %v6726, 0.00390625
    %v6983 = vmul.f32 %v6727, 0.00390625
    %v6984 = vmul.f32 %v6728, 0.00390625
    %v6985 = vmul.f32 %v6729, 0.00390625
    %v6986 = vmul.f32 %v6730, 0.00390625
    %v6987 = vmul.f32 %v6731, 0.00390625
    %v6988 = vmul.f32 %v6732, 0.00390625
    %v6989 = vmul.f32 %v6733, 0.00390625
    %v6990 = vmul.f32 %v6734, 0.00390625
    %v6991 = vmul.f32 %v6735, 0.00390625
    %v6992 = vmul.f32 %v6736, 0.00390625
    %v6993 = vmul.f32 %v6737, 0.00390625
    %v6994 = vmul.f32 %v6738, 0.00390625
    %v6995 = vmul.f32 %v6739, 0.00390625
    %v6996 = vmul.f32 %v6740, 0.00390625
    %v6997 = vmul.f32 %v6741, 0.00390625
    %v6998 = vmul.f32 %v6742, 0.00390625
    %v6999 = vmul.f32 %v6743, 0.00390625
    %v7000 = vmul.f32 %v6744, 0.00390625
    %v7001 = vmul.f32 %v6745, 0.00390625
    %v7002 = vmul.f32 %v6746, 0.00390625
    %v7003 = vmul.f32 %v6747, 0.00390625
    %v7004 = vmul.f32 %v6748, 0.00390625
    %v7005 = vmul.f32 %v6749, 0.00390625
    %v7006 = vmul.f32 %v6750, 0.00390625
    %v7007 = vmul.f32 %v6751, 0.00390625
    %v7008 = vmul.f32 %v6752, 0.00390625
    %v7009 = vmul.f32 %v6753, 0.00390625
    %v7010 = vmul.f32 %v6754, 0.00390625
    %v7011 = vmul.f32 %v6755, 0.00390625
    %v7012 = vmul.f32 %v6756, 0.00390625
    %v7013 = vmul.f32 %v6757, 0.00390625
    %v7014 = vmul.f32 %v6758, 0.00390625
    %v7015 = vmul.f32 %v6759, 0.00390625
    %v7016 = vmul.f32 %v6760, 0.00390625
    %v7017 = vmul.f32 %v6761, 0.00390625
    %v7018 = vmul.f32 %v6762, 0.00390625
    %v7019 = vmul.f32 %v6763, 0.00390625
    %v7020 = vmul.f32 %v6764, 0.00390625
    %v7021 = vmul.f32 %v6765, 0.00390625
    %v7022 = vmul.f32 %v6766, 0.00390625
    %v7023 = vmul.f32 %v6767, 0.00390625
    %v7024 = vmul.f32 %v6768, 0.00390625
    %v7025 = vmul.f32 %v6769, 0.00390625
    %v7026 = vmul.f32 %v6770, 0.00390625
    %v7027 = vmul.f32 %v6771, 0.00390625
    %v7028 = vmul.f32 %v6772, 0.00390625
    %v7029 = vmul.f32 %v6773, 0.00390625
    %v7030 = vmul.f32 %v6774, 0.00390625
    %v7031 = vmul.f32 %v6775, 0.00390625
    %v7032 = vmul.f32 %v6776, 0.00390625
    %v7033 = vmul.f32 %v6777, 0.00390625
    %v7034 = vmul.f32 %v6778, 0.00390625
    %v7035 = vmul.f32 %v6779, 0.00390625
    %v7036 = vmul.f32 %v6780, 0.00390625
    %v7037 = vmul.f32 %v6781, 0.00390625
    %v7038 = vmul.f32 %v6782, 0.00390625
    %v7039 = vmul.f32 %v6783, 0.00390625
    %v7040 = vmul.f32 %v6784, 0.00390625
    %v7041 = vmul.f32 %v6785, 0.00390625
    %v7042 = vmul.f32 %v6786, 0.00390625
    %v7043 = vmul.f32 %v6787, 0.00390625
    %v7044 = vmul.f32 %v6788, 0.00390625
    %v7045 = vmul.f32 %v6789, 0.00390625
    %v7046 = vmul.f32 %v6790, 0.00390625
    %v7047 = vmul.f32 %v6791, 0.00390625
    %v7048 = vmul.f32 %v6792, 0.00390625
    %v7049 = vmul.f32 %v6793, 0.00390625
    %v7050 = vmul.f32 %v6794, 0.00390625
    %v7051 = vmul.f32 %v6795, 0.00390625
    %v7052 = vmul.f32 %v6796, 0.00390625
    %v7053 = vmul.f32 %v6797, 0.00390625
    %v7054 = vmul.f32 %v6798, 0.00390625
    %v7055 = vmul.f32 %v6799, 0.00390625
    %v7056 = vmul.f32 %v6800, 0.00390625
    %v7057 = vmul.f32 %v6801, 0.00390625
    %v7058 = vmul.f32 %v6802, 0.00390625
    %v7059 = vmul.f32 %v6803, 0.00390625
    %v7060 = vmul.f32 %v6804, 0.00390625
    %v7061 = vmul.f32 %v6805, 0.00390625
    %v7062 = vmul.f32 %v6806, 0.00390625
    %v7063 = vmul.f32 %v6807, 0.00390625
    %v7064 = vmul.f32 %v6808, 0.00390625
    %v7065 = vmul.f32 %v6809, 0.00390625
    %v7066 = vmul.f32 %v6810, 0.00390625
    %v7067 = vmul.f32 %v6811, 0.00390625
    %v7068 = vmul.f32 %v6812, 0.00390625
    %v7069 = vmul.f32 %v6813, 0.00390625
    %v7070 = vmul.f32 %v6814, 0.00390625
    %v7071 = vmul.f32 %v6815, 0.00390625
    %v7072 = vmul.f32 %v6816, 0.00390625
    %v7073 = vmul.f32 %v6817, 0.00390625
    %v7074 = vmul.f32 %v6818, 0.00390625
    %v7075 = vmul.f32 %v6819, 0.00390625
    %v7076 = vmul.f32 %v6820, 0.00390625
    %v7077 = vmul.f32 %v6821, 0.00390625
    %v7078 = vmul.f32 %v6822, 0.00390625
    %v7079 = vmul.f32 %v6823, 0.00390625
    %v7080 = vmul.f32 %v6824, 0.00390625
    %v7081 = vmul.f32 %v6825, 0.00390625
    %v7082 = vmul.f32 %v6826, 0.00390625
    %v7083 = vmul.f32 %v6827, 0.00390625
    %v7084 = vmul.f32 %v6828, 0.00390625
    %v7085 = vmul.f32 %v6829, 0.00390625
    %v7086 = vmul.f32 %v6830, 0.00390625
    %v7087 = vmul.f32 %v6831, 0.00390625
    %v7088 = vmul.f32 %v6832, 0.00390625
    %v7089 = vmul.f32 %v6833, 0.00390625
    %v7090 = vmul.f32 %v6834, 0.00390625
    %v7091 = vmul.f32 %v6835, 0.00390625
    %v7092 = vmul.f32 %v6836, 0.00390625
    %v7093 = vmul.f32 %v6837, 0.00390625
    %v7094 = vmul.f32 %v6838, 0.00390625
    %v7095 = vmul.f32 %v6839, 0.00390625
    %v7096 = vmul.f32 %v6840, 0.00390625
    %v7097 = vmul.f32 %v6841, 0.00390625
    %v7098 = vmul.f32 %v6842, 0.00390625
    %v7099 = vmul.f32 %v6843, 0.00390625
    %v7100 = vmul.f32 %v6844, 0.00390625
    %v7101 = vmul.f32 %v6845, 0.00390625
    %v7102 = vmul.f32 %v6846, 0.00390625
    %v7103 = vmul.f32 %v6847, 0.00390625
    %v7104 = vmul.f32 %v6848, 0.00390625
    %v7105 = vmul.f32 %v6849, 0.00390625
    %v7106 = vmul.f32 %v6850, 0.00390625
    %v7107 = vmul.f32 %v6851, 0.00390625
    %v7108 = vmul.f32 %v6852, 0.00390625
    %v7109 = vmul.f32 %v6853, 0.00390625
    %v7110 = vmul.f32 %v6854, 0.00390625
    %v7111 = vmul.f32 %v6855, 0.00390625
    %v7112 = vmul.f32 %v6856, 0.00390625
    %v7113 = vmul.f32 %v6857, 0.00390625
    %v7114 = vmul.f32 %v6858, 0.00390625
    %v7115 = vmul.f32 %v6859, 0.00390625
    %v7116 = vmul.f32 %v6860, 0.00390625
    %v7117 = vmul.f32 %v6861, 0.00390625
    %v7118 = vmul.f32 %v6862, 0.00390625
    %v7119 = vmul.f32 %v6863, 0.00390625
    %v7120 = vmul.f32 %v6864, 0.00390625
    %v7121 = vmul.f32 %v6865, 0.00390625
    %v7122 = vmul.f32 %v6866, 0.00390625
    %v7123 = vmul.f32 %v6867, 0.00390625
    %v7124 = vmul.f32 %v6868, 0.00390625
    %v7125 = vmul.f32 %v6869, 0.00390625
    %v7126 = vmul.f32 %v6870, 0.00390625
    %v7127 = vmul.f32 %v6871, 0.00390625
    %v7128 = vmul.f32 %v6872, 0.00390625
    %v7129 = vmul.f32 %v6873, 0.00390625
    %v7130 = vmul.f32 %v6874, 0.00390625
    %v7131 = vmul.f32 %v6875, 0.00390625
    %v7132 = vmul.f32 %v6876, 0.00390625
    %v7133 = vmul.f32 %v6877, 0.00390625
    %v7134 = vmul.f32 %v6878, 0.00390625
    %v7135 = vmul.f32 %v6879, 0.00390625
    %v7136 = vmul.f32 %v6880, 0.00390625
    %v7137 = vmul.f32 %v6881, 0.00390625
    %v7138 = vmul.f32 %v6882, 0.00390625
    %v7139 = vmul.f32 %v6883, 0.00390625
    %v7140 = vmul.f32 %v6884, 0.00390625
    %v7141 = vmul.f32 %v6885, 0.00390625
    %v7142 = vmul.f32 %v6886, 0.00390625
    %v7143 = vmul.f32 %v6887, 0.00390625
    %v7144 = vmul.f32 %v6888, 0.00390625
    %v7145 = vmul.f32 %v6889, 0.00390625
    %v7146 = vmul.f32 %v6890, 0.00390625
    %v7147 = vmul.f32 %v6891, 0.00390625
    %v7148 = vmul.f32 %v6892, 0.00390625
    %v7149 = vmul.f32 %v6893, 0.00390625
    %v7150 = vmul.f32 %v6894, 0.00390625
    %v7151 = vmul.f32 %v6895, 0.00390625
    %v7152 = vmul.f32 %v6896, 0.00390625
    %v7153 = vmul.f32 %v6897, 0.00390625
    %v7154 = vmul.f32 %v6898, 0.00390625
    %v7155 = vmul.f32 %v6899, 0.00390625
    %v7156 = vmul.f32 %v6900, 0.00390625
    %v7157 = vmul.f32 %v6901, 0.00390625
    %v7158 = vmul.f32 %v6902, 0.00390625
    %v7159 = vmul.f32 %v6903, 0.00390625
    %v7160 = vmul.f32 %v6904, 0.00390625
    %v7161 = vmul.f32 %v6905, 0.00390625
    %v7162 = vmul.f32 %v6906, 0.00390625
    %v7163 = vmul.f32 %v6907, 0.00390625
    %v7164 = vmul.f32 %v6908, 0.00390625
    %v7165 = vmul.f32 %v6909, 0.00390625
    %v7166 = vmul.f32 %v6910, 0.00390625
    %v7167 = vmul.f32 %v6911, 0.00390625
    %v7168 = vmul.f32 %v6912, 0.00390625
    %v7169 = vmul.f32 %v6913, 0.00390625
    %v7170 = vmul.f32 %v6914, 0.00390625
    %v7171 = vmul.f32 %v6915, 0.00390625
    %v7172 = vmul.f32 %v6916, 0.00390625
    %v7173 = vmul.f32 %v6917, 0.00390625
    %v7174 = vmul.f32 %v6918, 0.00390625
    %v7175 = vmul.f32 %v6919, 0.00390625
    %v7176 = vmul.f32 %v6920, 0.00390625
    %v7177 = vmul.f32 %v6921, 0.00390625
    %v7178 = vmul.f32 %v6922, 0.00390625
    %v7179 = vmul.f32 %v6923, 0.00390625
    %v7180 = vmul.f32 %v6924, 0.00390625
    %v7181 = vmul.f32 %v6925, 0.00390625
    %v7182 = vmul.f32 %v6926, 0.00390625
    %v7183 = vmul.f32 %v6927, 0.00390625
    %v7184 = vmul.f32 %v6928, 0.00390625
    %v7185 = vmul.f32 %v6929, 0.00390625
    %v7186 = vmul.f32 %v6930, 0.00390625
    %v7187 = vmul.f32 %v6931, 0.00390625
    %v7188 = vmul.f32 %v6932, 0.00390625
    %v7189 = vmul.f32 %v6933, 0.00390625
    %v7190 = vlaneseq
    %v7191 = vshrl.u32 %v7190, 7
    %v7192 = vsub.s32 0, %v7191
    %v7193 = vrot.slane %v416, %v7192
    %v7194 = vlaneseq
    %v7195 = vshrl.u32 %v7194, 7
    %v7196 = vsub.s32 1, %v7195
    %v7197 = vrot.slane %v416, %v7196
    %v7198 = vlaneseq
    %v7199 = vshrl.u32 %v7198, 7
    %v7200 = vsub.s32 2, %v7199
    %v7201 = vrot.slane %v416, %v7200
    %v7202 = vlaneseq
    %v7203 = vshrl.u32 %v7202, 7
    %v7204 = vsub.s32 3, %v7203
    %v7205 = vrot.slane %v416, %v7204
    %v7206 = vlaneseq
    %v7207 = vshrl.u32 %v7206, 7
    %v7208 = vsub.s32 4, %v7207
    %v7209 = vrot.slane %v416, %v7208
    %v7210 = vlaneseq
    %v7211 = vshrl.u32 %v7210, 7
    %v7212 = vsub.s32 5, %v7211
    %v7213 = vrot.slane %v416, %v7212
    %v7214 = vlaneseq
    %v7215 = vshrl.u32 %v7214, 7
    %v7216 = vsub.s32 6, %v7215
    %v7217 = vrot.slane %v416, %v7216
    %v7218 = vlaneseq
    %v7219 = vshrl.u32 %v7218, 7
    %v7220 = vsub.s32 7, %v7219
    %v7221 = vrot.slane %v416, %v7220
    %v7222 = vlaneseq
    %v7223 = vshrl.u32 %v7222, 7
    %v7224 = vsub.s32 0, %v7223
    %v7225 = vrot.slane %v421, %v7224
    %v7226 = vlaneseq
    %v7227 = vshrl.u32 %v7226, 7
    %v7228 = vsub.s32 1, %v7227
    %v7229 = vrot.slane %v421, %v7228
    %v7230 = vlaneseq
    %v7231 = vshrl.u32 %v7230, 7
    %v7232 = vsub.s32 2, %v7231
    %v7233 = vrot.slane %v421, %v7232
    %v7234 = vlaneseq
    %v7235 = vshrl.u32 %v7234, 7
    %v7236 = vsub.s32 3, %v7235
    %v7237 = vrot.slane %v421, %v7236
    %v7238 = vlaneseq
    %v7239 = vshrl.u32 %v7238, 7
    %v7240 = vsub.s32 4, %v7239
    %v7241 = vrot.slane %v421, %v7240
    %v7242 = vlaneseq
    %v7243 = vshrl.u32 %v7242, 7
    %v7244 = vsub.s32 5, %v7243
    %v7245 = vrot.slane %v421, %v7244
    %v7246 = vlaneseq
    %v7247 = vshrl.u32 %v7246, 7
    %v7248 = vsub.s32 6, %v7247
    %v7249 = vrot.slane %v421, %v7248
    %v7250 = vlaneseq
    %v7251 = vshrl.u32 %v7250, 7
    %v7252 = vsub.s32 7, %v7251
    %v7253 = vrot.slane %v421, %v7252
    %v7270 = vmul.f32 %v6934, %v7193
    %v7271 = vmul.f32 %v6935, %v7193
    %v7272 = vmul.f32 %v6936, %v7193
    %v7273 = vmul.f32 %v6937, %v7193
    %v7274 = vmul.f32 %v6938, %v7193
    %v7275 = vmul.f32 %v6939, %v7193
    %v7276 = vmul.f32 %v6940, %v7193
    %v7277 = vmul.f32 %v6941, %v7193
    %v7278 = vmul.f32 %v6942, %v7193
    %v7279 = vmul.f32 %v6943, %v7193
    %v7280 = vmul.f32 %v6944, %v7193
    %v7281 = vmul.f32 %v6945, %v7193
    %v7282 = vmul.f32 %v6946, %v7193
    %v7283 = vmul.f32 %v6947, %v7193
    %v7284 = vmul.f32 %v6948, %v7193
    %v7285 = vmul.f32 %v6949, %v7193
    %v7286 = vmul.f32 %v6950, %v7197
    %v7287 = vmul.f32 %v6951, %v7197
    %v7288 = vmul.f32 %v6952, %v7197
    %v7289 = vmul.f32 %v6953, %v7197
    %v7290 = vmul.f32 %v6954, %v7197
    %v7291 = vmul.f32 %v6955, %v7197
    %v7292 = vmul.f32 %v6956, %v7197
    %v7293 = vmul.f32 %v6957, %v7197
    %v7294 = vmul.f32 %v6958, %v7197
    %v7295 = vmul.f32 %v6959, %v7197
    %v7296 = vmul.f32 %v6960, %v7197
    %v7297 = vmul.f32 %v6961, %v7197
    %v7298 = vmul.f32 %v6962, %v7197
    %v7299 = vmul.f32 %v6963, %v7197
    %v7300 = vmul.f32 %v6964, %v7197
    %v7301 = vmul.f32 %v6965, %v7197
    %v7302 = vmul.f32 %v6966, %v7201
    %v7303 = vmul.f32 %v6967, %v7201
    %v7304 = vmul.f32 %v6968, %v7201
    %v7305 = vmul.f32 %v6969, %v7201
    %v7306 = vmul.f32 %v6970, %v7201
    %v7307 = vmul.f32 %v6971, %v7201
    %v7308 = vmul.f32 %v6972, %v7201
    %v7309 = vmul.f32 %v6973, %v7201
    %v7310 = vmul.f32 %v6974, %v7201
    %v7311 = vmul.f32 %v6975, %v7201
    %v7312 = vmul.f32 %v6976, %v7201
    %v7313 = vmul.f32 %v6977, %v7201
    %v7314 = vmul.f32 %v6978, %v7201
    %v7315 = vmul.f32 %v6979, %v7201
    %v7316 = vmul.f32 %v6980, %v7201
    %v7317 = vmul.f32 %v6981, %v7201
    %v7318 = vmul.f32 %v6982, %v7205
    %v7319 = vmul.f32 %v6983, %v7205
    %v7320 = vmul.f32 %v6984, %v7205
    %v7321 = vmul.f32 %v6985, %v7205
    %v7322 = vmul.f32 %v6986, %v7205
    %v7323 = vmul.f32 %v6987, %v7205
    %v7324 = vmul.f32 %v6988, %v7205
    %v7325 = vmul.f32 %v6989, %v7205
    %v7326 = vmul.f32 %v6990, %v7205
    %v7327 = vmul.f32 %v6991, %v7205
    %v7328 = vmul.f32 %v6992, %v7205
    %v7329 = vmul.f32 %v6993, %v7205
    %v7330 = vmul.f32 %v6994, %v7205
    %v7331 = vmul.f32 %v6995, %v7205
    %v7332 = vmul.f32 %v6996, %v7205
    %v7333 = vmul.f32 %v6997, %v7205
    %v7334 = vmul.f32 %v6998, %v7209
    %v7335 = vmul.f32 %v6999, %v7209
    %v7336 = vmul.f32 %v7000, %v7209
    %v7337 = vmul.f32 %v7001, %v7209
    %v7338 = vmul.f32 %v7002, %v7209
    %v7339 = vmul.f32 %v7003, %v7209
    %v7340 = vmul.f32 %v7004, %v7209
    %v7341 = vmul.f32 %v7005, %v7209
    %v7342 = vmul.f32 %v7006, %v7209
    %v7343 = vmul.f32 %v7007, %v7209
    %v7344 = vmul.f32 %v7008, %v7209
    %v7345 = vmul.f32 %v7009, %v7209
    %v7346 = vmul.f32 %v7010, %v7209
    %v7347 = vmul.f32 %v7011, %v7209
    %v7348 = vmul.f32 %v7012, %v7209
    %v7349 = vmul.f32 %v7013, %v7209
    %v7350 = vmul.f32 %v7014, %v7213
    %v7351 = vmul.f32 %v7015, %v7213
    %v7352 = vmul.f32 %v7016, %v7213
    %v7353 = vmul.f32 %v7017, %v7213
    %v7354 = vmul.f32 %v7018, %v7213
    %v7355 = vmul.f32 %v7019, %v7213
    %v7356 = vmul.f32 %v7020, %v7213
    %v7357 = vmul.f32 %v7021, %v7213
    %v7358 = vmul.f32 %v7022, %v7213
    %v7359 = vmul.f32 %v7023, %v7213
    %v7360 = vmul.f32 %v7024, %v7213
    %v7361 = vmul.f32 %v7025, %v7213
    %v7362 = vmul.f32 %v7026, %v7213
    %v7363 = vmul.f32 %v7027, %v7213
    %v7364 = vmul.f32 %v7028, %v7213
    %v7365 = vmul.f32 %v7029, %v7213
    %v7366 = vmul.f32 %v7030, %v7217
    %v7367 = vmul.f32 %v7031, %v7217
    %v7368 = vmul.f32 %v7032, %v7217
    %v7369 = vmul.f32 %v7033, %v7217
    %v7370 = vmul.f32 %v7034, %v7217
    %v7371 = vmul.f32 %v7035, %v7217
    %v7372 = vmul.f32 %v7036, %v7217
    %v7373 = vmul.f32 %v7037, %v7217
    %v7374 = vmul.f32 %v7038, %v7217
    %v7375 = vmul.f32 %v7039, %v7217
    %v7376 = vmul.f32 %v7040, %v7217
    %v7377 = vmul.f32 %v7041, %v7217
    %v7378 = vmul.f32 %v7042, %v7217
    %v7379 = vmul.f32 %v7043, %v7217
    %v7380 = vmul.f32 %v7044, %v7217
    %v7381 = vmul.f32 %v7045, %v7217
    %v7382 = vmul.f32 %v7046, %v7221
    %v7383 = vmul.f32 %v7047, %v7221
    %v7384 = vmul.f32 %v7048, %v7221
    %v7385 = vmul.f32 %v7049, %v7221
    %v7386 = vmul.f32 %v7050, %v7221
    %v7387 = vmul.f32 %v7051, %v7221
    %v7388 = vmul.f32 %v7052, %v7221
    %v7389 = vmul.f32 %v7053, %v7221
    %v7390 = vmul.f32 %v7054, %v7221
    %v7391 = vmul.f32 %v7055, %v7221
    %v7392 = vmul.f32 %v7056, %v7221
    %v7393 = vmul.f32 %v7057, %v7221
    %v7394 = vmul.f32 %v7058, %v7221
    %v7395 = vmul.f32 %v7059, %v7221
    %v7396 = vmul.f32 %v7060, %v7221
    %v7397 = vmul.f32 %v7061, %v7221
    %v7398 = vmul.f32 %v7062, %v7225
    %v7399 = vmul.f32 %v7063, %v7225
    %v7400 = vmul.f32 %v7064, %v7225
    %v7401 = vmul.f32 %v7065, %v7225
    %v7402 = vmul.f32 %v7066, %v7225
    %v7403 = vmul.f32 %v7067, %v7225
    %v7404 = vmul.f32 %v7068, %v7225
    %v7405 = vmul.f32 %v7069, %v7225
    %v7406 = vmul.f32 %v7070, %v7225
    %v7407 = vmul.f32 %v7071, %v7225
    %v7408 = vmul.f32 %v7072, %v7225
    %v7409 = vmul.f32 %v7073, %v7225
    %v7410 = vmul.f32 %v7074, %v7225
    %v7411 = vmul.f32 %v7075, %v7225
    %v7412 = vmul.f32 %v7076, %v7225
    %v7413 = vmul.f32 %v7077, %v7225
    %v7414 = vmul.f32 %v7078, %v7229
    %v7415 = vmul.f32 %v7079, %v7229
    %v7416 = vmul.f32 %v7080, %v7229
    %v7417 = vmul.f32 %v7081, %v7229
    %v7418 = vmul.f32 %v7082, %v7229
    %v7419 = vmul.f32 %v7083, %v7229
    %v7420 = vmul.f32 %v7084, %v7229
    %v7421 = vmul.f32 %v7085, %v7229
    %v7422 = vmul.f32 %v7086, %v7229
    %v7423 = vmul.f32 %v7087, %v7229
    %v7424 = vmul.f32 %v7088, %v7229
    %v7425 = vmul.f32 %v7089, %v7229
    %v7426 = vmul.f32 %v7090, %v7229
    %v7427 = vmul.f32 %v7091, %v7229
    %v7428 = vmul.f32 %v7092, %v7229
    %v7429 = vmul.f32 %v7093, %v7229
    %v7430 = vmul.f32 %v7094, %v7233
    %v7431 = vmul.f32 %v7095, %v7233
    %v7432 = vmul.f32 %v7096, %v7233
    %v7433 = vmul.f32 %v7097, %v7233
    %v7434 = vmul.f32 %v7098, %v7233
    %v7435 = vmul.f32 %v7099, %v7233
    %v7436 = vmul.f32 %v7100, %v7233
    %v7437 = vmul.f32 %v7101, %v7233
    %v7438 = vmul.f32 %v7102, %v7233
    %v7439 = vmul.f32 %v7103, %v7233
    %v7440 = vmul.f32 %v7104, %v7233
    %v7441 = vmul.f32 %v7105, %v7233
    %v7442 = vmul.f32 %v7106, %v7233
    %v7443 = vmul.f32 %v7107, %v7233
    %v7444 = vmul.f32 %v7108, %v7233
    %v7445 = vmul.f32 %v7109, %v7233
    %v7446 = vmul.f32 %v7110, %v7237
    %v7447 = vmul.f32 %v7111, %v7237
    %v7448 = vmul.f32 %v7112, %v7237
    %v7449 = vmul.f32 %v7113, %v7237
    %v7450 = vmul.f32 %v7114, %v7237
    %v7451 = vmul.f32 %v7115, %v7237
    %v7452 = vmul.f32 %v7116, %v7237
    %v7453 = vmul.f32 %v7117, %v7237
    %v7454 = vmul.f32 %v7118, %v7237
    %v7455 = vmul.f32 %v7119, %v7237
    %v7456 = vmul.f32 %v7120, %v7237
    %v7457 = vmul.f32 %v7121, %v7237
    %v7458 = vmul.f32 %v7122, %v7237
    %v7459 = vmul.f32 %v7123, %v7237
    %v7460 = vmul.f32 %v7124, %v7237
    %v7461 = vmul.f32 %v7125, %v7237
    %v7462 = vmul.f32 %v7126, %v7241
    %v7463 = vmul.f32 %v7127, %v7241
    %v7464 = vmul.f32 %v7128, %v7241
    %v7465 = vmul.f32 %v7129, %v7241
    %v7466 = vmul.f32 %v7130, %v7241
    %v7467 = vmul.f32 %v7131, %v7241
    %v7468 = vmul.f32 %v7132, %v7241
    %v7469 = vmul.f32 %v7133, %v7241
    %v7470 = vmul.f32 %v7134, %v7241
    %v7471 = vmul.f32 %v7135, %v7241
    %v7472 = vmul.f32 %v7136, %v7241
    %v7473 = vmul.f32 %v7137, %v7241
    %v7474 = vmul.f32 %v7138, %v7241
    %v7475 = vmul.f32 %v7139, %v7241
    %v7476 = vmul.f32 %v7140, %v7241
    %v7477 = vmul.f32 %v7141, %v7241
    %v7478 = vmul.f32 %v7142, %v7245
    %v7479 = vmul.f32 %v7143, %v7245
    %v7480 = vmul.f32 %v7144, %v7245
    %v7481 = vmul.f32 %v7145, %v7245
    %v7482 = vmul.f32 %v7146, %v7245
    %v7483 = vmul.f32 %v7147, %v7245
    %v7484 = vmul.f32 %v7148, %v7245
    %v7485 = vmul.f32 %v7149, %v7245
    %v7486 = vmul.f32 %v7150, %v7245
    %v7487 = vmul.f32 %v7151, %v7245
    %v7488 = vmul.f32 %v7152, %v7245
    %v7489 = vmul.f32 %v7153, %v7245
    %v7490 = vmul.f32 %v7154, %v7245
    %v7491 = vmul.f32 %v7155, %v7245
    %v7492 = vmul.f32 %v7156, %v7245
    %v7493 = vmul.f32 %v7157, %v7245
    %v7494 = vmul.f32 %v7158, %v7249
    %v7495 = vmul.f32 %v7159, %v7249
    %v7496 = vmul.f32 %v7160, %v7249
    %v7497 = vmul.f32 %v7161, %v7249
    %v7498 = vmul.f32 %v7162, %v7249
    %v7499 = vmul.f32 %v7163, %v7249
    %v7500 = vmul.f32 %v7164, %v7249
    %v7501 = vmul.f32 %v7165, %v7249
    %v7502 = vmul.f32 %v7166, %v7249
    %v7503 = vmul.f32 %v7167, %v7249
    %v7504 = vmul.f32 %v7168, %v7249
    %v7505 = vmul.f32 %v7169, %v7249
    %v7506 = vmul.f32 %v7170, %v7249
    %v7507 = vmul.f32 %v7171, %v7249
    %v7508 = vmul.f32 %v7172, %v7249
    %v7509 = vmul.f32 %v7173, %v7249
    %v7510 = vmul.f32 %v7174, %v7253
    %v7511 = vmul.f32 %v7175, %v7253
    %v7512 = vmul.f32 %v7176, %v7253
    %v7513 = vmul.f32 %v7177, %v7253
    %v7514 = vmul.f32 %v7178, %v7253
    %v7515 = vmul.f32 %v7179, %v7253
    %v7516 = vmul.f32 %v7180, %v7253
    %v7517 = vmul.f32 %v7181, %v7253
    %v7518 = vmul.f32 %v7182, %v7253
    %v7519 = vmul.f32 %v7183, %v7253
    %v7520 = vmul.f32 %v7184, %v7253
    %v7521 = vmul.f32 %v7185, %v7253
    %v7522 = vmul.f32 %v7186, %v7253
    %v7523 = vmul.f32 %v7187, %v7253
    %v7524 = vmul.f32 %v7188, %v7253
    %v7525 = vmul.f32 %v7189, %v7253
    %7782 = vset.pattern.permute.xlu0 0
    %7783 = vperm.xlu0 %7782, %v7270
    %v7784 = vpop.permute.xlu0 %7783
    %7785 = vset.pattern.permute.xlu0 0
    %7786 = vperm.xlu0 %7785, %v7271
    %v7787 = vpop.permute.xlu0 %7786
    %7788 = vset.pattern.permute.xlu0 0
    %7789 = vperm.xlu0 %7788, %v7272
    %v7790 = vpop.permute.xlu0 %7789
    %7791 = vset.pattern.permute.xlu0 0
    %7792 = vperm.xlu0 %7791, %v7273
    %v7793 = vpop.permute.xlu0 %7792
    %7794 = vset.pattern.permute.xlu0 0
    %7795 = vperm.xlu0 %7794, %v7274
    %v7796 = vpop.permute.xlu0 %7795
    %7797 = vset.pattern.permute.xlu0 0
    %7798 = vperm.xlu0 %7797, %v7275
    %v7799 = vpop.permute.xlu0 %7798
    %7800 = vset.pattern.permute.xlu0 0
    %7801 = vperm.xlu0 %7800, %v7276
    %v7802 = vpop.permute.xlu0 %7801
    %7803 = vset.pattern.permute.xlu0 0
    %7804 = vperm.xlu0 %7803, %v7277
    %v7805 = vpop.permute.xlu0 %7804
    %7806 = vset.pattern.permute.xlu0 0
    %7807 = vperm.xlu0 %7806, %v7278
    %v7808 = vpop.permute.xlu0 %7807
    %7809 = vset.pattern.permute.xlu0 0
    %7810 = vperm.xlu0 %7809, %v7279
    %v7811 = vpop.permute.xlu0 %7810
    %7812 = vset.pattern.permute.xlu0 0
    %7813 = vperm.xlu0 %7812, %v7280
    %v7814 = vpop.permute.xlu0 %7813
    %7815 = vset.pattern.permute.xlu0 0
    %7816 = vperm.xlu0 %7815, %v7281
    %v7817 = vpop.permute.xlu0 %7816
    %7818 = vset.pattern.permute.xlu0 0
    %7819 = vperm.xlu0 %7818, %v7282
    %v7820 = vpop.permute.xlu0 %7819
    %7821 = vset.pattern.permute.xlu0 0
    %7822 = vperm.xlu0 %7821, %v7283
    %v7823 = vpop.permute.xlu0 %7822
    %7824 = vset.pattern.permute.xlu0 0
    %7825 = vperm.xlu0 %7824, %v7284
    %v7826 = vpop.permute.xlu0 %7825
    %7827 = vset.pattern.permute.xlu0 0
    %7828 = vperm.xlu0 %7827, %v7285
    %v7829 = vpop.permute.xlu0 %7828
    %7830 = vset.pattern.permute.xlu0 0
    %7831 = vperm.xlu0 %7830, %v7286
    %v7832 = vpop.permute.xlu0 %7831
    %7833 = vset.pattern.permute.xlu0 0
    %7834 = vperm.xlu0 %7833, %v7287
    %v7835 = vpop.permute.xlu0 %7834
    %7836 = vset.pattern.permute.xlu0 0
    %7837 = vperm.xlu0 %7836, %v7288
    %v7838 = vpop.permute.xlu0 %7837
    %7839 = vset.pattern.permute.xlu0 0
    %7840 = vperm.xlu0 %7839, %v7289
    %v7841 = vpop.permute.xlu0 %7840
    %7842 = vset.pattern.permute.xlu0 0
    %7843 = vperm.xlu0 %7842, %v7290
    %v7844 = vpop.permute.xlu0 %7843
    %7845 = vset.pattern.permute.xlu0 0
    %7846 = vperm.xlu0 %7845, %v7291
    %v7847 = vpop.permute.xlu0 %7846
    %7848 = vset.pattern.permute.xlu0 0
    %7849 = vperm.xlu0 %7848, %v7292
    %v7850 = vpop.permute.xlu0 %7849
    %7851 = vset.pattern.permute.xlu0 0
    %7852 = vperm.xlu0 %7851, %v7293
    %v7853 = vpop.permute.xlu0 %7852
    %7854 = vset.pattern.permute.xlu0 0
    %7855 = vperm.xlu0 %7854, %v7294
    %v7856 = vpop.permute.xlu0 %7855
    %7857 = vset.pattern.permute.xlu0 0
    %7858 = vperm.xlu0 %7857, %v7295
    %v7859 = vpop.permute.xlu0 %7858
    %7860 = vset.pattern.permute.xlu0 0
    %7861 = vperm.xlu0 %7860, %v7296
    %v7862 = vpop.permute.xlu0 %7861
    %7863 = vset.pattern.permute.xlu0 0
    %7864 = vperm.xlu0 %7863, %v7297
    %v7865 = vpop.permute.xlu0 %7864
    %7866 = vset.pattern.permute.xlu0 0
    %7867 = vperm.xlu0 %7866, %v7298
    %v7868 = vpop.permute.xlu0 %7867
    %7869 = vset.pattern.permute.xlu0 0
    %7870 = vperm.xlu0 %7869, %v7299
    %v7871 = vpop.permute.xlu0 %7870
    %7872 = vset.pattern.permute.xlu0 0
    %7873 = vperm.xlu0 %7872, %v7300
    %v7874 = vpop.permute.xlu0 %7873
    %7875 = vset.pattern.permute.xlu0 0
    %7876 = vperm.xlu0 %7875, %v7301
    %v7877 = vpop.permute.xlu0 %7876
    %7878 = vset.pattern.permute.xlu0 0
    %7879 = vperm.xlu0 %7878, %v7302
    %v7880 = vpop.permute.xlu0 %7879
    %7881 = vset.pattern.permute.xlu0 0
    %7882 = vperm.xlu0 %7881, %v7303
    %v7883 = vpop.permute.xlu0 %7882
    %7884 = vset.pattern.permute.xlu0 0
    %7885 = vperm.xlu0 %7884, %v7304
    %v7886 = vpop.permute.xlu0 %7885
    %7887 = vset.pattern.permute.xlu0 0
    %7888 = vperm.xlu0 %7887, %v7305
    %v7889 = vpop.permute.xlu0 %7888
    %7890 = vset.pattern.permute.xlu0 0
    %7891 = vperm.xlu0 %7890, %v7306
    %v7892 = vpop.permute.xlu0 %7891
    %7893 = vset.pattern.permute.xlu0 0
    %7894 = vperm.xlu0 %7893, %v7307
    %v7895 = vpop.permute.xlu0 %7894
    %7896 = vset.pattern.permute.xlu0 0
    %7897 = vperm.xlu0 %7896, %v7308
    %v7898 = vpop.permute.xlu0 %7897
    %7899 = vset.pattern.permute.xlu0 0
    %7900 = vperm.xlu0 %7899, %v7309
    %v7901 = vpop.permute.xlu0 %7900
    %7902 = vset.pattern.permute.xlu0 0
    %7903 = vperm.xlu0 %7902, %v7310
    %v7904 = vpop.permute.xlu0 %7903
    %7905 = vset.pattern.permute.xlu0 0
    %7906 = vperm.xlu0 %7905, %v7311
    %v7907 = vpop.permute.xlu0 %7906
    %7908 = vset.pattern.permute.xlu0 0
    %7909 = vperm.xlu0 %7908, %v7312
    %v7910 = vpop.permute.xlu0 %7909
    %7911 = vset.pattern.permute.xlu0 0
    %7912 = vperm.xlu0 %7911, %v7313
    %v7913 = vpop.permute.xlu0 %7912
    %7914 = vset.pattern.permute.xlu0 0
    %7915 = vperm.xlu0 %7914, %v7314
    %v7916 = vpop.permute.xlu0 %7915
    %7917 = vset.pattern.permute.xlu0 0
    %7918 = vperm.xlu0 %7917, %v7315
    %v7919 = vpop.permute.xlu0 %7918
    %7920 = vset.pattern.permute.xlu0 0
    %7921 = vperm.xlu0 %7920, %v7316
    %v7922 = vpop.permute.xlu0 %7921
    %7923 = vset.pattern.permute.xlu0 0
    %7924 = vperm.xlu0 %7923, %v7317
    %v7925 = vpop.permute.xlu0 %7924
    %7926 = vset.pattern.permute.xlu0 0
    %7927 = vperm.xlu0 %7926, %v7318
    %v7928 = vpop.permute.xlu0 %7927
    %7929 = vset.pattern.permute.xlu0 0
    %7930 = vperm.xlu0 %7929, %v7319
    %v7931 = vpop.permute.xlu0 %7930
    %7932 = vset.pattern.permute.xlu0 0
    %7933 = vperm.xlu0 %7932, %v7320
    %v7934 = vpop.permute.xlu0 %7933
    %7935 = vset.pattern.permute.xlu0 0
    %7936 = vperm.xlu0 %7935, %v7321
    %v7937 = vpop.permute.xlu0 %7936
    %7938 = vset.pattern.permute.xlu0 0
    %7939 = vperm.xlu0 %7938, %v7322
    %v7940 = vpop.permute.xlu0 %7939
    %7941 = vset.pattern.permute.xlu0 0
    %7942 = vperm.xlu0 %7941, %v7323
    %v7943 = vpop.permute.xlu0 %7942
    %7944 = vset.pattern.permute.xlu0 0
    %7945 = vperm.xlu0 %7944, %v7324
    %v7946 = vpop.permute.xlu0 %7945
    %7947 = vset.pattern.permute.xlu0 0
    %7948 = vperm.xlu0 %7947, %v7325
    %v7949 = vpop.permute.xlu0 %7948
    %7950 = vset.pattern.permute.xlu0 0
    %7951 = vperm.xlu0 %7950, %v7326
    %v7952 = vpop.permute.xlu0 %7951
    %7953 = vset.pattern.permute.xlu0 0
    %7954 = vperm.xlu0 %7953, %v7327
    %v7955 = vpop.permute.xlu0 %7954
    %7956 = vset.pattern.permute.xlu0 0
    %7957 = vperm.xlu0 %7956, %v7328
    %v7958 = vpop.permute.xlu0 %7957
    %7959 = vset.pattern.permute.xlu0 0
    %7960 = vperm.xlu0 %7959, %v7329
    %v7961 = vpop.permute.xlu0 %7960
    %7962 = vset.pattern.permute.xlu0 0
    %7963 = vperm.xlu0 %7962, %v7330
    %v7964 = vpop.permute.xlu0 %7963
    %7965 = vset.pattern.permute.xlu0 0
    %7966 = vperm.xlu0 %7965, %v7331
    %v7967 = vpop.permute.xlu0 %7966
    %7968 = vset.pattern.permute.xlu0 0
    %7969 = vperm.xlu0 %7968, %v7332
    %v7970 = vpop.permute.xlu0 %7969
    %7971 = vset.pattern.permute.xlu0 0
    %7972 = vperm.xlu0 %7971, %v7333
    %v7973 = vpop.permute.xlu0 %7972
    %7974 = vset.pattern.permute.xlu0 0
    %7975 = vperm.xlu0 %7974, %v7334
    %v7976 = vpop.permute.xlu0 %7975
    %7977 = vset.pattern.permute.xlu0 0
    %7978 = vperm.xlu0 %7977, %v7335
    %v7979 = vpop.permute.xlu0 %7978
    %7980 = vset.pattern.permute.xlu0 0
    %7981 = vperm.xlu0 %7980, %v7336
    %v7982 = vpop.permute.xlu0 %7981
    %7983 = vset.pattern.permute.xlu0 0
    %7984 = vperm.xlu0 %7983, %v7337
    %v7985 = vpop.permute.xlu0 %7984
    %7986 = vset.pattern.permute.xlu0 0
    %7987 = vperm.xlu0 %7986, %v7338
    %v7988 = vpop.permute.xlu0 %7987
    %7989 = vset.pattern.permute.xlu0 0
    %7990 = vperm.xlu0 %7989, %v7339
    %v7991 = vpop.permute.xlu0 %7990
    %7992 = vset.pattern.permute.xlu0 0
    %7993 = vperm.xlu0 %7992, %v7340
    %v7994 = vpop.permute.xlu0 %7993
    %7995 = vset.pattern.permute.xlu0 0
    %7996 = vperm.xlu0 %7995, %v7341
    %v7997 = vpop.permute.xlu0 %7996
    %7998 = vset.pattern.permute.xlu0 0
    %7999 = vperm.xlu0 %7998, %v7342
    %v8000 = vpop.permute.xlu0 %7999
    %8001 = vset.pattern.permute.xlu0 0
    %8002 = vperm.xlu0 %8001, %v7343
    %v8003 = vpop.permute.xlu0 %8002
    %8004 = vset.pattern.permute.xlu0 0
    %8005 = vperm.xlu0 %8004, %v7344
    %v8006 = vpop.permute.xlu0 %8005
    %8007 = vset.pattern.permute.xlu0 0
    %8008 = vperm.xlu0 %8007, %v7345
    %v8009 = vpop.permute.xlu0 %8008
    %8010 = vset.pattern.permute.xlu0 0
    %8011 = vperm.xlu0 %8010, %v7346
    %v8012 = vpop.permute.xlu0 %8011
    %8013 = vset.pattern.permute.xlu0 0
    %8014 = vperm.xlu0 %8013, %v7347
    %v8015 = vpop.permute.xlu0 %8014
    %8016 = vset.pattern.permute.xlu0 0
    %8017 = vperm.xlu0 %8016, %v7348
    %v8018 = vpop.permute.xlu0 %8017
    %8019 = vset.pattern.permute.xlu0 0
    %8020 = vperm.xlu0 %8019, %v7349
    %v8021 = vpop.permute.xlu0 %8020
    %8022 = vset.pattern.permute.xlu0 0
    %8023 = vperm.xlu0 %8022, %v7350
    %v8024 = vpop.permute.xlu0 %8023
    %8025 = vset.pattern.permute.xlu0 0
    %8026 = vperm.xlu0 %8025, %v7351
    %v8027 = vpop.permute.xlu0 %8026
    %8028 = vset.pattern.permute.xlu0 0
    %8029 = vperm.xlu0 %8028, %v7352
    %v8030 = vpop.permute.xlu0 %8029
    %8031 = vset.pattern.permute.xlu0 0
    %8032 = vperm.xlu0 %8031, %v7353
    %v8033 = vpop.permute.xlu0 %8032
    %8034 = vset.pattern.permute.xlu0 0
    %8035 = vperm.xlu0 %8034, %v7354
    %v8036 = vpop.permute.xlu0 %8035
    %8037 = vset.pattern.permute.xlu0 0
    %8038 = vperm.xlu0 %8037, %v7355
    %v8039 = vpop.permute.xlu0 %8038
    %8040 = vset.pattern.permute.xlu0 0
    %8041 = vperm.xlu0 %8040, %v7356
    %v8042 = vpop.permute.xlu0 %8041
    %8043 = vset.pattern.permute.xlu0 0
    %8044 = vperm.xlu0 %8043, %v7357
    %v8045 = vpop.permute.xlu0 %8044
    %8046 = vset.pattern.permute.xlu0 0
    %8047 = vperm.xlu0 %8046, %v7358
    %v8048 = vpop.permute.xlu0 %8047
    %8049 = vset.pattern.permute.xlu0 0
    %8050 = vperm.xlu0 %8049, %v7359
    %v8051 = vpop.permute.xlu0 %8050
    %8052 = vset.pattern.permute.xlu0 0
    %8053 = vperm.xlu0 %8052, %v7360
    %v8054 = vpop.permute.xlu0 %8053
    %8055 = vset.pattern.permute.xlu0 0
    %8056 = vperm.xlu0 %8055, %v7361
    %v8057 = vpop.permute.xlu0 %8056
    %8058 = vset.pattern.permute.xlu0 0
    %8059 = vperm.xlu0 %8058, %v7362
    %v8060 = vpop.permute.xlu0 %8059
    %8061 = vset.pattern.permute.xlu0 0
    %8062 = vperm.xlu0 %8061, %v7363
    %v8063 = vpop.permute.xlu0 %8062
    %8064 = vset.pattern.permute.xlu0 0
    %8065 = vperm.xlu0 %8064, %v7364
    %v8066 = vpop.permute.xlu0 %8065
    %8067 = vset.pattern.permute.xlu0 0
    %8068 = vperm.xlu0 %8067, %v7365
    %v8069 = vpop.permute.xlu0 %8068
    %8070 = vset.pattern.permute.xlu0 0
    %8071 = vperm.xlu0 %8070, %v7366
    %v8072 = vpop.permute.xlu0 %8071
    %8073 = vset.pattern.permute.xlu0 0
    %8074 = vperm.xlu0 %8073, %v7367
    %v8075 = vpop.permute.xlu0 %8074
    %8076 = vset.pattern.permute.xlu0 0
    %8077 = vperm.xlu0 %8076, %v7368
    %v8078 = vpop.permute.xlu0 %8077
    %8079 = vset.pattern.permute.xlu0 0
    %8080 = vperm.xlu0 %8079, %v7369
    %v8081 = vpop.permute.xlu0 %8080
    %8082 = vset.pattern.permute.xlu0 0
    %8083 = vperm.xlu0 %8082, %v7370
    %v8084 = vpop.permute.xlu0 %8083
    %8085 = vset.pattern.permute.xlu0 0
    %8086 = vperm.xlu0 %8085, %v7371
    %v8087 = vpop.permute.xlu0 %8086
    %8088 = vset.pattern.permute.xlu0 0
    %8089 = vperm.xlu0 %8088, %v7372
    %v8090 = vpop.permute.xlu0 %8089
    %8091 = vset.pattern.permute.xlu0 0
    %8092 = vperm.xlu0 %8091, %v7373
    %v8093 = vpop.permute.xlu0 %8092
    %8094 = vset.pattern.permute.xlu0 0
    %8095 = vperm.xlu0 %8094, %v7374
    %v8096 = vpop.permute.xlu0 %8095
    %8097 = vset.pattern.permute.xlu0 0
    %8098 = vperm.xlu0 %8097, %v7375
    %v8099 = vpop.permute.xlu0 %8098
    %8100 = vset.pattern.permute.xlu0 0
    %8101 = vperm.xlu0 %8100, %v7376
    %v8102 = vpop.permute.xlu0 %8101
    %8103 = vset.pattern.permute.xlu0 0
    %8104 = vperm.xlu0 %8103, %v7377
    %v8105 = vpop.permute.xlu0 %8104
    %8106 = vset.pattern.permute.xlu0 0
    %8107 = vperm.xlu0 %8106, %v7378
    %v8108 = vpop.permute.xlu0 %8107
    %8109 = vset.pattern.permute.xlu0 0
    %8110 = vperm.xlu0 %8109, %v7379
    %v8111 = vpop.permute.xlu0 %8110
    %8112 = vset.pattern.permute.xlu0 0
    %8113 = vperm.xlu0 %8112, %v7380
    %v8114 = vpop.permute.xlu0 %8113
    %8115 = vset.pattern.permute.xlu0 0
    %8116 = vperm.xlu0 %8115, %v7381
    %v8117 = vpop.permute.xlu0 %8116
    %8118 = vset.pattern.permute.xlu0 0
    %8119 = vperm.xlu0 %8118, %v7382
    %v8120 = vpop.permute.xlu0 %8119
    %8121 = vset.pattern.permute.xlu0 0
    %8122 = vperm.xlu0 %8121, %v7383
    %v8123 = vpop.permute.xlu0 %8122
    %8124 = vset.pattern.permute.xlu0 0
    %8125 = vperm.xlu0 %8124, %v7384
    %v8126 = vpop.permute.xlu0 %8125
    %8127 = vset.pattern.permute.xlu0 0
    %8128 = vperm.xlu0 %8127, %v7385
    %v8129 = vpop.permute.xlu0 %8128
    %8130 = vset.pattern.permute.xlu0 0
    %8131 = vperm.xlu0 %8130, %v7386
    %v8132 = vpop.permute.xlu0 %8131
    %8133 = vset.pattern.permute.xlu0 0
    %8134 = vperm.xlu0 %8133, %v7387
    %v8135 = vpop.permute.xlu0 %8134
    %8136 = vset.pattern.permute.xlu0 0
    %8137 = vperm.xlu0 %8136, %v7388
    %v8138 = vpop.permute.xlu0 %8137
    %8139 = vset.pattern.permute.xlu0 0
    %8140 = vperm.xlu0 %8139, %v7389
    %v8141 = vpop.permute.xlu0 %8140
    %8142 = vset.pattern.permute.xlu0 0
    %8143 = vperm.xlu0 %8142, %v7390
    %v8144 = vpop.permute.xlu0 %8143
    %8145 = vset.pattern.permute.xlu0 0
    %8146 = vperm.xlu0 %8145, %v7391
    %v8147 = vpop.permute.xlu0 %8146
    %8148 = vset.pattern.permute.xlu0 0
    %8149 = vperm.xlu0 %8148, %v7392
    %v8150 = vpop.permute.xlu0 %8149
    %8151 = vset.pattern.permute.xlu0 0
    %8152 = vperm.xlu0 %8151, %v7393
    %v8153 = vpop.permute.xlu0 %8152
    %8154 = vset.pattern.permute.xlu0 0
    %8155 = vperm.xlu0 %8154, %v7394
    %v8156 = vpop.permute.xlu0 %8155
    %8157 = vset.pattern.permute.xlu0 0
    %8158 = vperm.xlu0 %8157, %v7395
    %v8159 = vpop.permute.xlu0 %8158
    %8160 = vset.pattern.permute.xlu0 0
    %8161 = vperm.xlu0 %8160, %v7396
    %v8162 = vpop.permute.xlu0 %8161
    %8163 = vset.pattern.permute.xlu0 0
    %8164 = vperm.xlu0 %8163, %v7397
    %v8165 = vpop.permute.xlu0 %8164
    %8166 = vset.pattern.permute.xlu0 0
    %8167 = vperm.xlu0 %8166, %v7398
    %v8168 = vpop.permute.xlu0 %8167
    %8169 = vset.pattern.permute.xlu0 0
    %8170 = vperm.xlu0 %8169, %v7399
    %v8171 = vpop.permute.xlu0 %8170
    %8172 = vset.pattern.permute.xlu0 0
    %8173 = vperm.xlu0 %8172, %v7400
    %v8174 = vpop.permute.xlu0 %8173
    %8175 = vset.pattern.permute.xlu0 0
    %8176 = vperm.xlu0 %8175, %v7401
    %v8177 = vpop.permute.xlu0 %8176
    %8178 = vset.pattern.permute.xlu0 0
    %8179 = vperm.xlu0 %8178, %v7402
    %v8180 = vpop.permute.xlu0 %8179
    %8181 = vset.pattern.permute.xlu0 0
    %8182 = vperm.xlu0 %8181, %v7403
    %v8183 = vpop.permute.xlu0 %8182
    %8184 = vset.pattern.permute.xlu0 0
    %8185 = vperm.xlu0 %8184, %v7404
    %v8186 = vpop.permute.xlu0 %8185
    %8187 = vset.pattern.permute.xlu0 0
    %8188 = vperm.xlu0 %8187, %v7405
    %v8189 = vpop.permute.xlu0 %8188
    %8190 = vset.pattern.permute.xlu0 0
    %8191 = vperm.xlu0 %8190, %v7406
    %v8192 = vpop.permute.xlu0 %8191
    %8193 = vset.pattern.permute.xlu0 0
    %8194 = vperm.xlu0 %8193, %v7407
    %v8195 = vpop.permute.xlu0 %8194
    %8196 = vset.pattern.permute.xlu0 0
    %8197 = vperm.xlu0 %8196, %v7408
    %v8198 = vpop.permute.xlu0 %8197
    %8199 = vset.pattern.permute.xlu0 0
    %8200 = vperm.xlu0 %8199, %v7409
    %v8201 = vpop.permute.xlu0 %8200
    %8202 = vset.pattern.permute.xlu0 0
    %8203 = vperm.xlu0 %8202, %v7410
    %v8204 = vpop.permute.xlu0 %8203
    %8205 = vset.pattern.permute.xlu0 0
    %8206 = vperm.xlu0 %8205, %v7411
    %v8207 = vpop.permute.xlu0 %8206
    %8208 = vset.pattern.permute.xlu0 0
    %8209 = vperm.xlu0 %8208, %v7412
    %v8210 = vpop.permute.xlu0 %8209
    %8211 = vset.pattern.permute.xlu0 0
    %8212 = vperm.xlu0 %8211, %v7413
    %v8213 = vpop.permute.xlu0 %8212
    %8214 = vset.pattern.permute.xlu0 0
    %8215 = vperm.xlu0 %8214, %v7414
    %v8216 = vpop.permute.xlu0 %8215
    %8217 = vset.pattern.permute.xlu0 0
    %8218 = vperm.xlu0 %8217, %v7415
    %v8219 = vpop.permute.xlu0 %8218
    %8220 = vset.pattern.permute.xlu0 0
    %8221 = vperm.xlu0 %8220, %v7416
    %v8222 = vpop.permute.xlu0 %8221
    %8223 = vset.pattern.permute.xlu0 0
    %8224 = vperm.xlu0 %8223, %v7417
    %v8225 = vpop.permute.xlu0 %8224
    %8226 = vset.pattern.permute.xlu0 0
    %8227 = vperm.xlu0 %8226, %v7418
    %v8228 = vpop.permute.xlu0 %8227
    %8229 = vset.pattern.permute.xlu0 0
    %8230 = vperm.xlu0 %8229, %v7419
    %v8231 = vpop.permute.xlu0 %8230
    %8232 = vset.pattern.permute.xlu0 0
    %8233 = vperm.xlu0 %8232, %v7420
    %v8234 = vpop.permute.xlu0 %8233
    %8235 = vset.pattern.permute.xlu0 0
    %8236 = vperm.xlu0 %8235, %v7421
    %v8237 = vpop.permute.xlu0 %8236
    %8238 = vset.pattern.permute.xlu0 0
    %8239 = vperm.xlu0 %8238, %v7422
    %v8240 = vpop.permute.xlu0 %8239
    %8241 = vset.pattern.permute.xlu0 0
    %8242 = vperm.xlu0 %8241, %v7423
    %v8243 = vpop.permute.xlu0 %8242
    %8244 = vset.pattern.permute.xlu0 0
    %8245 = vperm.xlu0 %8244, %v7424
    %v8246 = vpop.permute.xlu0 %8245
    %8247 = vset.pattern.permute.xlu0 0
    %8248 = vperm.xlu0 %8247, %v7425
    %v8249 = vpop.permute.xlu0 %8248
    %8250 = vset.pattern.permute.xlu0 0
    %8251 = vperm.xlu0 %8250, %v7426
    %v8252 = vpop.permute.xlu0 %8251
    %8253 = vset.pattern.permute.xlu0 0
    %8254 = vperm.xlu0 %8253, %v7427
    %v8255 = vpop.permute.xlu0 %8254
    %8256 = vset.pattern.permute.xlu0 0
    %8257 = vperm.xlu0 %8256, %v7428
    %v8258 = vpop.permute.xlu0 %8257
    %8259 = vset.pattern.permute.xlu0 0
    %8260 = vperm.xlu0 %8259, %v7429
    %v8261 = vpop.permute.xlu0 %8260
    %8262 = vset.pattern.permute.xlu0 0
    %8263 = vperm.xlu0 %8262, %v7430
    %v8264 = vpop.permute.xlu0 %8263
    %8265 = vset.pattern.permute.xlu0 0
    %8266 = vperm.xlu0 %8265, %v7431
    %v8267 = vpop.permute.xlu0 %8266
    %8268 = vset.pattern.permute.xlu0 0
    %8269 = vperm.xlu0 %8268, %v7432
    %v8270 = vpop.permute.xlu0 %8269
    %8271 = vset.pattern.permute.xlu0 0
    %8272 = vperm.xlu0 %8271, %v7433
    %v8273 = vpop.permute.xlu0 %8272
    %8274 = vset.pattern.permute.xlu0 0
    %8275 = vperm.xlu0 %8274, %v7434
    %v8276 = vpop.permute.xlu0 %8275
    %8277 = vset.pattern.permute.xlu0 0
    %8278 = vperm.xlu0 %8277, %v7435
    %v8279 = vpop.permute.xlu0 %8278
    %8280 = vset.pattern.permute.xlu0 0
    %8281 = vperm.xlu0 %8280, %v7436
    %v8282 = vpop.permute.xlu0 %8281
    %8283 = vset.pattern.permute.xlu0 0
    %8284 = vperm.xlu0 %8283, %v7437
    %v8285 = vpop.permute.xlu0 %8284
    %8286 = vset.pattern.permute.xlu0 0
    %8287 = vperm.xlu0 %8286, %v7438
    %v8288 = vpop.permute.xlu0 %8287
    %8289 = vset.pattern.permute.xlu0 0
    %8290 = vperm.xlu0 %8289, %v7439
    %v8291 = vpop.permute.xlu0 %8290
    %8292 = vset.pattern.permute.xlu0 0
    %8293 = vperm.xlu0 %8292, %v7440
    %v8294 = vpop.permute.xlu0 %8293
    %8295 = vset.pattern.permute.xlu0 0
    %8296 = vperm.xlu0 %8295, %v7441
    %v8297 = vpop.permute.xlu0 %8296
    %8298 = vset.pattern.permute.xlu0 0
    %8299 = vperm.xlu0 %8298, %v7442
    %v8300 = vpop.permute.xlu0 %8299
    %8301 = vset.pattern.permute.xlu0 0
    %8302 = vperm.xlu0 %8301, %v7443
    %v8303 = vpop.permute.xlu0 %8302
    %8304 = vset.pattern.permute.xlu0 0
    %8305 = vperm.xlu0 %8304, %v7444
    %v8306 = vpop.permute.xlu0 %8305
    %8307 = vset.pattern.permute.xlu0 0
    %8308 = vperm.xlu0 %8307, %v7445
    %v8309 = vpop.permute.xlu0 %8308
    %8310 = vset.pattern.permute.xlu0 0
    %8311 = vperm.xlu0 %8310, %v7446
    %v8312 = vpop.permute.xlu0 %8311
    %8313 = vset.pattern.permute.xlu0 0
    %8314 = vperm.xlu0 %8313, %v7447
    %v8315 = vpop.permute.xlu0 %8314
    %8316 = vset.pattern.permute.xlu0 0
    %8317 = vperm.xlu0 %8316, %v7448
    %v8318 = vpop.permute.xlu0 %8317
    %8319 = vset.pattern.permute.xlu0 0
    %8320 = vperm.xlu0 %8319, %v7449
    %v8321 = vpop.permute.xlu0 %8320
    %8322 = vset.pattern.permute.xlu0 0
    %8323 = vperm.xlu0 %8322, %v7450
    %v8324 = vpop.permute.xlu0 %8323
    %8325 = vset.pattern.permute.xlu0 0
    %8326 = vperm.xlu0 %8325, %v7451
    %v8327 = vpop.permute.xlu0 %8326
    %8328 = vset.pattern.permute.xlu0 0
    %8329 = vperm.xlu0 %8328, %v7452
    %v8330 = vpop.permute.xlu0 %8329
    %8331 = vset.pattern.permute.xlu0 0
    %8332 = vperm.xlu0 %8331, %v7453
    %v8333 = vpop.permute.xlu0 %8332
    %8334 = vset.pattern.permute.xlu0 0
    %8335 = vperm.xlu0 %8334, %v7454
    %v8336 = vpop.permute.xlu0 %8335
    %8337 = vset.pattern.permute.xlu0 0
    %8338 = vperm.xlu0 %8337, %v7455
    %v8339 = vpop.permute.xlu0 %8338
    %8340 = vset.pattern.permute.xlu0 0
    %8341 = vperm.xlu0 %8340, %v7456
    %v8342 = vpop.permute.xlu0 %8341
    %8343 = vset.pattern.permute.xlu0 0
    %8344 = vperm.xlu0 %8343, %v7457
    %v8345 = vpop.permute.xlu0 %8344
    %8346 = vset.pattern.permute.xlu0 0
    %8347 = vperm.xlu0 %8346, %v7458
    %v8348 = vpop.permute.xlu0 %8347
    %8349 = vset.pattern.permute.xlu0 0
    %8350 = vperm.xlu0 %8349, %v7459
    %v8351 = vpop.permute.xlu0 %8350
    %8352 = vset.pattern.permute.xlu0 0
    %8353 = vperm.xlu0 %8352, %v7460
    %v8354 = vpop.permute.xlu0 %8353
    %8355 = vset.pattern.permute.xlu0 0
    %8356 = vperm.xlu0 %8355, %v7461
    %v8357 = vpop.permute.xlu0 %8356
    %8358 = vset.pattern.permute.xlu0 0
    %8359 = vperm.xlu0 %8358, %v7462
    %v8360 = vpop.permute.xlu0 %8359
    %8361 = vset.pattern.permute.xlu0 0
    %8362 = vperm.xlu0 %8361, %v7463
    %v8363 = vpop.permute.xlu0 %8362
    %8364 = vset.pattern.permute.xlu0 0
    %8365 = vperm.xlu0 %8364, %v7464
    %v8366 = vpop.permute.xlu0 %8365
    %8367 = vset.pattern.permute.xlu0 0
    %8368 = vperm.xlu0 %8367, %v7465
    %v8369 = vpop.permute.xlu0 %8368
    %8370 = vset.pattern.permute.xlu0 0
    %8371 = vperm.xlu0 %8370, %v7466
    %v8372 = vpop.permute.xlu0 %8371
    %8373 = vset.pattern.permute.xlu0 0
    %8374 = vperm.xlu0 %8373, %v7467
    %v8375 = vpop.permute.xlu0 %8374
    %8376 = vset.pattern.permute.xlu0 0
    %8377 = vperm.xlu0 %8376, %v7468
    %v8378 = vpop.permute.xlu0 %8377
    %8379 = vset.pattern.permute.xlu0 0
    %8380 = vperm.xlu0 %8379, %v7469
    %v8381 = vpop.permute.xlu0 %8380
    %8382 = vset.pattern.permute.xlu0 0
    %8383 = vperm.xlu0 %8382, %v7470
    %v8384 = vpop.permute.xlu0 %8383
    %8385 = vset.pattern.permute.xlu0 0
    %8386 = vperm.xlu0 %8385, %v7471
    %v8387 = vpop.permute.xlu0 %8386
    %8388 = vset.pattern.permute.xlu0 0
    %8389 = vperm.xlu0 %8388, %v7472
    %v8390 = vpop.permute.xlu0 %8389
    %8391 = vset.pattern.permute.xlu0 0
    %8392 = vperm.xlu0 %8391, %v7473
    %v8393 = vpop.permute.xlu0 %8392
    %8394 = vset.pattern.permute.xlu0 0
    %8395 = vperm.xlu0 %8394, %v7474
    %v8396 = vpop.permute.xlu0 %8395
    %8397 = vset.pattern.permute.xlu0 0
    %8398 = vperm.xlu0 %8397, %v7475
    %v8399 = vpop.permute.xlu0 %8398
    %8400 = vset.pattern.permute.xlu0 0
    %8401 = vperm.xlu0 %8400, %v7476
    %v8402 = vpop.permute.xlu0 %8401
    %8403 = vset.pattern.permute.xlu0 0
    %8404 = vperm.xlu0 %8403, %v7477
    %v8405 = vpop.permute.xlu0 %8404
    %8406 = vset.pattern.permute.xlu0 0
    %8407 = vperm.xlu0 %8406, %v7478
    %v8408 = vpop.permute.xlu0 %8407
    %8409 = vset.pattern.permute.xlu0 0
    %8410 = vperm.xlu0 %8409, %v7479
    %v8411 = vpop.permute.xlu0 %8410
    %8412 = vset.pattern.permute.xlu0 0
    %8413 = vperm.xlu0 %8412, %v7480
    %v8414 = vpop.permute.xlu0 %8413
    %8415 = vset.pattern.permute.xlu0 0
    %8416 = vperm.xlu0 %8415, %v7481
    %v8417 = vpop.permute.xlu0 %8416
    %8418 = vset.pattern.permute.xlu0 0
    %8419 = vperm.xlu0 %8418, %v7482
    %v8420 = vpop.permute.xlu0 %8419
    %8421 = vset.pattern.permute.xlu0 0
    %8422 = vperm.xlu0 %8421, %v7483
    %v8423 = vpop.permute.xlu0 %8422
    %8424 = vset.pattern.permute.xlu0 0
    %8425 = vperm.xlu0 %8424, %v7484
    %v8426 = vpop.permute.xlu0 %8425
    %8427 = vset.pattern.permute.xlu0 0
    %8428 = vperm.xlu0 %8427, %v7485
    %v8429 = vpop.permute.xlu0 %8428
    %8430 = vset.pattern.permute.xlu0 0
    %8431 = vperm.xlu0 %8430, %v7486
    %v8432 = vpop.permute.xlu0 %8431
    %8433 = vset.pattern.permute.xlu0 0
    %8434 = vperm.xlu0 %8433, %v7487
    %v8435 = vpop.permute.xlu0 %8434
    %8436 = vset.pattern.permute.xlu0 0
    %8437 = vperm.xlu0 %8436, %v7488
    %v8438 = vpop.permute.xlu0 %8437
    %8439 = vset.pattern.permute.xlu0 0
    %8440 = vperm.xlu0 %8439, %v7489
    %v8441 = vpop.permute.xlu0 %8440
    %8442 = vset.pattern.permute.xlu0 0
    %8443 = vperm.xlu0 %8442, %v7490
    %v8444 = vpop.permute.xlu0 %8443
    %8445 = vset.pattern.permute.xlu0 0
    %8446 = vperm.xlu0 %8445, %v7491
    %v8447 = vpop.permute.xlu0 %8446
    %8448 = vset.pattern.permute.xlu0 0
    %8449 = vperm.xlu0 %8448, %v7492
    %v8450 = vpop.permute.xlu0 %8449
    %8451 = vset.pattern.permute.xlu0 0
    %8452 = vperm.xlu0 %8451, %v7493
    %v8453 = vpop.permute.xlu0 %8452
    %8454 = vset.pattern.permute.xlu0 0
    %8455 = vperm.xlu0 %8454, %v7494
    %v8456 = vpop.permute.xlu0 %8455
    %8457 = vset.pattern.permute.xlu0 0
    %8458 = vperm.xlu0 %8457, %v7495
    %v8459 = vpop.permute.xlu0 %8458
    %8460 = vset.pattern.permute.xlu0 0
    %8461 = vperm.xlu0 %8460, %v7496
    %v8462 = vpop.permute.xlu0 %8461
    %8463 = vset.pattern.permute.xlu0 0
    %8464 = vperm.xlu0 %8463, %v7497
    %v8465 = vpop.permute.xlu0 %8464
    %8466 = vset.pattern.permute.xlu0 0
    %8467 = vperm.xlu0 %8466, %v7498
    %v8468 = vpop.permute.xlu0 %8467
    %8469 = vset.pattern.permute.xlu0 0
    %8470 = vperm.xlu0 %8469, %v7499
    %v8471 = vpop.permute.xlu0 %8470
    %8472 = vset.pattern.permute.xlu0 0
    %8473 = vperm.xlu0 %8472, %v7500
    %v8474 = vpop.permute.xlu0 %8473
    %8475 = vset.pattern.permute.xlu0 0
    %8476 = vperm.xlu0 %8475, %v7501
    %v8477 = vpop.permute.xlu0 %8476
    %8478 = vset.pattern.permute.xlu0 0
    %8479 = vperm.xlu0 %8478, %v7502
    %v8480 = vpop.permute.xlu0 %8479
    %8481 = vset.pattern.permute.xlu0 0
    %8482 = vperm.xlu0 %8481, %v7503
    %v8483 = vpop.permute.xlu0 %8482
    %8484 = vset.pattern.permute.xlu0 0
    %8485 = vperm.xlu0 %8484, %v7504
    %v8486 = vpop.permute.xlu0 %8485
    %8487 = vset.pattern.permute.xlu0 0
    %8488 = vperm.xlu0 %8487, %v7505
    %v8489 = vpop.permute.xlu0 %8488
    %8490 = vset.pattern.permute.xlu0 0
    %8491 = vperm.xlu0 %8490, %v7506
    %v8492 = vpop.permute.xlu0 %8491
    %8493 = vset.pattern.permute.xlu0 0
    %8494 = vperm.xlu0 %8493, %v7507
    %v8495 = vpop.permute.xlu0 %8494
    %8496 = vset.pattern.permute.xlu0 0
    %8497 = vperm.xlu0 %8496, %v7508
    %v8498 = vpop.permute.xlu0 %8497
    %8499 = vset.pattern.permute.xlu0 0
    %8500 = vperm.xlu0 %8499, %v7509
    %v8501 = vpop.permute.xlu0 %8500
    %8502 = vset.pattern.permute.xlu0 0
    %8503 = vperm.xlu0 %8502, %v7510
    %v8504 = vpop.permute.xlu0 %8503
    %8505 = vset.pattern.permute.xlu0 0
    %8506 = vperm.xlu0 %8505, %v7511
    %v8507 = vpop.permute.xlu0 %8506
    %8508 = vset.pattern.permute.xlu0 0
    %8509 = vperm.xlu0 %8508, %v7512
    %v8510 = vpop.permute.xlu0 %8509
    %8511 = vset.pattern.permute.xlu0 0
    %8512 = vperm.xlu0 %8511, %v7513
    %v8513 = vpop.permute.xlu0 %8512
    %8514 = vset.pattern.permute.xlu0 0
    %8515 = vperm.xlu0 %8514, %v7514
    %v8516 = vpop.permute.xlu0 %8515
    %8517 = vset.pattern.permute.xlu0 0
    %8518 = vperm.xlu0 %8517, %v7515
    %v8519 = vpop.permute.xlu0 %8518
    %8520 = vset.pattern.permute.xlu0 0
    %8521 = vperm.xlu0 %8520, %v7516
    %v8522 = vpop.permute.xlu0 %8521
    %8523 = vset.pattern.permute.xlu0 0
    %8524 = vperm.xlu0 %8523, %v7517
    %v8525 = vpop.permute.xlu0 %8524
    %8526 = vset.pattern.permute.xlu0 0
    %8527 = vperm.xlu0 %8526, %v7518
    %v8528 = vpop.permute.xlu0 %8527
    %8529 = vset.pattern.permute.xlu0 0
    %8530 = vperm.xlu0 %8529, %v7519
    %v8531 = vpop.permute.xlu0 %8530
    %8532 = vset.pattern.permute.xlu0 0
    %8533 = vperm.xlu0 %8532, %v7520
    %v8534 = vpop.permute.xlu0 %8533
    %8535 = vset.pattern.permute.xlu0 0
    %8536 = vperm.xlu0 %8535, %v7521
    %v8537 = vpop.permute.xlu0 %8536
    %8538 = vset.pattern.permute.xlu0 0
    %8539 = vperm.xlu0 %8538, %v7522
    %v8540 = vpop.permute.xlu0 %8539
    %8541 = vset.pattern.permute.xlu0 0
    %8542 = vperm.xlu0 %8541, %v7523
    %v8543 = vpop.permute.xlu0 %8542
    %8544 = vset.pattern.permute.xlu0 0
    %8545 = vperm.xlu0 %8544, %v7524
    %v8546 = vpop.permute.xlu0 %8545
    %8547 = vset.pattern.permute.xlu0 0
    %8548 = vperm.xlu0 %8547, %v7525
    %v8549 = vpop.permute.xlu0 %8548
    %v8550 = vlaneseq
    %v8551 = vand.u32 %v8550, 127
    %v8552 = vlaneseq
    %v8553 = vshrl.u32 %v8552, 7
    %v8554 = vsub.s32 %v8551, %v8553
    %v8555 = vrot.slane %v7784, %v8554
    %v8556 = vadd.s32 %v8551, 4294967288
    %v8557 = vlaneseq
    %v8558 = vshrl.u32 %v8557, 7
    %v8559 = vsub.s32 %v8556, %v8558
    %v8560 = vrot.slane %v7787, %v8559
    %vm8561 = vcmask 130112
    %v8562 = vsel %vm8561, %v8560, %v8555
    %v8563 = vadd.s32 %v8551, 4294967280
    %v8564 = vlaneseq
    %v8565 = vshrl.u32 %v8564, 7
    %v8566 = vsub.s32 %v8563, %v8565
    %v8567 = vrot.slane %v7790, %v8566
    %vm8568 = vcmask 195712
    %v8569 = vsel %vm8568, %v8567, %v8562
    %v8570 = vadd.s32 %v8551, 4294967272
    %v8571 = vlaneseq
    %v8572 = vshrl.u32 %v8571, 7
    %v8573 = vsub.s32 %v8570, %v8572
    %v8574 = vrot.slane %v7793, %v8573
    %vm8575 = vcmask 261312
    %v8576 = vsel %vm8575, %v8574, %v8569
    %v8577 = vadd.s32 %v8551, 4294967264
    %v8578 = vlaneseq
    %v8579 = vshrl.u32 %v8578, 7
    %v8580 = vsub.s32 %v8577, %v8579
    %v8581 = vrot.slane %v7796, %v8580
    %vm8582 = vcmask 326912
    %v8583 = vsel %vm8582, %v8581, %v8576
    %v8584 = vadd.s32 %v8551, 4294967256
    %v8585 = vlaneseq
    %v8586 = vshrl.u32 %v8585, 7
    %v8587 = vsub.s32 %v8584, %v8586
    %v8588 = vrot.slane %v7799, %v8587
    %vm8589 = vcmask 392512
    %v8590 = vsel %vm8589, %v8588, %v8583
    %v8591 = vadd.s32 %v8551, 4294967248
    %v8592 = vlaneseq
    %v8593 = vshrl.u32 %v8592, 7
    %v8594 = vsub.s32 %v8591, %v8593
    %v8595 = vrot.slane %v7802, %v8594
    %vm8596 = vcmask 458112
    %v8597 = vsel %vm8596, %v8595, %v8590
    %v8598 = vadd.s32 %v8551, 4294967240
    %v8599 = vlaneseq
    %v8600 = vshrl.u32 %v8599, 7
    %v8601 = vsub.s32 %v8598, %v8600
    %v8602 = vrot.slane %v7805, %v8601
    %vm8603 = vcmask 523712
    %v8604 = vsel %vm8603, %v8602, %v8597
    %v8605 = vadd.s32 %v8551, 4294967232
    %v8606 = vlaneseq
    %v8607 = vshrl.u32 %v8606, 7
    %v8608 = vsub.s32 %v8605, %v8607
    %v8609 = vrot.slane %v7808, %v8608
    %vm8610 = vcmask 589312
    %v8611 = vsel %vm8610, %v8609, %v8604
    %v8612 = vadd.s32 %v8551, 4294967224
    %v8613 = vlaneseq
    %v8614 = vshrl.u32 %v8613, 7
    %v8615 = vsub.s32 %v8612, %v8614
    %v8616 = vrot.slane %v7811, %v8615
    %vm8617 = vcmask 654912
    %v8618 = vsel %vm8617, %v8616, %v8611
    %v8619 = vadd.s32 %v8551, 4294967216
    %v8620 = vlaneseq
    %v8621 = vshrl.u32 %v8620, 7
    %v8622 = vsub.s32 %v8619, %v8621
    %v8623 = vrot.slane %v7814, %v8622
    %vm8624 = vcmask 720512
    %v8625 = vsel %vm8624, %v8623, %v8618
    %v8626 = vadd.s32 %v8551, 4294967208
    %v8627 = vlaneseq
    %v8628 = vshrl.u32 %v8627, 7
    %v8629 = vsub.s32 %v8626, %v8628
    %v8630 = vrot.slane %v7817, %v8629
    %vm8631 = vcmask 786112
    %v8632 = vsel %vm8631, %v8630, %v8625
    %v8633 = vadd.s32 %v8551, 4294967200
    %v8634 = vlaneseq
    %v8635 = vshrl.u32 %v8634, 7
    %v8636 = vsub.s32 %v8633, %v8635
    %v8637 = vrot.slane %v7820, %v8636
    %vm8638 = vcmask 851712
    %v8639 = vsel %vm8638, %v8637, %v8632
    %v8640 = vadd.s32 %v8551, 4294967192
    %v8641 = vlaneseq
    %v8642 = vshrl.u32 %v8641, 7
    %v8643 = vsub.s32 %v8640, %v8642
    %v8644 = vrot.slane %v7823, %v8643
    %vm8645 = vcmask 917312
    %v8646 = vsel %vm8645, %v8644, %v8639
    %v8647 = vadd.s32 %v8551, 4294967184
    %v8648 = vlaneseq
    %v8649 = vshrl.u32 %v8648, 7
    %v8650 = vsub.s32 %v8647, %v8649
    %v8651 = vrot.slane %v7826, %v8650
    %vm8652 = vcmask 982912
    %v8653 = vsel %vm8652, %v8651, %v8646
    %v8654 = vadd.s32 %v8551, 4294967176
    %v8655 = vlaneseq
    %v8656 = vshrl.u32 %v8655, 7
    %v8657 = vsub.s32 %v8654, %v8656
    %v8658 = vrot.slane %v7829, %v8657
    %vm8659 = vcmask 1048512
    %v8660 = vsel %vm8659, %v8658, %v8653
    %v8661 = vlaneseq
    %v8662 = vshrl.u32 %v8661, 7
    %v8663 = vsub.s32 %v8551, %v8662
    %v8664 = vrot.slane %v7832, %v8663
    %v8665 = vlaneseq
    %v8666 = vshrl.u32 %v8665, 7
    %v8667 = vsub.s32 %v8556, %v8666
    %v8668 = vrot.slane %v7835, %v8667
    %v8669 = vsel %vm8561, %v8668, %v8664
    %v8670 = vlaneseq
    %v8671 = vshrl.u32 %v8670, 7
    %v8672 = vsub.s32 %v8563, %v8671
    %v8673 = vrot.slane %v7838, %v8672
    %v8674 = vsel %vm8568, %v8673, %v8669
    %v8675 = vlaneseq
    %v8676 = vshrl.u32 %v8675, 7
    %v8677 = vsub.s32 %v8570, %v8676
    %v8678 = vrot.slane %v7841, %v8677
    %v8679 = vsel %vm8575, %v8678, %v8674
    %v8680 = vlaneseq
    %v8681 = vshrl.u32 %v8680, 7
    %v8682 = vsub.s32 %v8577, %v8681
    %v8683 = vrot.slane %v7844, %v8682
    %v8684 = vsel %vm8582, %v8683, %v8679
    %v8685 = vlaneseq
    %v8686 = vshrl.u32 %v8685, 7
    %v8687 = vsub.s32 %v8584, %v8686
    %v8688 = vrot.slane %v7847, %v8687
    %v8689 = vsel %vm8589, %v8688, %v8684
    %v8690 = vlaneseq
    %v8691 = vshrl.u32 %v8690, 7
    %v8692 = vsub.s32 %v8591, %v8691
    %v8693 = vrot.slane %v7850, %v8692
    %v8694 = vsel %vm8596, %v8693, %v8689
    %v8695 = vlaneseq
    %v8696 = vshrl.u32 %v8695, 7
    %v8697 = vsub.s32 %v8598, %v8696
    %v8698 = vrot.slane %v7853, %v8697
    %v8699 = vsel %vm8603, %v8698, %v8694
    %v8700 = vlaneseq
    %v8701 = vshrl.u32 %v8700, 7
    %v8702 = vsub.s32 %v8605, %v8701
    %v8703 = vrot.slane %v7856, %v8702
    %v8704 = vsel %vm8610, %v8703, %v8699
    %v8705 = vlaneseq
    %v8706 = vshrl.u32 %v8705, 7
    %v8707 = vsub.s32 %v8612, %v8706
    %v8708 = vrot.slane %v7859, %v8707
    %v8709 = vsel %vm8617, %v8708, %v8704
    %v8710 = vlaneseq
    %v8711 = vshrl.u32 %v8710, 7
    %v8712 = vsub.s32 %v8619, %v8711
    %v8713 = vrot.slane %v7862, %v8712
    %v8714 = vsel %vm8624, %v8713, %v8709
    %v8715 = vlaneseq
    %v8716 = vshrl.u32 %v8715, 7
    %v8717 = vsub.s32 %v8626, %v8716
    %v8718 = vrot.slane %v7865, %v8717
    %v8719 = vsel %vm8631, %v8718, %v8714
    %v8720 = vlaneseq
    %v8721 = vshrl.u32 %v8720, 7
    %v8722 = vsub.s32 %v8633, %v8721
    %v8723 = vrot.slane %v7868, %v8722
    %v8724 = vsel %vm8638, %v8723, %v8719
    %v8725 = vlaneseq
    %v8726 = vshrl.u32 %v8725, 7
    %v8727 = vsub.s32 %v8640, %v8726
    %v8728 = vrot.slane %v7871, %v8727
    %v8729 = vsel %vm8645, %v8728, %v8724
    %v8730 = vlaneseq
    %v8731 = vshrl.u32 %v8730, 7
    %v8732 = vsub.s32 %v8647, %v8731
    %v8733 = vrot.slane %v7874, %v8732
    %v8734 = vsel %vm8652, %v8733, %v8729
    %v8735 = vlaneseq
    %v8736 = vshrl.u32 %v8735, 7
    %v8737 = vsub.s32 %v8654, %v8736
    %v8738 = vrot.slane %v7877, %v8737
    %v8739 = vsel %vm8659, %v8738, %v8734
    %v8740 = vlaneseq
    %v8741 = vshrl.u32 %v8740, 7
    %v8742 = vsub.s32 %v8551, %v8741
    %v8743 = vrot.slane %v7880, %v8742
    %v8744 = vlaneseq
    %v8745 = vshrl.u32 %v8744, 7
    %v8746 = vsub.s32 %v8556, %v8745
    %v8747 = vrot.slane %v7883, %v8746
    %v8748 = vsel %vm8561, %v8747, %v8743
    %v8749 = vlaneseq
    %v8750 = vshrl.u32 %v8749, 7
    %v8751 = vsub.s32 %v8563, %v8750
    %v8752 = vrot.slane %v7886, %v8751
    %v8753 = vsel %vm8568, %v8752, %v8748
    %v8754 = vlaneseq
    %v8755 = vshrl.u32 %v8754, 7
    %v8756 = vsub.s32 %v8570, %v8755
    %v8757 = vrot.slane %v7889, %v8756
    %v8758 = vsel %vm8575, %v8757, %v8753
    %v8759 = vlaneseq
    %v8760 = vshrl.u32 %v8759, 7
    %v8761 = vsub.s32 %v8577, %v8760
    %v8762 = vrot.slane %v7892, %v8761
    %v8763 = vsel %vm8582, %v8762, %v8758
    %v8764 = vlaneseq
    %v8765 = vshrl.u32 %v8764, 7
    %v8766 = vsub.s32 %v8584, %v8765
    %v8767 = vrot.slane %v7895, %v8766
    %v8768 = vsel %vm8589, %v8767, %v8763
    %v8769 = vlaneseq
    %v8770 = vshrl.u32 %v8769, 7
    %v8771 = vsub.s32 %v8591, %v8770
    %v8772 = vrot.slane %v7898, %v8771
    %v8773 = vsel %vm8596, %v8772, %v8768
    %v8774 = vlaneseq
    %v8775 = vshrl.u32 %v8774, 7
    %v8776 = vsub.s32 %v8598, %v8775
    %v8777 = vrot.slane %v7901, %v8776
    %v8778 = vsel %vm8603, %v8777, %v8773
    %v8779 = vlaneseq
    %v8780 = vshrl.u32 %v8779, 7
    %v8781 = vsub.s32 %v8605, %v8780
    %v8782 = vrot.slane %v7904, %v8781
    %v8783 = vsel %vm8610, %v8782, %v8778
    %v8784 = vlaneseq
    %v8785 = vshrl.u32 %v8784, 7
    %v8786 = vsub.s32 %v8612, %v8785
    %v8787 = vrot.slane %v7907, %v8786
    %v8788 = vsel %vm8617, %v8787, %v8783
    %v8789 = vlaneseq
    %v8790 = vshrl.u32 %v8789, 7
    %v8791 = vsub.s32 %v8619, %v8790
    %v8792 = vrot.slane %v7910, %v8791
    %v8793 = vsel %vm8624, %v8792, %v8788
    %v8794 = vlaneseq
    %v8795 = vshrl.u32 %v8794, 7
    %v8796 = vsub.s32 %v8626, %v8795
    %v8797 = vrot.slane %v7913, %v8796
    %v8798 = vsel %vm8631, %v8797, %v8793
    %v8799 = vlaneseq
    %v8800 = vshrl.u32 %v8799, 7
    %v8801 = vsub.s32 %v8633, %v8800
    %v8802 = vrot.slane %v7916, %v8801
    %v8803 = vsel %vm8638, %v8802, %v8798
    %v8804 = vlaneseq
    %v8805 = vshrl.u32 %v8804, 7
    %v8806 = vsub.s32 %v8640, %v8805
    %v8807 = vrot.slane %v7919, %v8806
    %v8808 = vsel %vm8645, %v8807, %v8803
    %v8809 = vlaneseq
    %v8810 = vshrl.u32 %v8809, 7
    %v8811 = vsub.s32 %v8647, %v8810
    %v8812 = vrot.slane %v7922, %v8811
    %v8813 = vsel %vm8652, %v8812, %v8808
    %v8814 = vlaneseq
    %v8815 = vshrl.u32 %v8814, 7
    %v8816 = vsub.s32 %v8654, %v8815
    %v8817 = vrot.slane %v7925, %v8816
    %v8818 = vsel %vm8659, %v8817, %v8813
    %v8819 = vlaneseq
    %v8820 = vshrl.u32 %v8819, 7
    %v8821 = vsub.s32 %v8551, %v8820
    %v8822 = vrot.slane %v7928, %v8821
    %v8823 = vlaneseq
    %v8824 = vshrl.u32 %v8823, 7
    %v8825 = vsub.s32 %v8556, %v8824
    %v8826 = vrot.slane %v7931, %v8825
    %v8827 = vsel %vm8561, %v8826, %v8822
    %v8828 = vlaneseq
    %v8829 = vshrl.u32 %v8828, 7
    %v8830 = vsub.s32 %v8563, %v8829
    %v8831 = vrot.slane %v7934, %v8830
    %v8832 = vsel %vm8568, %v8831, %v8827
    %v8833 = vlaneseq
    %v8834 = vshrl.u32 %v8833, 7
    %v8835 = vsub.s32 %v8570, %v8834
    %v8836 = vrot.slane %v7937, %v8835
    %v8837 = vsel %vm8575, %v8836, %v8832
    %v8838 = vlaneseq
    %v8839 = vshrl.u32 %v8838, 7
    %v8840 = vsub.s32 %v8577, %v8839
    %v8841 = vrot.slane %v7940, %v8840
    %v8842 = vsel %vm8582, %v8841, %v8837
    %v8843 = vlaneseq
    %v8844 = vshrl.u32 %v8843, 7
    %v8845 = vsub.s32 %v8584, %v8844
    %v8846 = vrot.slane %v7943, %v8845
    %v8847 = vsel %vm8589, %v8846, %v8842
    %v8848 = vlaneseq
    %v8849 = vshrl.u32 %v8848, 7
    %v8850 = vsub.s32 %v8591, %v8849
    %v8851 = vrot.slane %v7946, %v8850
    %v8852 = vsel %vm8596, %v8851, %v8847
    %v8853 = vlaneseq
    %v8854 = vshrl.u32 %v8853, 7
    %v8855 = vsub.s32 %v8598, %v8854
    %v8856 = vrot.slane %v7949, %v8855
    %v8857 = vsel %vm8603, %v8856, %v8852
    %v8858 = vlaneseq
    %v8859 = vshrl.u32 %v8858, 7
    %v8860 = vsub.s32 %v8605, %v8859
    %v8861 = vrot.slane %v7952, %v8860
    %v8862 = vsel %vm8610, %v8861, %v8857
    %v8863 = vlaneseq
    %v8864 = vshrl.u32 %v8863, 7
    %v8865 = vsub.s32 %v8612, %v8864
    %v8866 = vrot.slane %v7955, %v8865
    %v8867 = vsel %vm8617, %v8866, %v8862
    %v8868 = vlaneseq
    %v8869 = vshrl.u32 %v8868, 7
    %v8870 = vsub.s32 %v8619, %v8869
    %v8871 = vrot.slane %v7958, %v8870
    %v8872 = vsel %vm8624, %v8871, %v8867
    %v8873 = vlaneseq
    %v8874 = vshrl.u32 %v8873, 7
    %v8875 = vsub.s32 %v8626, %v8874
    %v8876 = vrot.slane %v7961, %v8875
    %v8877 = vsel %vm8631, %v8876, %v8872
    %v8878 = vlaneseq
    %v8879 = vshrl.u32 %v8878, 7
    %v8880 = vsub.s32 %v8633, %v8879
    %v8881 = vrot.slane %v7964, %v8880
    %v8882 = vsel %vm8638, %v8881, %v8877
    %v8883 = vlaneseq
    %v8884 = vshrl.u32 %v8883, 7
    %v8885 = vsub.s32 %v8640, %v8884
    %v8886 = vrot.slane %v7967, %v8885
    %v8887 = vsel %vm8645, %v8886, %v8882
    %v8888 = vlaneseq
    %v8889 = vshrl.u32 %v8888, 7
    %v8890 = vsub.s32 %v8647, %v8889
    %v8891 = vrot.slane %v7970, %v8890
    %v8892 = vsel %vm8652, %v8891, %v8887
    %v8893 = vlaneseq
    %v8894 = vshrl.u32 %v8893, 7
    %v8895 = vsub.s32 %v8654, %v8894
    %v8896 = vrot.slane %v7973, %v8895
    %v8897 = vsel %vm8659, %v8896, %v8892
    %v8898 = vlaneseq
    %v8899 = vshrl.u32 %v8898, 7
    %v8900 = vsub.s32 %v8551, %v8899
    %v8901 = vrot.slane %v7976, %v8900
    %v8902 = vlaneseq
    %v8903 = vshrl.u32 %v8902, 7
    %v8904 = vsub.s32 %v8556, %v8903
    %v8905 = vrot.slane %v7979, %v8904
    %v8906 = vsel %vm8561, %v8905, %v8901
    %v8907 = vlaneseq
    %v8908 = vshrl.u32 %v8907, 7
    %v8909 = vsub.s32 %v8563, %v8908
    %v8910 = vrot.slane %v7982, %v8909
    %v8911 = vsel %vm8568, %v8910, %v8906
    %v8912 = vlaneseq
    %v8913 = vshrl.u32 %v8912, 7
    %v8914 = vsub.s32 %v8570, %v8913
    %v8915 = vrot.slane %v7985, %v8914
    %v8916 = vsel %vm8575, %v8915, %v8911
    %v8917 = vlaneseq
    %v8918 = vshrl.u32 %v8917, 7
    %v8919 = vsub.s32 %v8577, %v8918
    %v8920 = vrot.slane %v7988, %v8919
    %v8921 = vsel %vm8582, %v8920, %v8916
    %v8922 = vlaneseq
    %v8923 = vshrl.u32 %v8922, 7
    %v8924 = vsub.s32 %v8584, %v8923
    %v8925 = vrot.slane %v7991, %v8924
    %v8926 = vsel %vm8589, %v8925, %v8921
    %v8927 = vlaneseq
    %v8928 = vshrl.u32 %v8927, 7
    %v8929 = vsub.s32 %v8591, %v8928
    %v8930 = vrot.slane %v7994, %v8929
    %v8931 = vsel %vm8596, %v8930, %v8926
    %v8932 = vlaneseq
    %v8933 = vshrl.u32 %v8932, 7
    %v8934 = vsub.s32 %v8598, %v8933
    %v8935 = vrot.slane %v7997, %v8934
    %v8936 = vsel %vm8603, %v8935, %v8931
    %v8937 = vlaneseq
    %v8938 = vshrl.u32 %v8937, 7
    %v8939 = vsub.s32 %v8605, %v8938
    %v8940 = vrot.slane %v8000, %v8939
    %v8941 = vsel %vm8610, %v8940, %v8936
    %v8942 = vlaneseq
    %v8943 = vshrl.u32 %v8942, 7
    %v8944 = vsub.s32 %v8612, %v8943
    %v8945 = vrot.slane %v8003, %v8944
    %v8946 = vsel %vm8617, %v8945, %v8941
    %v8947 = vlaneseq
    %v8948 = vshrl.u32 %v8947, 7
    %v8949 = vsub.s32 %v8619, %v8948
    %v8950 = vrot.slane %v8006, %v8949
    %v8951 = vsel %vm8624, %v8950, %v8946
    %v8952 = vlaneseq
    %v8953 = vshrl.u32 %v8952, 7
    %v8954 = vsub.s32 %v8626, %v8953
    %v8955 = vrot.slane %v8009, %v8954
    %v8956 = vsel %vm8631, %v8955, %v8951
    %v8957 = vlaneseq
    %v8958 = vshrl.u32 %v8957, 7
    %v8959 = vsub.s32 %v8633, %v8958
    %v8960 = vrot.slane %v8012, %v8959
    %v8961 = vsel %vm8638, %v8960, %v8956
    %v8962 = vlaneseq
    %v8963 = vshrl.u32 %v8962, 7
    %v8964 = vsub.s32 %v8640, %v8963
    %v8965 = vrot.slane %v8015, %v8964
    %v8966 = vsel %vm8645, %v8965, %v8961
    %v8967 = vlaneseq
    %v8968 = vshrl.u32 %v8967, 7
    %v8969 = vsub.s32 %v8647, %v8968
    %v8970 = vrot.slane %v8018, %v8969
    %v8971 = vsel %vm8652, %v8970, %v8966
    %v8972 = vlaneseq
    %v8973 = vshrl.u32 %v8972, 7
    %v8974 = vsub.s32 %v8654, %v8973
    %v8975 = vrot.slane %v8021, %v8974
    %v8976 = vsel %vm8659, %v8975, %v8971
    %v8977 = vlaneseq
    %v8978 = vshrl.u32 %v8977, 7
    %v8979 = vsub.s32 %v8551, %v8978
    %v8980 = vrot.slane %v8024, %v8979
    %v8981 = vlaneseq
    %v8982 = vshrl.u32 %v8981, 7
    %v8983 = vsub.s32 %v8556, %v8982
    %v8984 = vrot.slane %v8027, %v8983
    %v8985 = vsel %vm8561, %v8984, %v8980
    %v8986 = vlaneseq
    %v8987 = vshrl.u32 %v8986, 7
    %v8988 = vsub.s32 %v8563, %v8987
    %v8989 = vrot.slane %v8030, %v8988
    %v8990 = vsel %vm8568, %v8989, %v8985
    %v8991 = vlaneseq
    %v8992 = vshrl.u32 %v8991, 7
    %v8993 = vsub.s32 %v8570, %v8992
    %v8994 = vrot.slane %v8033, %v8993
    %v8995 = vsel %vm8575, %v8994, %v8990
    %v8996 = vlaneseq
    %v8997 = vshrl.u32 %v8996, 7
    %v8998 = vsub.s32 %v8577, %v8997
    %v8999 = vrot.slane %v8036, %v8998
    %v9000 = vsel %vm8582, %v8999, %v8995
    %v9001 = vlaneseq
    %v9002 = vshrl.u32 %v9001, 7
    %v9003 = vsub.s32 %v8584, %v9002
    %v9004 = vrot.slane %v8039, %v9003
    %v9005 = vsel %vm8589, %v9004, %v9000
    %v9006 = vlaneseq
    %v9007 = vshrl.u32 %v9006, 7
    %v9008 = vsub.s32 %v8591, %v9007
    %v9009 = vrot.slane %v8042, %v9008
    %v9010 = vsel %vm8596, %v9009, %v9005
    %v9011 = vlaneseq
    %v9012 = vshrl.u32 %v9011, 7
    %v9013 = vsub.s32 %v8598, %v9012
    %v9014 = vrot.slane %v8045, %v9013
    %v9015 = vsel %vm8603, %v9014, %v9010
    %v9016 = vlaneseq
    %v9017 = vshrl.u32 %v9016, 7
    %v9018 = vsub.s32 %v8605, %v9017
    %v9019 = vrot.slane %v8048, %v9018
    %v9020 = vsel %vm8610, %v9019, %v9015
    %v9021 = vlaneseq
    %v9022 = vshrl.u32 %v9021, 7
    %v9023 = vsub.s32 %v8612, %v9022
    %v9024 = vrot.slane %v8051, %v9023
    %v9025 = vsel %vm8617, %v9024, %v9020
    %v9026 = vlaneseq
    %v9027 = vshrl.u32 %v9026, 7
    %v9028 = vsub.s32 %v8619, %v9027
    %v9029 = vrot.slane %v8054, %v9028
    %v9030 = vsel %vm8624, %v9029, %v9025
    %v9031 = vlaneseq
    %v9032 = vshrl.u32 %v9031, 7
    %v9033 = vsub.s32 %v8626, %v9032
    %v9034 = vrot.slane %v8057, %v9033
    %v9035 = vsel %vm8631, %v9034, %v9030
    %v9036 = vlaneseq
    %v9037 = vshrl.u32 %v9036, 7
    %v9038 = vsub.s32 %v8633, %v9037
    %v9039 = vrot.slane %v8060, %v9038
    %v9040 = vsel %vm8638, %v9039, %v9035
    %v9041 = vlaneseq
    %v9042 = vshrl.u32 %v9041, 7
    %v9043 = vsub.s32 %v8640, %v9042
    %v9044 = vrot.slane %v8063, %v9043
    %v9045 = vsel %vm8645, %v9044, %v9040
    %v9046 = vlaneseq
    %v9047 = vshrl.u32 %v9046, 7
    %v9048 = vsub.s32 %v8647, %v9047
    %v9049 = vrot.slane %v8066, %v9048
    %v9050 = vsel %vm8652, %v9049, %v9045
    %v9051 = vlaneseq
    %v9052 = vshrl.u32 %v9051, 7
    %v9053 = vsub.s32 %v8654, %v9052
    %v9054 = vrot.slane %v8069, %v9053
    %v9055 = vsel %vm8659, %v9054, %v9050
    %v9056 = vlaneseq
    %v9057 = vshrl.u32 %v9056, 7
    %v9058 = vsub.s32 %v8551, %v9057
    %v9059 = vrot.slane %v8072, %v9058
    %v9060 = vlaneseq
    %v9061 = vshrl.u32 %v9060, 7
    %v9062 = vsub.s32 %v8556, %v9061
    %v9063 = vrot.slane %v8075, %v9062
    %v9064 = vsel %vm8561, %v9063, %v9059
    %v9065 = vlaneseq
    %v9066 = vshrl.u32 %v9065, 7
    %v9067 = vsub.s32 %v8563, %v9066
    %v9068 = vrot.slane %v8078, %v9067
    %v9069 = vsel %vm8568, %v9068, %v9064
    %v9070 = vlaneseq
    %v9071 = vshrl.u32 %v9070, 7
    %v9072 = vsub.s32 %v8570, %v9071
    %v9073 = vrot.slane %v8081, %v9072
    %v9074 = vsel %vm8575, %v9073, %v9069
    %v9075 = vlaneseq
    %v9076 = vshrl.u32 %v9075, 7
    %v9077 = vsub.s32 %v8577, %v9076
    %v9078 = vrot.slane %v8084, %v9077
    %v9079 = vsel %vm8582, %v9078, %v9074
    %v9080 = vlaneseq
    %v9081 = vshrl.u32 %v9080, 7
    %v9082 = vsub.s32 %v8584, %v9081
    %v9083 = vrot.slane %v8087, %v9082
    %v9084 = vsel %vm8589, %v9083, %v9079
    %v9085 = vlaneseq
    %v9086 = vshrl.u32 %v9085, 7
    %v9087 = vsub.s32 %v8591, %v9086
    %v9088 = vrot.slane %v8090, %v9087
    %v9089 = vsel %vm8596, %v9088, %v9084
    %v9090 = vlaneseq
    %v9091 = vshrl.u32 %v9090, 7
    %v9092 = vsub.s32 %v8598, %v9091
    %v9093 = vrot.slane %v8093, %v9092
    %v9094 = vsel %vm8603, %v9093, %v9089
    %v9095 = vlaneseq
    %v9096 = vshrl.u32 %v9095, 7
    %v9097 = vsub.s32 %v8605, %v9096
    %v9098 = vrot.slane %v8096, %v9097
    %v9099 = vsel %vm8610, %v9098, %v9094
    %v9100 = vlaneseq
    %v9101 = vshrl.u32 %v9100, 7
    %v9102 = vsub.s32 %v8612, %v9101
    %v9103 = vrot.slane %v8099, %v9102
    %v9104 = vsel %vm8617, %v9103, %v9099
    %v9105 = vlaneseq
    %v9106 = vshrl.u32 %v9105, 7
    %v9107 = vsub.s32 %v8619, %v9106
    %v9108 = vrot.slane %v8102, %v9107
    %v9109 = vsel %vm8624, %v9108, %v9104
    %v9110 = vlaneseq
    %v9111 = vshrl.u32 %v9110, 7
    %v9112 = vsub.s32 %v8626, %v9111
    %v9113 = vrot.slane %v8105, %v9112
    %v9114 = vsel %vm8631, %v9113, %v9109
    %v9115 = vlaneseq
    %v9116 = vshrl.u32 %v9115, 7
    %v9117 = vsub.s32 %v8633, %v9116
    %v9118 = vrot.slane %v8108, %v9117
    %v9119 = vsel %vm8638, %v9118, %v9114
    %v9120 = vlaneseq
    %v9121 = vshrl.u32 %v9120, 7
    %v9122 = vsub.s32 %v8640, %v9121
    %v9123 = vrot.slane %v8111, %v9122
    %v9124 = vsel %vm8645, %v9123, %v9119
    %v9125 = vlaneseq
    %v9126 = vshrl.u32 %v9125, 7
    %v9127 = vsub.s32 %v8647, %v9126
    %v9128 = vrot.slane %v8114, %v9127
    %v9129 = vsel %vm8652, %v9128, %v9124
    %v9130 = vlaneseq
    %v9131 = vshrl.u32 %v9130, 7
    %v9132 = vsub.s32 %v8654, %v9131
    %v9133 = vrot.slane %v8117, %v9132
    %v9134 = vsel %vm8659, %v9133, %v9129
    %v9135 = vlaneseq
    %v9136 = vshrl.u32 %v9135, 7
    %v9137 = vsub.s32 %v8551, %v9136
    %v9138 = vrot.slane %v8120, %v9137
    %v9139 = vlaneseq
    %v9140 = vshrl.u32 %v9139, 7
    %v9141 = vsub.s32 %v8556, %v9140
    %v9142 = vrot.slane %v8123, %v9141
    %v9143 = vsel %vm8561, %v9142, %v9138
    %v9144 = vlaneseq
    %v9145 = vshrl.u32 %v9144, 7
    %v9146 = vsub.s32 %v8563, %v9145
    %v9147 = vrot.slane %v8126, %v9146
    %v9148 = vsel %vm8568, %v9147, %v9143
    %v9149 = vlaneseq
    %v9150 = vshrl.u32 %v9149, 7
    %v9151 = vsub.s32 %v8570, %v9150
    %v9152 = vrot.slane %v8129, %v9151
    %v9153 = vsel %vm8575, %v9152, %v9148
    %v9154 = vlaneseq
    %v9155 = vshrl.u32 %v9154, 7
    %v9156 = vsub.s32 %v8577, %v9155
    %v9157 = vrot.slane %v8132, %v9156
    %v9158 = vsel %vm8582, %v9157, %v9153
    %v9159 = vlaneseq
    %v9160 = vshrl.u32 %v9159, 7
    %v9161 = vsub.s32 %v8584, %v9160
    %v9162 = vrot.slane %v8135, %v9161
    %v9163 = vsel %vm8589, %v9162, %v9158
    %v9164 = vlaneseq
    %v9165 = vshrl.u32 %v9164, 7
    %v9166 = vsub.s32 %v8591, %v9165
    %v9167 = vrot.slane %v8138, %v9166
    %v9168 = vsel %vm8596, %v9167, %v9163
    %v9169 = vlaneseq
    %v9170 = vshrl.u32 %v9169, 7
    %v9171 = vsub.s32 %v8598, %v9170
    %v9172 = vrot.slane %v8141, %v9171
    %v9173 = vsel %vm8603, %v9172, %v9168
    %v9174 = vlaneseq
    %v9175 = vshrl.u32 %v9174, 7
    %v9176 = vsub.s32 %v8605, %v9175
    %v9177 = vrot.slane %v8144, %v9176
    %v9178 = vsel %vm8610, %v9177, %v9173
    %v9179 = vlaneseq
    %v9180 = vshrl.u32 %v9179, 7
    %v9181 = vsub.s32 %v8612, %v9180
    %v9182 = vrot.slane %v8147, %v9181
    %v9183 = vsel %vm8617, %v9182, %v9178
    %v9184 = vlaneseq
    %v9185 = vshrl.u32 %v9184, 7
    %v9186 = vsub.s32 %v8619, %v9185
    %v9187 = vrot.slane %v8150, %v9186
    %v9188 = vsel %vm8624, %v9187, %v9183
    %v9189 = vlaneseq
    %v9190 = vshrl.u32 %v9189, 7
    %v9191 = vsub.s32 %v8626, %v9190
    %v9192 = vrot.slane %v8153, %v9191
    %v9193 = vsel %vm8631, %v9192, %v9188
    %v9194 = vlaneseq
    %v9195 = vshrl.u32 %v9194, 7
    %v9196 = vsub.s32 %v8633, %v9195
    %v9197 = vrot.slane %v8156, %v9196
    %v9198 = vsel %vm8638, %v9197, %v9193
    %v9199 = vlaneseq
    %v9200 = vshrl.u32 %v9199, 7
    %v9201 = vsub.s32 %v8640, %v9200
    %v9202 = vrot.slane %v8159, %v9201
    %v9203 = vsel %vm8645, %v9202, %v9198
    %v9204 = vlaneseq
    %v9205 = vshrl.u32 %v9204, 7
    %v9206 = vsub.s32 %v8647, %v9205
    %v9207 = vrot.slane %v8162, %v9206
    %v9208 = vsel %vm8652, %v9207, %v9203
    %v9209 = vlaneseq
    %v9210 = vshrl.u32 %v9209, 7
    %v9211 = vsub.s32 %v8654, %v9210
    %v9212 = vrot.slane %v8165, %v9211
    %v9213 = vsel %vm8659, %v9212, %v9208
    %v9214 = vlaneseq
    %v9215 = vshrl.u32 %v9214, 7
    %v9216 = vsub.s32 %v8551, %v9215
    %v9217 = vrot.slane %v8168, %v9216
    %v9218 = vlaneseq
    %v9219 = vshrl.u32 %v9218, 7
    %v9220 = vsub.s32 %v8556, %v9219
    %v9221 = vrot.slane %v8171, %v9220
    %v9222 = vsel %vm8561, %v9221, %v9217
    %v9223 = vlaneseq
    %v9224 = vshrl.u32 %v9223, 7
    %v9225 = vsub.s32 %v8563, %v9224
    %v9226 = vrot.slane %v8174, %v9225
    %v9227 = vsel %vm8568, %v9226, %v9222
    %v9228 = vlaneseq
    %v9229 = vshrl.u32 %v9228, 7
    %v9230 = vsub.s32 %v8570, %v9229
    %v9231 = vrot.slane %v8177, %v9230
    %v9232 = vsel %vm8575, %v9231, %v9227
    %v9233 = vlaneseq
    %v9234 = vshrl.u32 %v9233, 7
    %v9235 = vsub.s32 %v8577, %v9234
    %v9236 = vrot.slane %v8180, %v9235
    %v9237 = vsel %vm8582, %v9236, %v9232
    %v9238 = vlaneseq
    %v9239 = vshrl.u32 %v9238, 7
    %v9240 = vsub.s32 %v8584, %v9239
    %v9241 = vrot.slane %v8183, %v9240
    %v9242 = vsel %vm8589, %v9241, %v9237
    %v9243 = vlaneseq
    %v9244 = vshrl.u32 %v9243, 7
    %v9245 = vsub.s32 %v8591, %v9244
    %v9246 = vrot.slane %v8186, %v9245
    %v9247 = vsel %vm8596, %v9246, %v9242
    %v9248 = vlaneseq
    %v9249 = vshrl.u32 %v9248, 7
    %v9250 = vsub.s32 %v8598, %v9249
    %v9251 = vrot.slane %v8189, %v9250
    %v9252 = vsel %vm8603, %v9251, %v9247
    %v9253 = vlaneseq
    %v9254 = vshrl.u32 %v9253, 7
    %v9255 = vsub.s32 %v8605, %v9254
    %v9256 = vrot.slane %v8192, %v9255
    %v9257 = vsel %vm8610, %v9256, %v9252
    %v9258 = vlaneseq
    %v9259 = vshrl.u32 %v9258, 7
    %v9260 = vsub.s32 %v8612, %v9259
    %v9261 = vrot.slane %v8195, %v9260
    %v9262 = vsel %vm8617, %v9261, %v9257
    %v9263 = vlaneseq
    %v9264 = vshrl.u32 %v9263, 7
    %v9265 = vsub.s32 %v8619, %v9264
    %v9266 = vrot.slane %v8198, %v9265
    %v9267 = vsel %vm8624, %v9266, %v9262
    %v9268 = vlaneseq
    %v9269 = vshrl.u32 %v9268, 7
    %v9270 = vsub.s32 %v8626, %v9269
    %v9271 = vrot.slane %v8201, %v9270
    %v9272 = vsel %vm8631, %v9271, %v9267
    %v9273 = vlaneseq
    %v9274 = vshrl.u32 %v9273, 7
    %v9275 = vsub.s32 %v8633, %v9274
    %v9276 = vrot.slane %v8204, %v9275
    %v9277 = vsel %vm8638, %v9276, %v9272
    %v9278 = vlaneseq
    %v9279 = vshrl.u32 %v9278, 7
    %v9280 = vsub.s32 %v8640, %v9279
    %v9281 = vrot.slane %v8207, %v9280
    %v9282 = vsel %vm8645, %v9281, %v9277
    %v9283 = vlaneseq
    %v9284 = vshrl.u32 %v9283, 7
    %v9285 = vsub.s32 %v8647, %v9284
    %v9286 = vrot.slane %v8210, %v9285
    %v9287 = vsel %vm8652, %v9286, %v9282
    %v9288 = vlaneseq
    %v9289 = vshrl.u32 %v9288, 7
    %v9290 = vsub.s32 %v8654, %v9289
    %v9291 = vrot.slane %v8213, %v9290
    %v9292 = vsel %vm8659, %v9291, %v9287
    %v9293 = vlaneseq
    %v9294 = vshrl.u32 %v9293, 7
    %v9295 = vsub.s32 %v8551, %v9294
    %v9296 = vrot.slane %v8216, %v9295
    %v9297 = vlaneseq
    %v9298 = vshrl.u32 %v9297, 7
    %v9299 = vsub.s32 %v8556, %v9298
    %v9300 = vrot.slane %v8219, %v9299
    %v9301 = vsel %vm8561, %v9300, %v9296
    %v9302 = vlaneseq
    %v9303 = vshrl.u32 %v9302, 7
    %v9304 = vsub.s32 %v8563, %v9303
    %v9305 = vrot.slane %v8222, %v9304
    %v9306 = vsel %vm8568, %v9305, %v9301
    %v9307 = vlaneseq
    %v9308 = vshrl.u32 %v9307, 7
    %v9309 = vsub.s32 %v8570, %v9308
    %v9310 = vrot.slane %v8225, %v9309
    %v9311 = vsel %vm8575, %v9310, %v9306
    %v9312 = vlaneseq
    %v9313 = vshrl.u32 %v9312, 7
    %v9314 = vsub.s32 %v8577, %v9313
    %v9315 = vrot.slane %v8228, %v9314
    %v9316 = vsel %vm8582, %v9315, %v9311
    %v9317 = vlaneseq
    %v9318 = vshrl.u32 %v9317, 7
    %v9319 = vsub.s32 %v8584, %v9318
    %v9320 = vrot.slane %v8231, %v9319
    %v9321 = vsel %vm8589, %v9320, %v9316
    %v9322 = vlaneseq
    %v9323 = vshrl.u32 %v9322, 7
    %v9324 = vsub.s32 %v8591, %v9323
    %v9325 = vrot.slane %v8234, %v9324
    %v9326 = vsel %vm8596, %v9325, %v9321
    %v9327 = vlaneseq
    %v9328 = vshrl.u32 %v9327, 7
    %v9329 = vsub.s32 %v8598, %v9328
    %v9330 = vrot.slane %v8237, %v9329
    %v9331 = vsel %vm8603, %v9330, %v9326
    %v9332 = vlaneseq
    %v9333 = vshrl.u32 %v9332, 7
    %v9334 = vsub.s32 %v8605, %v9333
    %v9335 = vrot.slane %v8240, %v9334
    %v9336 = vsel %vm8610, %v9335, %v9331
    %v9337 = vlaneseq
    %v9338 = vshrl.u32 %v9337, 7
    %v9339 = vsub.s32 %v8612, %v9338
    %v9340 = vrot.slane %v8243, %v9339
    %v9341 = vsel %vm8617, %v9340, %v9336
    %v9342 = vlaneseq
    %v9343 = vshrl.u32 %v9342, 7
    %v9344 = vsub.s32 %v8619, %v9343
    %v9345 = vrot.slane %v8246, %v9344
    %v9346 = vsel %vm8624, %v9345, %v9341
    %v9347 = vlaneseq
    %v9348 = vshrl.u32 %v9347, 7
    %v9349 = vsub.s32 %v8626, %v9348
    %v9350 = vrot.slane %v8249, %v9349
    %v9351 = vsel %vm8631, %v9350, %v9346
    %v9352 = vlaneseq
    %v9353 = vshrl.u32 %v9352, 7
    %v9354 = vsub.s32 %v8633, %v9353
    %v9355 = vrot.slane %v8252, %v9354
    %v9356 = vsel %vm8638, %v9355, %v9351
    %v9357 = vlaneseq
    %v9358 = vshrl.u32 %v9357, 7
    %v9359 = vsub.s32 %v8640, %v9358
    %v9360 = vrot.slane %v8255, %v9359
    %v9361 = vsel %vm8645, %v9360, %v9356
    %v9362 = vlaneseq
    %v9363 = vshrl.u32 %v9362, 7
    %v9364 = vsub.s32 %v8647, %v9363
    %v9365 = vrot.slane %v8258, %v9364
    %v9366 = vsel %vm8652, %v9365, %v9361
    %v9367 = vlaneseq
    %v9368 = vshrl.u32 %v9367, 7
    %v9369 = vsub.s32 %v8654, %v9368
    %v9370 = vrot.slane %v8261, %v9369
    %v9371 = vsel %vm8659, %v9370, %v9366
    %v9372 = vlaneseq
    %v9373 = vshrl.u32 %v9372, 7
    %v9374 = vsub.s32 %v8551, %v9373
    %v9375 = vrot.slane %v8264, %v9374
    %v9376 = vlaneseq
    %v9377 = vshrl.u32 %v9376, 7
    %v9378 = vsub.s32 %v8556, %v9377
    %v9379 = vrot.slane %v8267, %v9378
    %v9380 = vsel %vm8561, %v9379, %v9375
    %v9381 = vlaneseq
    %v9382 = vshrl.u32 %v9381, 7
    %v9383 = vsub.s32 %v8563, %v9382
    %v9384 = vrot.slane %v8270, %v9383
    %v9385 = vsel %vm8568, %v9384, %v9380
    %v9386 = vlaneseq
    %v9387 = vshrl.u32 %v9386, 7
    %v9388 = vsub.s32 %v8570, %v9387
    %v9389 = vrot.slane %v8273, %v9388
    %v9390 = vsel %vm8575, %v9389, %v9385
    %v9391 = vlaneseq
    %v9392 = vshrl.u32 %v9391, 7
    %v9393 = vsub.s32 %v8577, %v9392
    %v9394 = vrot.slane %v8276, %v9393
    %v9395 = vsel %vm8582, %v9394, %v9390
    %v9396 = vlaneseq
    %v9397 = vshrl.u32 %v9396, 7
    %v9398 = vsub.s32 %v8584, %v9397
    %v9399 = vrot.slane %v8279, %v9398
    %v9400 = vsel %vm8589, %v9399, %v9395
    %v9401 = vlaneseq
    %v9402 = vshrl.u32 %v9401, 7
    %v9403 = vsub.s32 %v8591, %v9402
    %v9404 = vrot.slane %v8282, %v9403
    %v9405 = vsel %vm8596, %v9404, %v9400
    %v9406 = vlaneseq
    %v9407 = vshrl.u32 %v9406, 7
    %v9408 = vsub.s32 %v8598, %v9407
    %v9409 = vrot.slane %v8285, %v9408
    %v9410 = vsel %vm8603, %v9409, %v9405
    %v9411 = vlaneseq
    %v9412 = vshrl.u32 %v9411, 7
    %v9413 = vsub.s32 %v8605, %v9412
    %v9414 = vrot.slane %v8288, %v9413
    %v9415 = vsel %vm8610, %v9414, %v9410
    %v9416 = vlaneseq
    %v9417 = vshrl.u32 %v9416, 7
    %v9418 = vsub.s32 %v8612, %v9417
    %v9419 = vrot.slane %v8291, %v9418
    %v9420 = vsel %vm8617, %v9419, %v9415
    %v9421 = vlaneseq
    %v9422 = vshrl.u32 %v9421, 7
    %v9423 = vsub.s32 %v8619, %v9422
    %v9424 = vrot.slane %v8294, %v9423
    %v9425 = vsel %vm8624, %v9424, %v9420
    %v9426 = vlaneseq
    %v9427 = vshrl.u32 %v9426, 7
    %v9428 = vsub.s32 %v8626, %v9427
    %v9429 = vrot.slane %v8297, %v9428
    %v9430 = vsel %vm8631, %v9429, %v9425
    %v9431 = vlaneseq
    %v9432 = vshrl.u32 %v9431, 7
    %v9433 = vsub.s32 %v8633, %v9432
    %v9434 = vrot.slane %v8300, %v9433
    %v9435 = vsel %vm8638, %v9434, %v9430
    %v9436 = vlaneseq
    %v9437 = vshrl.u32 %v9436, 7
    %v9438 = vsub.s32 %v8640, %v9437
    %v9439 = vrot.slane %v8303, %v9438
    %v9440 = vsel %vm8645, %v9439, %v9435
    %v9441 = vlaneseq
    %v9442 = vshrl.u32 %v9441, 7
    %v9443 = vsub.s32 %v8647, %v9442
    %v9444 = vrot.slane %v8306, %v9443
    %v9445 = vsel %vm8652, %v9444, %v9440
    %v9446 = vlaneseq
    %v9447 = vshrl.u32 %v9446, 7
    %v9448 = vsub.s32 %v8654, %v9447
    %v9449 = vrot.slane %v8309, %v9448
    %v9450 = vsel %vm8659, %v9449, %v9445
    %v9451 = vlaneseq
    %v9452 = vshrl.u32 %v9451, 7
    %v9453 = vsub.s32 %v8551, %v9452
    %v9454 = vrot.slane %v8312, %v9453
    %v9455 = vlaneseq
    %v9456 = vshrl.u32 %v9455, 7
    %v9457 = vsub.s32 %v8556, %v9456
    %v9458 = vrot.slane %v8315, %v9457
    %v9459 = vsel %vm8561, %v9458, %v9454
    %v9460 = vlaneseq
    %v9461 = vshrl.u32 %v9460, 7
    %v9462 = vsub.s32 %v8563, %v9461
    %v9463 = vrot.slane %v8318, %v9462
    %v9464 = vsel %vm8568, %v9463, %v9459
    %v9465 = vlaneseq
    %v9466 = vshrl.u32 %v9465, 7
    %v9467 = vsub.s32 %v8570, %v9466
    %v9468 = vrot.slane %v8321, %v9467
    %v9469 = vsel %vm8575, %v9468, %v9464
    %v9470 = vlaneseq
    %v9471 = vshrl.u32 %v9470, 7
    %v9472 = vsub.s32 %v8577, %v9471
    %v9473 = vrot.slane %v8324, %v9472
    %v9474 = vsel %vm8582, %v9473, %v9469
    %v9475 = vlaneseq
    %v9476 = vshrl.u32 %v9475, 7
    %v9477 = vsub.s32 %v8584, %v9476
    %v9478 = vrot.slane %v8327, %v9477
    %v9479 = vsel %vm8589, %v9478, %v9474
    %v9480 = vlaneseq
    %v9481 = vshrl.u32 %v9480, 7
    %v9482 = vsub.s32 %v8591, %v9481
    %v9483 = vrot.slane %v8330, %v9482
    %v9484 = vsel %vm8596, %v9483, %v9479
    %v9485 = vlaneseq
    %v9486 = vshrl.u32 %v9485, 7
    %v9487 = vsub.s32 %v8598, %v9486
    %v9488 = vrot.slane %v8333, %v9487
    %v9489 = vsel %vm8603, %v9488, %v9484
    %v9490 = vlaneseq
    %v9491 = vshrl.u32 %v9490, 7
    %v9492 = vsub.s32 %v8605, %v9491
    %v9493 = vrot.slane %v8336, %v9492
    %v9494 = vsel %vm8610, %v9493, %v9489
    %v9495 = vlaneseq
    %v9496 = vshrl.u32 %v9495, 7
    %v9497 = vsub.s32 %v8612, %v9496
    %v9498 = vrot.slane %v8339, %v9497
    %v9499 = vsel %vm8617, %v9498, %v9494
    %v9500 = vlaneseq
    %v9501 = vshrl.u32 %v9500, 7
    %v9502 = vsub.s32 %v8619, %v9501
    %v9503 = vrot.slane %v8342, %v9502
    %v9504 = vsel %vm8624, %v9503, %v9499
    %v9505 = vlaneseq
    %v9506 = vshrl.u32 %v9505, 7
    %v9507 = vsub.s32 %v8626, %v9506
    %v9508 = vrot.slane %v8345, %v9507
    %v9509 = vsel %vm8631, %v9508, %v9504
    %v9510 = vlaneseq
    %v9511 = vshrl.u32 %v9510, 7
    %v9512 = vsub.s32 %v8633, %v9511
    %v9513 = vrot.slane %v8348, %v9512
    %v9514 = vsel %vm8638, %v9513, %v9509
    %v9515 = vlaneseq
    %v9516 = vshrl.u32 %v9515, 7
    %v9517 = vsub.s32 %v8640, %v9516
    %v9518 = vrot.slane %v8351, %v9517
    %v9519 = vsel %vm8645, %v9518, %v9514
    %v9520 = vlaneseq
    %v9521 = vshrl.u32 %v9520, 7
    %v9522 = vsub.s32 %v8647, %v9521
    %v9523 = vrot.slane %v8354, %v9522
    %v9524 = vsel %vm8652, %v9523, %v9519
    %v9525 = vlaneseq
    %v9526 = vshrl.u32 %v9525, 7
    %v9527 = vsub.s32 %v8654, %v9526
    %v9528 = vrot.slane %v8357, %v9527
    %v9529 = vsel %vm8659, %v9528, %v9524
    %v9530 = vlaneseq
    %v9531 = vshrl.u32 %v9530, 7
    %v9532 = vsub.s32 %v8551, %v9531
    %v9533 = vrot.slane %v8360, %v9532
    %v9534 = vlaneseq
    %v9535 = vshrl.u32 %v9534, 7
    %v9536 = vsub.s32 %v8556, %v9535
    %v9537 = vrot.slane %v8363, %v9536
    %v9538 = vsel %vm8561, %v9537, %v9533
    %v9539 = vlaneseq
    %v9540 = vshrl.u32 %v9539, 7
    %v9541 = vsub.s32 %v8563, %v9540
    %v9542 = vrot.slane %v8366, %v9541
    %v9543 = vsel %vm8568, %v9542, %v9538
    %v9544 = vlaneseq
    %v9545 = vshrl.u32 %v9544, 7
    %v9546 = vsub.s32 %v8570, %v9545
    %v9547 = vrot.slane %v8369, %v9546
    %v9548 = vsel %vm8575, %v9547, %v9543
    %v9549 = vlaneseq
    %v9550 = vshrl.u32 %v9549, 7
    %v9551 = vsub.s32 %v8577, %v9550
    %v9552 = vrot.slane %v8372, %v9551
    %v9553 = vsel %vm8582, %v9552, %v9548
    %v9554 = vlaneseq
    %v9555 = vshrl.u32 %v9554, 7
    %v9556 = vsub.s32 %v8584, %v9555
    %v9557 = vrot.slane %v8375, %v9556
    %v9558 = vsel %vm8589, %v9557, %v9553
    %v9559 = vlaneseq
    %v9560 = vshrl.u32 %v9559, 7
    %v9561 = vsub.s32 %v8591, %v9560
    %v9562 = vrot.slane %v8378, %v9561
    %v9563 = vsel %vm8596, %v9562, %v9558
    %v9564 = vlaneseq
    %v9565 = vshrl.u32 %v9564, 7
    %v9566 = vsub.s32 %v8598, %v9565
    %v9567 = vrot.slane %v8381, %v9566
    %v9568 = vsel %vm8603, %v9567, %v9563
    %v9569 = vlaneseq
    %v9570 = vshrl.u32 %v9569, 7
    %v9571 = vsub.s32 %v8605, %v9570
    %v9572 = vrot.slane %v8384, %v9571
    %v9573 = vsel %vm8610, %v9572, %v9568
    %v9574 = vlaneseq
    %v9575 = vshrl.u32 %v9574, 7
    %v9576 = vsub.s32 %v8612, %v9575
    %v9577 = vrot.slane %v8387, %v9576
    %v9578 = vsel %vm8617, %v9577, %v9573
    %v9579 = vlaneseq
    %v9580 = vshrl.u32 %v9579, 7
    %v9581 = vsub.s32 %v8619, %v9580
    %v9582 = vrot.slane %v8390, %v9581
    %v9583 = vsel %vm8624, %v9582, %v9578
    %v9584 = vlaneseq
    %v9585 = vshrl.u32 %v9584, 7
    %v9586 = vsub.s32 %v8626, %v9585
    %v9587 = vrot.slane %v8393, %v9586
    %v9588 = vsel %vm8631, %v9587, %v9583
    %v9589 = vlaneseq
    %v9590 = vshrl.u32 %v9589, 7
    %v9591 = vsub.s32 %v8633, %v9590
    %v9592 = vrot.slane %v8396, %v9591
    %v9593 = vsel %vm8638, %v9592, %v9588
    %v9594 = vlaneseq
    %v9595 = vshrl.u32 %v9594, 7
    %v9596 = vsub.s32 %v8640, %v9595
    %v9597 = vrot.slane %v8399, %v9596
    %v9598 = vsel %vm8645, %v9597, %v9593
    %v9599 = vlaneseq
    %v9600 = vshrl.u32 %v9599, 7
    %v9601 = vsub.s32 %v8647, %v9600
    %v9602 = vrot.slane %v8402, %v9601
    %v9603 = vsel %vm8652, %v9602, %v9598
    %v9604 = vlaneseq
    %v9605 = vshrl.u32 %v9604, 7
    %v9606 = vsub.s32 %v8654, %v9605
    %v9607 = vrot.slane %v8405, %v9606
    %v9608 = vsel %vm8659, %v9607, %v9603
    %v9609 = vlaneseq
    %v9610 = vshrl.u32 %v9609, 7
    %v9611 = vsub.s32 %v8551, %v9610
    %v9612 = vrot.slane %v8408, %v9611
    %v9613 = vlaneseq
    %v9614 = vshrl.u32 %v9613, 7
    %v9615 = vsub.s32 %v8556, %v9614
    %v9616 = vrot.slane %v8411, %v9615
    %v9617 = vsel %vm8561, %v9616, %v9612
    %v9618 = vlaneseq
    %v9619 = vshrl.u32 %v9618, 7
    %v9620 = vsub.s32 %v8563, %v9619
    %v9621 = vrot.slane %v8414, %v9620
    %v9622 = vsel %vm8568, %v9621, %v9617
    %v9623 = vlaneseq
    %v9624 = vshrl.u32 %v9623, 7
    %v9625 = vsub.s32 %v8570, %v9624
    %v9626 = vrot.slane %v8417, %v9625
    %v9627 = vsel %vm8575, %v9626, %v9622
    %v9628 = vlaneseq
    %v9629 = vshrl.u32 %v9628, 7
    %v9630 = vsub.s32 %v8577, %v9629
    %v9631 = vrot.slane %v8420, %v9630
    %v9632 = vsel %vm8582, %v9631, %v9627
    %v9633 = vlaneseq
    %v9634 = vshrl.u32 %v9633, 7
    %v9635 = vsub.s32 %v8584, %v9634
    %v9636 = vrot.slane %v8423, %v9635
    %v9637 = vsel %vm8589, %v9636, %v9632
    %v9638 = vlaneseq
    %v9639 = vshrl.u32 %v9638, 7
    %v9640 = vsub.s32 %v8591, %v9639
    %v9641 = vrot.slane %v8426, %v9640
    %v9642 = vsel %vm8596, %v9641, %v9637
    %v9643 = vlaneseq
    %v9644 = vshrl.u32 %v9643, 7
    %v9645 = vsub.s32 %v8598, %v9644
    %v9646 = vrot.slane %v8429, %v9645
    %v9647 = vsel %vm8603, %v9646, %v9642
    %v9648 = vlaneseq
    %v9649 = vshrl.u32 %v9648, 7
    %v9650 = vsub.s32 %v8605, %v9649
    %v9651 = vrot.slane %v8432, %v9650
    %v9652 = vsel %vm8610, %v9651, %v9647
    %v9653 = vlaneseq
    %v9654 = vshrl.u32 %v9653, 7
    %v9655 = vsub.s32 %v8612, %v9654
    %v9656 = vrot.slane %v8435, %v9655
    %v9657 = vsel %vm8617, %v9656, %v9652
    %v9658 = vlaneseq
    %v9659 = vshrl.u32 %v9658, 7
    %v9660 = vsub.s32 %v8619, %v9659
    %v9661 = vrot.slane %v8438, %v9660
    %v9662 = vsel %vm8624, %v9661, %v9657
    %v9663 = vlaneseq
    %v9664 = vshrl.u32 %v9663, 7
    %v9665 = vsub.s32 %v8626, %v9664
    %v9666 = vrot.slane %v8441, %v9665
    %v9667 = vsel %vm8631, %v9666, %v9662
    %v9668 = vlaneseq
    %v9669 = vshrl.u32 %v9668, 7
    %v9670 = vsub.s32 %v8633, %v9669
    %v9671 = vrot.slane %v8444, %v9670
    %v9672 = vsel %vm8638, %v9671, %v9667
    %v9673 = vlaneseq
    %v9674 = vshrl.u32 %v9673, 7
    %v9675 = vsub.s32 %v8640, %v9674
    %v9676 = vrot.slane %v8447, %v9675
    %v9677 = vsel %vm8645, %v9676, %v9672
    %v9678 = vlaneseq
    %v9679 = vshrl.u32 %v9678, 7
    %v9680 = vsub.s32 %v8647, %v9679
    %v9681 = vrot.slane %v8450, %v9680
    %v9682 = vsel %vm8652, %v9681, %v9677
    %v9683 = vlaneseq
    %v9684 = vshrl.u32 %v9683, 7
    %v9685 = vsub.s32 %v8654, %v9684
    %v9686 = vrot.slane %v8453, %v9685
    %v9687 = vsel %vm8659, %v9686, %v9682
    %v9688 = vlaneseq
    %v9689 = vshrl.u32 %v9688, 7
    %v9690 = vsub.s32 %v8551, %v9689
    %v9691 = vrot.slane %v8456, %v9690
    %v9692 = vlaneseq
    %v9693 = vshrl.u32 %v9692, 7
    %v9694 = vsub.s32 %v8556, %v9693
    %v9695 = vrot.slane %v8459, %v9694
    %v9696 = vsel %vm8561, %v9695, %v9691
    %v9697 = vlaneseq
    %v9698 = vshrl.u32 %v9697, 7
    %v9699 = vsub.s32 %v8563, %v9698
    %v9700 = vrot.slane %v8462, %v9699
    %v9701 = vsel %vm8568, %v9700, %v9696
    %v9702 = vlaneseq
    %v9703 = vshrl.u32 %v9702, 7
    %v9704 = vsub.s32 %v8570, %v9703
    %v9705 = vrot.slane %v8465, %v9704
    %v9706 = vsel %vm8575, %v9705, %v9701
    %v9707 = vlaneseq
    %v9708 = vshrl.u32 %v9707, 7
    %v9709 = vsub.s32 %v8577, %v9708
    %v9710 = vrot.slane %v8468, %v9709
    %v9711 = vsel %vm8582, %v9710, %v9706
    %v9712 = vlaneseq
    %v9713 = vshrl.u32 %v9712, 7
    %v9714 = vsub.s32 %v8584, %v9713
    %v9715 = vrot.slane %v8471, %v9714
    %v9716 = vsel %vm8589, %v9715, %v9711
    %v9717 = vlaneseq
    %v9718 = vshrl.u32 %v9717, 7
    %v9719 = vsub.s32 %v8591, %v9718
    %v9720 = vrot.slane %v8474, %v9719
    %v9721 = vsel %vm8596, %v9720, %v9716
    %v9722 = vlaneseq
    %v9723 = vshrl.u32 %v9722, 7
    %v9724 = vsub.s32 %v8598, %v9723
    %v9725 = vrot.slane %v8477, %v9724
    %v9726 = vsel %vm8603, %v9725, %v9721
    %v9727 = vlaneseq
    %v9728 = vshrl.u32 %v9727, 7
    %v9729 = vsub.s32 %v8605, %v9728
    %v9730 = vrot.slane %v8480, %v9729
    %v9731 = vsel %vm8610, %v9730, %v9726
    %v9732 = vlaneseq
    %v9733 = vshrl.u32 %v9732, 7
    %v9734 = vsub.s32 %v8612, %v9733
    %v9735 = vrot.slane %v8483, %v9734
    %v9736 = vsel %vm8617, %v9735, %v9731
    %v9737 = vlaneseq
    %v9738 = vshrl.u32 %v9737, 7
    %v9739 = vsub.s32 %v8619, %v9738
    %v9740 = vrot.slane %v8486, %v9739
    %v9741 = vsel %vm8624, %v9740, %v9736
    %v9742 = vlaneseq
    %v9743 = vshrl.u32 %v9742, 7
    %v9744 = vsub.s32 %v8626, %v9743
    %v9745 = vrot.slane %v8489, %v9744
    %v9746 = vsel %vm8631, %v9745, %v9741
    %v9747 = vlaneseq
    %v9748 = vshrl.u32 %v9747, 7
    %v9749 = vsub.s32 %v8633, %v9748
    %v9750 = vrot.slane %v8492, %v9749
    %v9751 = vsel %vm8638, %v9750, %v9746
    %v9752 = vlaneseq
    %v9753 = vshrl.u32 %v9752, 7
    %v9754 = vsub.s32 %v8640, %v9753
    %v9755 = vrot.slane %v8495, %v9754
    %v9756 = vsel %vm8645, %v9755, %v9751
    %v9757 = vlaneseq
    %v9758 = vshrl.u32 %v9757, 7
    %v9759 = vsub.s32 %v8647, %v9758
    %v9760 = vrot.slane %v8498, %v9759
    %v9761 = vsel %vm8652, %v9760, %v9756
    %v9762 = vlaneseq
    %v9763 = vshrl.u32 %v9762, 7
    %v9764 = vsub.s32 %v8654, %v9763
    %v9765 = vrot.slane %v8501, %v9764
    %v9766 = vsel %vm8659, %v9765, %v9761
    %v9767 = vlaneseq
    %v9768 = vshrl.u32 %v9767, 7
    %v9769 = vsub.s32 %v8551, %v9768
    %v9770 = vrot.slane %v8504, %v9769
    %v9771 = vlaneseq
    %v9772 = vshrl.u32 %v9771, 7
    %v9773 = vsub.s32 %v8556, %v9772
    %v9774 = vrot.slane %v8507, %v9773
    %v9775 = vsel %vm8561, %v9774, %v9770
    %v9776 = vlaneseq
    %v9777 = vshrl.u32 %v9776, 7
    %v9778 = vsub.s32 %v8563, %v9777
    %v9779 = vrot.slane %v8510, %v9778
    %v9780 = vsel %vm8568, %v9779, %v9775
    %v9781 = vlaneseq
    %v9782 = vshrl.u32 %v9781, 7
    %v9783 = vsub.s32 %v8570, %v9782
    %v9784 = vrot.slane %v8513, %v9783
    %v9785 = vsel %vm8575, %v9784, %v9780
    %v9786 = vlaneseq
    %v9787 = vshrl.u32 %v9786, 7
    %v9788 = vsub.s32 %v8577, %v9787
    %v9789 = vrot.slane %v8516, %v9788
    %v9790 = vsel %vm8582, %v9789, %v9785
    %v9791 = vlaneseq
    %v9792 = vshrl.u32 %v9791, 7
    %v9793 = vsub.s32 %v8584, %v9792
    %v9794 = vrot.slane %v8519, %v9793
    %v9795 = vsel %vm8589, %v9794, %v9790
    %v9796 = vlaneseq
    %v9797 = vshrl.u32 %v9796, 7
    %v9798 = vsub.s32 %v8591, %v9797
    %v9799 = vrot.slane %v8522, %v9798
    %v9800 = vsel %vm8596, %v9799, %v9795
    %v9801 = vlaneseq
    %v9802 = vshrl.u32 %v9801, 7
    %v9803 = vsub.s32 %v8598, %v9802
    %v9804 = vrot.slane %v8525, %v9803
    %v9805 = vsel %vm8603, %v9804, %v9800
    %v9806 = vlaneseq
    %v9807 = vshrl.u32 %v9806, 7
    %v9808 = vsub.s32 %v8605, %v9807
    %v9809 = vrot.slane %v8528, %v9808
    %v9810 = vsel %vm8610, %v9809, %v9805
    %v9811 = vlaneseq
    %v9812 = vshrl.u32 %v9811, 7
    %v9813 = vsub.s32 %v8612, %v9812
    %v9814 = vrot.slane %v8531, %v9813
    %v9815 = vsel %vm8617, %v9814, %v9810
    %v9816 = vlaneseq
    %v9817 = vshrl.u32 %v9816, 7
    %v9818 = vsub.s32 %v8619, %v9817
    %v9819 = vrot.slane %v8534, %v9818
    %v9820 = vsel %vm8624, %v9819, %v9815
    %v9821 = vlaneseq
    %v9822 = vshrl.u32 %v9821, 7
    %v9823 = vsub.s32 %v8626, %v9822
    %v9824 = vrot.slane %v8537, %v9823
    %v9825 = vsel %vm8631, %v9824, %v9820
    %v9826 = vlaneseq
    %v9827 = vshrl.u32 %v9826, 7
    %v9828 = vsub.s32 %v8633, %v9827
    %v9829 = vrot.slane %v8540, %v9828
    %v9830 = vsel %vm8638, %v9829, %v9825
    %v9831 = vlaneseq
    %v9832 = vshrl.u32 %v9831, 7
    %v9833 = vsub.s32 %v8640, %v9832
    %v9834 = vrot.slane %v8543, %v9833
    %v9835 = vsel %vm8645, %v9834, %v9830
    %v9836 = vlaneseq
    %v9837 = vshrl.u32 %v9836, 7
    %v9838 = vsub.s32 %v8647, %v9837
    %v9839 = vrot.slane %v8546, %v9838
    %v9840 = vsel %vm8652, %v9839, %v9835
    %v9841 = vlaneseq
    %v9842 = vshrl.u32 %v9841, 7
    %v9843 = vsub.s32 %v8654, %v9842
    %v9844 = vrot.slane %v8549, %v9843
    %v9845 = vsel %vm8659, %v9844, %v9840
    %vm9846 = vcmask 1041409
    %v9847 = vsel %vm9846, %v8739, %v8660
    %vm9848 = vcmask 1042434
    %v9849 = vsel %vm9848, %v8818, %v9847
    %vm9850 = vcmask 1043459
    %v9851 = vsel %vm9850, %v8897, %v9849
    %vm9852 = vcmask 1044484
    %v9853 = vsel %vm9852, %v8976, %v9851
    %vm9854 = vcmask 1045509
    %v9855 = vsel %vm9854, %v9055, %v9853
    %vm9856 = vcmask 1046534
    %v9857 = vsel %vm9856, %v9134, %v9855
    %vm9858 = vcmask 1047559
    %v9859 = vsel %vm9858, %v9213, %v9857
    %v9860 = vsel %vm9846, %v9371, %v9292
    %v9861 = vsel %vm9848, %v9450, %v9860
    %v9862 = vsel %vm9850, %v9529, %v9861
    %v9863 = vsel %vm9852, %v9608, %v9862
    %v9864 = vsel %vm9854, %v9687, %v9863
    %v9865 = vsel %vm9856, %v9766, %v9864
    %v9866 = vsel %vm9858, %v9845, %v9865
    %v9869 = vpack.c.bf16 %v424, %v423
    %v9870 = vpack.c.bf16 %v9866, %v9859
    %v9871 = vld [vmem:[#allocation10] sm:$0xff]
    %v9872 = vld [vmem:[#allocation10 + $0x8] sm:$0xff]
    %v9873 = vld [vmem:[#allocation10 + $0x10] sm:$0xff]
    %v9874 = vld [vmem:[#allocation10 + $0x18] sm:$0xff]
    %v9875 = vld [vmem:[#allocation10 + $0x20] sm:$0xff]
    %v9876 = vld [vmem:[#allocation10 + $0x28] sm:$0xff]
    %v9877 = vld [vmem:[#allocation10 + $0x30] sm:$0xff]
    %v9878 = vld [vmem:[#allocation10 + $0x38] sm:$0xff]
    %v9879 = vld [vmem:[#allocation10 + $0x40] sm:$0xff]
    %v9880 = vld [vmem:[#allocation10 + $0x48] sm:$0xff]
    %v9881 = vld [vmem:[#allocation10 + $0x50] sm:$0xff]
    %v9882 = vld [vmem:[#allocation10 + $0x58] sm:$0xff]
    %v9883 = vld [vmem:[#allocation10 + $0x60] sm:$0xff]
    %v9884 = vld [vmem:[#allocation10 + $0x68] sm:$0xff]
    %v9885 = vld [vmem:[#allocation10 + $0x70] sm:$0xff]
    %v9886 = vld [vmem:[#allocation10 + $0x78] sm:$0xff]
    %v9887 = vld [vmem:[#allocation10 + $0x80] sm:$0xff]
    %v9888 = vld [vmem:[#allocation10 + $0x88] sm:$0xff]
    %v9889 = vld [vmem:[#allocation10 + $0x90] sm:$0xff]
    %v9890 = vld [vmem:[#allocation10 + $0x98] sm:$0xff]
    %v9891 = vld [vmem:[#allocation10 + $0xa0] sm:$0xff]
    %v9892 = vld [vmem:[#allocation10 + $0xa8] sm:$0xff]
    %v9893 = vld [vmem:[#allocation10 + $0xb0] sm:$0xff]
    %v9894 = vld [vmem:[#allocation10 + $0xb8] sm:$0xff]
    %v9895 = vld [vmem:[#allocation10 + $0xc0] sm:$0xff]
    %v9896 = vld [vmem:[#allocation10 + $0xc8] sm:$0xff]
    %v9897 = vld [vmem:[#allocation10 + $0xd0] sm:$0xff]
    %v9898 = vld [vmem:[#allocation10 + $0xd8] sm:$0xff]
    %v9899 = vld [vmem:[#allocation10 + $0xe0] sm:$0xff]
    %v9900 = vld [vmem:[#allocation10 + $0xe8] sm:$0xff]
    %v9901 = vld [vmem:[#allocation10 + $0xf0] sm:$0xff]
    %v9902 = vld [vmem:[#allocation10 + $0xf8] sm:$0xff]
    %v9903 = vld [vmem:[#allocation10 + $0x100] sm:$0xff]
    %v9904 = vld [vmem:[#allocation10 + $0x108] sm:$0xff]
    %v9905 = vld [vmem:[#allocation10 + $0x110] sm:$0xff]
    %v9906 = vld [vmem:[#allocation10 + $0x118] sm:$0xff]
    %v9907 = vld [vmem:[#allocation10 + $0x120] sm:$0xff]
    %v9908 = vld [vmem:[#allocation10 + $0x128] sm:$0xff]
    %v9909 = vld [vmem:[#allocation10 + $0x130] sm:$0xff]
    %v9910 = vld [vmem:[#allocation10 + $0x138] sm:$0xff]
    %v9911 = vld [vmem:[#allocation10 + $0x140] sm:$0xff]
    %v9912 = vld [vmem:[#allocation10 + $0x148] sm:$0xff]
    %v9913 = vld [vmem:[#allocation10 + $0x150] sm:$0xff]
    %v9914 = vld [vmem:[#allocation10 + $0x158] sm:$0xff]
    %v9915 = vld [vmem:[#allocation10 + $0x160] sm:$0xff]
    %v9916 = vld [vmem:[#allocation10 + $0x168] sm:$0xff]
    %v9917 = vld [vmem:[#allocation10 + $0x170] sm:$0xff]
    %v9918 = vld [vmem:[#allocation10 + $0x178] sm:$0xff]
    %v9919 = vld [vmem:[#allocation10 + $0x180] sm:$0xff]
    %v9920 = vld [vmem:[#allocation10 + $0x188] sm:$0xff]
    %v9921 = vld [vmem:[#allocation10 + $0x190] sm:$0xff]
    %v9922 = vld [vmem:[#allocation10 + $0x198] sm:$0xff]
    %v9923 = vld [vmem:[#allocation10 + $0x1a0] sm:$0xff]
    %v9924 = vld [vmem:[#allocation10 + $0x1a8] sm:$0xff]
    %v9925 = vld [vmem:[#allocation10 + $0x1b0] sm:$0xff]
    %v9926 = vld [vmem:[#allocation10 + $0x1b8] sm:$0xff]
    %v9927 = vld [vmem:[#allocation10 + $0x1c0] sm:$0xff]
    %v9928 = vld [vmem:[#allocation10 + $0x1c8] sm:$0xff]
    %v9929 = vld [vmem:[#allocation10 + $0x1d0] sm:$0xff]
    %v9930 = vld [vmem:[#allocation10 + $0x1d8] sm:$0xff]
    %v9931 = vld [vmem:[#allocation10 + $0x1e0] sm:$0xff]
    %v9932 = vld [vmem:[#allocation10 + $0x1e8] sm:$0xff]
    %v9933 = vld [vmem:[#allocation10 + $0x1f0] sm:$0xff]
    %v9934 = vld [vmem:[#allocation10 + $0x1f8] sm:$0xff]
    %v9935 = vld [vmem:[%s12] sm:$0xf]
    %v9937 = vlaneseq
    %v9938 = vshrl.u32 %v9937, 7
    %v9939 = vsub.s32 0, %v9938
    %v9940 = vrot.slane %v9935, %v9939
    %v9941 = vlaneseq
    %v9942 = vshrl.u32 %v9941, 7
    %v9943 = vsub.s32 1, %v9942
    %v9944 = vrot.slane %v9935, %v9943
    %v9945 = vlaneseq
    %v9946 = vshrl.u32 %v9945, 7
    %v9947 = vsub.s32 2, %v9946
    %v9948 = vrot.slane %v9935, %v9947
    %v9949 = vlaneseq
    %v9950 = vshrl.u32 %v9949, 7
    %v9951 = vsub.s32 3, %v9950
    %v9952 = vrot.slane %v9935, %v9951
    %v10021 = vunpack.c.l.b16 %v9871
    %v10022 = vunpack.c.h.b16 %v9871
    %v10023 = vunpack.c.l.b16 %v9872
    %v10024 = vunpack.c.h.b16 %v9872
    %v10025 = vunpack.c.l.b16 %v9873
    %v10026 = vunpack.c.h.b16 %v9873
    %v10027 = vunpack.c.l.b16 %v9874
    %v10028 = vunpack.c.h.b16 %v9874
    %v10029 = vunpack.c.l.b16 %v9875
    %v10030 = vunpack.c.h.b16 %v9875
    %v10031 = vunpack.c.l.b16 %v9876
    %v10032 = vunpack.c.h.b16 %v9876
    %v10033 = vunpack.c.l.b16 %v9877
    %v10034 = vunpack.c.h.b16 %v9877
    %v10035 = vunpack.c.l.b16 %v9878
    %v10036 = vunpack.c.h.b16 %v9878
    %v10037 = vunpack.c.l.b16 %v9879
    %v10038 = vunpack.c.h.b16 %v9879
    %v10039 = vunpack.c.l.b16 %v9880
    %v10040 = vunpack.c.h.b16 %v9880
    %v10041 = vunpack.c.l.b16 %v9881
    %v10042 = vunpack.c.h.b16 %v9881
    %v10043 = vunpack.c.l.b16 %v9882
    %v10044 = vunpack.c.h.b16 %v9882
    %v10045 = vunpack.c.l.b16 %v9883
    %v10046 = vunpack.c.h.b16 %v9883
    %v10047 = vunpack.c.l.b16 %v9884
    %v10048 = vunpack.c.h.b16 %v9884
    %v10049 = vunpack.c.l.b16 %v9885
    %v10050 = vunpack.c.h.b16 %v9885
    %v10051 = vunpack.c.l.b16 %v9886
    %v10052 = vunpack.c.h.b16 %v9886
    %v10053 = vunpack.c.l.b16 %v9887
    %v10054 = vunpack.c.h.b16 %v9887
    %v10055 = vunpack.c.l.b16 %v9888
    %v10056 = vunpack.c.h.b16 %v9888
    %v10057 = vunpack.c.l.b16 %v9889
    %v10058 = vunpack.c.h.b16 %v9889
    %v10059 = vunpack.c.l.b16 %v9890
    %v10060 = vunpack.c.h.b16 %v9890
    %v10061 = vunpack.c.l.b16 %v9891
    %v10062 = vunpack.c.h.b16 %v9891
    %v10063 = vunpack.c.l.b16 %v9892
    %v10064 = vunpack.c.h.b16 %v9892
    %v10065 = vunpack.c.l.b16 %v9893
    %v10066 = vunpack.c.h.b16 %v9893
    %v10067 = vunpack.c.l.b16 %v9894
    %v10068 = vunpack.c.h.b16 %v9894
    %v10069 = vunpack.c.l.b16 %v9895
    %v10070 = vunpack.c.h.b16 %v9895
    %v10071 = vunpack.c.l.b16 %v9896
    %v10072 = vunpack.c.h.b16 %v9896
    %v10073 = vunpack.c.l.b16 %v9897
    %v10074 = vunpack.c.h.b16 %v9897
    %v10075 = vunpack.c.l.b16 %v9898
    %v10076 = vunpack.c.h.b16 %v9898
    %v10077 = vunpack.c.l.b16 %v9899
    %v10078 = vunpack.c.h.b16 %v9899
    %v10079 = vunpack.c.l.b16 %v9900
    %v10080 = vunpack.c.h.b16 %v9900
    %v10081 = vunpack.c.l.b16 %v9901
    %v10082 = vunpack.c.h.b16 %v9901
    %v10083 = vunpack.c.l.b16 %v9902
    %v10084 = vunpack.c.h.b16 %v9902
    %v10085 = vunpack.c.l.b16 %v9903
    %v10086 = vunpack.c.h.b16 %v9903
    %v10087 = vunpack.c.l.b16 %v9904
    %v10088 = vunpack.c.h.b16 %v9904
    %v10089 = vunpack.c.l.b16 %v9905
    %v10090 = vunpack.c.h.b16 %v9905
    %v10091 = vunpack.c.l.b16 %v9906
    %v10092 = vunpack.c.h.b16 %v9906
    %v10093 = vunpack.c.l.b16 %v9907
    %v10094 = vunpack.c.h.b16 %v9907
    %v10095 = vunpack.c.l.b16 %v9908
    %v10096 = vunpack.c.h.b16 %v9908
    %v10097 = vunpack.c.l.b16 %v9909
    %v10098 = vunpack.c.h.b16 %v9909
    %v10099 = vunpack.c.l.b16 %v9910
    %v10100 = vunpack.c.h.b16 %v9910
    %v10101 = vunpack.c.l.b16 %v9911
    %v10102 = vunpack.c.h.b16 %v9911
    %v10103 = vunpack.c.l.b16 %v9912
    %v10104 = vunpack.c.h.b16 %v9912
    %v10105 = vunpack.c.l.b16 %v9913
    %v10106 = vunpack.c.h.b16 %v9913
    %v10107 = vunpack.c.l.b16 %v9914
    %v10108 = vunpack.c.h.b16 %v9914
    %v10109 = vunpack.c.l.b16 %v9915
    %v10110 = vunpack.c.h.b16 %v9915
    %v10111 = vunpack.c.l.b16 %v9916
    %v10112 = vunpack.c.h.b16 %v9916
    %v10113 = vunpack.c.l.b16 %v9917
    %v10114 = vunpack.c.h.b16 %v9917
    %v10115 = vunpack.c.l.b16 %v9918
    %v10116 = vunpack.c.h.b16 %v9918
    %v10117 = vunpack.c.l.b16 %v9919
    %v10118 = vunpack.c.h.b16 %v9919
    %v10119 = vunpack.c.l.b16 %v9920
    %v10120 = vunpack.c.h.b16 %v9920
    %v10121 = vunpack.c.l.b16 %v9921
    %v10122 = vunpack.c.h.b16 %v9921
    %v10123 = vunpack.c.l.b16 %v9922
    %v10124 = vunpack.c.h.b16 %v9922
    %v10125 = vunpack.c.l.b16 %v9923
    %v10126 = vunpack.c.h.b16 %v9923
    %v10127 = vunpack.c.l.b16 %v9924
    %v10128 = vunpack.c.h.b16 %v9924
    %v10129 = vunpack.c.l.b16 %v9925
    %v10130 = vunpack.c.h.b16 %v9925
    %v10131 = vunpack.c.l.b16 %v9926
    %v10132 = vunpack.c.h.b16 %v9926
    %v10133 = vunpack.c.l.b16 %v9927
    %v10134 = vunpack.c.h.b16 %v9927
    %v10135 = vunpack.c.l.b16 %v9928
    %v10136 = vunpack.c.h.b16 %v9928
    %v10137 = vunpack.c.l.b16 %v9929
    %v10138 = vunpack.c.h.b16 %v9929
    %v10139 = vunpack.c.l.b16 %v9930
    %v10140 = vunpack.c.h.b16 %v9930
    %v10141 = vunpack.c.l.b16 %v9931
    %v10142 = vunpack.c.h.b16 %v9931
    %v10143 = vunpack.c.l.b16 %v9932
    %v10144 = vunpack.c.h.b16 %v9932
    %v10145 = vunpack.c.l.b16 %v9933
    %v10146 = vunpack.c.h.b16 %v9933
    %v10147 = vunpack.c.l.b16 %v9934
    %v10148 = vunpack.c.h.b16 %v9934
    %v10149 = vpack.c.b16 %v10025, %v10021
    %v10150 = vpack.c.b16 %v10026, %v10022
    %v10151 = vpack.c.b16 %v10027, %v10023
    %v10152 = vpack.c.b16 %v10028, %v10024
    %v10153 = vpack.c.b16 %v10033, %v10029
    %v10154 = vpack.c.b16 %v10034, %v10030
    %v10155 = vpack.c.b16 %v10035, %v10031
    %v10156 = vpack.c.b16 %v10036, %v10032
    %v10157 = vpack.c.b16 %v10041, %v10037
    %v10158 = vpack.c.b16 %v10042, %v10038
    %v10159 = vpack.c.b16 %v10043, %v10039
    %v10160 = vpack.c.b16 %v10044, %v10040
    %v10161 = vpack.c.b16 %v10049, %v10045
    %v10162 = vpack.c.b16 %v10050, %v10046
    %v10163 = vpack.c.b16 %v10051, %v10047
    %v10164 = vpack.c.b16 %v10052, %v10048
    %v10165 = vpack.c.b16 %v10057, %v10053
    %v10166 = vpack.c.b16 %v10058, %v10054
    %v10167 = vpack.c.b16 %v10059, %v10055
    %v10168 = vpack.c.b16 %v10060, %v10056
    %v10169 = vpack.c.b16 %v10065, %v10061
    %v10170 = vpack.c.b16 %v10066, %v10062
    %v10171 = vpack.c.b16 %v10067, %v10063
    %v10172 = vpack.c.b16 %v10068, %v10064
    %v10173 = vpack.c.b16 %v10073, %v10069
    %v10174 = vpack.c.b16 %v10074, %v10070
    %v10175 = vpack.c.b16 %v10075, %v10071
    %v10176 = vpack.c.b16 %v10076, %v10072
    %v10177 = vpack.c.b16 %v10081, %v10077
    %v10178 = vpack.c.b16 %v10082, %v10078
    %v10179 = vpack.c.b16 %v10083, %v10079
    %v10180 = vpack.c.b16 %v10084, %v10080
    %v10181 = vpack.c.b16 %v10089, %v10085
    %v10182 = vpack.c.b16 %v10090, %v10086
    %v10183 = vpack.c.b16 %v10091, %v10087
    %v10184 = vpack.c.b16 %v10092, %v10088
    %v10185 = vpack.c.b16 %v10097, %v10093
    %v10186 = vpack.c.b16 %v10098, %v10094
    %v10187 = vpack.c.b16 %v10099, %v10095
    %v10188 = vpack.c.b16 %v10100, %v10096
    %v10189 = vpack.c.b16 %v10105, %v10101
    %v10190 = vpack.c.b16 %v10106, %v10102
    %v10191 = vpack.c.b16 %v10107, %v10103
    %v10192 = vpack.c.b16 %v10108, %v10104
    %v10193 = vpack.c.b16 %v10113, %v10109
    %v10194 = vpack.c.b16 %v10114, %v10110
    %v10195 = vpack.c.b16 %v10115, %v10111
    %v10196 = vpack.c.b16 %v10116, %v10112
    %v10197 = vpack.c.b16 %v10121, %v10117
    %v10198 = vpack.c.b16 %v10122, %v10118
    %v10199 = vpack.c.b16 %v10123, %v10119
    %v10200 = vpack.c.b16 %v10124, %v10120
    %v10201 = vpack.c.b16 %v10129, %v10125
    %v10202 = vpack.c.b16 %v10130, %v10126
    %v10203 = vpack.c.b16 %v10131, %v10127
    %v10204 = vpack.c.b16 %v10132, %v10128
    %v10205 = vpack.c.b16 %v10137, %v10133
    %v10206 = vpack.c.b16 %v10138, %v10134
    %v10207 = vpack.c.b16 %v10139, %v10135
    %v10208 = vpack.c.b16 %v10140, %v10136
    %v10209 = vpack.c.b16 %v10145, %v10141
    %v10210 = vpack.c.b16 %v10146, %v10142
    %v10211 = vpack.c.b16 %v10147, %v10143
    %v10212 = vpack.c.b16 %v10148, %v10144
    %10277 = vmatprep.subr.bf16.mxu0 %v10150
    %10278 = vmatpush1.bf16.msra.mxu0 %v10149
    %10279 = vmatprep.subr.bf16.mxu0 %v10154
    %10280 = vmatpush1.bf16.msra.mxu0 %v10153
    %10281 = vmatprep.subr.bf16.mxu0 %v10158
    %10282 = vmatpush1.bf16.msra.mxu0 %v10157
    %10283 = vmatprep.subr.bf16.mxu0 %v10162
    %10284 = vmatpush1.bf16.msra.mxu0 %v10161
    %10285 = vmatprep.subr.bf16.mxu0 %v10166
    %10286 = vmatpush1.bf16.msra.mxu0 %v10165
    %10287 = vmatprep.subr.bf16.mxu0 %v10170
    %10288 = vmatpush1.bf16.msra.mxu0 %v10169
    %10289 = vmatprep.subr.bf16.mxu0 %v10174
    %10290 = vmatpush1.bf16.msra.mxu0 %v10173
    %10291 = vmatprep.subr.bf16.mxu0 %v10178
    %10292 = vmatpush1.bf16.msra.mxu0 %v10177
    %10293 = vmatprep.subr.bf16.mxu0 %v10182
    %10294 = vmatpush1.bf16.msra.mxu0 %v10181
    %10295 = vmatprep.subr.bf16.mxu0 %v10186
    %10296 = vmatpush1.bf16.msra.mxu0 %v10185
    %10297 = vmatprep.subr.bf16.mxu0 %v10190
    %10298 = vmatpush1.bf16.msra.mxu0 %v10189
    %10299 = vmatprep.subr.bf16.mxu0 %v10194
    %10300 = vmatpush1.bf16.msra.mxu0 %v10193
    %10301 = vmatprep.subr.bf16.mxu0 %v10198
    %10302 = vmatpush1.bf16.msra.mxu0 %v10197
    %10303 = vmatprep.subr.bf16.mxu0 %v10202
    %10304 = vmatpush1.bf16.msra.mxu0 %v10201
    %10305 = vmatprep.subr.bf16.mxu0 %v10206
    %10306 = vmatpush1.bf16.msra.mxu0 %v10205
    %10307 = vmatprep.subr.bf16.mxu0 %v10210
    %10308 = vmatpush1.bf16.msra.mxu0 %v10209
    %10309 = vmatprep.mubr.bf16.mxu0 %v9870
    %10310 = vmatmul.mubr.bf16.gmra.mrb[0].mxu0 %v9869
    %v10311 = vpop.f32.mrb[0].mxu0
    %v10312 = vadd.f32 %v9940, %v10311
    %v10313 = vpop.f32.mrb[0].mxu0
    %v10314 = vadd.f32 %v9944, %v10313
    %v10315 = vpop.f32.mrb[0].mxu0
    %v10316 = vadd.f32 %v9940, %v10315
    %v10317 = vpop.f32.mrb[0].mxu0
    %v10318 = vadd.f32 %v9944, %v10317
    %10319 = vdwg.mxu0
    %10320 = vmatprep.subr.bf16.mxu0 %v10152
    %10321 = vmatpush1.bf16.msra.mxu0 %v10151
    %10322 = vmatprep.subr.bf16.mxu0 %v10156
    %10323 = vmatpush1.bf16.msra.mxu0 %v10155
    %10324 = vmatprep.subr.bf16.mxu0 %v10160
    %10325 = vmatpush1.bf16.msra.mxu0 %v10159
    %10326 = vmatprep.subr.bf16.mxu0 %v10164
    %10327 = vmatpush1.bf16.msra.mxu0 %v10163
    %10328 = vmatprep.subr.bf16.mxu0 %v10168
    %10329 = vmatpush1.bf16.msra.mxu0 %v10167
    %10330 = vmatprep.subr.bf16.mxu0 %v10172
    %10331 = vmatpush1.bf16.msra.mxu0 %v10171
    %10332 = vmatprep.subr.bf16.mxu0 %v10176
    %10333 = vmatpush1.bf16.msra.mxu0 %v10175
    %10334 = vmatprep.subr.bf16.mxu0 %v10180
    %10335 = vmatpush1.bf16.msra.mxu0 %v10179
    %10336 = vmatprep.subr.bf16.mxu0 %v10184
    %10337 = vmatpush1.bf16.msra.mxu0 %v10183
    %10338 = vmatprep.subr.bf16.mxu0 %v10188
    %10339 = vmatpush1.bf16.msra.mxu0 %v10187
    %10340 = vmatprep.subr.bf16.mxu0 %v10192
    %10341 = vmatpush1.bf16.msra.mxu0 %v10191
    %10342 = vmatprep.subr.bf16.mxu0 %v10196
    %10343 = vmatpush1.bf16.msra.mxu0 %v10195
    %10344 = vmatprep.subr.bf16.mxu0 %v10200
    %10345 = vmatpush1.bf16.msra.mxu0 %v10199
    %10346 = vmatprep.subr.bf16.mxu0 %v10204
    %10347 = vmatpush1.bf16.msra.mxu0 %v10203
    %10348 = vmatprep.subr.bf16.mxu0 %v10208
    %10349 = vmatpush1.bf16.msra.mxu0 %v10207
    %10350 = vmatprep.subr.bf16.mxu0 %v10212
    %10351 = vmatpush1.bf16.msra.mxu0 %v10211
    %10352 = vmatprep.mubr.bf16.mxu0 %v9870
    %10353 = vmatmul.mubr.bf16.gmra.mrb[0].mxu0 %v9869
    %v10354 = vpop.f32.mrb[0].mxu0
    %v10355 = vadd.f32 %v9948, %v10354
    %v10356 = vpop.f32.mrb[0].mxu0
    %v10357 = vadd.f32 %v9952, %v10356
    %v10358 = vpop.f32.mrb[0].mxu0
    %v10359 = vadd.f32 %v9948, %v10358
    %v10360 = vpop.f32.mrb[0].mxu0
    %v10361 = vadd.f32 %v9952, %v10360
    %10362 = vdwg.mxu0
    %10363 = vst [vmem:[#allocation11] sm:$0xff] %v10312
    %10364 = vst [vmem:[#allocation11 + $0x8] sm:$0xff] %v10314
    %10365 = vst [vmem:[#allocation11 + $0x10] sm:$0xff] %v10355
    %10366 = vst [vmem:[#allocation11 + $0x18] sm:$0xff] %v10357
    %10367 = vst [vmem:[#allocation11 + $0x20] sm:$0xff] %v10316
    %10368 = vst [vmem:[#allocation11 + $0x28] sm:$0xff] %v10318
    %10369 = vst [vmem:[#allocation11 + $0x30] sm:$0xff] %v10359
    %10370 = vst [vmem:[#allocation11 + $0x38] sm:$0xff] %v10361
    %10371 = vst [vmem:[#allocation12] sm:$0xff] %v423
    %10372 = vst [vmem:[#allocation12 + $0x8] sm:$0xff] %v424
    %10373 = vst [vmem:[#allocation14] sm:$0xff] %v9859
    %10374 = vst [vmem:[#allocation14 + $0x8] sm:$0xff] %v9866
    // Predicated region
    $region74: #{tpu_custom_call.1} parent=1 // pred_check
      _
    $region75: #{tpu_custom_call.1} parent=1 // pred_check_branch
      %10376 = sbr.rel (0) target = $region77
    $region76: #{tpu_custom_call.1} parent=1 // pred_region
      %s10378 = ssub.s32 1024, 1024
      %10379 = vsyncadd [#allocation4], %s10378
      %s10380 = sshll.u32 [#allocation11], 4
      %s10381 = int_to_ptr.vmem [resolvable:$true] %s10380
      %10386 = dma.vmem_to_hbm [thread:$0]  %s10381, 1024, %s13, [#allocation4], 512, 512, 32
    $region77: #{tpu_custom_call.1} parent=1 // pred_fallthru
      _
    // Predicated region
    $region78: #{tpu_custom_call.1} parent=1 // pred_check
      _
    $region79: #{tpu_custom_call.1} parent=1 // pred_check_branch
      %10388 = sbr.rel (0) target = $region81
    $region80: #{tpu_custom_call.1} parent=1 // pred_region
      %s10390 = ssub.s32 256, 256
      %10391 = vsyncadd [#allocation13], %s10390
      %s10392 = sshll.u32 [#allocation12], 4
      %s10393 = int_to_ptr.vmem [resolvable:$true] %s10392
      %10398 = dma.vmem_to_hbm [thread:$0]  %s10393, 256, %s14, [#allocation13], 128, 128, 8
    $region81: #{tpu_custom_call.1} parent=1 // pred_fallthru
      _
    // Predicated region
    $region82: #{tpu_custom_call.1} parent=1 // pred_check
      _
    $region83: #{tpu_custom_call.1} parent=1 // pred_check_branch
      %10400 = sbr.rel (0) target = $region85
    $region84: #{tpu_custom_call.1} parent=1 // pred_region
      %s10402 = ssub.s32 256, 256
      %10403 = vsyncadd [#allocation13], %s10402
      %s10404 = sshll.u32 [#allocation14], 4
      %s10405 = int_to_ptr.vmem [resolvable:$true] %s10404
      %10410 = dma.vmem_to_hbm [thread:$0]  %s10405, 256, %s15, [#allocation13], 128, 128, 8
    $region85: #{tpu_custom_call.1} parent=1 // pred_fallthru
      _
    // Predicated region
    $region86: #{tpu_custom_call.1} parent=1 // pred_check
      _
    $region87: #{tpu_custom_call.1} parent=1 // pred_check_branch
      %10412 = sbr.rel (0) target = $region89
    $region88: #{tpu_custom_call.1} parent=1 // pred_region
      %10413 = dma.done [#allocation4], 1024
    $region89: #{tpu_custom_call.1} parent=1 // pred_fallthru
      _
    // Predicated region
    $region90: #{tpu_custom_call.1} parent=1 // pred_check
      _
    $region91: #{tpu_custom_call.1} parent=1 // pred_check_branch
      %10415 = sbr.rel (0) target = $region93
    $region92: #{tpu_custom_call.1} parent=1 // pred_region
      %10416 = dma.done [#allocation13], 256
    $region93: #{tpu_custom_call.1} parent=1 // pred_fallthru
      _
    // Predicated region
    $region94: #{tpu_custom_call.1} parent=1 // pred_check
      _
    $region95: #{tpu_custom_call.1} parent=1 // pred_check_branch
      %10418 = sbr.rel (0) target = $region97
    $region96: #{tpu_custom_call.1} parent=1 // pred_region
      %10419 = dma.done [#allocation13], 256
    $region97: #{tpu_custom_call.1} parent=1 // pred_fallthru
      _
    %10420 = vsyncpa [#allocation3], 1
    %10421 = vsyncpa [#allocation6], 1
    %10422 = vsyncpa [#allocation9], 1
    %10423 = vsyncpa [#allocation4], 1
    %10424 = vsyncpa [#allocation13], 1

</llo_original>
